<compile_context>
chip_gen: v7x
topology: tpu7x:2x2x1
jax: 0.10.0
libtpu: 0.0.40
codegen_flags: <defaults>
</compile_context>

<pallas_src>
import functools

import jax
import jax.numpy as jnp
from jax.experimental import pallas as pl
from jax.experimental.pallas import tpu as pltpu

_HIGHEST = jax.lax.Precision.HIGHEST


def _rnn_ode_kernel(alpha_ref,    # SMEM (4,)  = [dt*alpha1, dt*alpha2, dt*W, dt]
                    x_ref,        # VMEM (BB, S, D)
                    h2_ref,       # VMEM (BB, S, D)
                    wih_t_ref,    # VMEM (D, D)  = W_ih^T
                    whh_t_ref,    # VMEM (D, D)  = W_hh^T
                    bias_ref,     # VMEM (1, D)  = b_ih + b_hh
                    fcw_ref,      # VMEM (P, S)  = fc.weight
                    fcb_ref,      # VMEM (P, 1)  = fc.bias
                    out_ref,      # VMEM (BB, P, D)
                    hid_ref,      # VMEM (2, BB, S, D)
                    h1_scr):      # VMEM scratch (BB, S, D)
    BB, S, D = x_ref.shape
    P = fcw_ref.shape[0]

    da1 = alpha_ref[0]   # dt * alpha1
    da2 = alpha_ref[1]   # dt * alpha2
    dw = alpha_ref[2]    # dt * W
    dt = alpha_ref[3]    # dt
    # alpha3 * ode_func.h_tmp: h_tmp is zero-initialized on first use and never
    # mutated by the PyTorch module, so it contributes exactly 0 (assumption documented).

    wih_t = wih_t_ref[...]
    whh_t = whh_t_ref[...]
    bias = bias_ref[...]                  # (1, D)

    # ---- Hoisted input projection: S independent (BB,D)@(D,D) dots ----------
    # These have no serial dependence, so they pipeline on the MXU off the
    # recurrence's critical chain.
    pres = [jnp.dot(x_ref[:, t, :], wih_t,
                    preferred_element_type=jnp.float32,
                    precision=_HIGHEST) + bias
            for t in range(S)]

    # ---- Elman RNN (tanh) recurrence, fully unrolled (static S) -------------
    # Per-step critical path: dot(h, Whh^T) -> add -> tanh (MXU -> VPU -> EUP).
    h = jnp.zeros((BB, D), jnp.float32)
    hs = []
    for t in range(S):
        h = jnp.tanh(pres[t] + jnp.dot(h, whh_t,
                                       preferred_element_type=jnp.float32,
                                       precision=_HIGHEST))
        hs.append(h)
    # Stores deferred off the serial chain.
    for t in range(S):
        h1_scr[:, t, :] = hs[t]

    # ---- Van der Pol ODE, 4 explicit Euler steps (elementwise, VPU) ---------
    # dt is pre-folded into da1/da2/dw; update factored to minimize VPU ops.
    h1 = h1_scr[...]                      # (BB, S, D)
    h2 = h2_ref[...]                      # (BB, S, D)
    for _ in range(4):
        h1_new = h1 + h1 * (da1 * (1.0 - h2 * h2) + dw) + da2 * h2
        h2 = h2 - dt * h1                 # uses old h1 (simultaneous Euler update)
        h1 = h1_new

    hid_ref[0] = h1
    hid_ref[1] = h2

    # ---- fc: Linear(seq_len -> pred_len) over the S axis --------------------
    # fc weight replicated in-kernel (cheap leading-dim broadcast), one batched
    # matmul -> single lane-dense (BB, P, D) store.
    fcw_b = jnp.broadcast_to(fcw_ref[...], (BB, P, S))
    out_ref[...] = (
        jnp.einsum('bps,bsd->bpd', fcw_b, h1,
                   preferred_element_type=jnp.float32,
                   precision=_HIGHEST)
        + fcb_ref[...])


def rnnwithode_forward(x, h2_init, wih, whh, b_ih, b_hh, fcw, fcb,
                       alpha1, alpha2, W, alpha3, *, batch_block=8):
    """x, h2_init: (B, S, D).  Returns (output (B, P, D), hidden (2, B, S, D))."""
    B, S, D = x.shape
    P = fcw.shape[0]

    dt = jnp.float32(0.1 / 4.0)
    # Pre-fold dt into the Euler coefficients (alpha3 unused: multiplies zeros).
    alphas = dt * jnp.stack([jnp.asarray(alpha1, jnp.float32),
                             jnp.asarray(alpha2, jnp.float32),
                             jnp.asarray(W, jnp.float32),
                             jnp.asarray(1.0, jnp.float32)])

    # Activations stay in their native PyTorch layouts (no transposes/reshapes).
    x_f = x.astype(jnp.float32)
    h2_f = h2_init.astype(jnp.float32)

    # Tiny parameter prep only (D/S/P-sized); no batch broadcasts.
    wih_t = wih.T.astype(jnp.float32)                      # (D, D)
    whh_t = whh.T.astype(jnp.float32)                      # (D, D)
    bias = (b_ih + b_hh).astype(jnp.float32).reshape(1, D)  # (1, D)
    fcw_f = fcw.astype(jnp.float32)                        # (P, S)
    fcb_f = fcb.astype(jnp.float32).reshape(P, 1)          # (P, 1)

    BB = min(B, batch_block)
    nb = pl.cdiv(B, BB)

    output, hidden = pl.pallas_call(
        _rnn_ode_kernel,
        grid=(nb,),
        in_specs=[
            pl.BlockSpec(memory_space=pltpu.MemorySpace.SMEM),        # alphas (4,)
            pl.BlockSpec((BB, S, D), lambda i: (i, 0, 0)),            # x
            pl.BlockSpec((BB, S, D), lambda i: (i, 0, 0)),            # h2 init
            pl.BlockSpec((D, D), lambda i: (0, 0)),                   # W_ih^T
            pl.BlockSpec((D, D), lambda i: (0, 0)),                   # W_hh^T
            pl.BlockSpec((1, D), lambda i: (0, 0)),                   # b_ih + b_hh
            pl.BlockSpec((P, S), lambda i: (0, 0)),                   # fc.weight
            pl.BlockSpec((P, 1), lambda i: (0, 0)),                   # fc.bias
        ],
        out_specs=(
            pl.BlockSpec((BB, P, D), lambda i: (i, 0, 0)),            # output
            pl.BlockSpec((2, BB, S, D), lambda i: (0, i, 0, 0)),      # hidden
        ),
        out_shape=(jax.ShapeDtypeStruct((B, P, D), jnp.float32),
                   jax.ShapeDtypeStruct((2, B, S, D), jnp.float32)),
        scratch_shapes=[pltpu.VMEM((BB, S, D), jnp.float32)],         # h1 (rnn output)
        compiler_params=pltpu.CompilerParams(
            dimension_semantics=("parallel",)),
    )(alphas, x_f, h2_f, wih_t, whh_t, bias, fcw_f, fcb_f)

    return output, hidden


def _reference(x, h2_init, wih, whh, b_ih, b_hh, fcw, fcb,
               alpha1, alpha2, W, alpha3):
    """Pure-JAX reference mirroring the PyTorch forward (same matmul precision)."""
    B, S, D = x.shape
    h = jnp.zeros((B, D), jnp.float32)
    outs = []
    for t in range(S):
        h = jnp.tanh(jnp.dot(x[:, t, :], wih.T, precision=_HIGHEST)
                     + jnp.dot(h, whh.T, precision=_HIGHEST) + b_ih + b_hh)
        outs.append(h)
    h1 = jnp.stack(outs, axis=1)                        # (B, S, D) = rnn output
    h2 = h2_init
    dt = 0.1 / 4.0
    for _ in range(4):
        dh1 = alpha1 * h1 * (1.0 - h2 ** 2) + alpha2 * h2 + W * h1   # alpha3 * 0
        dh2 = -h1
        h1, h2 = h1 + dt * dh1, h2 + dt * dh2
    out = jnp.einsum('bsd,ps->bpd', h1, fcw, precision=_HIGHEST) + fcb[None, :, None]
    hidden = jnp.stack([h1, h2], axis=0)                # (2, B, S, D)
    return out, hidden


if __name__ == "__main__":
    # configs: seq_len=8, pred_len=4, enc_in=8, batch=2
    B, S, D, P = 2, 8, 8, 4
    alpha1, alpha2, W, alpha3 = 0.5, -0.3, 0.1, 0.2

    key = jax.random.PRNGKey(0)
    ks = jax.random.split(key, 8)
    x = jax.random.normal(ks[0], (B, S, D), jnp.float32)
    # input_to_hidden(): deterministic stand-in for torch.randn h2_initial
    # (h1_initial is overwritten by the RNN output, so it is not needed).
    h2_init = jax.random.normal(ks[1], (B, S, D), jnp.float32)

    bound = 1.0 / jnp.sqrt(jnp.float32(D))
    wih = jax.random.uniform(ks[2], (D, D), jnp.float32, -bound, bound)
    whh = jax.random.uniform(ks[3], (D, D), jnp.float32, -bound, bound)
    b_ih = jax.random.uniform(ks[4], (D,), jnp.float32, -bound, bound)
    b_hh = jax.random.uniform(ks[5], (D,), jnp.float32, -bound, bound)
    fbound = 1.0 / jnp.sqrt(jnp.float32(S))
    fcw = jax.random.uniform(ks[6], (P, S), jnp.float32, -fbound, fbound)
    fcb = jax.random.uniform(ks[7], (P,), jnp.float32, -fbound, fbound)

    fwd = jax.jit(functools.partial(
        rnnwithode_forward,
        alpha1=alpha1, alpha2=alpha2, W=W, alpha3=alpha3))
    output, hidden = fwd(x, h2_init, wih, whh, b_ih, b_hh, fcw, fcb)
    jax.block_until_ready((output, hidden))

    ref_out, ref_hid = _reference(x, h2_init, wih, whh, b_ih, b_hh, fcw, fcb,
                                  alpha1, alpha2, W, alpha3)

    assert output.shape == (B, P, D) and hidden.shape == (2, B, S, D)
    assert jnp.allclose(output, ref_out, atol=1e-4, rtol=1e-4)
    assert jnp.allclose(hidden, ref_hid, atol=1e-4, rtol=1e-4)
    print("KERNEL_OK")
</pallas_src>

<mosaic_0001>
module attributes {stable_mosaic.version = 11 : i64} {
  func.func @_rnn_ode_kernel(%arg0: i32, %arg1: memref<4xf32, #tpu.memory_space<smem>>, %arg2: memref<2x8x8xf32, #tpu.memory_space<vmem>>, %arg3: memref<2x8x8xf32, #tpu.memory_space<vmem>>, %arg4: memref<8x8xf32, #tpu.memory_space<vmem>>, %arg5: memref<8x8xf32, #tpu.memory_space<vmem>>, %arg6: memref<1x8xf32, #tpu.memory_space<vmem>>, %arg7: memref<4x8xf32, #tpu.memory_space<vmem>>, %arg8: memref<4x1xf32, #tpu.memory_space<vmem>>, %arg9: memref<2x4x8xf32, #tpu.memory_space<vmem>>, %arg10: memref<2x2x8x8xf32, #tpu.memory_space<vmem>>, %arg11: memref<2x8x8xf32, #tpu.memory_space<vmem>>) attributes {dimension_semantics = [#tpu.dimension_semantics<parallel>], iteration_bounds = array<i64: 1>, scalar_prefetch = 0 : i64, scratch_operands = 1 : i64, tpu.core_type = #tpu.core_type<tc>, window_params = [{transform_indices = @transform_0, window_bounds = array<i64: 4>}, {transform_indices = @transform_1, window_bounds = array<i64: 2, 8, 8>}, {transform_indices = @transform_2, window_bounds = array<i64: 2, 8, 8>}, {pipeline_mode = #tpu.pipeline_mode<synchronous>, transform_indices = @transform_3, window_bounds = array<i64: 8, 8>}, {pipeline_mode = #tpu.pipeline_mode<synchronous>, transform_indices = @transform_4, window_bounds = array<i64: 8, 8>}, {pipeline_mode = #tpu.pipeline_mode<synchronous>, transform_indices = @transform_5, window_bounds = array<i64: 1, 8>}, {pipeline_mode = #tpu.pipeline_mode<synchronous>, transform_indices = @transform_6, window_bounds = array<i64: 4, 8>}, {pipeline_mode = #tpu.pipeline_mode<synchronous>, transform_indices = @transform_7, window_bounds = array<i64: 4, 1>}, {transform_indices = @transform_8, window_bounds = array<i64: 2, 4, 8>}, {transform_indices = @transform_9, window_bounds = array<i64: 2, 2, 8, 8>}]} {
    %c0 = arith.constant 0 : index
    %0 = memref.load %arg1[%c0] : memref<4xf32, #tpu.memory_space<smem>>
    %c1 = arith.constant 1 : index
    %1 = memref.load %arg1[%c1] : memref<4xf32, #tpu.memory_space<smem>>
    %c2 = arith.constant 2 : index
    %2 = memref.load %arg1[%c2] : memref<4xf32, #tpu.memory_space<smem>>
    %c3 = arith.constant 3 : index
    %3 = memref.load %arg1[%c3] : memref<4xf32, #tpu.memory_space<smem>>
    %c0_0 = arith.constant 0 : index
    %c0_1 = arith.constant 0 : index
    %4 = vector.load %arg4[%c0_0, %c0_1] : memref<8x8xf32, #tpu.memory_space<vmem>>, vector<8x8xf32>
    %c0_2 = arith.constant 0 : index
    %c0_3 = arith.constant 0 : index
    %5 = vector.load %arg5[%c0_2, %c0_3] : memref<8x8xf32, #tpu.memory_space<vmem>>, vector<8x8xf32>
    %c0_4 = arith.constant 0 : index
    %c0_5 = arith.constant 0 : index
    %6 = vector.load %arg6[%c0_4, %c0_5] : memref<1x8xf32, #tpu.memory_space<vmem>>, vector<1x8xf32>
    %c0_6 = arith.constant 0 : index
    %c0_7 = arith.constant 0 : index
    %c0_8 = arith.constant 0 : index
    %7 = vector.load %arg2[%c0_6, %c0_7, %c0_8] : memref<2x8x8xf32, #tpu.memory_space<vmem>>, vector<2x1x8xf32>
    %8 = vector.shape_cast %7 : vector<2x1x8xf32> to vector<2x8xf32>
    %cst = arith.constant dense<0.000000e+00> : vector<2x8xf32>
    %9 = tpu.matmul %8, %4, %cst {dimension_numbers = #tpu.dot_dimension_numbers<[1], [0], [0], [1], [0, 0, 1, 1], [], []>, precision = #tpu.contract_precision<fp32>} : vector<2x8xf32>, vector<8x8xf32>, vector<2x8xf32> -> vector<2x8xf32>
    %10 = vector.broadcast %6 : vector<1x8xf32> to vector<2x8xf32>
    %11 = arith.addf %9, %10 : vector<2x8xf32>
    %c0_9 = arith.constant 0 : index
    %c1_10 = arith.constant 1 : index
    %c0_11 = arith.constant 0 : index
    %12 = vector.load %arg2[%c0_9, %c1_10, %c0_11] : memref<2x8x8xf32, #tpu.memory_space<vmem>>, vector<2x1x8xf32>
    %13 = vector.shape_cast %12 : vector<2x1x8xf32> to vector<2x8xf32>
    %cst_12 = arith.constant dense<0.000000e+00> : vector<2x8xf32>
    %14 = tpu.matmul %13, %4, %cst_12 {dimension_numbers = #tpu.dot_dimension_numbers<[1], [0], [0], [1], [0, 0, 1, 1], [], []>, precision = #tpu.contract_precision<fp32>} : vector<2x8xf32>, vector<8x8xf32>, vector<2x8xf32> -> vector<2x8xf32>
    %15 = vector.broadcast %6 : vector<1x8xf32> to vector<2x8xf32>
    %16 = arith.addf %14, %15 : vector<2x8xf32>
    %c0_13 = arith.constant 0 : index
    %c2_14 = arith.constant 2 : index
    %c0_15 = arith.constant 0 : index
    %17 = vector.load %arg2[%c0_13, %c2_14, %c0_15] : memref<2x8x8xf32, #tpu.memory_space<vmem>>, vector<2x1x8xf32>
    %18 = vector.shape_cast %17 : vector<2x1x8xf32> to vector<2x8xf32>
    %cst_16 = arith.constant dense<0.000000e+00> : vector<2x8xf32>
    %19 = tpu.matmul %18, %4, %cst_16 {dimension_numbers = #tpu.dot_dimension_numbers<[1], [0], [0], [1], [0, 0, 1, 1], [], []>, precision = #tpu.contract_precision<fp32>} : vector<2x8xf32>, vector<8x8xf32>, vector<2x8xf32> -> vector<2x8xf32>
    %20 = vector.broadcast %6 : vector<1x8xf32> to vector<2x8xf32>
    %21 = arith.addf %19, %20 : vector<2x8xf32>
    %c0_17 = arith.constant 0 : index
    %c3_18 = arith.constant 3 : index
    %c0_19 = arith.constant 0 : index
    %22 = vector.load %arg2[%c0_17, %c3_18, %c0_19] : memref<2x8x8xf32, #tpu.memory_space<vmem>>, vector<2x1x8xf32>
    %23 = vector.shape_cast %22 : vector<2x1x8xf32> to vector<2x8xf32>
    %cst_20 = arith.constant dense<0.000000e+00> : vector<2x8xf32>
    %24 = tpu.matmul %23, %4, %cst_20 {dimension_numbers = #tpu.dot_dimension_numbers<[1], [0], [0], [1], [0, 0, 1, 1], [], []>, precision = #tpu.contract_precision<fp32>} : vector<2x8xf32>, vector<8x8xf32>, vector<2x8xf32> -> vector<2x8xf32>
    %25 = vector.broadcast %6 : vector<1x8xf32> to vector<2x8xf32>
    %26 = arith.addf %24, %25 : vector<2x8xf32>
    %c0_21 = arith.constant 0 : index
    %c4 = arith.constant 4 : index
    %c0_22 = arith.constant 0 : index
    %27 = vector.load %arg2[%c0_21, %c4, %c0_22] : memref<2x8x8xf32, #tpu.memory_space<vmem>>, vector<2x1x8xf32>
    %28 = vector.shape_cast %27 : vector<2x1x8xf32> to vector<2x8xf32>
    %cst_23 = arith.constant dense<0.000000e+00> : vector<2x8xf32>
    %29 = tpu.matmul %28, %4, %cst_23 {dimension_numbers = #tpu.dot_dimension_numbers<[1], [0], [0], [1], [0, 0, 1, 1], [], []>, precision = #tpu.contract_precision<fp32>} : vector<2x8xf32>, vector<8x8xf32>, vector<2x8xf32> -> vector<2x8xf32>
    %30 = vector.broadcast %6 : vector<1x8xf32> to vector<2x8xf32>
    %31 = arith.addf %29, %30 : vector<2x8xf32>
    %c0_24 = arith.constant 0 : index
    %c5 = arith.constant 5 : index
    %c0_25 = arith.constant 0 : index
    %32 = vector.load %arg2[%c0_24, %c5, %c0_25] : memref<2x8x8xf32, #tpu.memory_space<vmem>>, vector<2x1x8xf32>
    %33 = vector.shape_cast %32 : vector<2x1x8xf32> to vector<2x8xf32>
    %cst_26 = arith.constant dense<0.000000e+00> : vector<2x8xf32>
    %34 = tpu.matmul %33, %4, %cst_26 {dimension_numbers = #tpu.dot_dimension_numbers<[1], [0], [0], [1], [0, 0, 1, 1], [], []>, precision = #tpu.contract_precision<fp32>} : vector<2x8xf32>, vector<8x8xf32>, vector<2x8xf32> -> vector<2x8xf32>
    %35 = vector.broadcast %6 : vector<1x8xf32> to vector<2x8xf32>
    %36 = arith.addf %34, %35 : vector<2x8xf32>
    %c0_27 = arith.constant 0 : index
    %c6 = arith.constant 6 : index
    %c0_28 = arith.constant 0 : index
    %37 = vector.load %arg2[%c0_27, %c6, %c0_28] : memref<2x8x8xf32, #tpu.memory_space<vmem>>, vector<2x1x8xf32>
    %38 = vector.shape_cast %37 : vector<2x1x8xf32> to vector<2x8xf32>
    %cst_29 = arith.constant dense<0.000000e+00> : vector<2x8xf32>
    %39 = tpu.matmul %38, %4, %cst_29 {dimension_numbers = #tpu.dot_dimension_numbers<[1], [0], [0], [1], [0, 0, 1, 1], [], []>, precision = #tpu.contract_precision<fp32>} : vector<2x8xf32>, vector<8x8xf32>, vector<2x8xf32> -> vector<2x8xf32>
    %40 = vector.broadcast %6 : vector<1x8xf32> to vector<2x8xf32>
    %41 = arith.addf %39, %40 : vector<2x8xf32>
    %c0_30 = arith.constant 0 : index
    %c7 = arith.constant 7 : index
    %c0_31 = arith.constant 0 : index
    %42 = vector.load %arg2[%c0_30, %c7, %c0_31] : memref<2x8x8xf32, #tpu.memory_space<vmem>>, vector<2x1x8xf32>
    %43 = vector.shape_cast %42 : vector<2x1x8xf32> to vector<2x8xf32>
    %cst_32 = arith.constant dense<0.000000e+00> : vector<2x8xf32>
    %44 = tpu.matmul %43, %4, %cst_32 {dimension_numbers = #tpu.dot_dimension_numbers<[1], [0], [0], [1], [0, 0, 1, 1], [], []>, precision = #tpu.contract_precision<fp32>} : vector<2x8xf32>, vector<8x8xf32>, vector<2x8xf32> -> vector<2x8xf32>
    %45 = vector.broadcast %6 : vector<1x8xf32> to vector<2x8xf32>
    %46 = arith.addf %44, %45 : vector<2x8xf32>
    %cst_33 = arith.constant 0.000000e+00 : f32
    %47 = vector.broadcast %cst_33 : f32 to vector<2x8xf32>
    %cst_34 = arith.constant dense<0.000000e+00> : vector<2x8xf32>
    %48 = tpu.matmul %47, %5, %cst_34 {dimension_numbers = #tpu.dot_dimension_numbers<[1], [0], [0], [1], [0, 0, 1, 1], [], []>, precision = #tpu.contract_precision<fp32>} : vector<2x8xf32>, vector<8x8xf32>, vector<2x8xf32> -> vector<2x8xf32>
    %49 = arith.addf %11, %48 : vector<2x8xf32>
    %50 = math.tanh %49 : vector<2x8xf32>
    %cst_35 = arith.constant dense<0.000000e+00> : vector<2x8xf32>
    %51 = tpu.matmul %50, %5, %cst_35 {dimension_numbers = #tpu.dot_dimension_numbers<[1], [0], [0], [1], [0, 0, 1, 1], [], []>, precision = #tpu.contract_precision<fp32>} : vector<2x8xf32>, vector<8x8xf32>, vector<2x8xf32> -> vector<2x8xf32>
    %52 = arith.addf %16, %51 : vector<2x8xf32>
    %53 = math.tanh %52 : vector<2x8xf32>
    %cst_36 = arith.constant dense<0.000000e+00> : vector<2x8xf32>
    %54 = tpu.matmul %53, %5, %cst_36 {dimension_numbers = #tpu.dot_dimension_numbers<[1], [0], [0], [1], [0, 0, 1, 1], [], []>, precision = #tpu.contract_precision<fp32>} : vector<2x8xf32>, vector<8x8xf32>, vector<2x8xf32> -> vector<2x8xf32>
    %55 = arith.addf %21, %54 : vector<2x8xf32>
    %56 = math.tanh %55 : vector<2x8xf32>
    %cst_37 = arith.constant dense<0.000000e+00> : vector<2x8xf32>
    %57 = tpu.matmul %56, %5, %cst_37 {dimension_numbers = #tpu.dot_dimension_numbers<[1], [0], [0], [1], [0, 0, 1, 1], [], []>, precision = #tpu.contract_precision<fp32>} : vector<2x8xf32>, vector<8x8xf32>, vector<2x8xf32> -> vector<2x8xf32>
    %58 = arith.addf %26, %57 : vector<2x8xf32>
    %59 = math.tanh %58 : vector<2x8xf32>
    %cst_38 = arith.constant dense<0.000000e+00> : vector<2x8xf32>
    %60 = tpu.matmul %59, %5, %cst_38 {dimension_numbers = #tpu.dot_dimension_numbers<[1], [0], [0], [1], [0, 0, 1, 1], [], []>, precision = #tpu.contract_precision<fp32>} : vector<2x8xf32>, vector<8x8xf32>, vector<2x8xf32> -> vector<2x8xf32>
    %61 = arith.addf %31, %60 : vector<2x8xf32>
    %62 = math.tanh %61 : vector<2x8xf32>
    %cst_39 = arith.constant dense<0.000000e+00> : vector<2x8xf32>
    %63 = tpu.matmul %62, %5, %cst_39 {dimension_numbers = #tpu.dot_dimension_numbers<[1], [0], [0], [1], [0, 0, 1, 1], [], []>, precision = #tpu.contract_precision<fp32>} : vector<2x8xf32>, vector<8x8xf32>, vector<2x8xf32> -> vector<2x8xf32>
    %64 = arith.addf %36, %63 : vector<2x8xf32>
    %65 = math.tanh %64 : vector<2x8xf32>
    %cst_40 = arith.constant dense<0.000000e+00> : vector<2x8xf32>
    %66 = tpu.matmul %65, %5, %cst_40 {dimension_numbers = #tpu.dot_dimension_numbers<[1], [0], [0], [1], [0, 0, 1, 1], [], []>, precision = #tpu.contract_precision<fp32>} : vector<2x8xf32>, vector<8x8xf32>, vector<2x8xf32> -> vector<2x8xf32>
    %67 = arith.addf %41, %66 : vector<2x8xf32>
    %68 = math.tanh %67 : vector<2x8xf32>
    %cst_41 = arith.constant dense<0.000000e+00> : vector<2x8xf32>
    %69 = tpu.matmul %68, %5, %cst_41 {dimension_numbers = #tpu.dot_dimension_numbers<[1], [0], [0], [1], [0, 0, 1, 1], [], []>, precision = #tpu.contract_precision<fp32>} : vector<2x8xf32>, vector<8x8xf32>, vector<2x8xf32> -> vector<2x8xf32>
    %70 = arith.addf %46, %69 : vector<2x8xf32>
    %71 = math.tanh %70 : vector<2x8xf32>
    %c0_42 = arith.constant 0 : index
    %c0_43 = arith.constant 0 : index
    %c0_44 = arith.constant 0 : index
    %72 = vector.load %arg11[%c0_42, %c0_43, %c0_44] : memref<2x8x8xf32, #tpu.memory_space<vmem>>, vector<2x1x8xf32>
    %73 = vector.shape_cast %72 : vector<2x1x8xf32> to vector<2x8xf32>
    %74 = vector.shape_cast %50 : vector<2x8xf32> to vector<2x1x8xf32>
    tpu.vector_store %arg11[%c0_42, %c0_43, %c0_44], %74 {strides = array<i32>} : memref<2x8x8xf32, #tpu.memory_space<vmem>>, vector<2x1x8xf32>,
    %c0_45 = arith.constant 0 : index
    %c1_46 = arith.constant 1 : index
    %c0_47 = arith.constant 0 : index
    %75 = vector.load %arg11[%c0_45, %c1_46, %c0_47] : memref<2x8x8xf32, #tpu.memory_space<vmem>>, vector<2x1x8xf32>
    %76 = vector.shape_cast %75 : vector<2x1x8xf32> to vector<2x8xf32>
    %77 = vector.shape_cast %53 : vector<2x8xf32> to vector<2x1x8xf32>
    tpu.vector_store %arg11[%c0_45, %c1_46, %c0_47], %77 {strides = array<i32>} : memref<2x8x8xf32, #tpu.memory_space<vmem>>, vector<2x1x8xf32>,
    %c0_48 = arith.constant 0 : index
    %c2_49 = arith.constant 2 : index
    %c0_50 = arith.constant 0 : index
    %78 = vector.load %arg11[%c0_48, %c2_49, %c0_50] : memref<2x8x8xf32, #tpu.memory_space<vmem>>, vector<2x1x8xf32>
    %79 = vector.shape_cast %78 : vector<2x1x8xf32> to vector<2x8xf32>
    %80 = vector.shape_cast %56 : vector<2x8xf32> to vector<2x1x8xf32>
    tpu.vector_store %arg11[%c0_48, %c2_49, %c0_50], %80 {strides = array<i32>} : memref<2x8x8xf32, #tpu.memory_space<vmem>>, vector<2x1x8xf32>,
    %c0_51 = arith.constant 0 : index
    %c3_52 = arith.constant 3 : index
    %c0_53 = arith.constant 0 : index
    %81 = vector.load %arg11[%c0_51, %c3_52, %c0_53] : memref<2x8x8xf32, #tpu.memory_space<vmem>>, vector<2x1x8xf32>
    %82 = vector.shape_cast %81 : vector<2x1x8xf32> to vector<2x8xf32>
    %83 = vector.shape_cast %59 : vector<2x8xf32> to vector<2x1x8xf32>
    tpu.vector_store %arg11[%c0_51, %c3_52, %c0_53], %83 {strides = array<i32>} : memref<2x8x8xf32, #tpu.memory_space<vmem>>, vector<2x1x8xf32>,
    %c0_54 = arith.constant 0 : index
    %c4_55 = arith.constant 4 : index
    %c0_56 = arith.constant 0 : index
    %84 = vector.load %arg11[%c0_54, %c4_55, %c0_56] : memref<2x8x8xf32, #tpu.memory_space<vmem>>, vector<2x1x8xf32>
    %85 = vector.shape_cast %84 : vector<2x1x8xf32> to vector<2x8xf32>
    %86 = vector.shape_cast %62 : vector<2x8xf32> to vector<2x1x8xf32>
    tpu.vector_store %arg11[%c0_54, %c4_55, %c0_56], %86 {strides = array<i32>} : memref<2x8x8xf32, #tpu.memory_space<vmem>>, vector<2x1x8xf32>,
    %c0_57 = arith.constant 0 : index
    %c5_58 = arith.constant 5 : index
    %c0_59 = arith.constant 0 : index
    %87 = vector.load %arg11[%c0_57, %c5_58, %c0_59] : memref<2x8x8xf32, #tpu.memory_space<vmem>>, vector<2x1x8xf32>
    %88 = vector.shape_cast %87 : vector<2x1x8xf32> to vector<2x8xf32>
    %89 = vector.shape_cast %65 : vector<2x8xf32> to vector<2x1x8xf32>
    tpu.vector_store %arg11[%c0_57, %c5_58, %c0_59], %89 {strides = array<i32>} : memref<2x8x8xf32, #tpu.memory_space<vmem>>, vector<2x1x8xf32>,
    %c0_60 = arith.constant 0 : index
    %c6_61 = arith.constant 6 : index
    %c0_62 = arith.constant 0 : index
    %90 = vector.load %arg11[%c0_60, %c6_61, %c0_62] : memref<2x8x8xf32, #tpu.memory_space<vmem>>, vector<2x1x8xf32>
    %91 = vector.shape_cast %90 : vector<2x1x8xf32> to vector<2x8xf32>
    %92 = vector.shape_cast %68 : vector<2x8xf32> to vector<2x1x8xf32>
    tpu.vector_store %arg11[%c0_60, %c6_61, %c0_62], %92 {strides = array<i32>} : memref<2x8x8xf32, #tpu.memory_space<vmem>>, vector<2x1x8xf32>,
    %c0_63 = arith.constant 0 : index
    %c7_64 = arith.constant 7 : index
    %c0_65 = arith.constant 0 : index
    %93 = vector.load %arg11[%c0_63, %c7_64, %c0_65] : memref<2x8x8xf32, #tpu.memory_space<vmem>>, vector<2x1x8xf32>
    %94 = vector.shape_cast %93 : vector<2x1x8xf32> to vector<2x8xf32>
    %95 = vector.shape_cast %71 : vector<2x8xf32> to vector<2x1x8xf32>
    tpu.vector_store %arg11[%c0_63, %c7_64, %c0_65], %95 {strides = array<i32>} : memref<2x8x8xf32, #tpu.memory_space<vmem>>, vector<2x1x8xf32>,
    %c0_66 = arith.constant 0 : index
    %c0_67 = arith.constant 0 : index
    %c0_68 = arith.constant 0 : index
    %96 = vector.load %arg11[%c0_66, %c0_67, %c0_68] : memref<2x8x8xf32, #tpu.memory_space<vmem>>, vector<2x8x8xf32>
    %c0_69 = arith.constant 0 : index
    %c0_70 = arith.constant 0 : index
    %c0_71 = arith.constant 0 : index
    %97 = vector.load %arg3[%c0_69, %c0_70, %c0_71] : memref<2x8x8xf32, #tpu.memory_space<vmem>>, vector<2x8x8xf32>
    %98 = arith.mulf %97, %97 : vector<2x8x8xf32>
    %cst_72 = arith.constant 1.000000e+00 : f32
    %99 = vector.broadcast %cst_72 : f32 to vector<2x8x8xf32>
    %100 = arith.subf %99, %98 : vector<2x8x8xf32>
    %101 = vector.broadcast %0 : f32 to vector<2x8x8xf32>
    %102 = arith.mulf %101, %100 : vector<2x8x8xf32>
    %103 = vector.broadcast %2 : f32 to vector<2x8x8xf32>
    %104 = arith.addf %102, %103 : vector<2x8x8xf32>
    %105 = arith.mulf %96, %104 : vector<2x8x8xf32>
    %106 = arith.addf %96, %105 : vector<2x8x8xf32>
    %107 = vector.broadcast %1 : f32 to vector<2x8x8xf32>
    %108 = arith.mulf %107, %97 : vector<2x8x8xf32>
    %109 = arith.addf %106, %108 : vector<2x8x8xf32>
    %110 = vector.broadcast %3 : f32 to vector<2x8x8xf32>
    %111 = arith.mulf %110, %96 : vector<2x8x8xf32>
    %112 = arith.subf %97, %111 : vector<2x8x8xf32>
    %113 = arith.mulf %112, %112 : vector<2x8x8xf32>
    %cst_73 = arith.constant 1.000000e+00 : f32
    %114 = vector.broadcast %cst_73 : f32 to vector<2x8x8xf32>
    %115 = arith.subf %114, %113 : vector<2x8x8xf32>
    %116 = vector.broadcast %0 : f32 to vector<2x8x8xf32>
    %117 = arith.mulf %116, %115 : vector<2x8x8xf32>
    %118 = vector.broadcast %2 : f32 to vector<2x8x8xf32>
    %119 = arith.addf %117, %118 : vector<2x8x8xf32>
    %120 = arith.mulf %109, %119 : vector<2x8x8xf32>
    %121 = arith.addf %109, %120 : vector<2x8x8xf32>
    %122 = vector.broadcast %1 : f32 to vector<2x8x8xf32>
    %123 = arith.mulf %122, %112 : vector<2x8x8xf32>
    %124 = arith.addf %121, %123 : vector<2x8x8xf32>
    %125 = vector.broadcast %3 : f32 to vector<2x8x8xf32>
    %126 = arith.mulf %125, %109 : vector<2x8x8xf32>
    %127 = arith.subf %112, %126 : vector<2x8x8xf32>
    %128 = arith.mulf %127, %127 : vector<2x8x8xf32>
    %cst_74 = arith.constant 1.000000e+00 : f32
    %129 = vector.broadcast %cst_74 : f32 to vector<2x8x8xf32>
    %130 = arith.subf %129, %128 : vector<2x8x8xf32>
    %131 = vector.broadcast %0 : f32 to vector<2x8x8xf32>
    %132 = arith.mulf %131, %130 : vector<2x8x8xf32>
    %133 = vector.broadcast %2 : f32 to vector<2x8x8xf32>
    %134 = arith.addf %132, %133 : vector<2x8x8xf32>
    %135 = arith.mulf %124, %134 : vector<2x8x8xf32>
    %136 = arith.addf %124, %135 : vector<2x8x8xf32>
    %137 = vector.broadcast %1 : f32 to vector<2x8x8xf32>
    %138 = arith.mulf %137, %127 : vector<2x8x8xf32>
    %139 = arith.addf %136, %138 : vector<2x8x8xf32>
    %140 = vector.broadcast %3 : f32 to vector<2x8x8xf32>
    %141 = arith.mulf %140, %124 : vector<2x8x8xf32>
    %142 = arith.subf %127, %141 : vector<2x8x8xf32>
    %143 = arith.mulf %142, %142 : vector<2x8x8xf32>
    %cst_75 = arith.constant 1.000000e+00 : f32
    %144 = vector.broadcast %cst_75 : f32 to vector<2x8x8xf32>
    %145 = arith.subf %144, %143 : vector<2x8x8xf32>
    %146 = vector.broadcast %0 : f32 to vector<2x8x8xf32>
    %147 = arith.mulf %146, %145 : vector<2x8x8xf32>
    %148 = vector.broadcast %2 : f32 to vector<2x8x8xf32>
    %149 = arith.addf %147, %148 : vector<2x8x8xf32>
    %150 = arith.mulf %139, %149 : vector<2x8x8xf32>
    %151 = arith.addf %139, %150 : vector<2x8x8xf32>
    %152 = vector.broadcast %1 : f32 to vector<2x8x8xf32>
    %153 = arith.mulf %152, %142 : vector<2x8x8xf32>
    %154 = arith.addf %151, %153 : vector<2x8x8xf32>
    %155 = vector.broadcast %3 : f32 to vector<2x8x8xf32>
    %156 = arith.mulf %155, %139 : vector<2x8x8xf32>
    %157 = arith.subf %142, %156 : vector<2x8x8xf32>
    %c0_76 = arith.constant 0 : index
    %c0_77 = arith.constant 0 : index
    %c0_78 = arith.constant 0 : index
    %c0_79 = arith.constant 0 : index
    %158 = vector.load %arg10[%c0_76, %c0_77, %c0_78, %c0_79] : memref<2x2x8x8xf32, #tpu.memory_space<vmem>>, vector<1x2x8x8xf32>
    %159 = vector.shape_cast %158 : vector<1x2x8x8xf32> to vector<2x8x8xf32>
    %160 = vector.shape_cast %154 : vector<2x8x8xf32> to vector<1x2x8x8xf32>
    tpu.vector_store %arg10[%c0_76, %c0_77, %c0_78, %c0_79], %160 {strides = array<i32>} : memref<2x2x8x8xf32, #tpu.memory_space<vmem>>, vector<1x2x8x8xf32>,
    %c1_80 = arith.constant 1 : index
    %c0_81 = arith.constant 0 : index
    %c0_82 = arith.constant 0 : index
    %c0_83 = arith.constant 0 : index
    %161 = vector.load %arg10[%c1_80, %c0_81, %c0_82, %c0_83] : memref<2x2x8x8xf32, #tpu.memory_space<vmem>>, vector<1x2x8x8xf32>
    %162 = vector.shape_cast %161 : vector<1x2x8x8xf32> to vector<2x8x8xf32>
    %163 = vector.shape_cast %157 : vector<2x8x8xf32> to vector<1x2x8x8xf32>
    tpu.vector_store %arg10[%c1_80, %c0_81, %c0_82, %c0_83], %163 {strides = array<i32>} : memref<2x2x8x8xf32, #tpu.memory_space<vmem>>, vector<1x2x8x8xf32>,
    %c0_84 = arith.constant 0 : index
    %c0_85 = arith.constant 0 : index
    %164 = vector.load %arg7[%c0_84, %c0_85] : memref<4x8xf32, #tpu.memory_space<vmem>>, vector<4x8xf32>
    %165 = vector.shape_cast %164 : vector<4x8xf32> to vector<1x4x8xf32>
    %166 = vector.broadcast %165 : vector<1x4x8xf32> to vector<2x4x8xf32>
    "tpu.trace_start"() <{level = 10 : i32, message = "bps,bsd->bpd"}> : () -> ()
    %cst_86 = arith.constant dense<0.000000e+00> : vector<2x4x8xf32>
    %167 = tpu.matmul %166, %154, %cst_86 {dimension_numbers = #tpu.dot_dimension_numbers<[2], [1], [1], [2], [0, 0, 0, 1, 1, 2], [0], [0]>, precision = #tpu.contract_precision<fp32>} : vector<2x4x8xf32>, vector<2x8x8xf32>, vector<2x4x8xf32> -> vector<2x4x8xf32>
    "tpu.trace_stop"() : () -> ()
    %c0_87 = arith.constant 0 : index
    %c0_88 = arith.constant 0 : index
    %168 = vector.load %arg8[%c0_87, %c0_88] : memref<4x1xf32, #tpu.memory_space<vmem>>, vector<4x1xf32>
    %169 = vector.shape_cast %168 : vector<4x1xf32> to vector<1x4x1xf32>
    %170 = vector.broadcast %169 : vector<1x4x1xf32> to vector<2x4x8xf32>
    %171 = arith.addf %167, %170 : vector<2x4x8xf32>
    %c0_89 = arith.constant 0 : index
    %c0_90 = arith.constant 0 : index
    %c0_91 = arith.constant 0 : index
    %172 = vector.load %arg9[%c0_89, %c0_90, %c0_91] : memref<2x4x8xf32, #tpu.memory_space<vmem>>, vector<2x4x8xf32>
    tpu.vector_store %arg9[%c0_89, %c0_90, %c0_91], %171 {strides = array<i32>} : memref<2x4x8xf32, #tpu.memory_space<vmem>>, vector<2x4x8xf32>,
    return
  }
  func.func @transform_0(%arg0: i32) -> i32 {
    %c0_i32 = arith.constant 0 : i32
    %c0_i32_0 = arith.constant 0 : i32
    return %c0_i32 : i32
  }
  func.func @transform_1(%arg0: i32) -> (i32, i32, i32) {
    %c0_i32 = arith.constant 0 : i32
    %c0_i32_0 = arith.constant 0 : i32
    %c0_i32_1 = arith.constant 0 : i32
    return %arg0, %c0_i32, %c0_i32_0 : i32, i32, i32
  }
  func.func @transform_2(%arg0: i32) -> (i32, i32, i32) {
    %c0_i32 = arith.constant 0 : i32
    %c0_i32_0 = arith.constant 0 : i32
    %c0_i32_1 = arith.constant 0 : i32
    return %arg0, %c0_i32, %c0_i32_0 : i32, i32, i32
  }
  func.func @transform_3(%arg0: i32) -> (i32, i32) {
    %c0_i32 = arith.constant 0 : i32
    %c0_i32_0 = arith.constant 0 : i32
    %c0_i32_1 = arith.constant 0 : i32
    return %c0_i32, %c0_i32_0 : i32, i32
  }
  func.func @transform_4(%arg0: i32) -> (i32, i32) {
    %c0_i32 = arith.constant 0 : i32
    %c0_i32_0 = arith.constant 0 : i32
    %c0_i32_1 = arith.constant 0 : i32
    return %c0_i32, %c0_i32_0 : i32, i32
  }
  func.func @transform_5(%arg0: i32) -> (i32, i32) {
    %c0_i32 = arith.constant 0 : i32
    %c0_i32_0 = arith.constant 0 : i32
    %c0_i32_1 = arith.constant 0 : i32
    return %c0_i32, %c0_i32_0 : i32, i32
  }
  func.func @transform_6(%arg0: i32) -> (i32, i32) {
    %c0_i32 = arith.constant 0 : i32
    %c0_i32_0 = arith.constant 0 : i32
    %c0_i32_1 = arith.constant 0 : i32
    return %c0_i32, %c0_i32_0 : i32, i32
  }
  func.func @transform_7(%arg0: i32) -> (i32, i32) {
    %c0_i32 = arith.constant 0 : i32
    %c0_i32_0 = arith.constant 0 : i32
    %c0_i32_1 = arith.constant 0 : i32
    return %c0_i32, %c0_i32_0 : i32, i32
  }
  func.func @transform_8(%arg0: i32) -> (i32, i32, i32) {
    %c0_i32 = arith.constant 0 : i32
    %c0_i32_0 = arith.constant 0 : i32
    %c0_i32_1 = arith.constant 0 : i32
    return %arg0, %c0_i32, %c0_i32_0 : i32, i32, i32
  }
  func.func @transform_9(%arg0: i32) -> (i32, i32, i32, i32) {
    %c0_i32 = arith.constant 0 : i32
    %c0_i32_0 = arith.constant 0 : i32
    %c0_i32_1 = arith.constant 0 : i32
    %c0_i32_2 = arith.constant 0 : i32
    return %c0_i32, %arg0, %c0_i32_0, %c0_i32_1 : i32, i32, i32, i32
  }
}

</mosaic_0001>

<llo_original>
// kernel: rnnwithode_forward.1
$region0: #{rnnwithode_forward.1}
  #allocation0 [shape = 'u32[]', space=smem, size = 0x4, offset = 0x4, fixed_abs, tag = 'smem constant byte address 0x4 - core index']
  #allocation1 [shape = 'u32[144,128]{1,0:T(1,128)}', space=vmem, size = 0x12000, scoped, tag = 'internal scratch']
  #allocation2 [shape = 'f32[2,8,8]{2,1,0:T(8,128)}', space=vmem, size = 0x2000, scoped, tag = 'scratch operand']
  %s0 = inlined_call_operand.vmem [shape: f32[4], index: 0, kind: input, shape index: {}]
  %s1 = inlined_call_operand.vmem [shape: f32[2,8,8], index: 1, kind: input, shape index: {}]
  %s2 = inlined_call_operand.vmem [shape: f32[2,8,8], index: 2, kind: input, shape index: {}]
  %s3 = inlined_call_operand.vmem [shape: f32[8,8], index: 3, kind: input, shape index: {}]
  %s4 = inlined_call_operand.vmem [shape: f32[8,8], index: 4, kind: input, shape index: {}]
  %s5 = inlined_call_operand.vmem [shape: f32[1,8], index: 5, kind: input, shape index: {}]
  %s6 = inlined_call_operand.vmem [shape: f32[4,8], index: 6, kind: input, shape index: {}]
  %s7 = inlined_call_operand.vmem [shape: f32[4,1], index: 7, kind: input, shape index: {}]
  %s8 = inlined_call_operand.hbm [shape: f32[2,4,8], index: 8, kind: output, shape index: {0}]
  %s9 = inlined_call_operand.hbm [shape: f32[2,2,8,8], index: 9, kind: output, shape index: {1}]
  %10 = xla_tuple %s8, %s9
  %s11 = sld [smem:[#allocation0]]
  $region54: #{rnnwithode_forward.1} parent=0
    _
  %s13 = ssub.s32 1, %s11
  %s14 = scalar_select 0, %s13, %s11
  $region1: #{rnnwithode_forward.1} parent=0
    #allocation3 [shape = 'u8[512]{0}', space=smem, size = 0x200, scoped, tag = 'input window, operand 0, single buffered']
    #allocation4 [shape = 's32[1]{0}', space=sflag, size = 0x4, scoped, tag = 'scoped memory for rnnwithode_forward.1']
    #allocation5 [shape = 's32[1]{0}', space=sflag, size = 0x4, scoped, tag = 'scoped memory for rnnwithode_forward.1']
    #allocation6 [shape = 'u8[4096]{0}', space=vmem, size = 0x1000, scoped, tag = 'output window, operand 0, single buffered']
    #allocation7 [shape = 'u8[16384]{0}', space=vmem, size = 0x4000, scoped, tag = 'output window, operand 1, single buffered']
    #allocation8 [shape = 's32[1]{0}', space=sflag, size = 0x4, scoped, tag = 'scoped memory for rnnwithode_forward.1']
    %15 = vsyncpa [#allocation5], 0
    %16 = vsyncpa [#allocation4], 0
    %17 = vsyncpa [#allocation8], 0
    // Predicated region
    $region2: #{rnnwithode_forward.1} parent=1 // pred_check
      _
    $region3: #{rnnwithode_forward.1} parent=1 // pred_check_branch
      %19 = sbr.rel (0) target = $region5
    $region4: #{rnnwithode_forward.1} parent=1 // pred_region
      %s21 = ssub.s32 16, 16
      %22 = vsyncadd [#allocation5], %s21
      %s24 = sshll.u32 %s0, 4
      %s25 = int_to_ptr.vmem [resolvable:$true] %s24
      %27 = dma.vmem_to_smem %s25, 16, [#allocation3], [#allocation5]
    $region5: #{rnnwithode_forward.1} parent=1 // pred_fallthru
      _
    // Predicated region
    $region6: #{rnnwithode_forward.1} parent=1 // pred_check
      _
    $region7: #{rnnwithode_forward.1} parent=1 // pred_check_branch
      %29 = sbr.rel (0) target = $region9
    $region8: #{rnnwithode_forward.1} parent=1 // pred_region
      _
    $region9: #{rnnwithode_forward.1} parent=1 // pred_fallthru
      _
    // Predicated region
    $region10: #{rnnwithode_forward.1} parent=1 // pred_check
      _
    $region11: #{rnnwithode_forward.1} parent=1 // pred_check_branch
      %31 = sbr.rel (0) target = $region13
    $region12: #{rnnwithode_forward.1} parent=1 // pred_region
      _
    $region13: #{rnnwithode_forward.1} parent=1 // pred_fallthru
      _
    // Predicated region
    $region14: #{rnnwithode_forward.1} parent=1 // pred_check
      _
    $region15: #{rnnwithode_forward.1} parent=1 // pred_check_branch
      %33 = sbr.rel (0) target = $region17
    $region16: #{rnnwithode_forward.1} parent=1 // pred_region
      _
    $region17: #{rnnwithode_forward.1} parent=1 // pred_fallthru
      _
    // Predicated region
    $region18: #{rnnwithode_forward.1} parent=1 // pred_check
      _
    $region19: #{rnnwithode_forward.1} parent=1 // pred_check_branch
      %35 = sbr.rel (0) target = $region21
    $region20: #{rnnwithode_forward.1} parent=1 // pred_region
      _
    $region21: #{rnnwithode_forward.1} parent=1 // pred_fallthru
      _
    // Predicated region
    $region22: #{rnnwithode_forward.1} parent=1 // pred_check
      _
    $region23: #{rnnwithode_forward.1} parent=1 // pred_check_branch
      %37 = sbr.rel (0) target = $region25
    $region24: #{rnnwithode_forward.1} parent=1 // pred_region
      _
    $region25: #{rnnwithode_forward.1} parent=1 // pred_fallthru
      _
    // Predicated region
    $region26: #{rnnwithode_forward.1} parent=1 // pred_check
      _
    $region27: #{rnnwithode_forward.1} parent=1 // pred_check_branch
      %39 = sbr.rel (0) target = $region29
    $region28: #{rnnwithode_forward.1} parent=1 // pred_region
      _
    $region29: #{rnnwithode_forward.1} parent=1 // pred_fallthru
      _
    // Predicated region
    $region30: #{rnnwithode_forward.1} parent=1 // pred_check
      _
    $region31: #{rnnwithode_forward.1} parent=1 // pred_check_branch
      %41 = sbr.rel (0) target = $region33
    $region32: #{rnnwithode_forward.1} parent=1 // pred_region
      _
    $region33: #{rnnwithode_forward.1} parent=1 // pred_fallthru
      _
    // Predicated region
    $region34: #{rnnwithode_forward.1} parent=1 // pred_check
      _
    $region35: #{rnnwithode_forward.1} parent=1 // pred_check_branch
      %43 = sbr.rel (0) target = $region37
    $region36: #{rnnwithode_forward.1} parent=1 // pred_region
      %44 = dma.done [#allocation5], 16
    $region37: #{rnnwithode_forward.1} parent=1 // pred_fallthru
      _
    %45 = sfence
    %s46 = sld [smem:[#allocation3]]
    %s47 = sld [smem:[#allocation3 + $0x1]]
    %s48 = sld [smem:[#allocation3 + $0x2]]
    %s49 = sld [smem:[#allocation3 + $0x3]]
    %v50 = vld [vmem:[%s3] sm:$0xff]
    %v51 = vld [vmem:[%s4] sm:$0xff]
    %v52 = vld [vmem:[%s5] sm:$0x1]
    %v53 = vld [vmem:[%s1] sm:$0x1]
    %v54 = vld [vmem:[%s1 + $0x8] sm:$0x1]
    %v56 = vlaneseq
    %v57 = vshrl.u32 %v56, 7
    %v58 = vsub.s32 0, %v57
    %v59 = vrot.slane %v52, %v58
    %v63 = vrot.slane %v54, 7
    %vm64 = vcmask 1041409
    %v65 = vsel %vm64, %v63, %v53
    %vm66 = vcmask 64512
    %v67 = vsel %vm66, %v65, 0
    %69 = vmatprep.subr.mxu0 0.0
    %v70 = vand.u32 %v50, 4294901760
    %71 = vmatpush1.msra.mxu0 %v70
    %72 = vmatprep.subr.mxu0 0.0
    %73 = vmatpush1.msra.mxu0 0.0
    %74 = vmatprep.subr.mxu0 0.0
    %75 = vmatpush1.msra.mxu0 0.0
    %76 = vmatprep.subr.mxu0 0.0
    %77 = vmatpush1.msra.mxu0 0.0
    %78 = vmatprep.subr.mxu0 0.0
    %79 = vmatpush1.msra.mxu0 0.0
    %80 = vmatprep.subr.mxu0 0.0
    %81 = vmatpush1.msra.mxu0 0.0
    %82 = vmatprep.subr.mxu0 0.0
    %83 = vmatpush1.msra.mxu0 0.0
    %84 = vmatprep.subr.mxu0 0.0
    %85 = vmatpush1.msra.mxu0 0.0
    %86 = vmatprep.subr.mxu0 0.0
    %87 = vmatpush1.msra.mxu0 0.0
    %88 = vmatprep.subr.mxu0 0.0
    %89 = vmatpush1.msra.mxu0 0.0
    %90 = vmatprep.subr.mxu0 0.0
    %91 = vmatpush1.msra.mxu0 0.0
    %92 = vmatprep.subr.mxu0 0.0
    %93 = vmatpush1.msra.mxu0 0.0
    %94 = vmatprep.subr.mxu0 0.0
    %95 = vmatpush1.msra.mxu0 0.0
    %96 = vmatprep.subr.mxu0 0.0
    %97 = vmatpush1.msra.mxu0 0.0
    %98 = vmatprep.subr.mxu0 0.0
    %99 = vmatpush1.msra.mxu0 0.0
    %100 = vmatprep.subr.mxu0 0.0
    %101 = vmatpush1.msra.mxu0 0.0
    %102 = vmatprep.subr.mxu0 0.0
    %103 = vmatpush1.msra.mxu0 0.0
    %104 = vmatprep.subr.mxu0 0.0
    %105 = vmatpush1.msra.mxu0 0.0
    %106 = vmatprep.subr.mxu0 0.0
    %107 = vmatpush1.msra.mxu0 0.0
    %108 = vmatprep.subr.mxu0 0.0
    %109 = vmatpush1.msra.mxu0 0.0
    %110 = vmatprep.subr.mxu0 0.0
    %111 = vmatpush1.msra.mxu0 0.0
    %112 = vmatprep.subr.mxu0 0.0
    %113 = vmatpush1.msra.mxu0 0.0
    %114 = vmatprep.subr.mxu0 0.0
    %115 = vmatpush1.msra.mxu0 0.0
    %116 = vmatprep.subr.mxu0 0.0
    %117 = vmatpush1.msra.mxu0 0.0
    %118 = vmatprep.subr.mxu0 0.0
    %119 = vmatpush1.msra.mxu0 0.0
    %120 = vmatprep.subr.mxu0 0.0
    %121 = vmatpush1.msra.mxu0 0.0
    %122 = vmatprep.subr.mxu0 0.0
    %123 = vmatpush1.msra.mxu0 0.0
    %124 = vmatprep.subr.mxu0 0.0
    %125 = vmatpush1.msra.mxu0 0.0
    %126 = vmatprep.subr.mxu0 0.0
    %127 = vmatpush1.msra.mxu0 0.0
    %128 = vmatprep.subr.mxu0 0.0
    %129 = vmatpush1.msra.mxu0 0.0
    %130 = vmatprep.subr.mxu0 0.0
    %131 = vmatpush1.msra.mxu0 0.0
    %132 = vmatprep.subr.mxu0 0.0
    %133 = vmatpush1.msra.mxu0 0.0
    %134 = vmatprep.mubr.f32.mxu0 0.0
    %v135 = vand.u32 %v67, 4294901760
    %v136 = vsub.f32 %v67, %v135
    %v137 = vand.u32 %v136, 4294901760
    %v138 = vsub.f32 %v136, %v137
    %v139 = vand.u32 %v138, 4294901760
    %140 = vmatmul.mubr.f32.gmra.mrb[0].mxu0 %v139
    %v141 = vpop.f32.mrb[0].mxu0
    %v142 = vadd.f32 %v59, %v141
    %v143 = vpop.f32.mrb[0].mxu0
    %144 = vdwg.mxu0
    %145 = vmatprep.subr.mxu0 0.0
    %v146 = vand.u32 %v50, 4294901760
    %v147 = vsub.f32 %v50, %v146
    %v148 = vand.u32 %v147, 4294901760
    %v149 = vsub.f32 %v147, %v148
    %v150 = vand.u32 %v149, 4294901760
    %151 = vmatpush1.msra.mxu0 %v150
    %152 = vmatprep.subr.mxu0 0.0
    %153 = vmatpush1.msra.mxu0 0.0
    %154 = vmatprep.subr.mxu0 0.0
    %155 = vmatpush1.msra.mxu0 0.0
    %156 = vmatprep.subr.mxu0 0.0
    %157 = vmatpush1.msra.mxu0 0.0
    %158 = vmatprep.subr.mxu0 0.0
    %159 = vmatpush1.msra.mxu0 0.0
    %160 = vmatprep.subr.mxu0 0.0
    %161 = vmatpush1.msra.mxu0 0.0
    %162 = vmatprep.subr.mxu0 0.0
    %163 = vmatpush1.msra.mxu0 0.0
    %164 = vmatprep.subr.mxu0 0.0
    %165 = vmatpush1.msra.mxu0 0.0
    %166 = vmatprep.subr.mxu0 0.0
    %167 = vmatpush1.msra.mxu0 0.0
    %168 = vmatprep.subr.mxu0 0.0
    %169 = vmatpush1.msra.mxu0 0.0
    %170 = vmatprep.subr.mxu0 0.0
    %171 = vmatpush1.msra.mxu0 0.0
    %172 = vmatprep.subr.mxu0 0.0
    %173 = vmatpush1.msra.mxu0 0.0
    %174 = vmatprep.subr.mxu0 0.0
    %175 = vmatpush1.msra.mxu0 0.0
    %176 = vmatprep.subr.mxu0 0.0
    %177 = vmatpush1.msra.mxu0 0.0
    %178 = vmatprep.subr.mxu0 0.0
    %179 = vmatpush1.msra.mxu0 0.0
    %180 = vmatprep.subr.mxu0 0.0
    %181 = vmatpush1.msra.mxu0 0.0
    %182 = vmatprep.subr.mxu0 0.0
    %183 = vmatpush1.msra.mxu0 0.0
    %184 = vmatprep.subr.mxu0 0.0
    %185 = vmatpush1.msra.mxu0 0.0
    %186 = vmatprep.subr.mxu0 0.0
    %187 = vmatpush1.msra.mxu0 0.0
    %188 = vmatprep.subr.mxu0 0.0
    %189 = vmatpush1.msra.mxu0 0.0
    %190 = vmatprep.subr.mxu0 0.0
    %191 = vmatpush1.msra.mxu0 0.0
    %192 = vmatprep.subr.mxu0 0.0
    %193 = vmatpush1.msra.mxu0 0.0
    %194 = vmatprep.subr.mxu0 0.0
    %195 = vmatpush1.msra.mxu0 0.0
    %196 = vmatprep.subr.mxu0 0.0
    %197 = vmatpush1.msra.mxu0 0.0
    %198 = vmatprep.subr.mxu0 0.0
    %199 = vmatpush1.msra.mxu0 0.0
    %200 = vmatprep.subr.mxu0 0.0
    %201 = vmatpush1.msra.mxu0 0.0
    %202 = vmatprep.subr.mxu0 0.0
    %203 = vmatpush1.msra.mxu0 0.0
    %204 = vmatprep.subr.mxu0 0.0
    %205 = vmatpush1.msra.mxu0 0.0
    %206 = vmatprep.subr.mxu0 0.0
    %207 = vmatpush1.msra.mxu0 0.0
    %208 = vmatprep.subr.mxu0 0.0
    %209 = vmatpush1.msra.mxu0 0.0
    %210 = vmatprep.subr.mxu0 0.0
    %211 = vmatpush1.msra.mxu0 0.0
    %212 = vmatprep.subr.mxu0 0.0
    %213 = vmatpush1.msra.mxu0 0.0
    %214 = vmatprep.mubr.f32.mxu0 0.0
    %v215 = vand.u32 %v67, 4294901760
    %216 = vmatmul.mubr.f32.gmra.mrb[0].mxu0 %v215
    %v217 = vpop.f32.mrb[0].mxu0
    %v218 = vadd.f32 %v142, %v217
    %v219 = vpop.f32.mrb[0].mxu0
    %220 = vdwg.mxu0
    %221 = vmatprep.subr.mxu0 0.0
    %v222 = vand.u32 %v50, 4294901760
    %v223 = vsub.f32 %v50, %v222
    %224 = vmatpush1.msra.mxu0 %v223
    %225 = vmatprep.subr.mxu0 0.0
    %226 = vmatpush1.msra.mxu0 0.0
    %227 = vmatprep.subr.mxu0 0.0
    %228 = vmatpush1.msra.mxu0 0.0
    %229 = vmatprep.subr.mxu0 0.0
    %230 = vmatpush1.msra.mxu0 0.0
    %231 = vmatprep.subr.mxu0 0.0
    %232 = vmatpush1.msra.mxu0 0.0
    %233 = vmatprep.subr.mxu0 0.0
    %234 = vmatpush1.msra.mxu0 0.0
    %235 = vmatprep.subr.mxu0 0.0
    %236 = vmatpush1.msra.mxu0 0.0
    %237 = vmatprep.subr.mxu0 0.0
    %238 = vmatpush1.msra.mxu0 0.0
    %239 = vmatprep.subr.mxu0 0.0
    %240 = vmatpush1.msra.mxu0 0.0
    %241 = vmatprep.subr.mxu0 0.0
    %242 = vmatpush1.msra.mxu0 0.0
    %243 = vmatprep.subr.mxu0 0.0
    %244 = vmatpush1.msra.mxu0 0.0
    %245 = vmatprep.subr.mxu0 0.0
    %246 = vmatpush1.msra.mxu0 0.0
    %247 = vmatprep.subr.mxu0 0.0
    %248 = vmatpush1.msra.mxu0 0.0
    %249 = vmatprep.subr.mxu0 0.0
    %250 = vmatpush1.msra.mxu0 0.0
    %251 = vmatprep.subr.mxu0 0.0
    %252 = vmatpush1.msra.mxu0 0.0
    %253 = vmatprep.subr.mxu0 0.0
    %254 = vmatpush1.msra.mxu0 0.0
    %255 = vmatprep.subr.mxu0 0.0
    %256 = vmatpush1.msra.mxu0 0.0
    %257 = vmatprep.subr.mxu0 0.0
    %258 = vmatpush1.msra.mxu0 0.0
    %259 = vmatprep.subr.mxu0 0.0
    %260 = vmatpush1.msra.mxu0 0.0
    %261 = vmatprep.subr.mxu0 0.0
    %262 = vmatpush1.msra.mxu0 0.0
    %263 = vmatprep.subr.mxu0 0.0
    %264 = vmatpush1.msra.mxu0 0.0
    %265 = vmatprep.subr.mxu0 0.0
    %266 = vmatpush1.msra.mxu0 0.0
    %267 = vmatprep.subr.mxu0 0.0
    %268 = vmatpush1.msra.mxu0 0.0
    %269 = vmatprep.subr.mxu0 0.0
    %270 = vmatpush1.msra.mxu0 0.0
    %271 = vmatprep.subr.mxu0 0.0
    %272 = vmatpush1.msra.mxu0 0.0
    %273 = vmatprep.subr.mxu0 0.0
    %274 = vmatpush1.msra.mxu0 0.0
    %275 = vmatprep.subr.mxu0 0.0
    %276 = vmatpush1.msra.mxu0 0.0
    %277 = vmatprep.subr.mxu0 0.0
    %278 = vmatpush1.msra.mxu0 0.0
    %279 = vmatprep.subr.mxu0 0.0
    %280 = vmatpush1.msra.mxu0 0.0
    %281 = vmatprep.subr.mxu0 0.0
    %282 = vmatpush1.msra.mxu0 0.0
    %283 = vmatprep.subr.mxu0 0.0
    %284 = vmatpush1.msra.mxu0 0.0
    %285 = vmatprep.subr.mxu0 0.0
    %286 = vmatpush1.msra.mxu0 0.0
    %287 = vmatprep.mubr.f32.mxu0 0.0
    %v288 = vand.u32 %v67, 4294901760
    %v289 = vsub.f32 %v67, %v288
    %290 = vmatmul.mubr.f32.gmra.mrb[0].mxu0 %v289
    %v291 = vpop.f32.mrb[0].mxu0
    %v292 = vadd.f32 %v218, %v291
    %v293 = vpop.f32.mrb[0].mxu0
    %294 = vdwg.mxu0
    %295 = vmatprep.subr.mxu0 0.0
    %v296 = vand.u32 %v50, 4294901760
    %297 = vmatpush1.msra.mxu0 %v296
    %298 = vmatprep.subr.mxu0 0.0
    %299 = vmatpush1.msra.mxu0 0.0
    %300 = vmatprep.subr.mxu0 0.0
    %301 = vmatpush1.msra.mxu0 0.0
    %302 = vmatprep.subr.mxu0 0.0
    %303 = vmatpush1.msra.mxu0 0.0
    %304 = vmatprep.subr.mxu0 0.0
    %305 = vmatpush1.msra.mxu0 0.0
    %306 = vmatprep.subr.mxu0 0.0
    %307 = vmatpush1.msra.mxu0 0.0
    %308 = vmatprep.subr.mxu0 0.0
    %309 = vmatpush1.msra.mxu0 0.0
    %310 = vmatprep.subr.mxu0 0.0
    %311 = vmatpush1.msra.mxu0 0.0
    %312 = vmatprep.subr.mxu0 0.0
    %313 = vmatpush1.msra.mxu0 0.0
    %314 = vmatprep.subr.mxu0 0.0
    %315 = vmatpush1.msra.mxu0 0.0
    %316 = vmatprep.subr.mxu0 0.0
    %317 = vmatpush1.msra.mxu0 0.0
    %318 = vmatprep.subr.mxu0 0.0
    %319 = vmatpush1.msra.mxu0 0.0
    %320 = vmatprep.subr.mxu0 0.0
    %321 = vmatpush1.msra.mxu0 0.0
    %322 = vmatprep.subr.mxu0 0.0
    %323 = vmatpush1.msra.mxu0 0.0
    %324 = vmatprep.subr.mxu0 0.0
    %325 = vmatpush1.msra.mxu0 0.0
    %326 = vmatprep.subr.mxu0 0.0
    %327 = vmatpush1.msra.mxu0 0.0
    %328 = vmatprep.subr.mxu0 0.0
    %329 = vmatpush1.msra.mxu0 0.0
    %330 = vmatprep.subr.mxu0 0.0
    %331 = vmatpush1.msra.mxu0 0.0
    %332 = vmatprep.subr.mxu0 0.0
    %333 = vmatpush1.msra.mxu0 0.0
    %334 = vmatprep.subr.mxu0 0.0
    %335 = vmatpush1.msra.mxu0 0.0
    %336 = vmatprep.subr.mxu0 0.0
    %337 = vmatpush1.msra.mxu0 0.0
    %338 = vmatprep.subr.mxu0 0.0
    %339 = vmatpush1.msra.mxu0 0.0
    %340 = vmatprep.subr.mxu0 0.0
    %341 = vmatpush1.msra.mxu0 0.0
    %342 = vmatprep.subr.mxu0 0.0
    %343 = vmatpush1.msra.mxu0 0.0
    %344 = vmatprep.subr.mxu0 0.0
    %345 = vmatpush1.msra.mxu0 0.0
    %346 = vmatprep.subr.mxu0 0.0
    %347 = vmatpush1.msra.mxu0 0.0
    %348 = vmatprep.subr.mxu0 0.0
    %349 = vmatpush1.msra.mxu0 0.0
    %350 = vmatprep.subr.mxu0 0.0
    %351 = vmatpush1.msra.mxu0 0.0
    %352 = vmatprep.subr.mxu0 0.0
    %353 = vmatpush1.msra.mxu0 0.0
    %354 = vmatprep.subr.mxu0 0.0
    %355 = vmatpush1.msra.mxu0 0.0
    %356 = vmatprep.subr.mxu0 0.0
    %357 = vmatpush1.msra.mxu0 0.0
    %358 = vmatprep.subr.mxu0 0.0
    %359 = vmatpush1.msra.mxu0 0.0
    %360 = vmatprep.mubr.f32.mxu0 0.0
    %v361 = vand.u32 %v67, 4294901760
    %v362 = vsub.f32 %v67, %v361
    %v363 = vand.u32 %v362, 4294901760
    %364 = vmatmul.mubr.f32.gmra.mrb[0].mxu0 %v363
    %v365 = vpop.f32.mrb[0].mxu0
    %v366 = vadd.f32 %v292, %v365
    %v367 = vpop.f32.mrb[0].mxu0
    %368 = vdwg.mxu0
    %369 = vmatprep.subr.mxu0 0.0
    %v370 = vand.u32 %v50, 4294901760
    %v371 = vsub.f32 %v50, %v370
    %v372 = vand.u32 %v371, 4294901760
    %373 = vmatpush1.msra.mxu0 %v372
    %374 = vmatprep.subr.mxu0 0.0
    %375 = vmatpush1.msra.mxu0 0.0
    %376 = vmatprep.subr.mxu0 0.0
    %377 = vmatpush1.msra.mxu0 0.0
    %378 = vmatprep.subr.mxu0 0.0
    %379 = vmatpush1.msra.mxu0 0.0
    %380 = vmatprep.subr.mxu0 0.0
    %381 = vmatpush1.msra.mxu0 0.0
    %382 = vmatprep.subr.mxu0 0.0
    %383 = vmatpush1.msra.mxu0 0.0
    %384 = vmatprep.subr.mxu0 0.0
    %385 = vmatpush1.msra.mxu0 0.0
    %386 = vmatprep.subr.mxu0 0.0
    %387 = vmatpush1.msra.mxu0 0.0
    %388 = vmatprep.subr.mxu0 0.0
    %389 = vmatpush1.msra.mxu0 0.0
    %390 = vmatprep.subr.mxu0 0.0
    %391 = vmatpush1.msra.mxu0 0.0
    %392 = vmatprep.subr.mxu0 0.0
    %393 = vmatpush1.msra.mxu0 0.0
    %394 = vmatprep.subr.mxu0 0.0
    %395 = vmatpush1.msra.mxu0 0.0
    %396 = vmatprep.subr.mxu0 0.0
    %397 = vmatpush1.msra.mxu0 0.0
    %398 = vmatprep.subr.mxu0 0.0
    %399 = vmatpush1.msra.mxu0 0.0
    %400 = vmatprep.subr.mxu0 0.0
    %401 = vmatpush1.msra.mxu0 0.0
    %402 = vmatprep.subr.mxu0 0.0
    %403 = vmatpush1.msra.mxu0 0.0
    %404 = vmatprep.subr.mxu0 0.0
    %405 = vmatpush1.msra.mxu0 0.0
    %406 = vmatprep.subr.mxu0 0.0
    %407 = vmatpush1.msra.mxu0 0.0
    %408 = vmatprep.subr.mxu0 0.0
    %409 = vmatpush1.msra.mxu0 0.0
    %410 = vmatprep.subr.mxu0 0.0
    %411 = vmatpush1.msra.mxu0 0.0
    %412 = vmatprep.subr.mxu0 0.0
    %413 = vmatpush1.msra.mxu0 0.0
    %414 = vmatprep.subr.mxu0 0.0
    %415 = vmatpush1.msra.mxu0 0.0
    %416 = vmatprep.subr.mxu0 0.0
    %417 = vmatpush1.msra.mxu0 0.0
    %418 = vmatprep.subr.mxu0 0.0
    %419 = vmatpush1.msra.mxu0 0.0
    %420 = vmatprep.subr.mxu0 0.0
    %421 = vmatpush1.msra.mxu0 0.0
    %422 = vmatprep.subr.mxu0 0.0
    %423 = vmatpush1.msra.mxu0 0.0
    %424 = vmatprep.subr.mxu0 0.0
    %425 = vmatpush1.msra.mxu0 0.0
    %426 = vmatprep.subr.mxu0 0.0
    %427 = vmatpush1.msra.mxu0 0.0
    %428 = vmatprep.subr.mxu0 0.0
    %429 = vmatpush1.msra.mxu0 0.0
    %430 = vmatprep.subr.mxu0 0.0
    %431 = vmatpush1.msra.mxu0 0.0
    %432 = vmatprep.subr.mxu0 0.0
    %433 = vmatpush1.msra.mxu0 0.0
    %434 = vmatprep.subr.mxu0 0.0
    %435 = vmatpush1.msra.mxu0 0.0
    %436 = vmatprep.mubr.f32.mxu0 0.0
    %v437 = vand.u32 %v67, 4294901760
    %438 = vmatmul.mubr.f32.gmra.mrb[0].mxu0 %v437
    %v439 = vpop.f32.mrb[0].mxu0
    %v440 = vadd.f32 %v366, %v439
    %v441 = vpop.f32.mrb[0].mxu0
    %442 = vdwg.mxu0
    %443 = vmatprep.subr.mxu0 0.0
    %v444 = vand.u32 %v50, 4294901760
    %445 = vmatpush1.msra.mxu0 %v444
    %446 = vmatprep.subr.mxu0 0.0
    %447 = vmatpush1.msra.mxu0 0.0
    %448 = vmatprep.subr.mxu0 0.0
    %449 = vmatpush1.msra.mxu0 0.0
    %450 = vmatprep.subr.mxu0 0.0
    %451 = vmatpush1.msra.mxu0 0.0
    %452 = vmatprep.subr.mxu0 0.0
    %453 = vmatpush1.msra.mxu0 0.0
    %454 = vmatprep.subr.mxu0 0.0
    %455 = vmatpush1.msra.mxu0 0.0
    %456 = vmatprep.subr.mxu0 0.0
    %457 = vmatpush1.msra.mxu0 0.0
    %458 = vmatprep.subr.mxu0 0.0
    %459 = vmatpush1.msra.mxu0 0.0
    %460 = vmatprep.subr.mxu0 0.0
    %461 = vmatpush1.msra.mxu0 0.0
    %462 = vmatprep.subr.mxu0 0.0
    %463 = vmatpush1.msra.mxu0 0.0
    %464 = vmatprep.subr.mxu0 0.0
    %465 = vmatpush1.msra.mxu0 0.0
    %466 = vmatprep.subr.mxu0 0.0
    %467 = vmatpush1.msra.mxu0 0.0
    %468 = vmatprep.subr.mxu0 0.0
    %469 = vmatpush1.msra.mxu0 0.0
    %470 = vmatprep.subr.mxu0 0.0
    %471 = vmatpush1.msra.mxu0 0.0
    %472 = vmatprep.subr.mxu0 0.0
    %473 = vmatpush1.msra.mxu0 0.0
    %474 = vmatprep.subr.mxu0 0.0
    %475 = vmatpush1.msra.mxu0 0.0
    %476 = vmatprep.subr.mxu0 0.0
    %477 = vmatpush1.msra.mxu0 0.0
    %478 = vmatprep.subr.mxu0 0.0
    %479 = vmatpush1.msra.mxu0 0.0
    %480 = vmatprep.subr.mxu0 0.0
    %481 = vmatpush1.msra.mxu0 0.0
    %482 = vmatprep.subr.mxu0 0.0
    %483 = vmatpush1.msra.mxu0 0.0
    %484 = vmatprep.subr.mxu0 0.0
    %485 = vmatpush1.msra.mxu0 0.0
    %486 = vmatprep.subr.mxu0 0.0
    %487 = vmatpush1.msra.mxu0 0.0
    %488 = vmatprep.subr.mxu0 0.0
    %489 = vmatpush1.msra.mxu0 0.0
    %490 = vmatprep.subr.mxu0 0.0
    %491 = vmatpush1.msra.mxu0 0.0
    %492 = vmatprep.subr.mxu0 0.0
    %493 = vmatpush1.msra.mxu0 0.0
    %494 = vmatprep.subr.mxu0 0.0
    %495 = vmatpush1.msra.mxu0 0.0
    %496 = vmatprep.subr.mxu0 0.0
    %497 = vmatpush1.msra.mxu0 0.0
    %498 = vmatprep.subr.mxu0 0.0
    %499 = vmatpush1.msra.mxu0 0.0
    %500 = vmatprep.subr.mxu0 0.0
    %501 = vmatpush1.msra.mxu0 0.0
    %502 = vmatprep.subr.mxu0 0.0
    %503 = vmatpush1.msra.mxu0 0.0
    %504 = vmatprep.subr.mxu0 0.0
    %505 = vmatpush1.msra.mxu0 0.0
    %506 = vmatprep.subr.mxu0 0.0
    %507 = vmatpush1.msra.mxu0 0.0
    %508 = vmatprep.mubr.f32.mxu0 0.0
    %v509 = vand.u32 %v67, 4294901760
    %510 = vmatmul.mubr.f32.gmra.mrb[0].mxu0 %v509
    %v511 = vpop.f32.mrb[0].mxu0
    %v512 = vadd.f32 %v440, %v511
    %v513 = vpop.f32.mrb[0].mxu0
    %514 = vdwg.mxu0
    %v515 = vld [vmem:[%s1 + $0x1] sm:$0x1]
    %v516 = vld [vmem:[%s1 + $0x9] sm:$0x1]
    %v519 = vrot.slane %v516, 7
    %v520 = vsel %vm64, %v519, %v515
    %v521 = vsel %vm66, %v520, 0
    %523 = vmatprep.subr.mxu0 0.0
    %v524 = vand.u32 %v50, 4294901760
    %525 = vmatpush1.msra.mxu0 %v524
    %526 = vmatprep.subr.mxu0 0.0
    %527 = vmatpush1.msra.mxu0 0.0
    %528 = vmatprep.subr.mxu0 0.0
    %529 = vmatpush1.msra.mxu0 0.0
    %530 = vmatprep.subr.mxu0 0.0
    %531 = vmatpush1.msra.mxu0 0.0
    %532 = vmatprep.subr.mxu0 0.0
    %533 = vmatpush1.msra.mxu0 0.0
    %534 = vmatprep.subr.mxu0 0.0
    %535 = vmatpush1.msra.mxu0 0.0
    %536 = vmatprep.subr.mxu0 0.0
    %537 = vmatpush1.msra.mxu0 0.0
    %538 = vmatprep.subr.mxu0 0.0
    %539 = vmatpush1.msra.mxu0 0.0
    %540 = vmatprep.subr.mxu0 0.0
    %541 = vmatpush1.msra.mxu0 0.0
    %542 = vmatprep.subr.mxu0 0.0
    %543 = vmatpush1.msra.mxu0 0.0
    %544 = vmatprep.subr.mxu0 0.0
    %545 = vmatpush1.msra.mxu0 0.0
    %546 = vmatprep.subr.mxu0 0.0
    %547 = vmatpush1.msra.mxu0 0.0
    %548 = vmatprep.subr.mxu0 0.0
    %549 = vmatpush1.msra.mxu0 0.0
    %550 = vmatprep.subr.mxu0 0.0
    %551 = vmatpush1.msra.mxu0 0.0
    %552 = vmatprep.subr.mxu0 0.0
    %553 = vmatpush1.msra.mxu0 0.0
    %554 = vmatprep.subr.mxu0 0.0
    %555 = vmatpush1.msra.mxu0 0.0
    %556 = vmatprep.subr.mxu0 0.0
    %557 = vmatpush1.msra.mxu0 0.0
    %558 = vmatprep.subr.mxu0 0.0
    %559 = vmatpush1.msra.mxu0 0.0
    %560 = vmatprep.subr.mxu0 0.0
    %561 = vmatpush1.msra.mxu0 0.0
    %562 = vmatprep.subr.mxu0 0.0
    %563 = vmatpush1.msra.mxu0 0.0
    %564 = vmatprep.subr.mxu0 0.0
    %565 = vmatpush1.msra.mxu0 0.0
    %566 = vmatprep.subr.mxu0 0.0
    %567 = vmatpush1.msra.mxu0 0.0
    %568 = vmatprep.subr.mxu0 0.0
    %569 = vmatpush1.msra.mxu0 0.0
    %570 = vmatprep.subr.mxu0 0.0
    %571 = vmatpush1.msra.mxu0 0.0
    %572 = vmatprep.subr.mxu0 0.0
    %573 = vmatpush1.msra.mxu0 0.0
    %574 = vmatprep.subr.mxu0 0.0
    %575 = vmatpush1.msra.mxu0 0.0
    %576 = vmatprep.subr.mxu0 0.0
    %577 = vmatpush1.msra.mxu0 0.0
    %578 = vmatprep.subr.mxu0 0.0
    %579 = vmatpush1.msra.mxu0 0.0
    %580 = vmatprep.subr.mxu0 0.0
    %581 = vmatpush1.msra.mxu0 0.0
    %582 = vmatprep.subr.mxu0 0.0
    %583 = vmatpush1.msra.mxu0 0.0
    %584 = vmatprep.subr.mxu0 0.0
    %585 = vmatpush1.msra.mxu0 0.0
    %586 = vmatprep.subr.mxu0 0.0
    %587 = vmatpush1.msra.mxu0 0.0
    %588 = vmatprep.mubr.f32.mxu0 0.0
    %v589 = vand.u32 %v521, 4294901760
    %v590 = vsub.f32 %v521, %v589
    %v591 = vand.u32 %v590, 4294901760
    %v592 = vsub.f32 %v590, %v591
    %v593 = vand.u32 %v592, 4294901760
    %594 = vmatmul.mubr.f32.gmra.mrb[0].mxu0 %v593
    %v595 = vpop.f32.mrb[0].mxu0
    %v596 = vadd.f32 %v59, %v595
    %v597 = vpop.f32.mrb[0].mxu0
    %598 = vdwg.mxu0
    %599 = vmatprep.subr.mxu0 0.0
    %v600 = vand.u32 %v50, 4294901760
    %v601 = vsub.f32 %v50, %v600
    %v602 = vand.u32 %v601, 4294901760
    %v603 = vsub.f32 %v601, %v602
    %v604 = vand.u32 %v603, 4294901760
    %605 = vmatpush1.msra.mxu0 %v604
    %606 = vmatprep.subr.mxu0 0.0
    %607 = vmatpush1.msra.mxu0 0.0
    %608 = vmatprep.subr.mxu0 0.0
    %609 = vmatpush1.msra.mxu0 0.0
    %610 = vmatprep.subr.mxu0 0.0
    %611 = vmatpush1.msra.mxu0 0.0
    %612 = vmatprep.subr.mxu0 0.0
    %613 = vmatpush1.msra.mxu0 0.0
    %614 = vmatprep.subr.mxu0 0.0
    %615 = vmatpush1.msra.mxu0 0.0
    %616 = vmatprep.subr.mxu0 0.0
    %617 = vmatpush1.msra.mxu0 0.0
    %618 = vmatprep.subr.mxu0 0.0
    %619 = vmatpush1.msra.mxu0 0.0
    %620 = vmatprep.subr.mxu0 0.0
    %621 = vmatpush1.msra.mxu0 0.0
    %622 = vmatprep.subr.mxu0 0.0
    %623 = vmatpush1.msra.mxu0 0.0
    %624 = vmatprep.subr.mxu0 0.0
    %625 = vmatpush1.msra.mxu0 0.0
    %626 = vmatprep.subr.mxu0 0.0
    %627 = vmatpush1.msra.mxu0 0.0
    %628 = vmatprep.subr.mxu0 0.0
    %629 = vmatpush1.msra.mxu0 0.0
    %630 = vmatprep.subr.mxu0 0.0
    %631 = vmatpush1.msra.mxu0 0.0
    %632 = vmatprep.subr.mxu0 0.0
    %633 = vmatpush1.msra.mxu0 0.0
    %634 = vmatprep.subr.mxu0 0.0
    %635 = vmatpush1.msra.mxu0 0.0
    %636 = vmatprep.subr.mxu0 0.0
    %637 = vmatpush1.msra.mxu0 0.0
    %638 = vmatprep.subr.mxu0 0.0
    %639 = vmatpush1.msra.mxu0 0.0
    %640 = vmatprep.subr.mxu0 0.0
    %641 = vmatpush1.msra.mxu0 0.0
    %642 = vmatprep.subr.mxu0 0.0
    %643 = vmatpush1.msra.mxu0 0.0
    %644 = vmatprep.subr.mxu0 0.0
    %645 = vmatpush1.msra.mxu0 0.0
    %646 = vmatprep.subr.mxu0 0.0
    %647 = vmatpush1.msra.mxu0 0.0
    %648 = vmatprep.subr.mxu0 0.0
    %649 = vmatpush1.msra.mxu0 0.0
    %650 = vmatprep.subr.mxu0 0.0
    %651 = vmatpush1.msra.mxu0 0.0
    %652 = vmatprep.subr.mxu0 0.0
    %653 = vmatpush1.msra.mxu0 0.0
    %654 = vmatprep.subr.mxu0 0.0
    %655 = vmatpush1.msra.mxu0 0.0
    %656 = vmatprep.subr.mxu0 0.0
    %657 = vmatpush1.msra.mxu0 0.0
    %658 = vmatprep.subr.mxu0 0.0
    %659 = vmatpush1.msra.mxu0 0.0
    %660 = vmatprep.subr.mxu0 0.0
    %661 = vmatpush1.msra.mxu0 0.0
    %662 = vmatprep.subr.mxu0 0.0
    %663 = vmatpush1.msra.mxu0 0.0
    %664 = vmatprep.subr.mxu0 0.0
    %665 = vmatpush1.msra.mxu0 0.0
    %666 = vmatprep.subr.mxu0 0.0
    %667 = vmatpush1.msra.mxu0 0.0
    %668 = vmatprep.mubr.f32.mxu0 0.0
    %v669 = vand.u32 %v521, 4294901760
    %670 = vmatmul.mubr.f32.gmra.mrb[0].mxu0 %v669
    %v671 = vpop.f32.mrb[0].mxu0
    %v672 = vadd.f32 %v596, %v671
    %v673 = vpop.f32.mrb[0].mxu0
    %674 = vdwg.mxu0
    %675 = vmatprep.subr.mxu0 0.0
    %v676 = vand.u32 %v50, 4294901760
    %v677 = vsub.f32 %v50, %v676
    %678 = vmatpush1.msra.mxu0 %v677
    %679 = vmatprep.subr.mxu0 0.0
    %680 = vmatpush1.msra.mxu0 0.0
    %681 = vmatprep.subr.mxu0 0.0
    %682 = vmatpush1.msra.mxu0 0.0
    %683 = vmatprep.subr.mxu0 0.0
    %684 = vmatpush1.msra.mxu0 0.0
    %685 = vmatprep.subr.mxu0 0.0
    %686 = vmatpush1.msra.mxu0 0.0
    %687 = vmatprep.subr.mxu0 0.0
    %688 = vmatpush1.msra.mxu0 0.0
    %689 = vmatprep.subr.mxu0 0.0
    %690 = vmatpush1.msra.mxu0 0.0
    %691 = vmatprep.subr.mxu0 0.0
    %692 = vmatpush1.msra.mxu0 0.0
    %693 = vmatprep.subr.mxu0 0.0
    %694 = vmatpush1.msra.mxu0 0.0
    %695 = vmatprep.subr.mxu0 0.0
    %696 = vmatpush1.msra.mxu0 0.0
    %697 = vmatprep.subr.mxu0 0.0
    %698 = vmatpush1.msra.mxu0 0.0
    %699 = vmatprep.subr.mxu0 0.0
    %700 = vmatpush1.msra.mxu0 0.0
    %701 = vmatprep.subr.mxu0 0.0
    %702 = vmatpush1.msra.mxu0 0.0
    %703 = vmatprep.subr.mxu0 0.0
    %704 = vmatpush1.msra.mxu0 0.0
    %705 = vmatprep.subr.mxu0 0.0
    %706 = vmatpush1.msra.mxu0 0.0
    %707 = vmatprep.subr.mxu0 0.0
    %708 = vmatpush1.msra.mxu0 0.0
    %709 = vmatprep.subr.mxu0 0.0
    %710 = vmatpush1.msra.mxu0 0.0
    %711 = vmatprep.subr.mxu0 0.0
    %712 = vmatpush1.msra.mxu0 0.0
    %713 = vmatprep.subr.mxu0 0.0
    %714 = vmatpush1.msra.mxu0 0.0
    %715 = vmatprep.subr.mxu0 0.0
    %716 = vmatpush1.msra.mxu0 0.0
    %717 = vmatprep.subr.mxu0 0.0
    %718 = vmatpush1.msra.mxu0 0.0
    %719 = vmatprep.subr.mxu0 0.0
    %720 = vmatpush1.msra.mxu0 0.0
    %721 = vmatprep.subr.mxu0 0.0
    %722 = vmatpush1.msra.mxu0 0.0
    %723 = vmatprep.subr.mxu0 0.0
    %724 = vmatpush1.msra.mxu0 0.0
    %725 = vmatprep.subr.mxu0 0.0
    %726 = vmatpush1.msra.mxu0 0.0
    %727 = vmatprep.subr.mxu0 0.0
    %728 = vmatpush1.msra.mxu0 0.0
    %729 = vmatprep.subr.mxu0 0.0
    %730 = vmatpush1.msra.mxu0 0.0
    %731 = vmatprep.subr.mxu0 0.0
    %732 = vmatpush1.msra.mxu0 0.0
    %733 = vmatprep.subr.mxu0 0.0
    %734 = vmatpush1.msra.mxu0 0.0
    %735 = vmatprep.subr.mxu0 0.0
    %736 = vmatpush1.msra.mxu0 0.0
    %737 = vmatprep.subr.mxu0 0.0
    %738 = vmatpush1.msra.mxu0 0.0
    %739 = vmatprep.subr.mxu0 0.0
    %740 = vmatpush1.msra.mxu0 0.0
    %741 = vmatprep.mubr.f32.mxu0 0.0
    %v742 = vand.u32 %v521, 4294901760
    %v743 = vsub.f32 %v521, %v742
    %744 = vmatmul.mubr.f32.gmra.mrb[0].mxu0 %v743
    %v745 = vpop.f32.mrb[0].mxu0
    %v746 = vadd.f32 %v672, %v745
    %v747 = vpop.f32.mrb[0].mxu0
    %748 = vdwg.mxu0
    %749 = vmatprep.subr.mxu0 0.0
    %v750 = vand.u32 %v50, 4294901760
    %751 = vmatpush1.msra.mxu0 %v750
    %752 = vmatprep.subr.mxu0 0.0
    %753 = vmatpush1.msra.mxu0 0.0
    %754 = vmatprep.subr.mxu0 0.0
    %755 = vmatpush1.msra.mxu0 0.0
    %756 = vmatprep.subr.mxu0 0.0
    %757 = vmatpush1.msra.mxu0 0.0
    %758 = vmatprep.subr.mxu0 0.0
    %759 = vmatpush1.msra.mxu0 0.0
    %760 = vmatprep.subr.mxu0 0.0
    %761 = vmatpush1.msra.mxu0 0.0
    %762 = vmatprep.subr.mxu0 0.0
    %763 = vmatpush1.msra.mxu0 0.0
    %764 = vmatprep.subr.mxu0 0.0
    %765 = vmatpush1.msra.mxu0 0.0
    %766 = vmatprep.subr.mxu0 0.0
    %767 = vmatpush1.msra.mxu0 0.0
    %768 = vmatprep.subr.mxu0 0.0
    %769 = vmatpush1.msra.mxu0 0.0
    %770 = vmatprep.subr.mxu0 0.0
    %771 = vmatpush1.msra.mxu0 0.0
    %772 = vmatprep.subr.mxu0 0.0
    %773 = vmatpush1.msra.mxu0 0.0
    %774 = vmatprep.subr.mxu0 0.0
    %775 = vmatpush1.msra.mxu0 0.0
    %776 = vmatprep.subr.mxu0 0.0
    %777 = vmatpush1.msra.mxu0 0.0
    %778 = vmatprep.subr.mxu0 0.0
    %779 = vmatpush1.msra.mxu0 0.0
    %780 = vmatprep.subr.mxu0 0.0
    %781 = vmatpush1.msra.mxu0 0.0
    %782 = vmatprep.subr.mxu0 0.0
    %783 = vmatpush1.msra.mxu0 0.0
    %784 = vmatprep.subr.mxu0 0.0
    %785 = vmatpush1.msra.mxu0 0.0
    %786 = vmatprep.subr.mxu0 0.0
    %787 = vmatpush1.msra.mxu0 0.0
    %788 = vmatprep.subr.mxu0 0.0
    %789 = vmatpush1.msra.mxu0 0.0
    %790 = vmatprep.subr.mxu0 0.0
    %791 = vmatpush1.msra.mxu0 0.0
    %792 = vmatprep.subr.mxu0 0.0
    %793 = vmatpush1.msra.mxu0 0.0
    %794 = vmatprep.subr.mxu0 0.0
    %795 = vmatpush1.msra.mxu0 0.0
    %796 = vmatprep.subr.mxu0 0.0
    %797 = vmatpush1.msra.mxu0 0.0
    %798 = vmatprep.subr.mxu0 0.0
    %799 = vmatpush1.msra.mxu0 0.0
    %800 = vmatprep.subr.mxu0 0.0
    %801 = vmatpush1.msra.mxu0 0.0
    %802 = vmatprep.subr.mxu0 0.0
    %803 = vmatpush1.msra.mxu0 0.0
    %804 = vmatprep.subr.mxu0 0.0
    %805 = vmatpush1.msra.mxu0 0.0
    %806 = vmatprep.subr.mxu0 0.0
    %807 = vmatpush1.msra.mxu0 0.0
    %808 = vmatprep.subr.mxu0 0.0
    %809 = vmatpush1.msra.mxu0 0.0
    %810 = vmatprep.subr.mxu0 0.0
    %811 = vmatpush1.msra.mxu0 0.0
    %812 = vmatprep.subr.mxu0 0.0
    %813 = vmatpush1.msra.mxu0 0.0
    %814 = vmatprep.mubr.f32.mxu0 0.0
    %v815 = vand.u32 %v521, 4294901760
    %v816 = vsub.f32 %v521, %v815
    %v817 = vand.u32 %v816, 4294901760
    %818 = vmatmul.mubr.f32.gmra.mrb[0].mxu0 %v817
    %v819 = vpop.f32.mrb[0].mxu0
    %v820 = vadd.f32 %v746, %v819
    %v821 = vpop.f32.mrb[0].mxu0
    %822 = vdwg.mxu0
    %823 = vmatprep.subr.mxu0 0.0
    %v824 = vand.u32 %v50, 4294901760
    %v825 = vsub.f32 %v50, %v824
    %v826 = vand.u32 %v825, 4294901760
    %827 = vmatpush1.msra.mxu0 %v826
    %828 = vmatprep.subr.mxu0 0.0
    %829 = vmatpush1.msra.mxu0 0.0
    %830 = vmatprep.subr.mxu0 0.0
    %831 = vmatpush1.msra.mxu0 0.0
    %832 = vmatprep.subr.mxu0 0.0
    %833 = vmatpush1.msra.mxu0 0.0
    %834 = vmatprep.subr.mxu0 0.0
    %835 = vmatpush1.msra.mxu0 0.0
    %836 = vmatprep.subr.mxu0 0.0
    %837 = vmatpush1.msra.mxu0 0.0
    %838 = vmatprep.subr.mxu0 0.0
    %839 = vmatpush1.msra.mxu0 0.0
    %840 = vmatprep.subr.mxu0 0.0
    %841 = vmatpush1.msra.mxu0 0.0
    %842 = vmatprep.subr.mxu0 0.0
    %843 = vmatpush1.msra.mxu0 0.0
    %844 = vmatprep.subr.mxu0 0.0
    %845 = vmatpush1.msra.mxu0 0.0
    %846 = vmatprep.subr.mxu0 0.0
    %847 = vmatpush1.msra.mxu0 0.0
    %848 = vmatprep.subr.mxu0 0.0
    %849 = vmatpush1.msra.mxu0 0.0
    %850 = vmatprep.subr.mxu0 0.0
    %851 = vmatpush1.msra.mxu0 0.0
    %852 = vmatprep.subr.mxu0 0.0
    %853 = vmatpush1.msra.mxu0 0.0
    %854 = vmatprep.subr.mxu0 0.0
    %855 = vmatpush1.msra.mxu0 0.0
    %856 = vmatprep.subr.mxu0 0.0
    %857 = vmatpush1.msra.mxu0 0.0
    %858 = vmatprep.subr.mxu0 0.0
    %859 = vmatpush1.msra.mxu0 0.0
    %860 = vmatprep.subr.mxu0 0.0
    %861 = vmatpush1.msra.mxu0 0.0
    %862 = vmatprep.subr.mxu0 0.0
    %863 = vmatpush1.msra.mxu0 0.0
    %864 = vmatprep.subr.mxu0 0.0
    %865 = vmatpush1.msra.mxu0 0.0
    %866 = vmatprep.subr.mxu0 0.0
    %867 = vmatpush1.msra.mxu0 0.0
    %868 = vmatprep.subr.mxu0 0.0
    %869 = vmatpush1.msra.mxu0 0.0
    %870 = vmatprep.subr.mxu0 0.0
    %871 = vmatpush1.msra.mxu0 0.0
    %872 = vmatprep.subr.mxu0 0.0
    %873 = vmatpush1.msra.mxu0 0.0
    %874 = vmatprep.subr.mxu0 0.0
    %875 = vmatpush1.msra.mxu0 0.0
    %876 = vmatprep.subr.mxu0 0.0
    %877 = vmatpush1.msra.mxu0 0.0
    %878 = vmatprep.subr.mxu0 0.0
    %879 = vmatpush1.msra.mxu0 0.0
    %880 = vmatprep.subr.mxu0 0.0
    %881 = vmatpush1.msra.mxu0 0.0
    %882 = vmatprep.subr.mxu0 0.0
    %883 = vmatpush1.msra.mxu0 0.0
    %884 = vmatprep.subr.mxu0 0.0
    %885 = vmatpush1.msra.mxu0 0.0
    %886 = vmatprep.subr.mxu0 0.0
    %887 = vmatpush1.msra.mxu0 0.0
    %888 = vmatprep.subr.mxu0 0.0
    %889 = vmatpush1.msra.mxu0 0.0
    %890 = vmatprep.mubr.f32.mxu0 0.0
    %v891 = vand.u32 %v521, 4294901760
    %892 = vmatmul.mubr.f32.gmra.mrb[0].mxu0 %v891
    %v893 = vpop.f32.mrb[0].mxu0
    %v894 = vadd.f32 %v820, %v893
    %v895 = vpop.f32.mrb[0].mxu0
    %896 = vdwg.mxu0
    %897 = vmatprep.subr.mxu0 0.0
    %v898 = vand.u32 %v50, 4294901760
    %899 = vmatpush1.msra.mxu0 %v898
    %900 = vmatprep.subr.mxu0 0.0
    %901 = vmatpush1.msra.mxu0 0.0
    %902 = vmatprep.subr.mxu0 0.0
    %903 = vmatpush1.msra.mxu0 0.0
    %904 = vmatprep.subr.mxu0 0.0
    %905 = vmatpush1.msra.mxu0 0.0
    %906 = vmatprep.subr.mxu0 0.0
    %907 = vmatpush1.msra.mxu0 0.0
    %908 = vmatprep.subr.mxu0 0.0
    %909 = vmatpush1.msra.mxu0 0.0
    %910 = vmatprep.subr.mxu0 0.0
    %911 = vmatpush1.msra.mxu0 0.0
    %912 = vmatprep.subr.mxu0 0.0
    %913 = vmatpush1.msra.mxu0 0.0
    %914 = vmatprep.subr.mxu0 0.0
    %915 = vmatpush1.msra.mxu0 0.0
    %916 = vmatprep.subr.mxu0 0.0
    %917 = vmatpush1.msra.mxu0 0.0
    %918 = vmatprep.subr.mxu0 0.0
    %919 = vmatpush1.msra.mxu0 0.0
    %920 = vmatprep.subr.mxu0 0.0
    %921 = vmatpush1.msra.mxu0 0.0
    %922 = vmatprep.subr.mxu0 0.0
    %923 = vmatpush1.msra.mxu0 0.0
    %924 = vmatprep.subr.mxu0 0.0
    %925 = vmatpush1.msra.mxu0 0.0
    %926 = vmatprep.subr.mxu0 0.0
    %927 = vmatpush1.msra.mxu0 0.0
    %928 = vmatprep.subr.mxu0 0.0
    %929 = vmatpush1.msra.mxu0 0.0
    %930 = vmatprep.subr.mxu0 0.0
    %931 = vmatpush1.msra.mxu0 0.0
    %932 = vmatprep.subr.mxu0 0.0
    %933 = vmatpush1.msra.mxu0 0.0
    %934 = vmatprep.subr.mxu0 0.0
    %935 = vmatpush1.msra.mxu0 0.0
    %936 = vmatprep.subr.mxu0 0.0
    %937 = vmatpush1.msra.mxu0 0.0
    %938 = vmatprep.subr.mxu0 0.0
    %939 = vmatpush1.msra.mxu0 0.0
    %940 = vmatprep.subr.mxu0 0.0
    %941 = vmatpush1.msra.mxu0 0.0
    %942 = vmatprep.subr.mxu0 0.0
    %943 = vmatpush1.msra.mxu0 0.0
    %944 = vmatprep.subr.mxu0 0.0
    %945 = vmatpush1.msra.mxu0 0.0
    %946 = vmatprep.subr.mxu0 0.0
    %947 = vmatpush1.msra.mxu0 0.0
    %948 = vmatprep.subr.mxu0 0.0
    %949 = vmatpush1.msra.mxu0 0.0
    %950 = vmatprep.subr.mxu0 0.0
    %951 = vmatpush1.msra.mxu0 0.0
    %952 = vmatprep.subr.mxu0 0.0
    %953 = vmatpush1.msra.mxu0 0.0
    %954 = vmatprep.subr.mxu0 0.0
    %955 = vmatpush1.msra.mxu0 0.0
    %956 = vmatprep.subr.mxu0 0.0
    %957 = vmatpush1.msra.mxu0 0.0
    %958 = vmatprep.subr.mxu0 0.0
    %959 = vmatpush1.msra.mxu0 0.0
    %960 = vmatprep.subr.mxu0 0.0
    %961 = vmatpush1.msra.mxu0 0.0
    %962 = vmatprep.mubr.f32.mxu0 0.0
    %v963 = vand.u32 %v521, 4294901760
    %964 = vmatmul.mubr.f32.gmra.mrb[0].mxu0 %v963
    %v965 = vpop.f32.mrb[0].mxu0
    %v966 = vadd.f32 %v894, %v965
    %v967 = vpop.f32.mrb[0].mxu0
    %968 = vdwg.mxu0
    %v969 = vld [vmem:[%s1 + $0x2] sm:$0x1]
    %v970 = vld [vmem:[%s1 + $0xa] sm:$0x1]
    %v973 = vrot.slane %v970, 7
    %v974 = vsel %vm64, %v973, %v969
    %v975 = vsel %vm66, %v974, 0
    %977 = vmatprep.subr.mxu0 0.0
    %v978 = vand.u32 %v50, 4294901760
    %979 = vmatpush1.msra.mxu0 %v978
    %980 = vmatprep.subr.mxu0 0.0
    %981 = vmatpush1.msra.mxu0 0.0
    %982 = vmatprep.subr.mxu0 0.0
    %983 = vmatpush1.msra.mxu0 0.0
    %984 = vmatprep.subr.mxu0 0.0
    %985 = vmatpush1.msra.mxu0 0.0
    %986 = vmatprep.subr.mxu0 0.0
    %987 = vmatpush1.msra.mxu0 0.0
    %988 = vmatprep.subr.mxu0 0.0
    %989 = vmatpush1.msra.mxu0 0.0
    %990 = vmatprep.subr.mxu0 0.0
    %991 = vmatpush1.msra.mxu0 0.0
    %992 = vmatprep.subr.mxu0 0.0
    %993 = vmatpush1.msra.mxu0 0.0
    %994 = vmatprep.subr.mxu0 0.0
    %995 = vmatpush1.msra.mxu0 0.0
    %996 = vmatprep.subr.mxu0 0.0
    %997 = vmatpush1.msra.mxu0 0.0
    %998 = vmatprep.subr.mxu0 0.0
    %999 = vmatpush1.msra.mxu0 0.0
    %1000 = vmatprep.subr.mxu0 0.0
    %1001 = vmatpush1.msra.mxu0 0.0
    %1002 = vmatprep.subr.mxu0 0.0
    %1003 = vmatpush1.msra.mxu0 0.0
    %1004 = vmatprep.subr.mxu0 0.0
    %1005 = vmatpush1.msra.mxu0 0.0
    %1006 = vmatprep.subr.mxu0 0.0
    %1007 = vmatpush1.msra.mxu0 0.0
    %1008 = vmatprep.subr.mxu0 0.0
    %1009 = vmatpush1.msra.mxu0 0.0
    %1010 = vmatprep.subr.mxu0 0.0
    %1011 = vmatpush1.msra.mxu0 0.0
    %1012 = vmatprep.subr.mxu0 0.0
    %1013 = vmatpush1.msra.mxu0 0.0
    %1014 = vmatprep.subr.mxu0 0.0
    %1015 = vmatpush1.msra.mxu0 0.0
    %1016 = vmatprep.subr.mxu0 0.0
    %1017 = vmatpush1.msra.mxu0 0.0
    %1018 = vmatprep.subr.mxu0 0.0
    %1019 = vmatpush1.msra.mxu0 0.0
    %1020 = vmatprep.subr.mxu0 0.0
    %1021 = vmatpush1.msra.mxu0 0.0
    %1022 = vmatprep.subr.mxu0 0.0
    %1023 = vmatpush1.msra.mxu0 0.0
    %1024 = vmatprep.subr.mxu0 0.0
    %1025 = vmatpush1.msra.mxu0 0.0
    %1026 = vmatprep.subr.mxu0 0.0
    %1027 = vmatpush1.msra.mxu0 0.0
    %1028 = vmatprep.subr.mxu0 0.0
    %1029 = vmatpush1.msra.mxu0 0.0
    %1030 = vmatprep.subr.mxu0 0.0
    %1031 = vmatpush1.msra.mxu0 0.0
    %1032 = vmatprep.subr.mxu0 0.0
    %1033 = vmatpush1.msra.mxu0 0.0
    %1034 = vmatprep.subr.mxu0 0.0
    %1035 = vmatpush1.msra.mxu0 0.0
    %1036 = vmatprep.subr.mxu0 0.0
    %1037 = vmatpush1.msra.mxu0 0.0
    %1038 = vmatprep.subr.mxu0 0.0
    %1039 = vmatpush1.msra.mxu0 0.0
    %1040 = vmatprep.subr.mxu0 0.0
    %1041 = vmatpush1.msra.mxu0 0.0
    %1042 = vmatprep.mubr.f32.mxu0 0.0
    %v1043 = vand.u32 %v975, 4294901760
    %v1044 = vsub.f32 %v975, %v1043
    %v1045 = vand.u32 %v1044, 4294901760
    %v1046 = vsub.f32 %v1044, %v1045
    %v1047 = vand.u32 %v1046, 4294901760
    %1048 = vmatmul.mubr.f32.gmra.mrb[0].mxu0 %v1047
    %v1049 = vpop.f32.mrb[0].mxu0
    %v1050 = vadd.f32 %v59, %v1049
    %v1051 = vpop.f32.mrb[0].mxu0
    %1052 = vdwg.mxu0
    %1053 = vmatprep.subr.mxu0 0.0
    %v1054 = vand.u32 %v50, 4294901760
    %v1055 = vsub.f32 %v50, %v1054
    %v1056 = vand.u32 %v1055, 4294901760
    %v1057 = vsub.f32 %v1055, %v1056
    %v1058 = vand.u32 %v1057, 4294901760
    %1059 = vmatpush1.msra.mxu0 %v1058
    %1060 = vmatprep.subr.mxu0 0.0
    %1061 = vmatpush1.msra.mxu0 0.0
    %1062 = vmatprep.subr.mxu0 0.0
    %1063 = vmatpush1.msra.mxu0 0.0
    %1064 = vmatprep.subr.mxu0 0.0
    %1065 = vmatpush1.msra.mxu0 0.0
    %1066 = vmatprep.subr.mxu0 0.0
    %1067 = vmatpush1.msra.mxu0 0.0
    %1068 = vmatprep.subr.mxu0 0.0
    %1069 = vmatpush1.msra.mxu0 0.0
    %1070 = vmatprep.subr.mxu0 0.0
    %1071 = vmatpush1.msra.mxu0 0.0
    %1072 = vmatprep.subr.mxu0 0.0
    %1073 = vmatpush1.msra.mxu0 0.0
    %1074 = vmatprep.subr.mxu0 0.0
    %1075 = vmatpush1.msra.mxu0 0.0
    %1076 = vmatprep.subr.mxu0 0.0
    %1077 = vmatpush1.msra.mxu0 0.0
    %1078 = vmatprep.subr.mxu0 0.0
    %1079 = vmatpush1.msra.mxu0 0.0
    %1080 = vmatprep.subr.mxu0 0.0
    %1081 = vmatpush1.msra.mxu0 0.0
    %1082 = vmatprep.subr.mxu0 0.0
    %1083 = vmatpush1.msra.mxu0 0.0
    %1084 = vmatprep.subr.mxu0 0.0
    %1085 = vmatpush1.msra.mxu0 0.0
    %1086 = vmatprep.subr.mxu0 0.0
    %1087 = vmatpush1.msra.mxu0 0.0
    %1088 = vmatprep.subr.mxu0 0.0
    %1089 = vmatpush1.msra.mxu0 0.0
    %1090 = vmatprep.subr.mxu0 0.0
    %1091 = vmatpush1.msra.mxu0 0.0
    %1092 = vmatprep.subr.mxu0 0.0
    %1093 = vmatpush1.msra.mxu0 0.0
    %1094 = vmatprep.subr.mxu0 0.0
    %1095 = vmatpush1.msra.mxu0 0.0
    %1096 = vmatprep.subr.mxu0 0.0
    %1097 = vmatpush1.msra.mxu0 0.0
    %1098 = vmatprep.subr.mxu0 0.0
    %1099 = vmatpush1.msra.mxu0 0.0
    %1100 = vmatprep.subr.mxu0 0.0
    %1101 = vmatpush1.msra.mxu0 0.0
    %1102 = vmatprep.subr.mxu0 0.0
    %1103 = vmatpush1.msra.mxu0 0.0
    %1104 = vmatprep.subr.mxu0 0.0
    %1105 = vmatpush1.msra.mxu0 0.0
    %1106 = vmatprep.subr.mxu0 0.0
    %1107 = vmatpush1.msra.mxu0 0.0
    %1108 = vmatprep.subr.mxu0 0.0
    %1109 = vmatpush1.msra.mxu0 0.0
    %1110 = vmatprep.subr.mxu0 0.0
    %1111 = vmatpush1.msra.mxu0 0.0
    %1112 = vmatprep.subr.mxu0 0.0
    %1113 = vmatpush1.msra.mxu0 0.0
    %1114 = vmatprep.subr.mxu0 0.0
    %1115 = vmatpush1.msra.mxu0 0.0
    %1116 = vmatprep.subr.mxu0 0.0
    %1117 = vmatpush1.msra.mxu0 0.0
    %1118 = vmatprep.subr.mxu0 0.0
    %1119 = vmatpush1.msra.mxu0 0.0
    %1120 = vmatprep.subr.mxu0 0.0
    %1121 = vmatpush1.msra.mxu0 0.0
    %1122 = vmatprep.mubr.f32.mxu0 0.0
    %v1123 = vand.u32 %v975, 4294901760
    %1124 = vmatmul.mubr.f32.gmra.mrb[0].mxu0 %v1123
    %v1125 = vpop.f32.mrb[0].mxu0
    %v1126 = vadd.f32 %v1050, %v1125
    %v1127 = vpop.f32.mrb[0].mxu0
    %1128 = vdwg.mxu0
    %1129 = vmatprep.subr.mxu0 0.0
    %v1130 = vand.u32 %v50, 4294901760
    %v1131 = vsub.f32 %v50, %v1130
    %1132 = vmatpush1.msra.mxu0 %v1131
    %1133 = vmatprep.subr.mxu0 0.0
    %1134 = vmatpush1.msra.mxu0 0.0
    %1135 = vmatprep.subr.mxu0 0.0
    %1136 = vmatpush1.msra.mxu0 0.0
    %1137 = vmatprep.subr.mxu0 0.0
    %1138 = vmatpush1.msra.mxu0 0.0
    %1139 = vmatprep.subr.mxu0 0.0
    %1140 = vmatpush1.msra.mxu0 0.0
    %1141 = vmatprep.subr.mxu0 0.0
    %1142 = vmatpush1.msra.mxu0 0.0
    %1143 = vmatprep.subr.mxu0 0.0
    %1144 = vmatpush1.msra.mxu0 0.0
    %1145 = vmatprep.subr.mxu0 0.0
    %1146 = vmatpush1.msra.mxu0 0.0
    %1147 = vmatprep.subr.mxu0 0.0
    %1148 = vmatpush1.msra.mxu0 0.0
    %1149 = vmatprep.subr.mxu0 0.0
    %1150 = vmatpush1.msra.mxu0 0.0
    %1151 = vmatprep.subr.mxu0 0.0
    %1152 = vmatpush1.msra.mxu0 0.0
    %1153 = vmatprep.subr.mxu0 0.0
    %1154 = vmatpush1.msra.mxu0 0.0
    %1155 = vmatprep.subr.mxu0 0.0
    %1156 = vmatpush1.msra.mxu0 0.0
    %1157 = vmatprep.subr.mxu0 0.0
    %1158 = vmatpush1.msra.mxu0 0.0
    %1159 = vmatprep.subr.mxu0 0.0
    %1160 = vmatpush1.msra.mxu0 0.0
    %1161 = vmatprep.subr.mxu0 0.0
    %1162 = vmatpush1.msra.mxu0 0.0
    %1163 = vmatprep.subr.mxu0 0.0
    %1164 = vmatpush1.msra.mxu0 0.0
    %1165 = vmatprep.subr.mxu0 0.0
    %1166 = vmatpush1.msra.mxu0 0.0
    %1167 = vmatprep.subr.mxu0 0.0
    %1168 = vmatpush1.msra.mxu0 0.0
    %1169 = vmatprep.subr.mxu0 0.0
    %1170 = vmatpush1.msra.mxu0 0.0
    %1171 = vmatprep.subr.mxu0 0.0
    %1172 = vmatpush1.msra.mxu0 0.0
    %1173 = vmatprep.subr.mxu0 0.0
    %1174 = vmatpush1.msra.mxu0 0.0
    %1175 = vmatprep.subr.mxu0 0.0
    %1176 = vmatpush1.msra.mxu0 0.0
    %1177 = vmatprep.subr.mxu0 0.0
    %1178 = vmatpush1.msra.mxu0 0.0
    %1179 = vmatprep.subr.mxu0 0.0
    %1180 = vmatpush1.msra.mxu0 0.0
    %1181 = vmatprep.subr.mxu0 0.0
    %1182 = vmatpush1.msra.mxu0 0.0
    %1183 = vmatprep.subr.mxu0 0.0
    %1184 = vmatpush1.msra.mxu0 0.0
    %1185 = vmatprep.subr.mxu0 0.0
    %1186 = vmatpush1.msra.mxu0 0.0
    %1187 = vmatprep.subr.mxu0 0.0
    %1188 = vmatpush1.msra.mxu0 0.0
    %1189 = vmatprep.subr.mxu0 0.0
    %1190 = vmatpush1.msra.mxu0 0.0
    %1191 = vmatprep.subr.mxu0 0.0
    %1192 = vmatpush1.msra.mxu0 0.0
    %1193 = vmatprep.subr.mxu0 0.0
    %1194 = vmatpush1.msra.mxu0 0.0
    %1195 = vmatprep.mubr.f32.mxu0 0.0
    %v1196 = vand.u32 %v975, 4294901760
    %v1197 = vsub.f32 %v975, %v1196
    %1198 = vmatmul.mubr.f32.gmra.mrb[0].mxu0 %v1197
    %v1199 = vpop.f32.mrb[0].mxu0
    %v1200 = vadd.f32 %v1126, %v1199
    %v1201 = vpop.f32.mrb[0].mxu0
    %1202 = vdwg.mxu0
    %1203 = vmatprep.subr.mxu0 0.0
    %v1204 = vand.u32 %v50, 4294901760
    %1205 = vmatpush1.msra.mxu0 %v1204
    %1206 = vmatprep.subr.mxu0 0.0
    %1207 = vmatpush1.msra.mxu0 0.0
    %1208 = vmatprep.subr.mxu0 0.0
    %1209 = vmatpush1.msra.mxu0 0.0
    %1210 = vmatprep.subr.mxu0 0.0
    %1211 = vmatpush1.msra.mxu0 0.0
    %1212 = vmatprep.subr.mxu0 0.0
    %1213 = vmatpush1.msra.mxu0 0.0
    %1214 = vmatprep.subr.mxu0 0.0
    %1215 = vmatpush1.msra.mxu0 0.0
    %1216 = vmatprep.subr.mxu0 0.0
    %1217 = vmatpush1.msra.mxu0 0.0
    %1218 = vmatprep.subr.mxu0 0.0
    %1219 = vmatpush1.msra.mxu0 0.0
    %1220 = vmatprep.subr.mxu0 0.0
    %1221 = vmatpush1.msra.mxu0 0.0
    %1222 = vmatprep.subr.mxu0 0.0
    %1223 = vmatpush1.msra.mxu0 0.0
    %1224 = vmatprep.subr.mxu0 0.0
    %1225 = vmatpush1.msra.mxu0 0.0
    %1226 = vmatprep.subr.mxu0 0.0
    %1227 = vmatpush1.msra.mxu0 0.0
    %1228 = vmatprep.subr.mxu0 0.0
    %1229 = vmatpush1.msra.mxu0 0.0
    %1230 = vmatprep.subr.mxu0 0.0
    %1231 = vmatpush1.msra.mxu0 0.0
    %1232 = vmatprep.subr.mxu0 0.0
    %1233 = vmatpush1.msra.mxu0 0.0
    %1234 = vmatprep.subr.mxu0 0.0
    %1235 = vmatpush1.msra.mxu0 0.0
    %1236 = vmatprep.subr.mxu0 0.0
    %1237 = vmatpush1.msra.mxu0 0.0
    %1238 = vmatprep.subr.mxu0 0.0
    %1239 = vmatpush1.msra.mxu0 0.0
    %1240 = vmatprep.subr.mxu0 0.0
    %1241 = vmatpush1.msra.mxu0 0.0
    %1242 = vmatprep.subr.mxu0 0.0
    %1243 = vmatpush1.msra.mxu0 0.0
    %1244 = vmatprep.subr.mxu0 0.0
    %1245 = vmatpush1.msra.mxu0 0.0
    %1246 = vmatprep.subr.mxu0 0.0
    %1247 = vmatpush1.msra.mxu0 0.0
    %1248 = vmatprep.subr.mxu0 0.0
    %1249 = vmatpush1.msra.mxu0 0.0
    %1250 = vmatprep.subr.mxu0 0.0
    %1251 = vmatpush1.msra.mxu0 0.0
    %1252 = vmatprep.subr.mxu0 0.0
    %1253 = vmatpush1.msra.mxu0 0.0
    %1254 = vmatprep.subr.mxu0 0.0
    %1255 = vmatpush1.msra.mxu0 0.0
    %1256 = vmatprep.subr.mxu0 0.0
    %1257 = vmatpush1.msra.mxu0 0.0
    %1258 = vmatprep.subr.mxu0 0.0
    %1259 = vmatpush1.msra.mxu0 0.0
    %1260 = vmatprep.subr.mxu0 0.0
    %1261 = vmatpush1.msra.mxu0 0.0
    %1262 = vmatprep.subr.mxu0 0.0
    %1263 = vmatpush1.msra.mxu0 0.0
    %1264 = vmatprep.subr.mxu0 0.0
    %1265 = vmatpush1.msra.mxu0 0.0
    %1266 = vmatprep.subr.mxu0 0.0
    %1267 = vmatpush1.msra.mxu0 0.0
    %1268 = vmatprep.mubr.f32.mxu0 0.0
    %v1269 = vand.u32 %v975, 4294901760
    %v1270 = vsub.f32 %v975, %v1269
    %v1271 = vand.u32 %v1270, 4294901760
    %1272 = vmatmul.mubr.f32.gmra.mrb[0].mxu0 %v1271
    %v1273 = vpop.f32.mrb[0].mxu0
    %v1274 = vadd.f32 %v1200, %v1273
    %v1275 = vpop.f32.mrb[0].mxu0
    %1276 = vdwg.mxu0
    %1277 = vmatprep.subr.mxu0 0.0
    %v1278 = vand.u32 %v50, 4294901760
    %v1279 = vsub.f32 %v50, %v1278
    %v1280 = vand.u32 %v1279, 4294901760
    %1281 = vmatpush1.msra.mxu0 %v1280
    %1282 = vmatprep.subr.mxu0 0.0
    %1283 = vmatpush1.msra.mxu0 0.0
    %1284 = vmatprep.subr.mxu0 0.0
    %1285 = vmatpush1.msra.mxu0 0.0
    %1286 = vmatprep.subr.mxu0 0.0
    %1287 = vmatpush1.msra.mxu0 0.0
    %1288 = vmatprep.subr.mxu0 0.0
    %1289 = vmatpush1.msra.mxu0 0.0
    %1290 = vmatprep.subr.mxu0 0.0
    %1291 = vmatpush1.msra.mxu0 0.0
    %1292 = vmatprep.subr.mxu0 0.0
    %1293 = vmatpush1.msra.mxu0 0.0
    %1294 = vmatprep.subr.mxu0 0.0
    %1295 = vmatpush1.msra.mxu0 0.0
    %1296 = vmatprep.subr.mxu0 0.0
    %1297 = vmatpush1.msra.mxu0 0.0
    %1298 = vmatprep.subr.mxu0 0.0
    %1299 = vmatpush1.msra.mxu0 0.0
    %1300 = vmatprep.subr.mxu0 0.0
    %1301 = vmatpush1.msra.mxu0 0.0
    %1302 = vmatprep.subr.mxu0 0.0
    %1303 = vmatpush1.msra.mxu0 0.0
    %1304 = vmatprep.subr.mxu0 0.0
    %1305 = vmatpush1.msra.mxu0 0.0
    %1306 = vmatprep.subr.mxu0 0.0
    %1307 = vmatpush1.msra.mxu0 0.0
    %1308 = vmatprep.subr.mxu0 0.0
    %1309 = vmatpush1.msra.mxu0 0.0
    %1310 = vmatprep.subr.mxu0 0.0
    %1311 = vmatpush1.msra.mxu0 0.0
    %1312 = vmatprep.subr.mxu0 0.0
    %1313 = vmatpush1.msra.mxu0 0.0
    %1314 = vmatprep.subr.mxu0 0.0
    %1315 = vmatpush1.msra.mxu0 0.0
    %1316 = vmatprep.subr.mxu0 0.0
    %1317 = vmatpush1.msra.mxu0 0.0
    %1318 = vmatprep.subr.mxu0 0.0
    %1319 = vmatpush1.msra.mxu0 0.0
    %1320 = vmatprep.subr.mxu0 0.0
    %1321 = vmatpush1.msra.mxu0 0.0
    %1322 = vmatprep.subr.mxu0 0.0
    %1323 = vmatpush1.msra.mxu0 0.0
    %1324 = vmatprep.subr.mxu0 0.0
    %1325 = vmatpush1.msra.mxu0 0.0
    %1326 = vmatprep.subr.mxu0 0.0
    %1327 = vmatpush1.msra.mxu0 0.0
    %1328 = vmatprep.subr.mxu0 0.0
    %1329 = vmatpush1.msra.mxu0 0.0
    %1330 = vmatprep.subr.mxu0 0.0
    %1331 = vmatpush1.msra.mxu0 0.0
    %1332 = vmatprep.subr.mxu0 0.0
    %1333 = vmatpush1.msra.mxu0 0.0
    %1334 = vmatprep.subr.mxu0 0.0
    %1335 = vmatpush1.msra.mxu0 0.0
    %1336 = vmatprep.subr.mxu0 0.0
    %1337 = vmatpush1.msra.mxu0 0.0
    %1338 = vmatprep.subr.mxu0 0.0
    %1339 = vmatpush1.msra.mxu0 0.0
    %1340 = vmatprep.subr.mxu0 0.0
    %1341 = vmatpush1.msra.mxu0 0.0
    %1342 = vmatprep.subr.mxu0 0.0
    %1343 = vmatpush1.msra.mxu0 0.0
    %1344 = vmatprep.mubr.f32.mxu0 0.0
    %v1345 = vand.u32 %v975, 4294901760
    %1346 = vmatmul.mubr.f32.gmra.mrb[0].mxu0 %v1345
    %v1347 = vpop.f32.mrb[0].mxu0
    %v1348 = vadd.f32 %v1274, %v1347
    %v1349 = vpop.f32.mrb[0].mxu0
    %1350 = vdwg.mxu0
    %1351 = vmatprep.subr.mxu0 0.0
    %v1352 = vand.u32 %v50, 4294901760
    %1353 = vmatpush1.msra.mxu0 %v1352
    %1354 = vmatprep.subr.mxu0 0.0
    %1355 = vmatpush1.msra.mxu0 0.0
    %1356 = vmatprep.subr.mxu0 0.0
    %1357 = vmatpush1.msra.mxu0 0.0
    %1358 = vmatprep.subr.mxu0 0.0
    %1359 = vmatpush1.msra.mxu0 0.0
    %1360 = vmatprep.subr.mxu0 0.0
    %1361 = vmatpush1.msra.mxu0 0.0
    %1362 = vmatprep.subr.mxu0 0.0
    %1363 = vmatpush1.msra.mxu0 0.0
    %1364 = vmatprep.subr.mxu0 0.0
    %1365 = vmatpush1.msra.mxu0 0.0
    %1366 = vmatprep.subr.mxu0 0.0
    %1367 = vmatpush1.msra.mxu0 0.0
    %1368 = vmatprep.subr.mxu0 0.0
    %1369 = vmatpush1.msra.mxu0 0.0
    %1370 = vmatprep.subr.mxu0 0.0
    %1371 = vmatpush1.msra.mxu0 0.0
    %1372 = vmatprep.subr.mxu0 0.0
    %1373 = vmatpush1.msra.mxu0 0.0
    %1374 = vmatprep.subr.mxu0 0.0
    %1375 = vmatpush1.msra.mxu0 0.0
    %1376 = vmatprep.subr.mxu0 0.0
    %1377 = vmatpush1.msra.mxu0 0.0
    %1378 = vmatprep.subr.mxu0 0.0
    %1379 = vmatpush1.msra.mxu0 0.0
    %1380 = vmatprep.subr.mxu0 0.0
    %1381 = vmatpush1.msra.mxu0 0.0
    %1382 = vmatprep.subr.mxu0 0.0
    %1383 = vmatpush1.msra.mxu0 0.0
    %1384 = vmatprep.subr.mxu0 0.0
    %1385 = vmatpush1.msra.mxu0 0.0
    %1386 = vmatprep.subr.mxu0 0.0
    %1387 = vmatpush1.msra.mxu0 0.0
    %1388 = vmatprep.subr.mxu0 0.0
    %1389 = vmatpush1.msra.mxu0 0.0
    %1390 = vmatprep.subr.mxu0 0.0
    %1391 = vmatpush1.msra.mxu0 0.0
    %1392 = vmatprep.subr.mxu0 0.0
    %1393 = vmatpush1.msra.mxu0 0.0
    %1394 = vmatprep.subr.mxu0 0.0
    %1395 = vmatpush1.msra.mxu0 0.0
    %1396 = vmatprep.subr.mxu0 0.0
    %1397 = vmatpush1.msra.mxu0 0.0
    %1398 = vmatprep.subr.mxu0 0.0
    %1399 = vmatpush1.msra.mxu0 0.0
    %1400 = vmatprep.subr.mxu0 0.0
    %1401 = vmatpush1.msra.mxu0 0.0
    %1402 = vmatprep.subr.mxu0 0.0
    %1403 = vmatpush1.msra.mxu0 0.0
    %1404 = vmatprep.subr.mxu0 0.0
    %1405 = vmatpush1.msra.mxu0 0.0
    %1406 = vmatprep.subr.mxu0 0.0
    %1407 = vmatpush1.msra.mxu0 0.0
    %1408 = vmatprep.subr.mxu0 0.0
    %1409 = vmatpush1.msra.mxu0 0.0
    %1410 = vmatprep.subr.mxu0 0.0
    %1411 = vmatpush1.msra.mxu0 0.0
    %1412 = vmatprep.subr.mxu0 0.0
    %1413 = vmatpush1.msra.mxu0 0.0
    %1414 = vmatprep.subr.mxu0 0.0
    %1415 = vmatpush1.msra.mxu0 0.0
    %1416 = vmatprep.mubr.f32.mxu0 0.0
    %v1417 = vand.u32 %v975, 4294901760
    %1418 = vmatmul.mubr.f32.gmra.mrb[0].mxu0 %v1417
    %v1419 = vpop.f32.mrb[0].mxu0
    %v1420 = vadd.f32 %v1348, %v1419
    %v1421 = vpop.f32.mrb[0].mxu0
    %1422 = vdwg.mxu0
    %v1423 = vld [vmem:[%s1 + $0x3] sm:$0x1]
    %v1424 = vld [vmem:[%s1 + $0xb] sm:$0x1]
    %v1427 = vrot.slane %v1424, 7
    %v1428 = vsel %vm64, %v1427, %v1423
    %v1429 = vsel %vm66, %v1428, 0
    %1431 = vmatprep.subr.mxu0 0.0
    %v1432 = vand.u32 %v50, 4294901760
    %1433 = vmatpush1.msra.mxu0 %v1432
    %1434 = vmatprep.subr.mxu0 0.0
    %1435 = vmatpush1.msra.mxu0 0.0
    %1436 = vmatprep.subr.mxu0 0.0
    %1437 = vmatpush1.msra.mxu0 0.0
    %1438 = vmatprep.subr.mxu0 0.0
    %1439 = vmatpush1.msra.mxu0 0.0
    %1440 = vmatprep.subr.mxu0 0.0
    %1441 = vmatpush1.msra.mxu0 0.0
    %1442 = vmatprep.subr.mxu0 0.0
    %1443 = vmatpush1.msra.mxu0 0.0
    %1444 = vmatprep.subr.mxu0 0.0
    %1445 = vmatpush1.msra.mxu0 0.0
    %1446 = vmatprep.subr.mxu0 0.0
    %1447 = vmatpush1.msra.mxu0 0.0
    %1448 = vmatprep.subr.mxu0 0.0
    %1449 = vmatpush1.msra.mxu0 0.0
    %1450 = vmatprep.subr.mxu0 0.0
    %1451 = vmatpush1.msra.mxu0 0.0
    %1452 = vmatprep.subr.mxu0 0.0
    %1453 = vmatpush1.msra.mxu0 0.0
    %1454 = vmatprep.subr.mxu0 0.0
    %1455 = vmatpush1.msra.mxu0 0.0
    %1456 = vmatprep.subr.mxu0 0.0
    %1457 = vmatpush1.msra.mxu0 0.0
    %1458 = vmatprep.subr.mxu0 0.0
    %1459 = vmatpush1.msra.mxu0 0.0
    %1460 = vmatprep.subr.mxu0 0.0
    %1461 = vmatpush1.msra.mxu0 0.0
    %1462 = vmatprep.subr.mxu0 0.0
    %1463 = vmatpush1.msra.mxu0 0.0
    %1464 = vmatprep.subr.mxu0 0.0
    %1465 = vmatpush1.msra.mxu0 0.0
    %1466 = vmatprep.subr.mxu0 0.0
    %1467 = vmatpush1.msra.mxu0 0.0
    %1468 = vmatprep.subr.mxu0 0.0
    %1469 = vmatpush1.msra.mxu0 0.0
    %1470 = vmatprep.subr.mxu0 0.0
    %1471 = vmatpush1.msra.mxu0 0.0
    %1472 = vmatprep.subr.mxu0 0.0
    %1473 = vmatpush1.msra.mxu0 0.0
    %1474 = vmatprep.subr.mxu0 0.0
    %1475 = vmatpush1.msra.mxu0 0.0
    %1476 = vmatprep.subr.mxu0 0.0
    %1477 = vmatpush1.msra.mxu0 0.0
    %1478 = vmatprep.subr.mxu0 0.0
    %1479 = vmatpush1.msra.mxu0 0.0
    %1480 = vmatprep.subr.mxu0 0.0
    %1481 = vmatpush1.msra.mxu0 0.0
    %1482 = vmatprep.subr.mxu0 0.0
    %1483 = vmatpush1.msra.mxu0 0.0
    %1484 = vmatprep.subr.mxu0 0.0
    %1485 = vmatpush1.msra.mxu0 0.0
    %1486 = vmatprep.subr.mxu0 0.0
    %1487 = vmatpush1.msra.mxu0 0.0
    %1488 = vmatprep.subr.mxu0 0.0
    %1489 = vmatpush1.msra.mxu0 0.0
    %1490 = vmatprep.subr.mxu0 0.0
    %1491 = vmatpush1.msra.mxu0 0.0
    %1492 = vmatprep.subr.mxu0 0.0
    %1493 = vmatpush1.msra.mxu0 0.0
    %1494 = vmatprep.subr.mxu0 0.0
    %1495 = vmatpush1.msra.mxu0 0.0
    %1496 = vmatprep.mubr.f32.mxu0 0.0
    %v1497 = vand.u32 %v1429, 4294901760
    %v1498 = vsub.f32 %v1429, %v1497
    %v1499 = vand.u32 %v1498, 4294901760
    %v1500 = vsub.f32 %v1498, %v1499
    %v1501 = vand.u32 %v1500, 4294901760
    %1502 = vmatmul.mubr.f32.gmra.mrb[0].mxu0 %v1501
    %v1503 = vpop.f32.mrb[0].mxu0
    %v1504 = vadd.f32 %v59, %v1503
    %v1505 = vpop.f32.mrb[0].mxu0
    %1506 = vdwg.mxu0
    %1507 = vmatprep.subr.mxu0 0.0
    %v1508 = vand.u32 %v50, 4294901760
    %v1509 = vsub.f32 %v50, %v1508
    %v1510 = vand.u32 %v1509, 4294901760
    %v1511 = vsub.f32 %v1509, %v1510
    %v1512 = vand.u32 %v1511, 4294901760
    %1513 = vmatpush1.msra.mxu0 %v1512
    %1514 = vmatprep.subr.mxu0 0.0
    %1515 = vmatpush1.msra.mxu0 0.0
    %1516 = vmatprep.subr.mxu0 0.0
    %1517 = vmatpush1.msra.mxu0 0.0
    %1518 = vmatprep.subr.mxu0 0.0
    %1519 = vmatpush1.msra.mxu0 0.0
    %1520 = vmatprep.subr.mxu0 0.0
    %1521 = vmatpush1.msra.mxu0 0.0
    %1522 = vmatprep.subr.mxu0 0.0
    %1523 = vmatpush1.msra.mxu0 0.0
    %1524 = vmatprep.subr.mxu0 0.0
    %1525 = vmatpush1.msra.mxu0 0.0
    %1526 = vmatprep.subr.mxu0 0.0
    %1527 = vmatpush1.msra.mxu0 0.0
    %1528 = vmatprep.subr.mxu0 0.0
    %1529 = vmatpush1.msra.mxu0 0.0
    %1530 = vmatprep.subr.mxu0 0.0
    %1531 = vmatpush1.msra.mxu0 0.0
    %1532 = vmatprep.subr.mxu0 0.0
    %1533 = vmatpush1.msra.mxu0 0.0
    %1534 = vmatprep.subr.mxu0 0.0
    %1535 = vmatpush1.msra.mxu0 0.0
    %1536 = vmatprep.subr.mxu0 0.0
    %1537 = vmatpush1.msra.mxu0 0.0
    %1538 = vmatprep.subr.mxu0 0.0
    %1539 = vmatpush1.msra.mxu0 0.0
    %1540 = vmatprep.subr.mxu0 0.0
    %1541 = vmatpush1.msra.mxu0 0.0
    %1542 = vmatprep.subr.mxu0 0.0
    %1543 = vmatpush1.msra.mxu0 0.0
    %1544 = vmatprep.subr.mxu0 0.0
    %1545 = vmatpush1.msra.mxu0 0.0
    %1546 = vmatprep.subr.mxu0 0.0
    %1547 = vmatpush1.msra.mxu0 0.0
    %1548 = vmatprep.subr.mxu0 0.0
    %1549 = vmatpush1.msra.mxu0 0.0
    %1550 = vmatprep.subr.mxu0 0.0
    %1551 = vmatpush1.msra.mxu0 0.0
    %1552 = vmatprep.subr.mxu0 0.0
    %1553 = vmatpush1.msra.mxu0 0.0
    %1554 = vmatprep.subr.mxu0 0.0
    %1555 = vmatpush1.msra.mxu0 0.0
    %1556 = vmatprep.subr.mxu0 0.0
    %1557 = vmatpush1.msra.mxu0 0.0
    %1558 = vmatprep.subr.mxu0 0.0
    %1559 = vmatpush1.msra.mxu0 0.0
    %1560 = vmatprep.subr.mxu0 0.0
    %1561 = vmatpush1.msra.mxu0 0.0
    %1562 = vmatprep.subr.mxu0 0.0
    %1563 = vmatpush1.msra.mxu0 0.0
    %1564 = vmatprep.subr.mxu0 0.0
    %1565 = vmatpush1.msra.mxu0 0.0
    %1566 = vmatprep.subr.mxu0 0.0
    %1567 = vmatpush1.msra.mxu0 0.0
    %1568 = vmatprep.subr.mxu0 0.0
    %1569 = vmatpush1.msra.mxu0 0.0
    %1570 = vmatprep.subr.mxu0 0.0
    %1571 = vmatpush1.msra.mxu0 0.0
    %1572 = vmatprep.subr.mxu0 0.0
    %1573 = vmatpush1.msra.mxu0 0.0
    %1574 = vmatprep.subr.mxu0 0.0
    %1575 = vmatpush1.msra.mxu0 0.0
    %1576 = vmatprep.mubr.f32.mxu0 0.0
    %v1577 = vand.u32 %v1429, 4294901760
    %1578 = vmatmul.mubr.f32.gmra.mrb[0].mxu0 %v1577
    %v1579 = vpop.f32.mrb[0].mxu0
    %v1580 = vadd.f32 %v1504, %v1579
    %v1581 = vpop.f32.mrb[0].mxu0
    %1582 = vdwg.mxu0
    %1583 = vmatprep.subr.mxu0 0.0
    %v1584 = vand.u32 %v50, 4294901760
    %v1585 = vsub.f32 %v50, %v1584
    %1586 = vmatpush1.msra.mxu0 %v1585
    %1587 = vmatprep.subr.mxu0 0.0
    %1588 = vmatpush1.msra.mxu0 0.0
    %1589 = vmatprep.subr.mxu0 0.0
    %1590 = vmatpush1.msra.mxu0 0.0
    %1591 = vmatprep.subr.mxu0 0.0
    %1592 = vmatpush1.msra.mxu0 0.0
    %1593 = vmatprep.subr.mxu0 0.0
    %1594 = vmatpush1.msra.mxu0 0.0
    %1595 = vmatprep.subr.mxu0 0.0
    %1596 = vmatpush1.msra.mxu0 0.0
    %1597 = vmatprep.subr.mxu0 0.0
    %1598 = vmatpush1.msra.mxu0 0.0
    %1599 = vmatprep.subr.mxu0 0.0
    %1600 = vmatpush1.msra.mxu0 0.0
    %1601 = vmatprep.subr.mxu0 0.0
    %1602 = vmatpush1.msra.mxu0 0.0
    %1603 = vmatprep.subr.mxu0 0.0
    %1604 = vmatpush1.msra.mxu0 0.0
    %1605 = vmatprep.subr.mxu0 0.0
    %1606 = vmatpush1.msra.mxu0 0.0
    %1607 = vmatprep.subr.mxu0 0.0
    %1608 = vmatpush1.msra.mxu0 0.0
    %1609 = vmatprep.subr.mxu0 0.0
    %1610 = vmatpush1.msra.mxu0 0.0
    %1611 = vmatprep.subr.mxu0 0.0
    %1612 = vmatpush1.msra.mxu0 0.0
    %1613 = vmatprep.subr.mxu0 0.0
    %1614 = vmatpush1.msra.mxu0 0.0
    %1615 = vmatprep.subr.mxu0 0.0
    %1616 = vmatpush1.msra.mxu0 0.0
    %1617 = vmatprep.subr.mxu0 0.0
    %1618 = vmatpush1.msra.mxu0 0.0
    %1619 = vmatprep.subr.mxu0 0.0
    %1620 = vmatpush1.msra.mxu0 0.0
    %1621 = vmatprep.subr.mxu0 0.0
    %1622 = vmatpush1.msra.mxu0 0.0
    %1623 = vmatprep.subr.mxu0 0.0
    %1624 = vmatpush1.msra.mxu0 0.0
    %1625 = vmatprep.subr.mxu0 0.0
    %1626 = vmatpush1.msra.mxu0 0.0
    %1627 = vmatprep.subr.mxu0 0.0
    %1628 = vmatpush1.msra.mxu0 0.0
    %1629 = vmatprep.subr.mxu0 0.0
    %1630 = vmatpush1.msra.mxu0 0.0
    %1631 = vmatprep.subr.mxu0 0.0
    %1632 = vmatpush1.msra.mxu0 0.0
    %1633 = vmatprep.subr.mxu0 0.0
    %1634 = vmatpush1.msra.mxu0 0.0
    %1635 = vmatprep.subr.mxu0 0.0
    %1636 = vmatpush1.msra.mxu0 0.0
    %1637 = vmatprep.subr.mxu0 0.0
    %1638 = vmatpush1.msra.mxu0 0.0
    %1639 = vmatprep.subr.mxu0 0.0
    %1640 = vmatpush1.msra.mxu0 0.0
    %1641 = vmatprep.subr.mxu0 0.0
    %1642 = vmatpush1.msra.mxu0 0.0
    %1643 = vmatprep.subr.mxu0 0.0
    %1644 = vmatpush1.msra.mxu0 0.0
    %1645 = vmatprep.subr.mxu0 0.0
    %1646 = vmatpush1.msra.mxu0 0.0
    %1647 = vmatprep.subr.mxu0 0.0
    %1648 = vmatpush1.msra.mxu0 0.0
    %1649 = vmatprep.mubr.f32.mxu0 0.0
    %v1650 = vand.u32 %v1429, 4294901760
    %v1651 = vsub.f32 %v1429, %v1650
    %1652 = vmatmul.mubr.f32.gmra.mrb[0].mxu0 %v1651
    %v1653 = vpop.f32.mrb[0].mxu0
    %v1654 = vadd.f32 %v1580, %v1653
    %v1655 = vpop.f32.mrb[0].mxu0
    %1656 = vdwg.mxu0
    %1657 = vmatprep.subr.mxu0 0.0
    %v1658 = vand.u32 %v50, 4294901760
    %1659 = vmatpush1.msra.mxu0 %v1658
    %1660 = vmatprep.subr.mxu0 0.0
    %1661 = vmatpush1.msra.mxu0 0.0
    %1662 = vmatprep.subr.mxu0 0.0
    %1663 = vmatpush1.msra.mxu0 0.0
    %1664 = vmatprep.subr.mxu0 0.0
    %1665 = vmatpush1.msra.mxu0 0.0
    %1666 = vmatprep.subr.mxu0 0.0
    %1667 = vmatpush1.msra.mxu0 0.0
    %1668 = vmatprep.subr.mxu0 0.0
    %1669 = vmatpush1.msra.mxu0 0.0
    %1670 = vmatprep.subr.mxu0 0.0
    %1671 = vmatpush1.msra.mxu0 0.0
    %1672 = vmatprep.subr.mxu0 0.0
    %1673 = vmatpush1.msra.mxu0 0.0
    %1674 = vmatprep.subr.mxu0 0.0
    %1675 = vmatpush1.msra.mxu0 0.0
    %1676 = vmatprep.subr.mxu0 0.0
    %1677 = vmatpush1.msra.mxu0 0.0
    %1678 = vmatprep.subr.mxu0 0.0
    %1679 = vmatpush1.msra.mxu0 0.0
    %1680 = vmatprep.subr.mxu0 0.0
    %1681 = vmatpush1.msra.mxu0 0.0
    %1682 = vmatprep.subr.mxu0 0.0
    %1683 = vmatpush1.msra.mxu0 0.0
    %1684 = vmatprep.subr.mxu0 0.0
    %1685 = vmatpush1.msra.mxu0 0.0
    %1686 = vmatprep.subr.mxu0 0.0
    %1687 = vmatpush1.msra.mxu0 0.0
    %1688 = vmatprep.subr.mxu0 0.0
    %1689 = vmatpush1.msra.mxu0 0.0
    %1690 = vmatprep.subr.mxu0 0.0
    %1691 = vmatpush1.msra.mxu0 0.0
    %1692 = vmatprep.subr.mxu0 0.0
    %1693 = vmatpush1.msra.mxu0 0.0
    %1694 = vmatprep.subr.mxu0 0.0
    %1695 = vmatpush1.msra.mxu0 0.0
    %1696 = vmatprep.subr.mxu0 0.0
    %1697 = vmatpush1.msra.mxu0 0.0
    %1698 = vmatprep.subr.mxu0 0.0
    %1699 = vmatpush1.msra.mxu0 0.0
    %1700 = vmatprep.subr.mxu0 0.0
    %1701 = vmatpush1.msra.mxu0 0.0
    %1702 = vmatprep.subr.mxu0 0.0
    %1703 = vmatpush1.msra.mxu0 0.0
    %1704 = vmatprep.subr.mxu0 0.0
    %1705 = vmatpush1.msra.mxu0 0.0
    %1706 = vmatprep.subr.mxu0 0.0
    %1707 = vmatpush1.msra.mxu0 0.0
    %1708 = vmatprep.subr.mxu0 0.0
    %1709 = vmatpush1.msra.mxu0 0.0
    %1710 = vmatprep.subr.mxu0 0.0
    %1711 = vmatpush1.msra.mxu0 0.0
    %1712 = vmatprep.subr.mxu0 0.0
    %1713 = vmatpush1.msra.mxu0 0.0
    %1714 = vmatprep.subr.mxu0 0.0
    %1715 = vmatpush1.msra.mxu0 0.0
    %1716 = vmatprep.subr.mxu0 0.0
    %1717 = vmatpush1.msra.mxu0 0.0
    %1718 = vmatprep.subr.mxu0 0.0
    %1719 = vmatpush1.msra.mxu0 0.0
    %1720 = vmatprep.subr.mxu0 0.0
    %1721 = vmatpush1.msra.mxu0 0.0
    %1722 = vmatprep.mubr.f32.mxu0 0.0
    %v1723 = vand.u32 %v1429, 4294901760
    %v1724 = vsub.f32 %v1429, %v1723
    %v1725 = vand.u32 %v1724, 4294901760
    %1726 = vmatmul.mubr.f32.gmra.mrb[0].mxu0 %v1725
    %v1727 = vpop.f32.mrb[0].mxu0
    %v1728 = vadd.f32 %v1654, %v1727
    %v1729 = vpop.f32.mrb[0].mxu0
    %1730 = vdwg.mxu0
    %1731 = vmatprep.subr.mxu0 0.0
    %v1732 = vand.u32 %v50, 4294901760
    %v1733 = vsub.f32 %v50, %v1732
    %v1734 = vand.u32 %v1733, 4294901760
    %1735 = vmatpush1.msra.mxu0 %v1734
    %1736 = vmatprep.subr.mxu0 0.0
    %1737 = vmatpush1.msra.mxu0 0.0
    %1738 = vmatprep.subr.mxu0 0.0
    %1739 = vmatpush1.msra.mxu0 0.0
    %1740 = vmatprep.subr.mxu0 0.0
    %1741 = vmatpush1.msra.mxu0 0.0
    %1742 = vmatprep.subr.mxu0 0.0
    %1743 = vmatpush1.msra.mxu0 0.0
    %1744 = vmatprep.subr.mxu0 0.0
    %1745 = vmatpush1.msra.mxu0 0.0
    %1746 = vmatprep.subr.mxu0 0.0
    %1747 = vmatpush1.msra.mxu0 0.0
    %1748 = vmatprep.subr.mxu0 0.0
    %1749 = vmatpush1.msra.mxu0 0.0
    %1750 = vmatprep.subr.mxu0 0.0
    %1751 = vmatpush1.msra.mxu0 0.0
    %1752 = vmatprep.subr.mxu0 0.0
    %1753 = vmatpush1.msra.mxu0 0.0
    %1754 = vmatprep.subr.mxu0 0.0
    %1755 = vmatpush1.msra.mxu0 0.0
    %1756 = vmatprep.subr.mxu0 0.0
    %1757 = vmatpush1.msra.mxu0 0.0
    %1758 = vmatprep.subr.mxu0 0.0
    %1759 = vmatpush1.msra.mxu0 0.0
    %1760 = vmatprep.subr.mxu0 0.0
    %1761 = vmatpush1.msra.mxu0 0.0
    %1762 = vmatprep.subr.mxu0 0.0
    %1763 = vmatpush1.msra.mxu0 0.0
    %1764 = vmatprep.subr.mxu0 0.0
    %1765 = vmatpush1.msra.mxu0 0.0
    %1766 = vmatprep.subr.mxu0 0.0
    %1767 = vmatpush1.msra.mxu0 0.0
    %1768 = vmatprep.subr.mxu0 0.0
    %1769 = vmatpush1.msra.mxu0 0.0
    %1770 = vmatprep.subr.mxu0 0.0
    %1771 = vmatpush1.msra.mxu0 0.0
    %1772 = vmatprep.subr.mxu0 0.0
    %1773 = vmatpush1.msra.mxu0 0.0
    %1774 = vmatprep.subr.mxu0 0.0
    %1775 = vmatpush1.msra.mxu0 0.0
    %1776 = vmatprep.subr.mxu0 0.0
    %1777 = vmatpush1.msra.mxu0 0.0
    %1778 = vmatprep.subr.mxu0 0.0
    %1779 = vmatpush1.msra.mxu0 0.0
    %1780 = vmatprep.subr.mxu0 0.0
    %1781 = vmatpush1.msra.mxu0 0.0
    %1782 = vmatprep.subr.mxu0 0.0
    %1783 = vmatpush1.msra.mxu0 0.0
    %1784 = vmatprep.subr.mxu0 0.0
    %1785 = vmatpush1.msra.mxu0 0.0
    %1786 = vmatprep.subr.mxu0 0.0
    %1787 = vmatpush1.msra.mxu0 0.0
    %1788 = vmatprep.subr.mxu0 0.0
    %1789 = vmatpush1.msra.mxu0 0.0
    %1790 = vmatprep.subr.mxu0 0.0
    %1791 = vmatpush1.msra.mxu0 0.0
    %1792 = vmatprep.subr.mxu0 0.0
    %1793 = vmatpush1.msra.mxu0 0.0
    %1794 = vmatprep.subr.mxu0 0.0
    %1795 = vmatpush1.msra.mxu0 0.0
    %1796 = vmatprep.subr.mxu0 0.0
    %1797 = vmatpush1.msra.mxu0 0.0
    %1798 = vmatprep.mubr.f32.mxu0 0.0
    %v1799 = vand.u32 %v1429, 4294901760
    %1800 = vmatmul.mubr.f32.gmra.mrb[0].mxu0 %v1799
    %v1801 = vpop.f32.mrb[0].mxu0
    %v1802 = vadd.f32 %v1728, %v1801
    %v1803 = vpop.f32.mrb[0].mxu0
    %1804 = vdwg.mxu0
    %1805 = vmatprep.subr.mxu0 0.0
    %v1806 = vand.u32 %v50, 4294901760
    %1807 = vmatpush1.msra.mxu0 %v1806
    %1808 = vmatprep.subr.mxu0 0.0
    %1809 = vmatpush1.msra.mxu0 0.0
    %1810 = vmatprep.subr.mxu0 0.0
    %1811 = vmatpush1.msra.mxu0 0.0
    %1812 = vmatprep.subr.mxu0 0.0
    %1813 = vmatpush1.msra.mxu0 0.0
    %1814 = vmatprep.subr.mxu0 0.0
    %1815 = vmatpush1.msra.mxu0 0.0
    %1816 = vmatprep.subr.mxu0 0.0
    %1817 = vmatpush1.msra.mxu0 0.0
    %1818 = vmatprep.subr.mxu0 0.0
    %1819 = vmatpush1.msra.mxu0 0.0
    %1820 = vmatprep.subr.mxu0 0.0
    %1821 = vmatpush1.msra.mxu0 0.0
    %1822 = vmatprep.subr.mxu0 0.0
    %1823 = vmatpush1.msra.mxu0 0.0
    %1824 = vmatprep.subr.mxu0 0.0
    %1825 = vmatpush1.msra.mxu0 0.0
    %1826 = vmatprep.subr.mxu0 0.0
    %1827 = vmatpush1.msra.mxu0 0.0
    %1828 = vmatprep.subr.mxu0 0.0
    %1829 = vmatpush1.msra.mxu0 0.0
    %1830 = vmatprep.subr.mxu0 0.0
    %1831 = vmatpush1.msra.mxu0 0.0
    %1832 = vmatprep.subr.mxu0 0.0
    %1833 = vmatpush1.msra.mxu0 0.0
    %1834 = vmatprep.subr.mxu0 0.0
    %1835 = vmatpush1.msra.mxu0 0.0
    %1836 = vmatprep.subr.mxu0 0.0
    %1837 = vmatpush1.msra.mxu0 0.0
    %1838 = vmatprep.subr.mxu0 0.0
    %1839 = vmatpush1.msra.mxu0 0.0
    %1840 = vmatprep.subr.mxu0 0.0
    %1841 = vmatpush1.msra.mxu0 0.0
    %1842 = vmatprep.subr.mxu0 0.0
    %1843 = vmatpush1.msra.mxu0 0.0
    %1844 = vmatprep.subr.mxu0 0.0
    %1845 = vmatpush1.msra.mxu0 0.0
    %1846 = vmatprep.subr.mxu0 0.0
    %1847 = vmatpush1.msra.mxu0 0.0
    %1848 = vmatprep.subr.mxu0 0.0
    %1849 = vmatpush1.msra.mxu0 0.0
    %1850 = vmatprep.subr.mxu0 0.0
    %1851 = vmatpush1.msra.mxu0 0.0
    %1852 = vmatprep.subr.mxu0 0.0
    %1853 = vmatpush1.msra.mxu0 0.0
    %1854 = vmatprep.subr.mxu0 0.0
    %1855 = vmatpush1.msra.mxu0 0.0
    %1856 = vmatprep.subr.mxu0 0.0
    %1857 = vmatpush1.msra.mxu0 0.0
    %1858 = vmatprep.subr.mxu0 0.0
    %1859 = vmatpush1.msra.mxu0 0.0
    %1860 = vmatprep.subr.mxu0 0.0
    %1861 = vmatpush1.msra.mxu0 0.0
    %1862 = vmatprep.subr.mxu0 0.0
    %1863 = vmatpush1.msra.mxu0 0.0
    %1864 = vmatprep.subr.mxu0 0.0
    %1865 = vmatpush1.msra.mxu0 0.0
    %1866 = vmatprep.subr.mxu0 0.0
    %1867 = vmatpush1.msra.mxu0 0.0
    %1868 = vmatprep.subr.mxu0 0.0
    %1869 = vmatpush1.msra.mxu0 0.0
    %1870 = vmatprep.mubr.f32.mxu0 0.0
    %v1871 = vand.u32 %v1429, 4294901760
    %1872 = vmatmul.mubr.f32.gmra.mrb[0].mxu0 %v1871
    %v1873 = vpop.f32.mrb[0].mxu0
    %v1874 = vadd.f32 %v1802, %v1873
    %v1875 = vpop.f32.mrb[0].mxu0
    %1876 = vdwg.mxu0
    %v1877 = vld [vmem:[%s1 + $0x4] sm:$0x1]
    %v1878 = vld [vmem:[%s1 + $0xc] sm:$0x1]
    %v1881 = vrot.slane %v1878, 7
    %v1882 = vsel %vm64, %v1881, %v1877
    %v1883 = vsel %vm66, %v1882, 0
    %1885 = vmatprep.subr.mxu0 0.0
    %v1886 = vand.u32 %v50, 4294901760
    %1887 = vmatpush1.msra.mxu0 %v1886
    %1888 = vmatprep.subr.mxu0 0.0
    %1889 = vmatpush1.msra.mxu0 0.0
    %1890 = vmatprep.subr.mxu0 0.0
    %1891 = vmatpush1.msra.mxu0 0.0
    %1892 = vmatprep.subr.mxu0 0.0
    %1893 = vmatpush1.msra.mxu0 0.0
    %1894 = vmatprep.subr.mxu0 0.0
    %1895 = vmatpush1.msra.mxu0 0.0
    %1896 = vmatprep.subr.mxu0 0.0
    %1897 = vmatpush1.msra.mxu0 0.0
    %1898 = vmatprep.subr.mxu0 0.0
    %1899 = vmatpush1.msra.mxu0 0.0
    %1900 = vmatprep.subr.mxu0 0.0
    %1901 = vmatpush1.msra.mxu0 0.0
    %1902 = vmatprep.subr.mxu0 0.0
    %1903 = vmatpush1.msra.mxu0 0.0
    %1904 = vmatprep.subr.mxu0 0.0
    %1905 = vmatpush1.msra.mxu0 0.0
    %1906 = vmatprep.subr.mxu0 0.0
    %1907 = vmatpush1.msra.mxu0 0.0
    %1908 = vmatprep.subr.mxu0 0.0
    %1909 = vmatpush1.msra.mxu0 0.0
    %1910 = vmatprep.subr.mxu0 0.0
    %1911 = vmatpush1.msra.mxu0 0.0
    %1912 = vmatprep.subr.mxu0 0.0
    %1913 = vmatpush1.msra.mxu0 0.0
    %1914 = vmatprep.subr.mxu0 0.0
    %1915 = vmatpush1.msra.mxu0 0.0
    %1916 = vmatprep.subr.mxu0 0.0
    %1917 = vmatpush1.msra.mxu0 0.0
    %1918 = vmatprep.subr.mxu0 0.0
    %1919 = vmatpush1.msra.mxu0 0.0
    %1920 = vmatprep.subr.mxu0 0.0
    %1921 = vmatpush1.msra.mxu0 0.0
    %1922 = vmatprep.subr.mxu0 0.0
    %1923 = vmatpush1.msra.mxu0 0.0
    %1924 = vmatprep.subr.mxu0 0.0
    %1925 = vmatpush1.msra.mxu0 0.0
    %1926 = vmatprep.subr.mxu0 0.0
    %1927 = vmatpush1.msra.mxu0 0.0
    %1928 = vmatprep.subr.mxu0 0.0
    %1929 = vmatpush1.msra.mxu0 0.0
    %1930 = vmatprep.subr.mxu0 0.0
    %1931 = vmatpush1.msra.mxu0 0.0
    %1932 = vmatprep.subr.mxu0 0.0
    %1933 = vmatpush1.msra.mxu0 0.0
    %1934 = vmatprep.subr.mxu0 0.0
    %1935 = vmatpush1.msra.mxu0 0.0
    %1936 = vmatprep.subr.mxu0 0.0
    %1937 = vmatpush1.msra.mxu0 0.0
    %1938 = vmatprep.subr.mxu0 0.0
    %1939 = vmatpush1.msra.mxu0 0.0
    %1940 = vmatprep.subr.mxu0 0.0
    %1941 = vmatpush1.msra.mxu0 0.0
    %1942 = vmatprep.subr.mxu0 0.0
    %1943 = vmatpush1.msra.mxu0 0.0
    %1944 = vmatprep.subr.mxu0 0.0
    %1945 = vmatpush1.msra.mxu0 0.0
    %1946 = vmatprep.subr.mxu0 0.0
    %1947 = vmatpush1.msra.mxu0 0.0
    %1948 = vmatprep.subr.mxu0 0.0
    %1949 = vmatpush1.msra.mxu0 0.0
    %1950 = vmatprep.mubr.f32.mxu0 0.0
    %v1951 = vand.u32 %v1883, 4294901760
    %v1952 = vsub.f32 %v1883, %v1951
    %v1953 = vand.u32 %v1952, 4294901760
    %v1954 = vsub.f32 %v1952, %v1953
    %v1955 = vand.u32 %v1954, 4294901760
    %1956 = vmatmul.mubr.f32.gmra.mrb[0].mxu0 %v1955
    %v1957 = vpop.f32.mrb[0].mxu0
    %v1958 = vadd.f32 %v59, %v1957
    %v1959 = vpop.f32.mrb[0].mxu0
    %1960 = vdwg.mxu0
    %1961 = vmatprep.subr.mxu0 0.0
    %v1962 = vand.u32 %v50, 4294901760
    %v1963 = vsub.f32 %v50, %v1962
    %v1964 = vand.u32 %v1963, 4294901760
    %v1965 = vsub.f32 %v1963, %v1964
    %v1966 = vand.u32 %v1965, 4294901760
    %1967 = vmatpush1.msra.mxu0 %v1966
    %1968 = vmatprep.subr.mxu0 0.0
    %1969 = vmatpush1.msra.mxu0 0.0
    %1970 = vmatprep.subr.mxu0 0.0
    %1971 = vmatpush1.msra.mxu0 0.0
    %1972 = vmatprep.subr.mxu0 0.0
    %1973 = vmatpush1.msra.mxu0 0.0
    %1974 = vmatprep.subr.mxu0 0.0
    %1975 = vmatpush1.msra.mxu0 0.0
    %1976 = vmatprep.subr.mxu0 0.0
    %1977 = vmatpush1.msra.mxu0 0.0
    %1978 = vmatprep.subr.mxu0 0.0
    %1979 = vmatpush1.msra.mxu0 0.0
    %1980 = vmatprep.subr.mxu0 0.0
    %1981 = vmatpush1.msra.mxu0 0.0
    %1982 = vmatprep.subr.mxu0 0.0
    %1983 = vmatpush1.msra.mxu0 0.0
    %1984 = vmatprep.subr.mxu0 0.0
    %1985 = vmatpush1.msra.mxu0 0.0
    %1986 = vmatprep.subr.mxu0 0.0
    %1987 = vmatpush1.msra.mxu0 0.0
    %1988 = vmatprep.subr.mxu0 0.0
    %1989 = vmatpush1.msra.mxu0 0.0
    %1990 = vmatprep.subr.mxu0 0.0
    %1991 = vmatpush1.msra.mxu0 0.0
    %1992 = vmatprep.subr.mxu0 0.0
    %1993 = vmatpush1.msra.mxu0 0.0
    %1994 = vmatprep.subr.mxu0 0.0
    %1995 = vmatpush1.msra.mxu0 0.0
    %1996 = vmatprep.subr.mxu0 0.0
    %1997 = vmatpush1.msra.mxu0 0.0
    %1998 = vmatprep.subr.mxu0 0.0
    %1999 = vmatpush1.msra.mxu0 0.0
    %2000 = vmatprep.subr.mxu0 0.0
    %2001 = vmatpush1.msra.mxu0 0.0
    %2002 = vmatprep.subr.mxu0 0.0
    %2003 = vmatpush1.msra.mxu0 0.0
    %2004 = vmatprep.subr.mxu0 0.0
    %2005 = vmatpush1.msra.mxu0 0.0
    %2006 = vmatprep.subr.mxu0 0.0
    %2007 = vmatpush1.msra.mxu0 0.0
    %2008 = vmatprep.subr.mxu0 0.0
    %2009 = vmatpush1.msra.mxu0 0.0
    %2010 = vmatprep.subr.mxu0 0.0
    %2011 = vmatpush1.msra.mxu0 0.0
    %2012 = vmatprep.subr.mxu0 0.0
    %2013 = vmatpush1.msra.mxu0 0.0
    %2014 = vmatprep.subr.mxu0 0.0
    %2015 = vmatpush1.msra.mxu0 0.0
    %2016 = vmatprep.subr.mxu0 0.0
    %2017 = vmatpush1.msra.mxu0 0.0
    %2018 = vmatprep.subr.mxu0 0.0
    %2019 = vmatpush1.msra.mxu0 0.0
    %2020 = vmatprep.subr.mxu0 0.0
    %2021 = vmatpush1.msra.mxu0 0.0
    %2022 = vmatprep.subr.mxu0 0.0
    %2023 = vmatpush1.msra.mxu0 0.0
    %2024 = vmatprep.subr.mxu0 0.0
    %2025 = vmatpush1.msra.mxu0 0.0
    %2026 = vmatprep.subr.mxu0 0.0
    %2027 = vmatpush1.msra.mxu0 0.0
    %2028 = vmatprep.subr.mxu0 0.0
    %2029 = vmatpush1.msra.mxu0 0.0
    %2030 = vmatprep.mubr.f32.mxu0 0.0
    %v2031 = vand.u32 %v1883, 4294901760
    %2032 = vmatmul.mubr.f32.gmra.mrb[0].mxu0 %v2031
    %v2033 = vpop.f32.mrb[0].mxu0
    %v2034 = vadd.f32 %v1958, %v2033
    %v2035 = vpop.f32.mrb[0].mxu0
    %2036 = vdwg.mxu0
    %2037 = vmatprep.subr.mxu0 0.0
    %v2038 = vand.u32 %v50, 4294901760
    %v2039 = vsub.f32 %v50, %v2038
    %2040 = vmatpush1.msra.mxu0 %v2039
    %2041 = vmatprep.subr.mxu0 0.0
    %2042 = vmatpush1.msra.mxu0 0.0
    %2043 = vmatprep.subr.mxu0 0.0
    %2044 = vmatpush1.msra.mxu0 0.0
    %2045 = vmatprep.subr.mxu0 0.0
    %2046 = vmatpush1.msra.mxu0 0.0
    %2047 = vmatprep.subr.mxu0 0.0
    %2048 = vmatpush1.msra.mxu0 0.0
    %2049 = vmatprep.subr.mxu0 0.0
    %2050 = vmatpush1.msra.mxu0 0.0
    %2051 = vmatprep.subr.mxu0 0.0
    %2052 = vmatpush1.msra.mxu0 0.0
    %2053 = vmatprep.subr.mxu0 0.0
    %2054 = vmatpush1.msra.mxu0 0.0
    %2055 = vmatprep.subr.mxu0 0.0
    %2056 = vmatpush1.msra.mxu0 0.0
    %2057 = vmatprep.subr.mxu0 0.0
    %2058 = vmatpush1.msra.mxu0 0.0
    %2059 = vmatprep.subr.mxu0 0.0
    %2060 = vmatpush1.msra.mxu0 0.0
    %2061 = vmatprep.subr.mxu0 0.0
    %2062 = vmatpush1.msra.mxu0 0.0
    %2063 = vmatprep.subr.mxu0 0.0
    %2064 = vmatpush1.msra.mxu0 0.0
    %2065 = vmatprep.subr.mxu0 0.0
    %2066 = vmatpush1.msra.mxu0 0.0
    %2067 = vmatprep.subr.mxu0 0.0
    %2068 = vmatpush1.msra.mxu0 0.0
    %2069 = vmatprep.subr.mxu0 0.0
    %2070 = vmatpush1.msra.mxu0 0.0
    %2071 = vmatprep.subr.mxu0 0.0
    %2072 = vmatpush1.msra.mxu0 0.0
    %2073 = vmatprep.subr.mxu0 0.0
    %2074 = vmatpush1.msra.mxu0 0.0
    %2075 = vmatprep.subr.mxu0 0.0
    %2076 = vmatpush1.msra.mxu0 0.0
    %2077 = vmatprep.subr.mxu0 0.0
    %2078 = vmatpush1.msra.mxu0 0.0
    %2079 = vmatprep.subr.mxu0 0.0
    %2080 = vmatpush1.msra.mxu0 0.0
    %2081 = vmatprep.subr.mxu0 0.0
    %2082 = vmatpush1.msra.mxu0 0.0
    %2083 = vmatprep.subr.mxu0 0.0
    %2084 = vmatpush1.msra.mxu0 0.0
    %2085 = vmatprep.subr.mxu0 0.0
    %2086 = vmatpush1.msra.mxu0 0.0
    %2087 = vmatprep.subr.mxu0 0.0
    %2088 = vmatpush1.msra.mxu0 0.0
    %2089 = vmatprep.subr.mxu0 0.0
    %2090 = vmatpush1.msra.mxu0 0.0
    %2091 = vmatprep.subr.mxu0 0.0
    %2092 = vmatpush1.msra.mxu0 0.0
    %2093 = vmatprep.subr.mxu0 0.0
    %2094 = vmatpush1.msra.mxu0 0.0
    %2095 = vmatprep.subr.mxu0 0.0
    %2096 = vmatpush1.msra.mxu0 0.0
    %2097 = vmatprep.subr.mxu0 0.0
    %2098 = vmatpush1.msra.mxu0 0.0
    %2099 = vmatprep.subr.mxu0 0.0
    %2100 = vmatpush1.msra.mxu0 0.0
    %2101 = vmatprep.subr.mxu0 0.0
    %2102 = vmatpush1.msra.mxu0 0.0
    %2103 = vmatprep.mubr.f32.mxu0 0.0
    %v2104 = vand.u32 %v1883, 4294901760
    %v2105 = vsub.f32 %v1883, %v2104
    %2106 = vmatmul.mubr.f32.gmra.mrb[0].mxu0 %v2105
    %v2107 = vpop.f32.mrb[0].mxu0
    %v2108 = vadd.f32 %v2034, %v2107
    %v2109 = vpop.f32.mrb[0].mxu0
    %2110 = vdwg.mxu0
    %2111 = vmatprep.subr.mxu0 0.0
    %v2112 = vand.u32 %v50, 4294901760
    %2113 = vmatpush1.msra.mxu0 %v2112
    %2114 = vmatprep.subr.mxu0 0.0
    %2115 = vmatpush1.msra.mxu0 0.0
    %2116 = vmatprep.subr.mxu0 0.0
    %2117 = vmatpush1.msra.mxu0 0.0
    %2118 = vmatprep.subr.mxu0 0.0
    %2119 = vmatpush1.msra.mxu0 0.0
    %2120 = vmatprep.subr.mxu0 0.0
    %2121 = vmatpush1.msra.mxu0 0.0
    %2122 = vmatprep.subr.mxu0 0.0
    %2123 = vmatpush1.msra.mxu0 0.0
    %2124 = vmatprep.subr.mxu0 0.0
    %2125 = vmatpush1.msra.mxu0 0.0
    %2126 = vmatprep.subr.mxu0 0.0
    %2127 = vmatpush1.msra.mxu0 0.0
    %2128 = vmatprep.subr.mxu0 0.0
    %2129 = vmatpush1.msra.mxu0 0.0
    %2130 = vmatprep.subr.mxu0 0.0
    %2131 = vmatpush1.msra.mxu0 0.0
    %2132 = vmatprep.subr.mxu0 0.0
    %2133 = vmatpush1.msra.mxu0 0.0
    %2134 = vmatprep.subr.mxu0 0.0
    %2135 = vmatpush1.msra.mxu0 0.0
    %2136 = vmatprep.subr.mxu0 0.0
    %2137 = vmatpush1.msra.mxu0 0.0
    %2138 = vmatprep.subr.mxu0 0.0
    %2139 = vmatpush1.msra.mxu0 0.0
    %2140 = vmatprep.subr.mxu0 0.0
    %2141 = vmatpush1.msra.mxu0 0.0
    %2142 = vmatprep.subr.mxu0 0.0
    %2143 = vmatpush1.msra.mxu0 0.0
    %2144 = vmatprep.subr.mxu0 0.0
    %2145 = vmatpush1.msra.mxu0 0.0
    %2146 = vmatprep.subr.mxu0 0.0
    %2147 = vmatpush1.msra.mxu0 0.0
    %2148 = vmatprep.subr.mxu0 0.0
    %2149 = vmatpush1.msra.mxu0 0.0
    %2150 = vmatprep.subr.mxu0 0.0
    %2151 = vmatpush1.msra.mxu0 0.0
    %2152 = vmatprep.subr.mxu0 0.0
    %2153 = vmatpush1.msra.mxu0 0.0
    %2154 = vmatprep.subr.mxu0 0.0
    %2155 = vmatpush1.msra.mxu0 0.0
    %2156 = vmatprep.subr.mxu0 0.0
    %2157 = vmatpush1.msra.mxu0 0.0
    %2158 = vmatprep.subr.mxu0 0.0
    %2159 = vmatpush1.msra.mxu0 0.0
    %2160 = vmatprep.subr.mxu0 0.0
    %2161 = vmatpush1.msra.mxu0 0.0
    %2162 = vmatprep.subr.mxu0 0.0
    %2163 = vmatpush1.msra.mxu0 0.0
    %2164 = vmatprep.subr.mxu0 0.0
    %2165 = vmatpush1.msra.mxu0 0.0
    %2166 = vmatprep.subr.mxu0 0.0
    %2167 = vmatpush1.msra.mxu0 0.0
    %2168 = vmatprep.subr.mxu0 0.0
    %2169 = vmatpush1.msra.mxu0 0.0
    %2170 = vmatprep.subr.mxu0 0.0
    %2171 = vmatpush1.msra.mxu0 0.0
    %2172 = vmatprep.subr.mxu0 0.0
    %2173 = vmatpush1.msra.mxu0 0.0
    %2174 = vmatprep.subr.mxu0 0.0
    %2175 = vmatpush1.msra.mxu0 0.0
    %2176 = vmatprep.mubr.f32.mxu0 0.0
    %v2177 = vand.u32 %v1883, 4294901760
    %v2178 = vsub.f32 %v1883, %v2177
    %v2179 = vand.u32 %v2178, 4294901760
    %2180 = vmatmul.mubr.f32.gmra.mrb[0].mxu0 %v2179
    %v2181 = vpop.f32.mrb[0].mxu0
    %v2182 = vadd.f32 %v2108, %v2181
    %v2183 = vpop.f32.mrb[0].mxu0
    %2184 = vdwg.mxu0
    %2185 = vmatprep.subr.mxu0 0.0
    %v2186 = vand.u32 %v50, 4294901760
    %v2187 = vsub.f32 %v50, %v2186
    %v2188 = vand.u32 %v2187, 4294901760
    %2189 = vmatpush1.msra.mxu0 %v2188
    %2190 = vmatprep.subr.mxu0 0.0
    %2191 = vmatpush1.msra.mxu0 0.0
    %2192 = vmatprep.subr.mxu0 0.0
    %2193 = vmatpush1.msra.mxu0 0.0
    %2194 = vmatprep.subr.mxu0 0.0
    %2195 = vmatpush1.msra.mxu0 0.0
    %2196 = vmatprep.subr.mxu0 0.0
    %2197 = vmatpush1.msra.mxu0 0.0
    %2198 = vmatprep.subr.mxu0 0.0
    %2199 = vmatpush1.msra.mxu0 0.0
    %2200 = vmatprep.subr.mxu0 0.0
    %2201 = vmatpush1.msra.mxu0 0.0
    %2202 = vmatprep.subr.mxu0 0.0
    %2203 = vmatpush1.msra.mxu0 0.0
    %2204 = vmatprep.subr.mxu0 0.0
    %2205 = vmatpush1.msra.mxu0 0.0
    %2206 = vmatprep.subr.mxu0 0.0
    %2207 = vmatpush1.msra.mxu0 0.0
    %2208 = vmatprep.subr.mxu0 0.0
    %2209 = vmatpush1.msra.mxu0 0.0
    %2210 = vmatprep.subr.mxu0 0.0
    %2211 = vmatpush1.msra.mxu0 0.0
    %2212 = vmatprep.subr.mxu0 0.0
    %2213 = vmatpush1.msra.mxu0 0.0
    %2214 = vmatprep.subr.mxu0 0.0
    %2215 = vmatpush1.msra.mxu0 0.0
    %2216 = vmatprep.subr.mxu0 0.0
    %2217 = vmatpush1.msra.mxu0 0.0
    %2218 = vmatprep.subr.mxu0 0.0
    %2219 = vmatpush1.msra.mxu0 0.0
    %2220 = vmatprep.subr.mxu0 0.0
    %2221 = vmatpush1.msra.mxu0 0.0
    %2222 = vmatprep.subr.mxu0 0.0
    %2223 = vmatpush1.msra.mxu0 0.0
    %2224 = vmatprep.subr.mxu0 0.0
    %2225 = vmatpush1.msra.mxu0 0.0
    %2226 = vmatprep.subr.mxu0 0.0
    %2227 = vmatpush1.msra.mxu0 0.0
    %2228 = vmatprep.subr.mxu0 0.0
    %2229 = vmatpush1.msra.mxu0 0.0
    %2230 = vmatprep.subr.mxu0 0.0
    %2231 = vmatpush1.msra.mxu0 0.0
    %2232 = vmatprep.subr.mxu0 0.0
    %2233 = vmatpush1.msra.mxu0 0.0
    %2234 = vmatprep.subr.mxu0 0.0
    %2235 = vmatpush1.msra.mxu0 0.0
    %2236 = vmatprep.subr.mxu0 0.0
    %2237 = vmatpush1.msra.mxu0 0.0
    %2238 = vmatprep.subr.mxu0 0.0
    %2239 = vmatpush1.msra.mxu0 0.0
    %2240 = vmatprep.subr.mxu0 0.0
    %2241 = vmatpush1.msra.mxu0 0.0
    %2242 = vmatprep.subr.mxu0 0.0
    %2243 = vmatpush1.msra.mxu0 0.0
    %2244 = vmatprep.subr.mxu0 0.0
    %2245 = vmatpush1.msra.mxu0 0.0
    %2246 = vmatprep.subr.mxu0 0.0
    %2247 = vmatpush1.msra.mxu0 0.0
    %2248 = vmatprep.subr.mxu0 0.0
    %2249 = vmatpush1.msra.mxu0 0.0
    %2250 = vmatprep.subr.mxu0 0.0
    %2251 = vmatpush1.msra.mxu0 0.0
    %2252 = vmatprep.mubr.f32.mxu0 0.0
    %v2253 = vand.u32 %v1883, 4294901760
    %2254 = vmatmul.mubr.f32.gmra.mrb[0].mxu0 %v2253
    %v2255 = vpop.f32.mrb[0].mxu0
    %v2256 = vadd.f32 %v2182, %v2255
    %v2257 = vpop.f32.mrb[0].mxu0
    %2258 = vdwg.mxu0
    %2259 = vmatprep.subr.mxu0 0.0
    %v2260 = vand.u32 %v50, 4294901760
    %2261 = vmatpush1.msra.mxu0 %v2260
    %2262 = vmatprep.subr.mxu0 0.0
    %2263 = vmatpush1.msra.mxu0 0.0
    %2264 = vmatprep.subr.mxu0 0.0
    %2265 = vmatpush1.msra.mxu0 0.0
    %2266 = vmatprep.subr.mxu0 0.0
    %2267 = vmatpush1.msra.mxu0 0.0
    %2268 = vmatprep.subr.mxu0 0.0
    %2269 = vmatpush1.msra.mxu0 0.0
    %2270 = vmatprep.subr.mxu0 0.0
    %2271 = vmatpush1.msra.mxu0 0.0
    %2272 = vmatprep.subr.mxu0 0.0
    %2273 = vmatpush1.msra.mxu0 0.0
    %2274 = vmatprep.subr.mxu0 0.0
    %2275 = vmatpush1.msra.mxu0 0.0
    %2276 = vmatprep.subr.mxu0 0.0
    %2277 = vmatpush1.msra.mxu0 0.0
    %2278 = vmatprep.subr.mxu0 0.0
    %2279 = vmatpush1.msra.mxu0 0.0
    %2280 = vmatprep.subr.mxu0 0.0
    %2281 = vmatpush1.msra.mxu0 0.0
    %2282 = vmatprep.subr.mxu0 0.0
    %2283 = vmatpush1.msra.mxu0 0.0
    %2284 = vmatprep.subr.mxu0 0.0
    %2285 = vmatpush1.msra.mxu0 0.0
    %2286 = vmatprep.subr.mxu0 0.0
    %2287 = vmatpush1.msra.mxu0 0.0
    %2288 = vmatprep.subr.mxu0 0.0
    %2289 = vmatpush1.msra.mxu0 0.0
    %2290 = vmatprep.subr.mxu0 0.0
    %2291 = vmatpush1.msra.mxu0 0.0
    %2292 = vmatprep.subr.mxu0 0.0
    %2293 = vmatpush1.msra.mxu0 0.0
    %2294 = vmatprep.subr.mxu0 0.0
    %2295 = vmatpush1.msra.mxu0 0.0
    %2296 = vmatprep.subr.mxu0 0.0
    %2297 = vmatpush1.msra.mxu0 0.0
    %2298 = vmatprep.subr.mxu0 0.0
    %2299 = vmatpush1.msra.mxu0 0.0
    %2300 = vmatprep.subr.mxu0 0.0
    %2301 = vmatpush1.msra.mxu0 0.0
    %2302 = vmatprep.subr.mxu0 0.0
    %2303 = vmatpush1.msra.mxu0 0.0
    %2304 = vmatprep.subr.mxu0 0.0
    %2305 = vmatpush1.msra.mxu0 0.0
    %2306 = vmatprep.subr.mxu0 0.0
    %2307 = vmatpush1.msra.mxu0 0.0
    %2308 = vmatprep.subr.mxu0 0.0
    %2309 = vmatpush1.msra.mxu0 0.0
    %2310 = vmatprep.subr.mxu0 0.0
    %2311 = vmatpush1.msra.mxu0 0.0
    %2312 = vmatprep.subr.mxu0 0.0
    %2313 = vmatpush1.msra.mxu0 0.0
    %2314 = vmatprep.subr.mxu0 0.0
    %2315 = vmatpush1.msra.mxu0 0.0
    %2316 = vmatprep.subr.mxu0 0.0
    %2317 = vmatpush1.msra.mxu0 0.0
    %2318 = vmatprep.subr.mxu0 0.0
    %2319 = vmatpush1.msra.mxu0 0.0
    %2320 = vmatprep.subr.mxu0 0.0
    %2321 = vmatpush1.msra.mxu0 0.0
    %2322 = vmatprep.subr.mxu0 0.0
    %2323 = vmatpush1.msra.mxu0 0.0
    %2324 = vmatprep.mubr.f32.mxu0 0.0
    %v2325 = vand.u32 %v1883, 4294901760
    %2326 = vmatmul.mubr.f32.gmra.mrb[0].mxu0 %v2325
    %v2327 = vpop.f32.mrb[0].mxu0
    %v2328 = vadd.f32 %v2256, %v2327
    %v2329 = vpop.f32.mrb[0].mxu0
    %2330 = vdwg.mxu0
    %v2331 = vld [vmem:[%s1 + $0x5] sm:$0x1]
    %v2332 = vld [vmem:[%s1 + $0xd] sm:$0x1]
    %v2335 = vrot.slane %v2332, 7
    %v2336 = vsel %vm64, %v2335, %v2331
    %v2337 = vsel %vm66, %v2336, 0
    %2339 = vmatprep.subr.mxu0 0.0
    %v2340 = vand.u32 %v50, 4294901760
    %2341 = vmatpush1.msra.mxu0 %v2340
    %2342 = vmatprep.subr.mxu0 0.0
    %2343 = vmatpush1.msra.mxu0 0.0
    %2344 = vmatprep.subr.mxu0 0.0
    %2345 = vmatpush1.msra.mxu0 0.0
    %2346 = vmatprep.subr.mxu0 0.0
    %2347 = vmatpush1.msra.mxu0 0.0
    %2348 = vmatprep.subr.mxu0 0.0
    %2349 = vmatpush1.msra.mxu0 0.0
    %2350 = vmatprep.subr.mxu0 0.0
    %2351 = vmatpush1.msra.mxu0 0.0
    %2352 = vmatprep.subr.mxu0 0.0
    %2353 = vmatpush1.msra.mxu0 0.0
    %2354 = vmatprep.subr.mxu0 0.0
    %2355 = vmatpush1.msra.mxu0 0.0
    %2356 = vmatprep.subr.mxu0 0.0
    %2357 = vmatpush1.msra.mxu0 0.0
    %2358 = vmatprep.subr.mxu0 0.0
    %2359 = vmatpush1.msra.mxu0 0.0
    %2360 = vmatprep.subr.mxu0 0.0
    %2361 = vmatpush1.msra.mxu0 0.0
    %2362 = vmatprep.subr.mxu0 0.0
    %2363 = vmatpush1.msra.mxu0 0.0
    %2364 = vmatprep.subr.mxu0 0.0
    %2365 = vmatpush1.msra.mxu0 0.0
    %2366 = vmatprep.subr.mxu0 0.0
    %2367 = vmatpush1.msra.mxu0 0.0
    %2368 = vmatprep.subr.mxu0 0.0
    %2369 = vmatpush1.msra.mxu0 0.0
    %2370 = vmatprep.subr.mxu0 0.0
    %2371 = vmatpush1.msra.mxu0 0.0
    %2372 = vmatprep.subr.mxu0 0.0
    %2373 = vmatpush1.msra.mxu0 0.0
    %2374 = vmatprep.subr.mxu0 0.0
    %2375 = vmatpush1.msra.mxu0 0.0
    %2376 = vmatprep.subr.mxu0 0.0
    %2377 = vmatpush1.msra.mxu0 0.0
    %2378 = vmatprep.subr.mxu0 0.0
    %2379 = vmatpush1.msra.mxu0 0.0
    %2380 = vmatprep.subr.mxu0 0.0
    %2381 = vmatpush1.msra.mxu0 0.0
    %2382 = vmatprep.subr.mxu0 0.0
    %2383 = vmatpush1.msra.mxu0 0.0
    %2384 = vmatprep.subr.mxu0 0.0
    %2385 = vmatpush1.msra.mxu0 0.0
    %2386 = vmatprep.subr.mxu0 0.0
    %2387 = vmatpush1.msra.mxu0 0.0
    %2388 = vmatprep.subr.mxu0 0.0
    %2389 = vmatpush1.msra.mxu0 0.0
    %2390 = vmatprep.subr.mxu0 0.0
    %2391 = vmatpush1.msra.mxu0 0.0
    %2392 = vmatprep.subr.mxu0 0.0
    %2393 = vmatpush1.msra.mxu0 0.0
    %2394 = vmatprep.subr.mxu0 0.0
    %2395 = vmatpush1.msra.mxu0 0.0
    %2396 = vmatprep.subr.mxu0 0.0
    %2397 = vmatpush1.msra.mxu0 0.0
    %2398 = vmatprep.subr.mxu0 0.0
    %2399 = vmatpush1.msra.mxu0 0.0
    %2400 = vmatprep.subr.mxu0 0.0
    %2401 = vmatpush1.msra.mxu0 0.0
    %2402 = vmatprep.subr.mxu0 0.0
    %2403 = vmatpush1.msra.mxu0 0.0
    %2404 = vmatprep.mubr.f32.mxu0 0.0
    %v2405 = vand.u32 %v2337, 4294901760
    %v2406 = vsub.f32 %v2337, %v2405
    %v2407 = vand.u32 %v2406, 4294901760
    %v2408 = vsub.f32 %v2406, %v2407
    %v2409 = vand.u32 %v2408, 4294901760
    %2410 = vmatmul.mubr.f32.gmra.mrb[0].mxu0 %v2409
    %v2411 = vpop.f32.mrb[0].mxu0
    %v2412 = vadd.f32 %v59, %v2411
    %v2413 = vpop.f32.mrb[0].mxu0
    %2414 = vdwg.mxu0
    %2415 = vmatprep.subr.mxu0 0.0
    %v2416 = vand.u32 %v50, 4294901760
    %v2417 = vsub.f32 %v50, %v2416
    %v2418 = vand.u32 %v2417, 4294901760
    %v2419 = vsub.f32 %v2417, %v2418
    %v2420 = vand.u32 %v2419, 4294901760
    %2421 = vmatpush1.msra.mxu0 %v2420
    %2422 = vmatprep.subr.mxu0 0.0
    %2423 = vmatpush1.msra.mxu0 0.0
    %2424 = vmatprep.subr.mxu0 0.0
    %2425 = vmatpush1.msra.mxu0 0.0
    %2426 = vmatprep.subr.mxu0 0.0
    %2427 = vmatpush1.msra.mxu0 0.0
    %2428 = vmatprep.subr.mxu0 0.0
    %2429 = vmatpush1.msra.mxu0 0.0
    %2430 = vmatprep.subr.mxu0 0.0
    %2431 = vmatpush1.msra.mxu0 0.0
    %2432 = vmatprep.subr.mxu0 0.0
    %2433 = vmatpush1.msra.mxu0 0.0
    %2434 = vmatprep.subr.mxu0 0.0
    %2435 = vmatpush1.msra.mxu0 0.0
    %2436 = vmatprep.subr.mxu0 0.0
    %2437 = vmatpush1.msra.mxu0 0.0
    %2438 = vmatprep.subr.mxu0 0.0
    %2439 = vmatpush1.msra.mxu0 0.0
    %2440 = vmatprep.subr.mxu0 0.0
    %2441 = vmatpush1.msra.mxu0 0.0
    %2442 = vmatprep.subr.mxu0 0.0
    %2443 = vmatpush1.msra.mxu0 0.0
    %2444 = vmatprep.subr.mxu0 0.0
    %2445 = vmatpush1.msra.mxu0 0.0
    %2446 = vmatprep.subr.mxu0 0.0
    %2447 = vmatpush1.msra.mxu0 0.0
    %2448 = vmatprep.subr.mxu0 0.0
    %2449 = vmatpush1.msra.mxu0 0.0
    %2450 = vmatprep.subr.mxu0 0.0
    %2451 = vmatpush1.msra.mxu0 0.0
    %2452 = vmatprep.subr.mxu0 0.0
    %2453 = vmatpush1.msra.mxu0 0.0
    %2454 = vmatprep.subr.mxu0 0.0
    %2455 = vmatpush1.msra.mxu0 0.0
    %2456 = vmatprep.subr.mxu0 0.0
    %2457 = vmatpush1.msra.mxu0 0.0
    %2458 = vmatprep.subr.mxu0 0.0
    %2459 = vmatpush1.msra.mxu0 0.0
    %2460 = vmatprep.subr.mxu0 0.0
    %2461 = vmatpush1.msra.mxu0 0.0
    %2462 = vmatprep.subr.mxu0 0.0
    %2463 = vmatpush1.msra.mxu0 0.0
    %2464 = vmatprep.subr.mxu0 0.0
    %2465 = vmatpush1.msra.mxu0 0.0
    %2466 = vmatprep.subr.mxu0 0.0
    %2467 = vmatpush1.msra.mxu0 0.0
    %2468 = vmatprep.subr.mxu0 0.0
    %2469 = vmatpush1.msra.mxu0 0.0
    %2470 = vmatprep.subr.mxu0 0.0
    %2471 = vmatpush1.msra.mxu0 0.0
    %2472 = vmatprep.subr.mxu0 0.0
    %2473 = vmatpush1.msra.mxu0 0.0
    %2474 = vmatprep.subr.mxu0 0.0
    %2475 = vmatpush1.msra.mxu0 0.0
    %2476 = vmatprep.subr.mxu0 0.0
    %2477 = vmatpush1.msra.mxu0 0.0
    %2478 = vmatprep.subr.mxu0 0.0
    %2479 = vmatpush1.msra.mxu0 0.0
    %2480 = vmatprep.subr.mxu0 0.0
    %2481 = vmatpush1.msra.mxu0 0.0
    %2482 = vmatprep.subr.mxu0 0.0
    %2483 = vmatpush1.msra.mxu0 0.0
    %2484 = vmatprep.mubr.f32.mxu0 0.0
    %v2485 = vand.u32 %v2337, 4294901760
    %2486 = vmatmul.mubr.f32.gmra.mrb[0].mxu0 %v2485
    %v2487 = vpop.f32.mrb[0].mxu0
    %v2488 = vadd.f32 %v2412, %v2487
    %v2489 = vpop.f32.mrb[0].mxu0
    %2490 = vdwg.mxu0
    %2491 = vmatprep.subr.mxu0 0.0
    %v2492 = vand.u32 %v50, 4294901760
    %v2493 = vsub.f32 %v50, %v2492
    %2494 = vmatpush1.msra.mxu0 %v2493
    %2495 = vmatprep.subr.mxu0 0.0
    %2496 = vmatpush1.msra.mxu0 0.0
    %2497 = vmatprep.subr.mxu0 0.0
    %2498 = vmatpush1.msra.mxu0 0.0
    %2499 = vmatprep.subr.mxu0 0.0
    %2500 = vmatpush1.msra.mxu0 0.0
    %2501 = vmatprep.subr.mxu0 0.0
    %2502 = vmatpush1.msra.mxu0 0.0
    %2503 = vmatprep.subr.mxu0 0.0
    %2504 = vmatpush1.msra.mxu0 0.0
    %2505 = vmatprep.subr.mxu0 0.0
    %2506 = vmatpush1.msra.mxu0 0.0
    %2507 = vmatprep.subr.mxu0 0.0
    %2508 = vmatpush1.msra.mxu0 0.0
    %2509 = vmatprep.subr.mxu0 0.0
    %2510 = vmatpush1.msra.mxu0 0.0
    %2511 = vmatprep.subr.mxu0 0.0
    %2512 = vmatpush1.msra.mxu0 0.0
    %2513 = vmatprep.subr.mxu0 0.0
    %2514 = vmatpush1.msra.mxu0 0.0
    %2515 = vmatprep.subr.mxu0 0.0
    %2516 = vmatpush1.msra.mxu0 0.0
    %2517 = vmatprep.subr.mxu0 0.0
    %2518 = vmatpush1.msra.mxu0 0.0
    %2519 = vmatprep.subr.mxu0 0.0
    %2520 = vmatpush1.msra.mxu0 0.0
    %2521 = vmatprep.subr.mxu0 0.0
    %2522 = vmatpush1.msra.mxu0 0.0
    %2523 = vmatprep.subr.mxu0 0.0
    %2524 = vmatpush1.msra.mxu0 0.0
    %2525 = vmatprep.subr.mxu0 0.0
    %2526 = vmatpush1.msra.mxu0 0.0
    %2527 = vmatprep.subr.mxu0 0.0
    %2528 = vmatpush1.msra.mxu0 0.0
    %2529 = vmatprep.subr.mxu0 0.0
    %2530 = vmatpush1.msra.mxu0 0.0
    %2531 = vmatprep.subr.mxu0 0.0
    %2532 = vmatpush1.msra.mxu0 0.0
    %2533 = vmatprep.subr.mxu0 0.0
    %2534 = vmatpush1.msra.mxu0 0.0
    %2535 = vmatprep.subr.mxu0 0.0
    %2536 = vmatpush1.msra.mxu0 0.0
    %2537 = vmatprep.subr.mxu0 0.0
    %2538 = vmatpush1.msra.mxu0 0.0
    %2539 = vmatprep.subr.mxu0 0.0
    %2540 = vmatpush1.msra.mxu0 0.0
    %2541 = vmatprep.subr.mxu0 0.0
    %2542 = vmatpush1.msra.mxu0 0.0
    %2543 = vmatprep.subr.mxu0 0.0
    %2544 = vmatpush1.msra.mxu0 0.0
    %2545 = vmatprep.subr.mxu0 0.0
    %2546 = vmatpush1.msra.mxu0 0.0
    %2547 = vmatprep.subr.mxu0 0.0
    %2548 = vmatpush1.msra.mxu0 0.0
    %2549 = vmatprep.subr.mxu0 0.0
    %2550 = vmatpush1.msra.mxu0 0.0
    %2551 = vmatprep.subr.mxu0 0.0
    %2552 = vmatpush1.msra.mxu0 0.0
    %2553 = vmatprep.subr.mxu0 0.0
    %2554 = vmatpush1.msra.mxu0 0.0
    %2555 = vmatprep.subr.mxu0 0.0
    %2556 = vmatpush1.msra.mxu0 0.0
    %2557 = vmatprep.mubr.f32.mxu0 0.0
    %v2558 = vand.u32 %v2337, 4294901760
    %v2559 = vsub.f32 %v2337, %v2558
    %2560 = vmatmul.mubr.f32.gmra.mrb[0].mxu0 %v2559
    %v2561 = vpop.f32.mrb[0].mxu0
    %v2562 = vadd.f32 %v2488, %v2561
    %v2563 = vpop.f32.mrb[0].mxu0
    %2564 = vdwg.mxu0
    %2565 = vmatprep.subr.mxu0 0.0
    %v2566 = vand.u32 %v50, 4294901760
    %2567 = vmatpush1.msra.mxu0 %v2566
    %2568 = vmatprep.subr.mxu0 0.0
    %2569 = vmatpush1.msra.mxu0 0.0
    %2570 = vmatprep.subr.mxu0 0.0
    %2571 = vmatpush1.msra.mxu0 0.0
    %2572 = vmatprep.subr.mxu0 0.0
    %2573 = vmatpush1.msra.mxu0 0.0
    %2574 = vmatprep.subr.mxu0 0.0
    %2575 = vmatpush1.msra.mxu0 0.0
    %2576 = vmatprep.subr.mxu0 0.0
    %2577 = vmatpush1.msra.mxu0 0.0
    %2578 = vmatprep.subr.mxu0 0.0
    %2579 = vmatpush1.msra.mxu0 0.0
    %2580 = vmatprep.subr.mxu0 0.0
    %2581 = vmatpush1.msra.mxu0 0.0
    %2582 = vmatprep.subr.mxu0 0.0
    %2583 = vmatpush1.msra.mxu0 0.0
    %2584 = vmatprep.subr.mxu0 0.0
    %2585 = vmatpush1.msra.mxu0 0.0
    %2586 = vmatprep.subr.mxu0 0.0
    %2587 = vmatpush1.msra.mxu0 0.0
    %2588 = vmatprep.subr.mxu0 0.0
    %2589 = vmatpush1.msra.mxu0 0.0
    %2590 = vmatprep.subr.mxu0 0.0
    %2591 = vmatpush1.msra.mxu0 0.0
    %2592 = vmatprep.subr.mxu0 0.0
    %2593 = vmatpush1.msra.mxu0 0.0
    %2594 = vmatprep.subr.mxu0 0.0
    %2595 = vmatpush1.msra.mxu0 0.0
    %2596 = vmatprep.subr.mxu0 0.0
    %2597 = vmatpush1.msra.mxu0 0.0
    %2598 = vmatprep.subr.mxu0 0.0
    %2599 = vmatpush1.msra.mxu0 0.0
    %2600 = vmatprep.subr.mxu0 0.0
    %2601 = vmatpush1.msra.mxu0 0.0
    %2602 = vmatprep.subr.mxu0 0.0
    %2603 = vmatpush1.msra.mxu0 0.0
    %2604 = vmatprep.subr.mxu0 0.0
    %2605 = vmatpush1.msra.mxu0 0.0
    %2606 = vmatprep.subr.mxu0 0.0
    %2607 = vmatpush1.msra.mxu0 0.0
    %2608 = vmatprep.subr.mxu0 0.0
    %2609 = vmatpush1.msra.mxu0 0.0
    %2610 = vmatprep.subr.mxu0 0.0
    %2611 = vmatpush1.msra.mxu0 0.0
    %2612 = vmatprep.subr.mxu0 0.0
    %2613 = vmatpush1.msra.mxu0 0.0
    %2614 = vmatprep.subr.mxu0 0.0
    %2615 = vmatpush1.msra.mxu0 0.0
    %2616 = vmatprep.subr.mxu0 0.0
    %2617 = vmatpush1.msra.mxu0 0.0
    %2618 = vmatprep.subr.mxu0 0.0
    %2619 = vmatpush1.msra.mxu0 0.0
    %2620 = vmatprep.subr.mxu0 0.0
    %2621 = vmatpush1.msra.mxu0 0.0
    %2622 = vmatprep.subr.mxu0 0.0
    %2623 = vmatpush1.msra.mxu0 0.0
    %2624 = vmatprep.subr.mxu0 0.0
    %2625 = vmatpush1.msra.mxu0 0.0
    %2626 = vmatprep.subr.mxu0 0.0
    %2627 = vmatpush1.msra.mxu0 0.0
    %2628 = vmatprep.subr.mxu0 0.0
    %2629 = vmatpush1.msra.mxu0 0.0
    %2630 = vmatprep.mubr.f32.mxu0 0.0
    %v2631 = vand.u32 %v2337, 4294901760
    %v2632 = vsub.f32 %v2337, %v2631
    %v2633 = vand.u32 %v2632, 4294901760
    %2634 = vmatmul.mubr.f32.gmra.mrb[0].mxu0 %v2633
    %v2635 = vpop.f32.mrb[0].mxu0
    %v2636 = vadd.f32 %v2562, %v2635
    %v2637 = vpop.f32.mrb[0].mxu0
    %2638 = vdwg.mxu0
    %2639 = vmatprep.subr.mxu0 0.0
    %v2640 = vand.u32 %v50, 4294901760
    %v2641 = vsub.f32 %v50, %v2640
    %v2642 = vand.u32 %v2641, 4294901760
    %2643 = vmatpush1.msra.mxu0 %v2642
    %2644 = vmatprep.subr.mxu0 0.0
    %2645 = vmatpush1.msra.mxu0 0.0
    %2646 = vmatprep.subr.mxu0 0.0
    %2647 = vmatpush1.msra.mxu0 0.0
    %2648 = vmatprep.subr.mxu0 0.0
    %2649 = vmatpush1.msra.mxu0 0.0
    %2650 = vmatprep.subr.mxu0 0.0
    %2651 = vmatpush1.msra.mxu0 0.0
    %2652 = vmatprep.subr.mxu0 0.0
    %2653 = vmatpush1.msra.mxu0 0.0
    %2654 = vmatprep.subr.mxu0 0.0
    %2655 = vmatpush1.msra.mxu0 0.0
    %2656 = vmatprep.subr.mxu0 0.0
    %2657 = vmatpush1.msra.mxu0 0.0
    %2658 = vmatprep.subr.mxu0 0.0
    %2659 = vmatpush1.msra.mxu0 0.0
    %2660 = vmatprep.subr.mxu0 0.0
    %2661 = vmatpush1.msra.mxu0 0.0
    %2662 = vmatprep.subr.mxu0 0.0
    %2663 = vmatpush1.msra.mxu0 0.0
    %2664 = vmatprep.subr.mxu0 0.0
    %2665 = vmatpush1.msra.mxu0 0.0
    %2666 = vmatprep.subr.mxu0 0.0
    %2667 = vmatpush1.msra.mxu0 0.0
    %2668 = vmatprep.subr.mxu0 0.0
    %2669 = vmatpush1.msra.mxu0 0.0
    %2670 = vmatprep.subr.mxu0 0.0
    %2671 = vmatpush1.msra.mxu0 0.0
    %2672 = vmatprep.subr.mxu0 0.0
    %2673 = vmatpush1.msra.mxu0 0.0
    %2674 = vmatprep.subr.mxu0 0.0
    %2675 = vmatpush1.msra.mxu0 0.0
    %2676 = vmatprep.subr.mxu0 0.0
    %2677 = vmatpush1.msra.mxu0 0.0
    %2678 = vmatprep.subr.mxu0 0.0
    %2679 = vmatpush1.msra.mxu0 0.0
    %2680 = vmatprep.subr.mxu0 0.0
    %2681 = vmatpush1.msra.mxu0 0.0
    %2682 = vmatprep.subr.mxu0 0.0
    %2683 = vmatpush1.msra.mxu0 0.0
    %2684 = vmatprep.subr.mxu0 0.0
    %2685 = vmatpush1.msra.mxu0 0.0
    %2686 = vmatprep.subr.mxu0 0.0
    %2687 = vmatpush1.msra.mxu0 0.0
    %2688 = vmatprep.subr.mxu0 0.0
    %2689 = vmatpush1.msra.mxu0 0.0
    %2690 = vmatprep.subr.mxu0 0.0
    %2691 = vmatpush1.msra.mxu0 0.0
    %2692 = vmatprep.subr.mxu0 0.0
    %2693 = vmatpush1.msra.mxu0 0.0
    %2694 = vmatprep.subr.mxu0 0.0
    %2695 = vmatpush1.msra.mxu0 0.0
    %2696 = vmatprep.subr.mxu0 0.0
    %2697 = vmatpush1.msra.mxu0 0.0
    %2698 = vmatprep.subr.mxu0 0.0
    %2699 = vmatpush1.msra.mxu0 0.0
    %2700 = vmatprep.subr.mxu0 0.0
    %2701 = vmatpush1.msra.mxu0 0.0
    %2702 = vmatprep.subr.mxu0 0.0
    %2703 = vmatpush1.msra.mxu0 0.0
    %2704 = vmatprep.subr.mxu0 0.0
    %2705 = vmatpush1.msra.mxu0 0.0
    %2706 = vmatprep.mubr.f32.mxu0 0.0
    %v2707 = vand.u32 %v2337, 4294901760
    %2708 = vmatmul.mubr.f32.gmra.mrb[0].mxu0 %v2707
    %v2709 = vpop.f32.mrb[0].mxu0
    %v2710 = vadd.f32 %v2636, %v2709
    %v2711 = vpop.f32.mrb[0].mxu0
    %2712 = vdwg.mxu0
    %2713 = vmatprep.subr.mxu0 0.0
    %v2714 = vand.u32 %v50, 4294901760
    %2715 = vmatpush1.msra.mxu0 %v2714
    %2716 = vmatprep.subr.mxu0 0.0
    %2717 = vmatpush1.msra.mxu0 0.0
    %2718 = vmatprep.subr.mxu0 0.0
    %2719 = vmatpush1.msra.mxu0 0.0
    %2720 = vmatprep.subr.mxu0 0.0
    %2721 = vmatpush1.msra.mxu0 0.0
    %2722 = vmatprep.subr.mxu0 0.0
    %2723 = vmatpush1.msra.mxu0 0.0
    %2724 = vmatprep.subr.mxu0 0.0
    %2725 = vmatpush1.msra.mxu0 0.0
    %2726 = vmatprep.subr.mxu0 0.0
    %2727 = vmatpush1.msra.mxu0 0.0
    %2728 = vmatprep.subr.mxu0 0.0
    %2729 = vmatpush1.msra.mxu0 0.0
    %2730 = vmatprep.subr.mxu0 0.0
    %2731 = vmatpush1.msra.mxu0 0.0
    %2732 = vmatprep.subr.mxu0 0.0
    %2733 = vmatpush1.msra.mxu0 0.0
    %2734 = vmatprep.subr.mxu0 0.0
    %2735 = vmatpush1.msra.mxu0 0.0
    %2736 = vmatprep.subr.mxu0 0.0
    %2737 = vmatpush1.msra.mxu0 0.0
    %2738 = vmatprep.subr.mxu0 0.0
    %2739 = vmatpush1.msra.mxu0 0.0
    %2740 = vmatprep.subr.mxu0 0.0
    %2741 = vmatpush1.msra.mxu0 0.0
    %2742 = vmatprep.subr.mxu0 0.0
    %2743 = vmatpush1.msra.mxu0 0.0
    %2744 = vmatprep.subr.mxu0 0.0
    %2745 = vmatpush1.msra.mxu0 0.0
    %2746 = vmatprep.subr.mxu0 0.0
    %2747 = vmatpush1.msra.mxu0 0.0
    %2748 = vmatprep.subr.mxu0 0.0
    %2749 = vmatpush1.msra.mxu0 0.0
    %2750 = vmatprep.subr.mxu0 0.0
    %2751 = vmatpush1.msra.mxu0 0.0
    %2752 = vmatprep.subr.mxu0 0.0
    %2753 = vmatpush1.msra.mxu0 0.0
    %2754 = vmatprep.subr.mxu0 0.0
    %2755 = vmatpush1.msra.mxu0 0.0
    %2756 = vmatprep.subr.mxu0 0.0
    %2757 = vmatpush1.msra.mxu0 0.0
    %2758 = vmatprep.subr.mxu0 0.0
    %2759 = vmatpush1.msra.mxu0 0.0
    %2760 = vmatprep.subr.mxu0 0.0
    %2761 = vmatpush1.msra.mxu0 0.0
    %2762 = vmatprep.subr.mxu0 0.0
    %2763 = vmatpush1.msra.mxu0 0.0
    %2764 = vmatprep.subr.mxu0 0.0
    %2765 = vmatpush1.msra.mxu0 0.0
    %2766 = vmatprep.subr.mxu0 0.0
    %2767 = vmatpush1.msra.mxu0 0.0
    %2768 = vmatprep.subr.mxu0 0.0
    %2769 = vmatpush1.msra.mxu0 0.0
    %2770 = vmatprep.subr.mxu0 0.0
    %2771 = vmatpush1.msra.mxu0 0.0
    %2772 = vmatprep.subr.mxu0 0.0
    %2773 = vmatpush1.msra.mxu0 0.0
    %2774 = vmatprep.subr.mxu0 0.0
    %2775 = vmatpush1.msra.mxu0 0.0
    %2776 = vmatprep.subr.mxu0 0.0
    %2777 = vmatpush1.msra.mxu0 0.0
    %2778 = vmatprep.mubr.f32.mxu0 0.0
    %v2779 = vand.u32 %v2337, 4294901760
    %2780 = vmatmul.mubr.f32.gmra.mrb[0].mxu0 %v2779
    %v2781 = vpop.f32.mrb[0].mxu0
    %v2782 = vadd.f32 %v2710, %v2781
    %v2783 = vpop.f32.mrb[0].mxu0
    %2784 = vdwg.mxu0
    %v2785 = vld [vmem:[%s1 + $0x6] sm:$0x1]
    %v2786 = vld [vmem:[%s1 + $0xe] sm:$0x1]
    %v2789 = vrot.slane %v2786, 7
    %v2790 = vsel %vm64, %v2789, %v2785
    %v2791 = vsel %vm66, %v2790, 0
    %2793 = vmatprep.subr.mxu0 0.0
    %v2794 = vand.u32 %v50, 4294901760
    %2795 = vmatpush1.msra.mxu0 %v2794
    %2796 = vmatprep.subr.mxu0 0.0
    %2797 = vmatpush1.msra.mxu0 0.0
    %2798 = vmatprep.subr.mxu0 0.0
    %2799 = vmatpush1.msra.mxu0 0.0
    %2800 = vmatprep.subr.mxu0 0.0
    %2801 = vmatpush1.msra.mxu0 0.0
    %2802 = vmatprep.subr.mxu0 0.0
    %2803 = vmatpush1.msra.mxu0 0.0
    %2804 = vmatprep.subr.mxu0 0.0
    %2805 = vmatpush1.msra.mxu0 0.0
    %2806 = vmatprep.subr.mxu0 0.0
    %2807 = vmatpush1.msra.mxu0 0.0
    %2808 = vmatprep.subr.mxu0 0.0
    %2809 = vmatpush1.msra.mxu0 0.0
    %2810 = vmatprep.subr.mxu0 0.0
    %2811 = vmatpush1.msra.mxu0 0.0
    %2812 = vmatprep.subr.mxu0 0.0
    %2813 = vmatpush1.msra.mxu0 0.0
    %2814 = vmatprep.subr.mxu0 0.0
    %2815 = vmatpush1.msra.mxu0 0.0
    %2816 = vmatprep.subr.mxu0 0.0
    %2817 = vmatpush1.msra.mxu0 0.0
    %2818 = vmatprep.subr.mxu0 0.0
    %2819 = vmatpush1.msra.mxu0 0.0
    %2820 = vmatprep.subr.mxu0 0.0
    %2821 = vmatpush1.msra.mxu0 0.0
    %2822 = vmatprep.subr.mxu0 0.0
    %2823 = vmatpush1.msra.mxu0 0.0
    %2824 = vmatprep.subr.mxu0 0.0
    %2825 = vmatpush1.msra.mxu0 0.0
    %2826 = vmatprep.subr.mxu0 0.0
    %2827 = vmatpush1.msra.mxu0 0.0
    %2828 = vmatprep.subr.mxu0 0.0
    %2829 = vmatpush1.msra.mxu0 0.0
    %2830 = vmatprep.subr.mxu0 0.0
    %2831 = vmatpush1.msra.mxu0 0.0
    %2832 = vmatprep.subr.mxu0 0.0
    %2833 = vmatpush1.msra.mxu0 0.0
    %2834 = vmatprep.subr.mxu0 0.0
    %2835 = vmatpush1.msra.mxu0 0.0
    %2836 = vmatprep.subr.mxu0 0.0
    %2837 = vmatpush1.msra.mxu0 0.0
    %2838 = vmatprep.subr.mxu0 0.0
    %2839 = vmatpush1.msra.mxu0 0.0
    %2840 = vmatprep.subr.mxu0 0.0
    %2841 = vmatpush1.msra.mxu0 0.0
    %2842 = vmatprep.subr.mxu0 0.0
    %2843 = vmatpush1.msra.mxu0 0.0
    %2844 = vmatprep.subr.mxu0 0.0
    %2845 = vmatpush1.msra.mxu0 0.0
    %2846 = vmatprep.subr.mxu0 0.0
    %2847 = vmatpush1.msra.mxu0 0.0
    %2848 = vmatprep.subr.mxu0 0.0
    %2849 = vmatpush1.msra.mxu0 0.0
    %2850 = vmatprep.subr.mxu0 0.0
    %2851 = vmatpush1.msra.mxu0 0.0
    %2852 = vmatprep.subr.mxu0 0.0
    %2853 = vmatpush1.msra.mxu0 0.0
    %2854 = vmatprep.subr.mxu0 0.0
    %2855 = vmatpush1.msra.mxu0 0.0
    %2856 = vmatprep.subr.mxu0 0.0
    %2857 = vmatpush1.msra.mxu0 0.0
    %2858 = vmatprep.mubr.f32.mxu0 0.0
    %v2859 = vand.u32 %v2791, 4294901760
    %v2860 = vsub.f32 %v2791, %v2859
    %v2861 = vand.u32 %v2860, 4294901760
    %v2862 = vsub.f32 %v2860, %v2861
    %v2863 = vand.u32 %v2862, 4294901760
    %2864 = vmatmul.mubr.f32.gmra.mrb[0].mxu0 %v2863
    %v2865 = vpop.f32.mrb[0].mxu0
    %v2866 = vadd.f32 %v59, %v2865
    %v2867 = vpop.f32.mrb[0].mxu0
    %2868 = vdwg.mxu0
    %2869 = vmatprep.subr.mxu0 0.0
    %v2870 = vand.u32 %v50, 4294901760
    %v2871 = vsub.f32 %v50, %v2870
    %v2872 = vand.u32 %v2871, 4294901760
    %v2873 = vsub.f32 %v2871, %v2872
    %v2874 = vand.u32 %v2873, 4294901760
    %2875 = vmatpush1.msra.mxu0 %v2874
    %2876 = vmatprep.subr.mxu0 0.0
    %2877 = vmatpush1.msra.mxu0 0.0
    %2878 = vmatprep.subr.mxu0 0.0
    %2879 = vmatpush1.msra.mxu0 0.0
    %2880 = vmatprep.subr.mxu0 0.0
    %2881 = vmatpush1.msra.mxu0 0.0
    %2882 = vmatprep.subr.mxu0 0.0
    %2883 = vmatpush1.msra.mxu0 0.0
    %2884 = vmatprep.subr.mxu0 0.0
    %2885 = vmatpush1.msra.mxu0 0.0
    %2886 = vmatprep.subr.mxu0 0.0
    %2887 = vmatpush1.msra.mxu0 0.0
    %2888 = vmatprep.subr.mxu0 0.0
    %2889 = vmatpush1.msra.mxu0 0.0
    %2890 = vmatprep.subr.mxu0 0.0
    %2891 = vmatpush1.msra.mxu0 0.0
    %2892 = vmatprep.subr.mxu0 0.0
    %2893 = vmatpush1.msra.mxu0 0.0
    %2894 = vmatprep.subr.mxu0 0.0
    %2895 = vmatpush1.msra.mxu0 0.0
    %2896 = vmatprep.subr.mxu0 0.0
    %2897 = vmatpush1.msra.mxu0 0.0
    %2898 = vmatprep.subr.mxu0 0.0
    %2899 = vmatpush1.msra.mxu0 0.0
    %2900 = vmatprep.subr.mxu0 0.0
    %2901 = vmatpush1.msra.mxu0 0.0
    %2902 = vmatprep.subr.mxu0 0.0
    %2903 = vmatpush1.msra.mxu0 0.0
    %2904 = vmatprep.subr.mxu0 0.0
    %2905 = vmatpush1.msra.mxu0 0.0
    %2906 = vmatprep.subr.mxu0 0.0
    %2907 = vmatpush1.msra.mxu0 0.0
    %2908 = vmatprep.subr.mxu0 0.0
    %2909 = vmatpush1.msra.mxu0 0.0
    %2910 = vmatprep.subr.mxu0 0.0
    %2911 = vmatpush1.msra.mxu0 0.0
    %2912 = vmatprep.subr.mxu0 0.0
    %2913 = vmatpush1.msra.mxu0 0.0
    %2914 = vmatprep.subr.mxu0 0.0
    %2915 = vmatpush1.msra.mxu0 0.0
    %2916 = vmatprep.subr.mxu0 0.0
    %2917 = vmatpush1.msra.mxu0 0.0
    %2918 = vmatprep.subr.mxu0 0.0
    %2919 = vmatpush1.msra.mxu0 0.0
    %2920 = vmatprep.subr.mxu0 0.0
    %2921 = vmatpush1.msra.mxu0 0.0
    %2922 = vmatprep.subr.mxu0 0.0
    %2923 = vmatpush1.msra.mxu0 0.0
    %2924 = vmatprep.subr.mxu0 0.0
    %2925 = vmatpush1.msra.mxu0 0.0
    %2926 = vmatprep.subr.mxu0 0.0
    %2927 = vmatpush1.msra.mxu0 0.0
    %2928 = vmatprep.subr.mxu0 0.0
    %2929 = vmatpush1.msra.mxu0 0.0
    %2930 = vmatprep.subr.mxu0 0.0
    %2931 = vmatpush1.msra.mxu0 0.0
    %2932 = vmatprep.subr.mxu0 0.0
    %2933 = vmatpush1.msra.mxu0 0.0
    %2934 = vmatprep.subr.mxu0 0.0
    %2935 = vmatpush1.msra.mxu0 0.0
    %2936 = vmatprep.subr.mxu0 0.0
    %2937 = vmatpush1.msra.mxu0 0.0
    %2938 = vmatprep.mubr.f32.mxu0 0.0
    %v2939 = vand.u32 %v2791, 4294901760
    %2940 = vmatmul.mubr.f32.gmra.mrb[0].mxu0 %v2939
    %v2941 = vpop.f32.mrb[0].mxu0
    %v2942 = vadd.f32 %v2866, %v2941
    %v2943 = vpop.f32.mrb[0].mxu0
    %2944 = vdwg.mxu0
    %2945 = vmatprep.subr.mxu0 0.0
    %v2946 = vand.u32 %v50, 4294901760
    %v2947 = vsub.f32 %v50, %v2946
    %2948 = vmatpush1.msra.mxu0 %v2947
    %2949 = vmatprep.subr.mxu0 0.0
    %2950 = vmatpush1.msra.mxu0 0.0
    %2951 = vmatprep.subr.mxu0 0.0
    %2952 = vmatpush1.msra.mxu0 0.0
    %2953 = vmatprep.subr.mxu0 0.0
    %2954 = vmatpush1.msra.mxu0 0.0
    %2955 = vmatprep.subr.mxu0 0.0
    %2956 = vmatpush1.msra.mxu0 0.0
    %2957 = vmatprep.subr.mxu0 0.0
    %2958 = vmatpush1.msra.mxu0 0.0
    %2959 = vmatprep.subr.mxu0 0.0
    %2960 = vmatpush1.msra.mxu0 0.0
    %2961 = vmatprep.subr.mxu0 0.0
    %2962 = vmatpush1.msra.mxu0 0.0
    %2963 = vmatprep.subr.mxu0 0.0
    %2964 = vmatpush1.msra.mxu0 0.0
    %2965 = vmatprep.subr.mxu0 0.0
    %2966 = vmatpush1.msra.mxu0 0.0
    %2967 = vmatprep.subr.mxu0 0.0
    %2968 = vmatpush1.msra.mxu0 0.0
    %2969 = vmatprep.subr.mxu0 0.0
    %2970 = vmatpush1.msra.mxu0 0.0
    %2971 = vmatprep.subr.mxu0 0.0
    %2972 = vmatpush1.msra.mxu0 0.0
    %2973 = vmatprep.subr.mxu0 0.0
    %2974 = vmatpush1.msra.mxu0 0.0
    %2975 = vmatprep.subr.mxu0 0.0
    %2976 = vmatpush1.msra.mxu0 0.0
    %2977 = vmatprep.subr.mxu0 0.0
    %2978 = vmatpush1.msra.mxu0 0.0
    %2979 = vmatprep.subr.mxu0 0.0
    %2980 = vmatpush1.msra.mxu0 0.0
    %2981 = vmatprep.subr.mxu0 0.0
    %2982 = vmatpush1.msra.mxu0 0.0
    %2983 = vmatprep.subr.mxu0 0.0
    %2984 = vmatpush1.msra.mxu0 0.0
    %2985 = vmatprep.subr.mxu0 0.0
    %2986 = vmatpush1.msra.mxu0 0.0
    %2987 = vmatprep.subr.mxu0 0.0
    %2988 = vmatpush1.msra.mxu0 0.0
    %2989 = vmatprep.subr.mxu0 0.0
    %2990 = vmatpush1.msra.mxu0 0.0
    %2991 = vmatprep.subr.mxu0 0.0
    %2992 = vmatpush1.msra.mxu0 0.0
    %2993 = vmatprep.subr.mxu0 0.0
    %2994 = vmatpush1.msra.mxu0 0.0
    %2995 = vmatprep.subr.mxu0 0.0
    %2996 = vmatpush1.msra.mxu0 0.0
    %2997 = vmatprep.subr.mxu0 0.0
    %2998 = vmatpush1.msra.mxu0 0.0
    %2999 = vmatprep.subr.mxu0 0.0
    %3000 = vmatpush1.msra.mxu0 0.0
    %3001 = vmatprep.subr.mxu0 0.0
    %3002 = vmatpush1.msra.mxu0 0.0
    %3003 = vmatprep.subr.mxu0 0.0
    %3004 = vmatpush1.msra.mxu0 0.0
    %3005 = vmatprep.subr.mxu0 0.0
    %3006 = vmatpush1.msra.mxu0 0.0
    %3007 = vmatprep.subr.mxu0 0.0
    %3008 = vmatpush1.msra.mxu0 0.0
    %3009 = vmatprep.subr.mxu0 0.0
    %3010 = vmatpush1.msra.mxu0 0.0
    %3011 = vmatprep.mubr.f32.mxu0 0.0
    %v3012 = vand.u32 %v2791, 4294901760
    %v3013 = vsub.f32 %v2791, %v3012
    %3014 = vmatmul.mubr.f32.gmra.mrb[0].mxu0 %v3013
    %v3015 = vpop.f32.mrb[0].mxu0
    %v3016 = vadd.f32 %v2942, %v3015
    %v3017 = vpop.f32.mrb[0].mxu0
    %3018 = vdwg.mxu0
    %3019 = vmatprep.subr.mxu0 0.0
    %v3020 = vand.u32 %v50, 4294901760
    %3021 = vmatpush1.msra.mxu0 %v3020
    %3022 = vmatprep.subr.mxu0 0.0
    %3023 = vmatpush1.msra.mxu0 0.0
    %3024 = vmatprep.subr.mxu0 0.0
    %3025 = vmatpush1.msra.mxu0 0.0
    %3026 = vmatprep.subr.mxu0 0.0
    %3027 = vmatpush1.msra.mxu0 0.0
    %3028 = vmatprep.subr.mxu0 0.0
    %3029 = vmatpush1.msra.mxu0 0.0
    %3030 = vmatprep.subr.mxu0 0.0
    %3031 = vmatpush1.msra.mxu0 0.0
    %3032 = vmatprep.subr.mxu0 0.0
    %3033 = vmatpush1.msra.mxu0 0.0
    %3034 = vmatprep.subr.mxu0 0.0
    %3035 = vmatpush1.msra.mxu0 0.0
    %3036 = vmatprep.subr.mxu0 0.0
    %3037 = vmatpush1.msra.mxu0 0.0
    %3038 = vmatprep.subr.mxu0 0.0
    %3039 = vmatpush1.msra.mxu0 0.0
    %3040 = vmatprep.subr.mxu0 0.0
    %3041 = vmatpush1.msra.mxu0 0.0
    %3042 = vmatprep.subr.mxu0 0.0
    %3043 = vmatpush1.msra.mxu0 0.0
    %3044 = vmatprep.subr.mxu0 0.0
    %3045 = vmatpush1.msra.mxu0 0.0
    %3046 = vmatprep.subr.mxu0 0.0
    %3047 = vmatpush1.msra.mxu0 0.0
    %3048 = vmatprep.subr.mxu0 0.0
    %3049 = vmatpush1.msra.mxu0 0.0
    %3050 = vmatprep.subr.mxu0 0.0
    %3051 = vmatpush1.msra.mxu0 0.0
    %3052 = vmatprep.subr.mxu0 0.0
    %3053 = vmatpush1.msra.mxu0 0.0
    %3054 = vmatprep.subr.mxu0 0.0
    %3055 = vmatpush1.msra.mxu0 0.0
    %3056 = vmatprep.subr.mxu0 0.0
    %3057 = vmatpush1.msra.mxu0 0.0
    %3058 = vmatprep.subr.mxu0 0.0
    %3059 = vmatpush1.msra.mxu0 0.0
    %3060 = vmatprep.subr.mxu0 0.0
    %3061 = vmatpush1.msra.mxu0 0.0
    %3062 = vmatprep.subr.mxu0 0.0
    %3063 = vmatpush1.msra.mxu0 0.0
    %3064 = vmatprep.subr.mxu0 0.0
    %3065 = vmatpush1.msra.mxu0 0.0
    %3066 = vmatprep.subr.mxu0 0.0
    %3067 = vmatpush1.msra.mxu0 0.0
    %3068 = vmatprep.subr.mxu0 0.0
    %3069 = vmatpush1.msra.mxu0 0.0
    %3070 = vmatprep.subr.mxu0 0.0
    %3071 = vmatpush1.msra.mxu0 0.0
    %3072 = vmatprep.subr.mxu0 0.0
    %3073 = vmatpush1.msra.mxu0 0.0
    %3074 = vmatprep.subr.mxu0 0.0
    %3075 = vmatpush1.msra.mxu0 0.0
    %3076 = vmatprep.subr.mxu0 0.0
    %3077 = vmatpush1.msra.mxu0 0.0
    %3078 = vmatprep.subr.mxu0 0.0
    %3079 = vmatpush1.msra.mxu0 0.0
    %3080 = vmatprep.subr.mxu0 0.0
    %3081 = vmatpush1.msra.mxu0 0.0
    %3082 = vmatprep.subr.mxu0 0.0
    %3083 = vmatpush1.msra.mxu0 0.0
    %3084 = vmatprep.mubr.f32.mxu0 0.0
    %v3085 = vand.u32 %v2791, 4294901760
    %v3086 = vsub.f32 %v2791, %v3085
    %v3087 = vand.u32 %v3086, 4294901760
    %3088 = vmatmul.mubr.f32.gmra.mrb[0].mxu0 %v3087
    %v3089 = vpop.f32.mrb[0].mxu0
    %v3090 = vadd.f32 %v3016, %v3089
    %v3091 = vpop.f32.mrb[0].mxu0
    %3092 = vdwg.mxu0
    %3093 = vmatprep.subr.mxu0 0.0
    %v3094 = vand.u32 %v50, 4294901760
    %v3095 = vsub.f32 %v50, %v3094
    %v3096 = vand.u32 %v3095, 4294901760
    %3097 = vmatpush1.msra.mxu0 %v3096
    %3098 = vmatprep.subr.mxu0 0.0
    %3099 = vmatpush1.msra.mxu0 0.0
    %3100 = vmatprep.subr.mxu0 0.0
    %3101 = vmatpush1.msra.mxu0 0.0
    %3102 = vmatprep.subr.mxu0 0.0
    %3103 = vmatpush1.msra.mxu0 0.0
    %3104 = vmatprep.subr.mxu0 0.0
    %3105 = vmatpush1.msra.mxu0 0.0
    %3106 = vmatprep.subr.mxu0 0.0
    %3107 = vmatpush1.msra.mxu0 0.0
    %3108 = vmatprep.subr.mxu0 0.0
    %3109 = vmatpush1.msra.mxu0 0.0
    %3110 = vmatprep.subr.mxu0 0.0
    %3111 = vmatpush1.msra.mxu0 0.0
    %3112 = vmatprep.subr.mxu0 0.0
    %3113 = vmatpush1.msra.mxu0 0.0
    %3114 = vmatprep.subr.mxu0 0.0
    %3115 = vmatpush1.msra.mxu0 0.0
    %3116 = vmatprep.subr.mxu0 0.0
    %3117 = vmatpush1.msra.mxu0 0.0
    %3118 = vmatprep.subr.mxu0 0.0
    %3119 = vmatpush1.msra.mxu0 0.0
    %3120 = vmatprep.subr.mxu0 0.0
    %3121 = vmatpush1.msra.mxu0 0.0
    %3122 = vmatprep.subr.mxu0 0.0
    %3123 = vmatpush1.msra.mxu0 0.0
    %3124 = vmatprep.subr.mxu0 0.0
    %3125 = vmatpush1.msra.mxu0 0.0
    %3126 = vmatprep.subr.mxu0 0.0
    %3127 = vmatpush1.msra.mxu0 0.0
    %3128 = vmatprep.subr.mxu0 0.0
    %3129 = vmatpush1.msra.mxu0 0.0
    %3130 = vmatprep.subr.mxu0 0.0
    %3131 = vmatpush1.msra.mxu0 0.0
    %3132 = vmatprep.subr.mxu0 0.0
    %3133 = vmatpush1.msra.mxu0 0.0
    %3134 = vmatprep.subr.mxu0 0.0
    %3135 = vmatpush1.msra.mxu0 0.0
    %3136 = vmatprep.subr.mxu0 0.0
    %3137 = vmatpush1.msra.mxu0 0.0
    %3138 = vmatprep.subr.mxu0 0.0
    %3139 = vmatpush1.msra.mxu0 0.0
    %3140 = vmatprep.subr.mxu0 0.0
    %3141 = vmatpush1.msra.mxu0 0.0
    %3142 = vmatprep.subr.mxu0 0.0
    %3143 = vmatpush1.msra.mxu0 0.0
    %3144 = vmatprep.subr.mxu0 0.0
    %3145 = vmatpush1.msra.mxu0 0.0
    %3146 = vmatprep.subr.mxu0 0.0
    %3147 = vmatpush1.msra.mxu0 0.0
    %3148 = vmatprep.subr.mxu0 0.0
    %3149 = vmatpush1.msra.mxu0 0.0
    %3150 = vmatprep.subr.mxu0 0.0
    %3151 = vmatpush1.msra.mxu0 0.0
    %3152 = vmatprep.subr.mxu0 0.0
    %3153 = vmatpush1.msra.mxu0 0.0
    %3154 = vmatprep.subr.mxu0 0.0
    %3155 = vmatpush1.msra.mxu0 0.0
    %3156 = vmatprep.subr.mxu0 0.0
    %3157 = vmatpush1.msra.mxu0 0.0
    %3158 = vmatprep.subr.mxu0 0.0
    %3159 = vmatpush1.msra.mxu0 0.0
    %3160 = vmatprep.mubr.f32.mxu0 0.0
    %v3161 = vand.u32 %v2791, 4294901760
    %3162 = vmatmul.mubr.f32.gmra.mrb[0].mxu0 %v3161
    %v3163 = vpop.f32.mrb[0].mxu0
    %v3164 = vadd.f32 %v3090, %v3163
    %v3165 = vpop.f32.mrb[0].mxu0
    %3166 = vdwg.mxu0
    %3167 = vmatprep.subr.mxu0 0.0
    %v3168 = vand.u32 %v50, 4294901760
    %3169 = vmatpush1.msra.mxu0 %v3168
    %3170 = vmatprep.subr.mxu0 0.0
    %3171 = vmatpush1.msra.mxu0 0.0
    %3172 = vmatprep.subr.mxu0 0.0
    %3173 = vmatpush1.msra.mxu0 0.0
    %3174 = vmatprep.subr.mxu0 0.0
    %3175 = vmatpush1.msra.mxu0 0.0
    %3176 = vmatprep.subr.mxu0 0.0
    %3177 = vmatpush1.msra.mxu0 0.0
    %3178 = vmatprep.subr.mxu0 0.0
    %3179 = vmatpush1.msra.mxu0 0.0
    %3180 = vmatprep.subr.mxu0 0.0
    %3181 = vmatpush1.msra.mxu0 0.0
    %3182 = vmatprep.subr.mxu0 0.0
    %3183 = vmatpush1.msra.mxu0 0.0
    %3184 = vmatprep.subr.mxu0 0.0
    %3185 = vmatpush1.msra.mxu0 0.0
    %3186 = vmatprep.subr.mxu0 0.0
    %3187 = vmatpush1.msra.mxu0 0.0
    %3188 = vmatprep.subr.mxu0 0.0
    %3189 = vmatpush1.msra.mxu0 0.0
    %3190 = vmatprep.subr.mxu0 0.0
    %3191 = vmatpush1.msra.mxu0 0.0
    %3192 = vmatprep.subr.mxu0 0.0
    %3193 = vmatpush1.msra.mxu0 0.0
    %3194 = vmatprep.subr.mxu0 0.0
    %3195 = vmatpush1.msra.mxu0 0.0
    %3196 = vmatprep.subr.mxu0 0.0
    %3197 = vmatpush1.msra.mxu0 0.0
    %3198 = vmatprep.subr.mxu0 0.0
    %3199 = vmatpush1.msra.mxu0 0.0
    %3200 = vmatprep.subr.mxu0 0.0
    %3201 = vmatpush1.msra.mxu0 0.0
    %3202 = vmatprep.subr.mxu0 0.0
    %3203 = vmatpush1.msra.mxu0 0.0
    %3204 = vmatprep.subr.mxu0 0.0
    %3205 = vmatpush1.msra.mxu0 0.0
    %3206 = vmatprep.subr.mxu0 0.0
    %3207 = vmatpush1.msra.mxu0 0.0
    %3208 = vmatprep.subr.mxu0 0.0
    %3209 = vmatpush1.msra.mxu0 0.0
    %3210 = vmatprep.subr.mxu0 0.0
    %3211 = vmatpush1.msra.mxu0 0.0
    %3212 = vmatprep.subr.mxu0 0.0
    %3213 = vmatpush1.msra.mxu0 0.0
    %3214 = vmatprep.subr.mxu0 0.0
    %3215 = vmatpush1.msra.mxu0 0.0
    %3216 = vmatprep.subr.mxu0 0.0
    %3217 = vmatpush1.msra.mxu0 0.0
    %3218 = vmatprep.subr.mxu0 0.0
    %3219 = vmatpush1.msra.mxu0 0.0
    %3220 = vmatprep.subr.mxu0 0.0
    %3221 = vmatpush1.msra.mxu0 0.0
    %3222 = vmatprep.subr.mxu0 0.0
    %3223 = vmatpush1.msra.mxu0 0.0
    %3224 = vmatprep.subr.mxu0 0.0
    %3225 = vmatpush1.msra.mxu0 0.0
    %3226 = vmatprep.subr.mxu0 0.0
    %3227 = vmatpush1.msra.mxu0 0.0
    %3228 = vmatprep.subr.mxu0 0.0
    %3229 = vmatpush1.msra.mxu0 0.0
    %3230 = vmatprep.subr.mxu0 0.0
    %3231 = vmatpush1.msra.mxu0 0.0
    %3232 = vmatprep.mubr.f32.mxu0 0.0
    %v3233 = vand.u32 %v2791, 4294901760
    %3234 = vmatmul.mubr.f32.gmra.mrb[0].mxu0 %v3233
    %v3235 = vpop.f32.mrb[0].mxu0
    %v3236 = vadd.f32 %v3164, %v3235
    %v3237 = vpop.f32.mrb[0].mxu0
    %3238 = vdwg.mxu0
    %v3239 = vld [vmem:[%s1 + $0x7] sm:$0x1]
    %v3240 = vld [vmem:[%s1 + $0xf] sm:$0x1]
    %v3243 = vrot.slane %v3240, 7
    %v3244 = vsel %vm64, %v3243, %v3239
    %v3245 = vsel %vm66, %v3244, 0
    %3247 = vmatprep.subr.mxu0 0.0
    %v3248 = vand.u32 %v50, 4294901760
    %3249 = vmatpush1.msra.mxu0 %v3248
    %3250 = vmatprep.subr.mxu0 0.0
    %3251 = vmatpush1.msra.mxu0 0.0
    %3252 = vmatprep.subr.mxu0 0.0
    %3253 = vmatpush1.msra.mxu0 0.0
    %3254 = vmatprep.subr.mxu0 0.0
    %3255 = vmatpush1.msra.mxu0 0.0
    %3256 = vmatprep.subr.mxu0 0.0
    %3257 = vmatpush1.msra.mxu0 0.0
    %3258 = vmatprep.subr.mxu0 0.0
    %3259 = vmatpush1.msra.mxu0 0.0
    %3260 = vmatprep.subr.mxu0 0.0
    %3261 = vmatpush1.msra.mxu0 0.0
    %3262 = vmatprep.subr.mxu0 0.0
    %3263 = vmatpush1.msra.mxu0 0.0
    %3264 = vmatprep.subr.mxu0 0.0
    %3265 = vmatpush1.msra.mxu0 0.0
    %3266 = vmatprep.subr.mxu0 0.0
    %3267 = vmatpush1.msra.mxu0 0.0
    %3268 = vmatprep.subr.mxu0 0.0
    %3269 = vmatpush1.msra.mxu0 0.0
    %3270 = vmatprep.subr.mxu0 0.0
    %3271 = vmatpush1.msra.mxu0 0.0
    %3272 = vmatprep.subr.mxu0 0.0
    %3273 = vmatpush1.msra.mxu0 0.0
    %3274 = vmatprep.subr.mxu0 0.0
    %3275 = vmatpush1.msra.mxu0 0.0
    %3276 = vmatprep.subr.mxu0 0.0
    %3277 = vmatpush1.msra.mxu0 0.0
    %3278 = vmatprep.subr.mxu0 0.0
    %3279 = vmatpush1.msra.mxu0 0.0
    %3280 = vmatprep.subr.mxu0 0.0
    %3281 = vmatpush1.msra.mxu0 0.0
    %3282 = vmatprep.subr.mxu0 0.0
    %3283 = vmatpush1.msra.mxu0 0.0
    %3284 = vmatprep.subr.mxu0 0.0
    %3285 = vmatpush1.msra.mxu0 0.0
    %3286 = vmatprep.subr.mxu0 0.0
    %3287 = vmatpush1.msra.mxu0 0.0
    %3288 = vmatprep.subr.mxu0 0.0
    %3289 = vmatpush1.msra.mxu0 0.0
    %3290 = vmatprep.subr.mxu0 0.0
    %3291 = vmatpush1.msra.mxu0 0.0
    %3292 = vmatprep.subr.mxu0 0.0
    %3293 = vmatpush1.msra.mxu0 0.0
    %3294 = vmatprep.subr.mxu0 0.0
    %3295 = vmatpush1.msra.mxu0 0.0
    %3296 = vmatprep.subr.mxu0 0.0
    %3297 = vmatpush1.msra.mxu0 0.0
    %3298 = vmatprep.subr.mxu0 0.0
    %3299 = vmatpush1.msra.mxu0 0.0
    %3300 = vmatprep.subr.mxu0 0.0
    %3301 = vmatpush1.msra.mxu0 0.0
    %3302 = vmatprep.subr.mxu0 0.0
    %3303 = vmatpush1.msra.mxu0 0.0
    %3304 = vmatprep.subr.mxu0 0.0
    %3305 = vmatpush1.msra.mxu0 0.0
    %3306 = vmatprep.subr.mxu0 0.0
    %3307 = vmatpush1.msra.mxu0 0.0
    %3308 = vmatprep.subr.mxu0 0.0
    %3309 = vmatpush1.msra.mxu0 0.0
    %3310 = vmatprep.subr.mxu0 0.0
    %3311 = vmatpush1.msra.mxu0 0.0
    %3312 = vmatprep.mubr.f32.mxu0 0.0
    %v3313 = vand.u32 %v3245, 4294901760
    %v3314 = vsub.f32 %v3245, %v3313
    %v3315 = vand.u32 %v3314, 4294901760
    %v3316 = vsub.f32 %v3314, %v3315
    %v3317 = vand.u32 %v3316, 4294901760
    %3318 = vmatmul.mubr.f32.gmra.mrb[0].mxu0 %v3317
    %v3319 = vpop.f32.mrb[0].mxu0
    %v3320 = vadd.f32 %v59, %v3319
    %v3321 = vpop.f32.mrb[0].mxu0
    %3322 = vdwg.mxu0
    %3323 = vmatprep.subr.mxu0 0.0
    %v3324 = vand.u32 %v50, 4294901760
    %v3325 = vsub.f32 %v50, %v3324
    %v3326 = vand.u32 %v3325, 4294901760
    %v3327 = vsub.f32 %v3325, %v3326
    %v3328 = vand.u32 %v3327, 4294901760
    %3329 = vmatpush1.msra.mxu0 %v3328
    %3330 = vmatprep.subr.mxu0 0.0
    %3331 = vmatpush1.msra.mxu0 0.0
    %3332 = vmatprep.subr.mxu0 0.0
    %3333 = vmatpush1.msra.mxu0 0.0
    %3334 = vmatprep.subr.mxu0 0.0
    %3335 = vmatpush1.msra.mxu0 0.0
    %3336 = vmatprep.subr.mxu0 0.0
    %3337 = vmatpush1.msra.mxu0 0.0
    %3338 = vmatprep.subr.mxu0 0.0
    %3339 = vmatpush1.msra.mxu0 0.0
    %3340 = vmatprep.subr.mxu0 0.0
    %3341 = vmatpush1.msra.mxu0 0.0
    %3342 = vmatprep.subr.mxu0 0.0
    %3343 = vmatpush1.msra.mxu0 0.0
    %3344 = vmatprep.subr.mxu0 0.0
    %3345 = vmatpush1.msra.mxu0 0.0
    %3346 = vmatprep.subr.mxu0 0.0
    %3347 = vmatpush1.msra.mxu0 0.0
    %3348 = vmatprep.subr.mxu0 0.0
    %3349 = vmatpush1.msra.mxu0 0.0
    %3350 = vmatprep.subr.mxu0 0.0
    %3351 = vmatpush1.msra.mxu0 0.0
    %3352 = vmatprep.subr.mxu0 0.0
    %3353 = vmatpush1.msra.mxu0 0.0
    %3354 = vmatprep.subr.mxu0 0.0
    %3355 = vmatpush1.msra.mxu0 0.0
    %3356 = vmatprep.subr.mxu0 0.0
    %3357 = vmatpush1.msra.mxu0 0.0
    %3358 = vmatprep.subr.mxu0 0.0
    %3359 = vmatpush1.msra.mxu0 0.0
    %3360 = vmatprep.subr.mxu0 0.0
    %3361 = vmatpush1.msra.mxu0 0.0
    %3362 = vmatprep.subr.mxu0 0.0
    %3363 = vmatpush1.msra.mxu0 0.0
    %3364 = vmatprep.subr.mxu0 0.0
    %3365 = vmatpush1.msra.mxu0 0.0
    %3366 = vmatprep.subr.mxu0 0.0
    %3367 = vmatpush1.msra.mxu0 0.0
    %3368 = vmatprep.subr.mxu0 0.0
    %3369 = vmatpush1.msra.mxu0 0.0
    %3370 = vmatprep.subr.mxu0 0.0
    %3371 = vmatpush1.msra.mxu0 0.0
    %3372 = vmatprep.subr.mxu0 0.0
    %3373 = vmatpush1.msra.mxu0 0.0
    %3374 = vmatprep.subr.mxu0 0.0
    %3375 = vmatpush1.msra.mxu0 0.0
    %3376 = vmatprep.subr.mxu0 0.0
    %3377 = vmatpush1.msra.mxu0 0.0
    %3378 = vmatprep.subr.mxu0 0.0
    %3379 = vmatpush1.msra.mxu0 0.0
    %3380 = vmatprep.subr.mxu0 0.0
    %3381 = vmatpush1.msra.mxu0 0.0
    %3382 = vmatprep.subr.mxu0 0.0
    %3383 = vmatpush1.msra.mxu0 0.0
    %3384 = vmatprep.subr.mxu0 0.0
    %3385 = vmatpush1.msra.mxu0 0.0
    %3386 = vmatprep.subr.mxu0 0.0
    %3387 = vmatpush1.msra.mxu0 0.0
    %3388 = vmatprep.subr.mxu0 0.0
    %3389 = vmatpush1.msra.mxu0 0.0
    %3390 = vmatprep.subr.mxu0 0.0
    %3391 = vmatpush1.msra.mxu0 0.0
    %3392 = vmatprep.mubr.f32.mxu0 0.0
    %v3393 = vand.u32 %v3245, 4294901760
    %3394 = vmatmul.mubr.f32.gmra.mrb[0].mxu0 %v3393
    %v3395 = vpop.f32.mrb[0].mxu0
    %v3396 = vadd.f32 %v3320, %v3395
    %v3397 = vpop.f32.mrb[0].mxu0
    %3398 = vdwg.mxu0
    %3399 = vmatprep.subr.mxu0 0.0
    %v3400 = vand.u32 %v50, 4294901760
    %v3401 = vsub.f32 %v50, %v3400
    %3402 = vmatpush1.msra.mxu0 %v3401
    %3403 = vmatprep.subr.mxu0 0.0
    %3404 = vmatpush1.msra.mxu0 0.0
    %3405 = vmatprep.subr.mxu0 0.0
    %3406 = vmatpush1.msra.mxu0 0.0
    %3407 = vmatprep.subr.mxu0 0.0
    %3408 = vmatpush1.msra.mxu0 0.0
    %3409 = vmatprep.subr.mxu0 0.0
    %3410 = vmatpush1.msra.mxu0 0.0
    %3411 = vmatprep.subr.mxu0 0.0
    %3412 = vmatpush1.msra.mxu0 0.0
    %3413 = vmatprep.subr.mxu0 0.0
    %3414 = vmatpush1.msra.mxu0 0.0
    %3415 = vmatprep.subr.mxu0 0.0
    %3416 = vmatpush1.msra.mxu0 0.0
    %3417 = vmatprep.subr.mxu0 0.0
    %3418 = vmatpush1.msra.mxu0 0.0
    %3419 = vmatprep.subr.mxu0 0.0
    %3420 = vmatpush1.msra.mxu0 0.0
    %3421 = vmatprep.subr.mxu0 0.0
    %3422 = vmatpush1.msra.mxu0 0.0
    %3423 = vmatprep.subr.mxu0 0.0
    %3424 = vmatpush1.msra.mxu0 0.0
    %3425 = vmatprep.subr.mxu0 0.0
    %3426 = vmatpush1.msra.mxu0 0.0
    %3427 = vmatprep.subr.mxu0 0.0
    %3428 = vmatpush1.msra.mxu0 0.0
    %3429 = vmatprep.subr.mxu0 0.0
    %3430 = vmatpush1.msra.mxu0 0.0
    %3431 = vmatprep.subr.mxu0 0.0
    %3432 = vmatpush1.msra.mxu0 0.0
    %3433 = vmatprep.subr.mxu0 0.0
    %3434 = vmatpush1.msra.mxu0 0.0
    %3435 = vmatprep.subr.mxu0 0.0
    %3436 = vmatpush1.msra.mxu0 0.0
    %3437 = vmatprep.subr.mxu0 0.0
    %3438 = vmatpush1.msra.mxu0 0.0
    %3439 = vmatprep.subr.mxu0 0.0
    %3440 = vmatpush1.msra.mxu0 0.0
    %3441 = vmatprep.subr.mxu0 0.0
    %3442 = vmatpush1.msra.mxu0 0.0
    %3443 = vmatprep.subr.mxu0 0.0
    %3444 = vmatpush1.msra.mxu0 0.0
    %3445 = vmatprep.subr.mxu0 0.0
    %3446 = vmatpush1.msra.mxu0 0.0
    %3447 = vmatprep.subr.mxu0 0.0
    %3448 = vmatpush1.msra.mxu0 0.0
    %3449 = vmatprep.subr.mxu0 0.0
    %3450 = vmatpush1.msra.mxu0 0.0
    %3451 = vmatprep.subr.mxu0 0.0
    %3452 = vmatpush1.msra.mxu0 0.0
    %3453 = vmatprep.subr.mxu0 0.0
    %3454 = vmatpush1.msra.mxu0 0.0
    %3455 = vmatprep.subr.mxu0 0.0
    %3456 = vmatpush1.msra.mxu0 0.0
    %3457 = vmatprep.subr.mxu0 0.0
    %3458 = vmatpush1.msra.mxu0 0.0
    %3459 = vmatprep.subr.mxu0 0.0
    %3460 = vmatpush1.msra.mxu0 0.0
    %3461 = vmatprep.subr.mxu0 0.0
    %3462 = vmatpush1.msra.mxu0 0.0
    %3463 = vmatprep.subr.mxu0 0.0
    %3464 = vmatpush1.msra.mxu0 0.0
    %3465 = vmatprep.mubr.f32.mxu0 0.0
    %v3466 = vand.u32 %v3245, 4294901760
    %v3467 = vsub.f32 %v3245, %v3466
    %3468 = vmatmul.mubr.f32.gmra.mrb[0].mxu0 %v3467
    %v3469 = vpop.f32.mrb[0].mxu0
    %v3470 = vadd.f32 %v3396, %v3469
    %v3471 = vpop.f32.mrb[0].mxu0
    %3472 = vdwg.mxu0
    %3473 = vmatprep.subr.mxu0 0.0
    %v3474 = vand.u32 %v50, 4294901760
    %3475 = vmatpush1.msra.mxu0 %v3474
    %3476 = vmatprep.subr.mxu0 0.0
    %3477 = vmatpush1.msra.mxu0 0.0
    %3478 = vmatprep.subr.mxu0 0.0
    %3479 = vmatpush1.msra.mxu0 0.0
    %3480 = vmatprep.subr.mxu0 0.0
    %3481 = vmatpush1.msra.mxu0 0.0
    %3482 = vmatprep.subr.mxu0 0.0
    %3483 = vmatpush1.msra.mxu0 0.0
    %3484 = vmatprep.subr.mxu0 0.0
    %3485 = vmatpush1.msra.mxu0 0.0
    %3486 = vmatprep.subr.mxu0 0.0
    %3487 = vmatpush1.msra.mxu0 0.0
    %3488 = vmatprep.subr.mxu0 0.0
    %3489 = vmatpush1.msra.mxu0 0.0
    %3490 = vmatprep.subr.mxu0 0.0
    %3491 = vmatpush1.msra.mxu0 0.0
    %3492 = vmatprep.subr.mxu0 0.0
    %3493 = vmatpush1.msra.mxu0 0.0
    %3494 = vmatprep.subr.mxu0 0.0
    %3495 = vmatpush1.msra.mxu0 0.0
    %3496 = vmatprep.subr.mxu0 0.0
    %3497 = vmatpush1.msra.mxu0 0.0
    %3498 = vmatprep.subr.mxu0 0.0
    %3499 = vmatpush1.msra.mxu0 0.0
    %3500 = vmatprep.subr.mxu0 0.0
    %3501 = vmatpush1.msra.mxu0 0.0
    %3502 = vmatprep.subr.mxu0 0.0
    %3503 = vmatpush1.msra.mxu0 0.0
    %3504 = vmatprep.subr.mxu0 0.0
    %3505 = vmatpush1.msra.mxu0 0.0
    %3506 = vmatprep.subr.mxu0 0.0
    %3507 = vmatpush1.msra.mxu0 0.0
    %3508 = vmatprep.subr.mxu0 0.0
    %3509 = vmatpush1.msra.mxu0 0.0
    %3510 = vmatprep.subr.mxu0 0.0
    %3511 = vmatpush1.msra.mxu0 0.0
    %3512 = vmatprep.subr.mxu0 0.0
    %3513 = vmatpush1.msra.mxu0 0.0
    %3514 = vmatprep.subr.mxu0 0.0
    %3515 = vmatpush1.msra.mxu0 0.0
    %3516 = vmatprep.subr.mxu0 0.0
    %3517 = vmatpush1.msra.mxu0 0.0
    %3518 = vmatprep.subr.mxu0 0.0
    %3519 = vmatpush1.msra.mxu0 0.0
    %3520 = vmatprep.subr.mxu0 0.0
    %3521 = vmatpush1.msra.mxu0 0.0
    %3522 = vmatprep.subr.mxu0 0.0
    %3523 = vmatpush1.msra.mxu0 0.0
    %3524 = vmatprep.subr.mxu0 0.0
    %3525 = vmatpush1.msra.mxu0 0.0
    %3526 = vmatprep.subr.mxu0 0.0
    %3527 = vmatpush1.msra.mxu0 0.0
    %3528 = vmatprep.subr.mxu0 0.0
    %3529 = vmatpush1.msra.mxu0 0.0
    %3530 = vmatprep.subr.mxu0 0.0
    %3531 = vmatpush1.msra.mxu0 0.0
    %3532 = vmatprep.subr.mxu0 0.0
    %3533 = vmatpush1.msra.mxu0 0.0
    %3534 = vmatprep.subr.mxu0 0.0
    %3535 = vmatpush1.msra.mxu0 0.0
    %3536 = vmatprep.subr.mxu0 0.0
    %3537 = vmatpush1.msra.mxu0 0.0
    %3538 = vmatprep.mubr.f32.mxu0 0.0
    %v3539 = vand.u32 %v3245, 4294901760
    %v3540 = vsub.f32 %v3245, %v3539
    %v3541 = vand.u32 %v3540, 4294901760
    %3542 = vmatmul.mubr.f32.gmra.mrb[0].mxu0 %v3541
    %v3543 = vpop.f32.mrb[0].mxu0
    %v3544 = vadd.f32 %v3470, %v3543
    %v3545 = vpop.f32.mrb[0].mxu0
    %3546 = vdwg.mxu0
    %3547 = vmatprep.subr.mxu0 0.0
    %v3548 = vand.u32 %v50, 4294901760
    %v3549 = vsub.f32 %v50, %v3548
    %v3550 = vand.u32 %v3549, 4294901760
    %3551 = vmatpush1.msra.mxu0 %v3550
    %3552 = vmatprep.subr.mxu0 0.0
    %3553 = vmatpush1.msra.mxu0 0.0
    %3554 = vmatprep.subr.mxu0 0.0
    %3555 = vmatpush1.msra.mxu0 0.0
    %3556 = vmatprep.subr.mxu0 0.0
    %3557 = vmatpush1.msra.mxu0 0.0
    %3558 = vmatprep.subr.mxu0 0.0
    %3559 = vmatpush1.msra.mxu0 0.0
    %3560 = vmatprep.subr.mxu0 0.0
    %3561 = vmatpush1.msra.mxu0 0.0
    %3562 = vmatprep.subr.mxu0 0.0
    %3563 = vmatpush1.msra.mxu0 0.0
    %3564 = vmatprep.subr.mxu0 0.0
    %3565 = vmatpush1.msra.mxu0 0.0
    %3566 = vmatprep.subr.mxu0 0.0
    %3567 = vmatpush1.msra.mxu0 0.0
    %3568 = vmatprep.subr.mxu0 0.0
    %3569 = vmatpush1.msra.mxu0 0.0
    %3570 = vmatprep.subr.mxu0 0.0
    %3571 = vmatpush1.msra.mxu0 0.0
    %3572 = vmatprep.subr.mxu0 0.0
    %3573 = vmatpush1.msra.mxu0 0.0
    %3574 = vmatprep.subr.mxu0 0.0
    %3575 = vmatpush1.msra.mxu0 0.0
    %3576 = vmatprep.subr.mxu0 0.0
    %3577 = vmatpush1.msra.mxu0 0.0
    %3578 = vmatprep.subr.mxu0 0.0
    %3579 = vmatpush1.msra.mxu0 0.0
    %3580 = vmatprep.subr.mxu0 0.0
    %3581 = vmatpush1.msra.mxu0 0.0
    %3582 = vmatprep.subr.mxu0 0.0
    %3583 = vmatpush1.msra.mxu0 0.0
    %3584 = vmatprep.subr.mxu0 0.0
    %3585 = vmatpush1.msra.mxu0 0.0
    %3586 = vmatprep.subr.mxu0 0.0
    %3587 = vmatpush1.msra.mxu0 0.0
    %3588 = vmatprep.subr.mxu0 0.0
    %3589 = vmatpush1.msra.mxu0 0.0
    %3590 = vmatprep.subr.mxu0 0.0
    %3591 = vmatpush1.msra.mxu0 0.0
    %3592 = vmatprep.subr.mxu0 0.0
    %3593 = vmatpush1.msra.mxu0 0.0
    %3594 = vmatprep.subr.mxu0 0.0
    %3595 = vmatpush1.msra.mxu0 0.0
    %3596 = vmatprep.subr.mxu0 0.0
    %3597 = vmatpush1.msra.mxu0 0.0
    %3598 = vmatprep.subr.mxu0 0.0
    %3599 = vmatpush1.msra.mxu0 0.0
    %3600 = vmatprep.subr.mxu0 0.0
    %3601 = vmatpush1.msra.mxu0 0.0
    %3602 = vmatprep.subr.mxu0 0.0
    %3603 = vmatpush1.msra.mxu0 0.0
    %3604 = vmatprep.subr.mxu0 0.0
    %3605 = vmatpush1.msra.mxu0 0.0
    %3606 = vmatprep.subr.mxu0 0.0
    %3607 = vmatpush1.msra.mxu0 0.0
    %3608 = vmatprep.subr.mxu0 0.0
    %3609 = vmatpush1.msra.mxu0 0.0
    %3610 = vmatprep.subr.mxu0 0.0
    %3611 = vmatpush1.msra.mxu0 0.0
    %3612 = vmatprep.subr.mxu0 0.0
    %3613 = vmatpush1.msra.mxu0 0.0
    %3614 = vmatprep.mubr.f32.mxu0 0.0
    %v3615 = vand.u32 %v3245, 4294901760
    %3616 = vmatmul.mubr.f32.gmra.mrb[0].mxu0 %v3615
    %v3617 = vpop.f32.mrb[0].mxu0
    %v3618 = vadd.f32 %v3544, %v3617
    %v3619 = vpop.f32.mrb[0].mxu0
    %3620 = vdwg.mxu0
    %3621 = vmatprep.subr.mxu0 0.0
    %v3622 = vand.u32 %v50, 4294901760
    %3623 = vmatpush1.msra.mxu0 %v3622
    %3624 = vmatprep.subr.mxu0 0.0
    %3625 = vmatpush1.msra.mxu0 0.0
    %3626 = vmatprep.subr.mxu0 0.0
    %3627 = vmatpush1.msra.mxu0 0.0
    %3628 = vmatprep.subr.mxu0 0.0
    %3629 = vmatpush1.msra.mxu0 0.0
    %3630 = vmatprep.subr.mxu0 0.0
    %3631 = vmatpush1.msra.mxu0 0.0
    %3632 = vmatprep.subr.mxu0 0.0
    %3633 = vmatpush1.msra.mxu0 0.0
    %3634 = vmatprep.subr.mxu0 0.0
    %3635 = vmatpush1.msra.mxu0 0.0
    %3636 = vmatprep.subr.mxu0 0.0
    %3637 = vmatpush1.msra.mxu0 0.0
    %3638 = vmatprep.subr.mxu0 0.0
    %3639 = vmatpush1.msra.mxu0 0.0
    %3640 = vmatprep.subr.mxu0 0.0
    %3641 = vmatpush1.msra.mxu0 0.0
    %3642 = vmatprep.subr.mxu0 0.0
    %3643 = vmatpush1.msra.mxu0 0.0
    %3644 = vmatprep.subr.mxu0 0.0
    %3645 = vmatpush1.msra.mxu0 0.0
    %3646 = vmatprep.subr.mxu0 0.0
    %3647 = vmatpush1.msra.mxu0 0.0
    %3648 = vmatprep.subr.mxu0 0.0
    %3649 = vmatpush1.msra.mxu0 0.0
    %3650 = vmatprep.subr.mxu0 0.0
    %3651 = vmatpush1.msra.mxu0 0.0
    %3652 = vmatprep.subr.mxu0 0.0
    %3653 = vmatpush1.msra.mxu0 0.0
    %3654 = vmatprep.subr.mxu0 0.0
    %3655 = vmatpush1.msra.mxu0 0.0
    %3656 = vmatprep.subr.mxu0 0.0
    %3657 = vmatpush1.msra.mxu0 0.0
    %3658 = vmatprep.subr.mxu0 0.0
    %3659 = vmatpush1.msra.mxu0 0.0
    %3660 = vmatprep.subr.mxu0 0.0
    %3661 = vmatpush1.msra.mxu0 0.0
    %3662 = vmatprep.subr.mxu0 0.0
    %3663 = vmatpush1.msra.mxu0 0.0
    %3664 = vmatprep.subr.mxu0 0.0
    %3665 = vmatpush1.msra.mxu0 0.0
    %3666 = vmatprep.subr.mxu0 0.0
    %3667 = vmatpush1.msra.mxu0 0.0
    %3668 = vmatprep.subr.mxu0 0.0
    %3669 = vmatpush1.msra.mxu0 0.0
    %3670 = vmatprep.subr.mxu0 0.0
    %3671 = vmatpush1.msra.mxu0 0.0
    %3672 = vmatprep.subr.mxu0 0.0
    %3673 = vmatpush1.msra.mxu0 0.0
    %3674 = vmatprep.subr.mxu0 0.0
    %3675 = vmatpush1.msra.mxu0 0.0
    %3676 = vmatprep.subr.mxu0 0.0
    %3677 = vmatpush1.msra.mxu0 0.0
    %3678 = vmatprep.subr.mxu0 0.0
    %3679 = vmatpush1.msra.mxu0 0.0
    %3680 = vmatprep.subr.mxu0 0.0
    %3681 = vmatpush1.msra.mxu0 0.0
    %3682 = vmatprep.subr.mxu0 0.0
    %3683 = vmatpush1.msra.mxu0 0.0
    %3684 = vmatprep.subr.mxu0 0.0
    %3685 = vmatpush1.msra.mxu0 0.0
    %3686 = vmatprep.mubr.f32.mxu0 0.0
    %v3687 = vand.u32 %v3245, 4294901760
    %3688 = vmatmul.mubr.f32.gmra.mrb[0].mxu0 %v3687
    %v3689 = vpop.f32.mrb[0].mxu0
    %v3690 = vadd.f32 %v3618, %v3689
    %v3691 = vpop.f32.mrb[0].mxu0
    %3692 = vdwg.mxu0
    %v3694 = vsel %vm66, 0.0, 0
    %3696 = vmatprep.subr.mxu0 0.0
    %v3697 = vand.u32 %v51, 4294901760
    %3698 = vmatpush1.msra.mxu0 %v3697
    %3699 = vmatprep.subr.mxu0 0.0
    %3700 = vmatpush1.msra.mxu0 0.0
    %3701 = vmatprep.subr.mxu0 0.0
    %3702 = vmatpush1.msra.mxu0 0.0
    %3703 = vmatprep.subr.mxu0 0.0
    %3704 = vmatpush1.msra.mxu0 0.0
    %3705 = vmatprep.subr.mxu0 0.0
    %3706 = vmatpush1.msra.mxu0 0.0
    %3707 = vmatprep.subr.mxu0 0.0
    %3708 = vmatpush1.msra.mxu0 0.0
    %3709 = vmatprep.subr.mxu0 0.0
    %3710 = vmatpush1.msra.mxu0 0.0
    %3711 = vmatprep.subr.mxu0 0.0
    %3712 = vmatpush1.msra.mxu0 0.0
    %3713 = vmatprep.subr.mxu0 0.0
    %3714 = vmatpush1.msra.mxu0 0.0
    %3715 = vmatprep.subr.mxu0 0.0
    %3716 = vmatpush1.msra.mxu0 0.0
    %3717 = vmatprep.subr.mxu0 0.0
    %3718 = vmatpush1.msra.mxu0 0.0
    %3719 = vmatprep.subr.mxu0 0.0
    %3720 = vmatpush1.msra.mxu0 0.0
    %3721 = vmatprep.subr.mxu0 0.0
    %3722 = vmatpush1.msra.mxu0 0.0
    %3723 = vmatprep.subr.mxu0 0.0
    %3724 = vmatpush1.msra.mxu0 0.0
    %3725 = vmatprep.subr.mxu0 0.0
    %3726 = vmatpush1.msra.mxu0 0.0
    %3727 = vmatprep.subr.mxu0 0.0
    %3728 = vmatpush1.msra.mxu0 0.0
    %3729 = vmatprep.subr.mxu0 0.0
    %3730 = vmatpush1.msra.mxu0 0.0
    %3731 = vmatprep.subr.mxu0 0.0
    %3732 = vmatpush1.msra.mxu0 0.0
    %3733 = vmatprep.subr.mxu0 0.0
    %3734 = vmatpush1.msra.mxu0 0.0
    %3735 = vmatprep.subr.mxu0 0.0
    %3736 = vmatpush1.msra.mxu0 0.0
    %3737 = vmatprep.subr.mxu0 0.0
    %3738 = vmatpush1.msra.mxu0 0.0
    %3739 = vmatprep.subr.mxu0 0.0
    %3740 = vmatpush1.msra.mxu0 0.0
    %3741 = vmatprep.subr.mxu0 0.0
    %3742 = vmatpush1.msra.mxu0 0.0
    %3743 = vmatprep.subr.mxu0 0.0
    %3744 = vmatpush1.msra.mxu0 0.0
    %3745 = vmatprep.subr.mxu0 0.0
    %3746 = vmatpush1.msra.mxu0 0.0
    %3747 = vmatprep.subr.mxu0 0.0
    %3748 = vmatpush1.msra.mxu0 0.0
    %3749 = vmatprep.subr.mxu0 0.0
    %3750 = vmatpush1.msra.mxu0 0.0
    %3751 = vmatprep.subr.mxu0 0.0
    %3752 = vmatpush1.msra.mxu0 0.0
    %3753 = vmatprep.subr.mxu0 0.0
    %3754 = vmatpush1.msra.mxu0 0.0
    %3755 = vmatprep.subr.mxu0 0.0
    %3756 = vmatpush1.msra.mxu0 0.0
    %3757 = vmatprep.subr.mxu0 0.0
    %3758 = vmatpush1.msra.mxu0 0.0
    %3759 = vmatprep.subr.mxu0 0.0
    %3760 = vmatpush1.msra.mxu0 0.0
    %3761 = vmatprep.mubr.f32.mxu0 0.0
    %v3762 = vand.u32 %v3694, 4294901760
    %v3763 = vsub.f32 %v3694, %v3762
    %v3764 = vand.u32 %v3763, 4294901760
    %v3765 = vsub.f32 %v3763, %v3764
    %v3766 = vand.u32 %v3765, 4294901760
    %3767 = vmatmul.mubr.f32.gmra.mrb[0].mxu0 %v3766
    %v3768 = vpop.f32.mrb[0].mxu0
    %v3769 = vadd.f32 0.0, %v3768
    %v3770 = vpop.f32.mrb[0].mxu0
    %3771 = vdwg.mxu0
    %3772 = vmatprep.subr.mxu0 0.0
    %v3773 = vand.u32 %v51, 4294901760
    %v3774 = vsub.f32 %v51, %v3773
    %v3775 = vand.u32 %v3774, 4294901760
    %v3776 = vsub.f32 %v3774, %v3775
    %v3777 = vand.u32 %v3776, 4294901760
    %3778 = vmatpush1.msra.mxu0 %v3777
    %3779 = vmatprep.subr.mxu0 0.0
    %3780 = vmatpush1.msra.mxu0 0.0
    %3781 = vmatprep.subr.mxu0 0.0
    %3782 = vmatpush1.msra.mxu0 0.0
    %3783 = vmatprep.subr.mxu0 0.0
    %3784 = vmatpush1.msra.mxu0 0.0
    %3785 = vmatprep.subr.mxu0 0.0
    %3786 = vmatpush1.msra.mxu0 0.0
    %3787 = vmatprep.subr.mxu0 0.0
    %3788 = vmatpush1.msra.mxu0 0.0
    %3789 = vmatprep.subr.mxu0 0.0
    %3790 = vmatpush1.msra.mxu0 0.0
    %3791 = vmatprep.subr.mxu0 0.0
    %3792 = vmatpush1.msra.mxu0 0.0
    %3793 = vmatprep.subr.mxu0 0.0
    %3794 = vmatpush1.msra.mxu0 0.0
    %3795 = vmatprep.subr.mxu0 0.0
    %3796 = vmatpush1.msra.mxu0 0.0
    %3797 = vmatprep.subr.mxu0 0.0
    %3798 = vmatpush1.msra.mxu0 0.0
    %3799 = vmatprep.subr.mxu0 0.0
    %3800 = vmatpush1.msra.mxu0 0.0
    %3801 = vmatprep.subr.mxu0 0.0
    %3802 = vmatpush1.msra.mxu0 0.0
    %3803 = vmatprep.subr.mxu0 0.0
    %3804 = vmatpush1.msra.mxu0 0.0
    %3805 = vmatprep.subr.mxu0 0.0
    %3806 = vmatpush1.msra.mxu0 0.0
    %3807 = vmatprep.subr.mxu0 0.0
    %3808 = vmatpush1.msra.mxu0 0.0
    %3809 = vmatprep.subr.mxu0 0.0
    %3810 = vmatpush1.msra.mxu0 0.0
    %3811 = vmatprep.subr.mxu0 0.0
    %3812 = vmatpush1.msra.mxu0 0.0
    %3813 = vmatprep.subr.mxu0 0.0
    %3814 = vmatpush1.msra.mxu0 0.0
    %3815 = vmatprep.subr.mxu0 0.0
    %3816 = vmatpush1.msra.mxu0 0.0
    %3817 = vmatprep.subr.mxu0 0.0
    %3818 = vmatpush1.msra.mxu0 0.0
    %3819 = vmatprep.subr.mxu0 0.0
    %3820 = vmatpush1.msra.mxu0 0.0
    %3821 = vmatprep.subr.mxu0 0.0
    %3822 = vmatpush1.msra.mxu0 0.0
    %3823 = vmatprep.subr.mxu0 0.0
    %3824 = vmatpush1.msra.mxu0 0.0
    %3825 = vmatprep.subr.mxu0 0.0
    %3826 = vmatpush1.msra.mxu0 0.0
    %3827 = vmatprep.subr.mxu0 0.0
    %3828 = vmatpush1.msra.mxu0 0.0
    %3829 = vmatprep.subr.mxu0 0.0
    %3830 = vmatpush1.msra.mxu0 0.0
    %3831 = vmatprep.subr.mxu0 0.0
    %3832 = vmatpush1.msra.mxu0 0.0
    %3833 = vmatprep.subr.mxu0 0.0
    %3834 = vmatpush1.msra.mxu0 0.0
    %3835 = vmatprep.subr.mxu0 0.0
    %3836 = vmatpush1.msra.mxu0 0.0
    %3837 = vmatprep.subr.mxu0 0.0
    %3838 = vmatpush1.msra.mxu0 0.0
    %3839 = vmatprep.subr.mxu0 0.0
    %3840 = vmatpush1.msra.mxu0 0.0
    %3841 = vmatprep.mubr.f32.mxu0 0.0
    %v3842 = vand.u32 %v3694, 4294901760
    %3843 = vmatmul.mubr.f32.gmra.mrb[0].mxu0 %v3842
    %v3844 = vpop.f32.mrb[0].mxu0
    %v3845 = vadd.f32 %v3769, %v3844
    %v3846 = vpop.f32.mrb[0].mxu0
    %3847 = vdwg.mxu0
    %3848 = vmatprep.subr.mxu0 0.0
    %v3849 = vand.u32 %v51, 4294901760
    %v3850 = vsub.f32 %v51, %v3849
    %3851 = vmatpush1.msra.mxu0 %v3850
    %3852 = vmatprep.subr.mxu0 0.0
    %3853 = vmatpush1.msra.mxu0 0.0
    %3854 = vmatprep.subr.mxu0 0.0
    %3855 = vmatpush1.msra.mxu0 0.0
    %3856 = vmatprep.subr.mxu0 0.0
    %3857 = vmatpush1.msra.mxu0 0.0
    %3858 = vmatprep.subr.mxu0 0.0
    %3859 = vmatpush1.msra.mxu0 0.0
    %3860 = vmatprep.subr.mxu0 0.0
    %3861 = vmatpush1.msra.mxu0 0.0
    %3862 = vmatprep.subr.mxu0 0.0
    %3863 = vmatpush1.msra.mxu0 0.0
    %3864 = vmatprep.subr.mxu0 0.0
    %3865 = vmatpush1.msra.mxu0 0.0
    %3866 = vmatprep.subr.mxu0 0.0
    %3867 = vmatpush1.msra.mxu0 0.0
    %3868 = vmatprep.subr.mxu0 0.0
    %3869 = vmatpush1.msra.mxu0 0.0
    %3870 = vmatprep.subr.mxu0 0.0
    %3871 = vmatpush1.msra.mxu0 0.0
    %3872 = vmatprep.subr.mxu0 0.0
    %3873 = vmatpush1.msra.mxu0 0.0
    %3874 = vmatprep.subr.mxu0 0.0
    %3875 = vmatpush1.msra.mxu0 0.0
    %3876 = vmatprep.subr.mxu0 0.0
    %3877 = vmatpush1.msra.mxu0 0.0
    %3878 = vmatprep.subr.mxu0 0.0
    %3879 = vmatpush1.msra.mxu0 0.0
    %3880 = vmatprep.subr.mxu0 0.0
    %3881 = vmatpush1.msra.mxu0 0.0
    %3882 = vmatprep.subr.mxu0 0.0
    %3883 = vmatpush1.msra.mxu0 0.0
    %3884 = vmatprep.subr.mxu0 0.0
    %3885 = vmatpush1.msra.mxu0 0.0
    %3886 = vmatprep.subr.mxu0 0.0
    %3887 = vmatpush1.msra.mxu0 0.0
    %3888 = vmatprep.subr.mxu0 0.0
    %3889 = vmatpush1.msra.mxu0 0.0
    %3890 = vmatprep.subr.mxu0 0.0
    %3891 = vmatpush1.msra.mxu0 0.0
    %3892 = vmatprep.subr.mxu0 0.0
    %3893 = vmatpush1.msra.mxu0 0.0
    %3894 = vmatprep.subr.mxu0 0.0
    %3895 = vmatpush1.msra.mxu0 0.0
    %3896 = vmatprep.subr.mxu0 0.0
    %3897 = vmatpush1.msra.mxu0 0.0
    %3898 = vmatprep.subr.mxu0 0.0
    %3899 = vmatpush1.msra.mxu0 0.0
    %3900 = vmatprep.subr.mxu0 0.0
    %3901 = vmatpush1.msra.mxu0 0.0
    %3902 = vmatprep.subr.mxu0 0.0
    %3903 = vmatpush1.msra.mxu0 0.0
    %3904 = vmatprep.subr.mxu0 0.0
    %3905 = vmatpush1.msra.mxu0 0.0
    %3906 = vmatprep.subr.mxu0 0.0
    %3907 = vmatpush1.msra.mxu0 0.0
    %3908 = vmatprep.subr.mxu0 0.0
    %3909 = vmatpush1.msra.mxu0 0.0
    %3910 = vmatprep.subr.mxu0 0.0
    %3911 = vmatpush1.msra.mxu0 0.0
    %3912 = vmatprep.subr.mxu0 0.0
    %3913 = vmatpush1.msra.mxu0 0.0
    %3914 = vmatprep.mubr.f32.mxu0 0.0
    %v3915 = vand.u32 %v3694, 4294901760
    %v3916 = vsub.f32 %v3694, %v3915
    %3917 = vmatmul.mubr.f32.gmra.mrb[0].mxu0 %v3916
    %v3918 = vpop.f32.mrb[0].mxu0
    %v3919 = vadd.f32 %v3845, %v3918
    %v3920 = vpop.f32.mrb[0].mxu0
    %3921 = vdwg.mxu0
    %3922 = vmatprep.subr.mxu0 0.0
    %v3923 = vand.u32 %v51, 4294901760
    %3924 = vmatpush1.msra.mxu0 %v3923
    %3925 = vmatprep.subr.mxu0 0.0
    %3926 = vmatpush1.msra.mxu0 0.0
    %3927 = vmatprep.subr.mxu0 0.0
    %3928 = vmatpush1.msra.mxu0 0.0
    %3929 = vmatprep.subr.mxu0 0.0
    %3930 = vmatpush1.msra.mxu0 0.0
    %3931 = vmatprep.subr.mxu0 0.0
    %3932 = vmatpush1.msra.mxu0 0.0
    %3933 = vmatprep.subr.mxu0 0.0
    %3934 = vmatpush1.msra.mxu0 0.0
    %3935 = vmatprep.subr.mxu0 0.0
    %3936 = vmatpush1.msra.mxu0 0.0
    %3937 = vmatprep.subr.mxu0 0.0
    %3938 = vmatpush1.msra.mxu0 0.0
    %3939 = vmatprep.subr.mxu0 0.0
    %3940 = vmatpush1.msra.mxu0 0.0
    %3941 = vmatprep.subr.mxu0 0.0
    %3942 = vmatpush1.msra.mxu0 0.0
    %3943 = vmatprep.subr.mxu0 0.0
    %3944 = vmatpush1.msra.mxu0 0.0
    %3945 = vmatprep.subr.mxu0 0.0
    %3946 = vmatpush1.msra.mxu0 0.0
    %3947 = vmatprep.subr.mxu0 0.0
    %3948 = vmatpush1.msra.mxu0 0.0
    %3949 = vmatprep.subr.mxu0 0.0
    %3950 = vmatpush1.msra.mxu0 0.0
    %3951 = vmatprep.subr.mxu0 0.0
    %3952 = vmatpush1.msra.mxu0 0.0
    %3953 = vmatprep.subr.mxu0 0.0
    %3954 = vmatpush1.msra.mxu0 0.0
    %3955 = vmatprep.subr.mxu0 0.0
    %3956 = vmatpush1.msra.mxu0 0.0
    %3957 = vmatprep.subr.mxu0 0.0
    %3958 = vmatpush1.msra.mxu0 0.0
    %3959 = vmatprep.subr.mxu0 0.0
    %3960 = vmatpush1.msra.mxu0 0.0
    %3961 = vmatprep.subr.mxu0 0.0
    %3962 = vmatpush1.msra.mxu0 0.0
    %3963 = vmatprep.subr.mxu0 0.0
    %3964 = vmatpush1.msra.mxu0 0.0
    %3965 = vmatprep.subr.mxu0 0.0
    %3966 = vmatpush1.msra.mxu0 0.0
    %3967 = vmatprep.subr.mxu0 0.0
    %3968 = vmatpush1.msra.mxu0 0.0
    %3969 = vmatprep.subr.mxu0 0.0
    %3970 = vmatpush1.msra.mxu0 0.0
    %3971 = vmatprep.subr.mxu0 0.0
    %3972 = vmatpush1.msra.mxu0 0.0
    %3973 = vmatprep.subr.mxu0 0.0
    %3974 = vmatpush1.msra.mxu0 0.0
    %3975 = vmatprep.subr.mxu0 0.0
    %3976 = vmatpush1.msra.mxu0 0.0
    %3977 = vmatprep.subr.mxu0 0.0
    %3978 = vmatpush1.msra.mxu0 0.0
    %3979 = vmatprep.subr.mxu0 0.0
    %3980 = vmatpush1.msra.mxu0 0.0
    %3981 = vmatprep.subr.mxu0 0.0
    %3982 = vmatpush1.msra.mxu0 0.0
    %3983 = vmatprep.subr.mxu0 0.0
    %3984 = vmatpush1.msra.mxu0 0.0
    %3985 = vmatprep.subr.mxu0 0.0
    %3986 = vmatpush1.msra.mxu0 0.0
    %3987 = vmatprep.mubr.f32.mxu0 0.0
    %v3988 = vand.u32 %v3694, 4294901760
    %v3989 = vsub.f32 %v3694, %v3988
    %v3990 = vand.u32 %v3989, 4294901760
    %3991 = vmatmul.mubr.f32.gmra.mrb[0].mxu0 %v3990
    %v3992 = vpop.f32.mrb[0].mxu0
    %v3993 = vadd.f32 %v3919, %v3992
    %v3994 = vpop.f32.mrb[0].mxu0
    %3995 = vdwg.mxu0
    %3996 = vmatprep.subr.mxu0 0.0
    %v3997 = vand.u32 %v51, 4294901760
    %v3998 = vsub.f32 %v51, %v3997
    %v3999 = vand.u32 %v3998, 4294901760
    %4000 = vmatpush1.msra.mxu0 %v3999
    %4001 = vmatprep.subr.mxu0 0.0
    %4002 = vmatpush1.msra.mxu0 0.0
    %4003 = vmatprep.subr.mxu0 0.0
    %4004 = vmatpush1.msra.mxu0 0.0
    %4005 = vmatprep.subr.mxu0 0.0
    %4006 = vmatpush1.msra.mxu0 0.0
    %4007 = vmatprep.subr.mxu0 0.0
    %4008 = vmatpush1.msra.mxu0 0.0
    %4009 = vmatprep.subr.mxu0 0.0
    %4010 = vmatpush1.msra.mxu0 0.0
    %4011 = vmatprep.subr.mxu0 0.0
    %4012 = vmatpush1.msra.mxu0 0.0
    %4013 = vmatprep.subr.mxu0 0.0
    %4014 = vmatpush1.msra.mxu0 0.0
    %4015 = vmatprep.subr.mxu0 0.0
    %4016 = vmatpush1.msra.mxu0 0.0
    %4017 = vmatprep.subr.mxu0 0.0
    %4018 = vmatpush1.msra.mxu0 0.0
    %4019 = vmatprep.subr.mxu0 0.0
    %4020 = vmatpush1.msra.mxu0 0.0
    %4021 = vmatprep.subr.mxu0 0.0
    %4022 = vmatpush1.msra.mxu0 0.0
    %4023 = vmatprep.subr.mxu0 0.0
    %4024 = vmatpush1.msra.mxu0 0.0
    %4025 = vmatprep.subr.mxu0 0.0
    %4026 = vmatpush1.msra.mxu0 0.0
    %4027 = vmatprep.subr.mxu0 0.0
    %4028 = vmatpush1.msra.mxu0 0.0
    %4029 = vmatprep.subr.mxu0 0.0
    %4030 = vmatpush1.msra.mxu0 0.0
    %4031 = vmatprep.subr.mxu0 0.0
    %4032 = vmatpush1.msra.mxu0 0.0
    %4033 = vmatprep.subr.mxu0 0.0
    %4034 = vmatpush1.msra.mxu0 0.0
    %4035 = vmatprep.subr.mxu0 0.0
    %4036 = vmatpush1.msra.mxu0 0.0
    %4037 = vmatprep.subr.mxu0 0.0
    %4038 = vmatpush1.msra.mxu0 0.0
    %4039 = vmatprep.subr.mxu0 0.0
    %4040 = vmatpush1.msra.mxu0 0.0
    %4041 = vmatprep.subr.mxu0 0.0
    %4042 = vmatpush1.msra.mxu0 0.0
    %4043 = vmatprep.subr.mxu0 0.0
    %4044 = vmatpush1.msra.mxu0 0.0
    %4045 = vmatprep.subr.mxu0 0.0
    %4046 = vmatpush1.msra.mxu0 0.0
    %4047 = vmatprep.subr.mxu0 0.0
    %4048 = vmatpush1.msra.mxu0 0.0
    %4049 = vmatprep.subr.mxu0 0.0
    %4050 = vmatpush1.msra.mxu0 0.0
    %4051 = vmatprep.subr.mxu0 0.0
    %4052 = vmatpush1.msra.mxu0 0.0
    %4053 = vmatprep.subr.mxu0 0.0
    %4054 = vmatpush1.msra.mxu0 0.0
    %4055 = vmatprep.subr.mxu0 0.0
    %4056 = vmatpush1.msra.mxu0 0.0
    %4057 = vmatprep.subr.mxu0 0.0
    %4058 = vmatpush1.msra.mxu0 0.0
    %4059 = vmatprep.subr.mxu0 0.0
    %4060 = vmatpush1.msra.mxu0 0.0
    %4061 = vmatprep.subr.mxu0 0.0
    %4062 = vmatpush1.msra.mxu0 0.0
    %4063 = vmatprep.mubr.f32.mxu0 0.0
    %v4064 = vand.u32 %v3694, 4294901760
    %4065 = vmatmul.mubr.f32.gmra.mrb[0].mxu0 %v4064
    %v4066 = vpop.f32.mrb[0].mxu0
    %v4067 = vadd.f32 %v3993, %v4066
    %v4068 = vpop.f32.mrb[0].mxu0
    %4069 = vdwg.mxu0
    %4070 = vmatprep.subr.mxu0 0.0
    %v4071 = vand.u32 %v51, 4294901760
    %4072 = vmatpush1.msra.mxu0 %v4071
    %4073 = vmatprep.subr.mxu0 0.0
    %4074 = vmatpush1.msra.mxu0 0.0
    %4075 = vmatprep.subr.mxu0 0.0
    %4076 = vmatpush1.msra.mxu0 0.0
    %4077 = vmatprep.subr.mxu0 0.0
    %4078 = vmatpush1.msra.mxu0 0.0
    %4079 = vmatprep.subr.mxu0 0.0
    %4080 = vmatpush1.msra.mxu0 0.0
    %4081 = vmatprep.subr.mxu0 0.0
    %4082 = vmatpush1.msra.mxu0 0.0
    %4083 = vmatprep.subr.mxu0 0.0
    %4084 = vmatpush1.msra.mxu0 0.0
    %4085 = vmatprep.subr.mxu0 0.0
    %4086 = vmatpush1.msra.mxu0 0.0
    %4087 = vmatprep.subr.mxu0 0.0
    %4088 = vmatpush1.msra.mxu0 0.0
    %4089 = vmatprep.subr.mxu0 0.0
    %4090 = vmatpush1.msra.mxu0 0.0
    %4091 = vmatprep.subr.mxu0 0.0
    %4092 = vmatpush1.msra.mxu0 0.0
    %4093 = vmatprep.subr.mxu0 0.0
    %4094 = vmatpush1.msra.mxu0 0.0
    %4095 = vmatprep.subr.mxu0 0.0
    %4096 = vmatpush1.msra.mxu0 0.0
    %4097 = vmatprep.subr.mxu0 0.0
    %4098 = vmatpush1.msra.mxu0 0.0
    %4099 = vmatprep.subr.mxu0 0.0
    %4100 = vmatpush1.msra.mxu0 0.0
    %4101 = vmatprep.subr.mxu0 0.0
    %4102 = vmatpush1.msra.mxu0 0.0
    %4103 = vmatprep.subr.mxu0 0.0
    %4104 = vmatpush1.msra.mxu0 0.0
    %4105 = vmatprep.subr.mxu0 0.0
    %4106 = vmatpush1.msra.mxu0 0.0
    %4107 = vmatprep.subr.mxu0 0.0
    %4108 = vmatpush1.msra.mxu0 0.0
    %4109 = vmatprep.subr.mxu0 0.0
    %4110 = vmatpush1.msra.mxu0 0.0
    %4111 = vmatprep.subr.mxu0 0.0
    %4112 = vmatpush1.msra.mxu0 0.0
    %4113 = vmatprep.subr.mxu0 0.0
    %4114 = vmatpush1.msra.mxu0 0.0
    %4115 = vmatprep.subr.mxu0 0.0
    %4116 = vmatpush1.msra.mxu0 0.0
    %4117 = vmatprep.subr.mxu0 0.0
    %4118 = vmatpush1.msra.mxu0 0.0
    %4119 = vmatprep.subr.mxu0 0.0
    %4120 = vmatpush1.msra.mxu0 0.0
    %4121 = vmatprep.subr.mxu0 0.0
    %4122 = vmatpush1.msra.mxu0 0.0
    %4123 = vmatprep.subr.mxu0 0.0
    %4124 = vmatpush1.msra.mxu0 0.0
    %4125 = vmatprep.subr.mxu0 0.0
    %4126 = vmatpush1.msra.mxu0 0.0
    %4127 = vmatprep.subr.mxu0 0.0
    %4128 = vmatpush1.msra.mxu0 0.0
    %4129 = vmatprep.subr.mxu0 0.0
    %4130 = vmatpush1.msra.mxu0 0.0
    %4131 = vmatprep.subr.mxu0 0.0
    %4132 = vmatpush1.msra.mxu0 0.0
    %4133 = vmatprep.subr.mxu0 0.0
    %4134 = vmatpush1.msra.mxu0 0.0
    %4135 = vmatprep.mubr.f32.mxu0 0.0
    %v4136 = vand.u32 %v3694, 4294901760
    %4137 = vmatmul.mubr.f32.gmra.mrb[0].mxu0 %v4136
    %v4138 = vpop.f32.mrb[0].mxu0
    %v4139 = vadd.f32 %v4067, %v4138
    %v4140 = vpop.f32.mrb[0].mxu0
    %4141 = vdwg.mxu0
    %v4142 = vadd.f32 %v512, %v4139
    %v4143 = vtanh.pop %v4142
    %v4145 = vsel %vm66, %v4143, 0
    %4147 = vmatprep.subr.mxu0 0.0
    %v4148 = vand.u32 %v51, 4294901760
    %4149 = vmatpush1.msra.mxu0 %v4148
    %4150 = vmatprep.subr.mxu0 0.0
    %4151 = vmatpush1.msra.mxu0 0.0
    %4152 = vmatprep.subr.mxu0 0.0
    %4153 = vmatpush1.msra.mxu0 0.0
    %4154 = vmatprep.subr.mxu0 0.0
    %4155 = vmatpush1.msra.mxu0 0.0
    %4156 = vmatprep.subr.mxu0 0.0
    %4157 = vmatpush1.msra.mxu0 0.0
    %4158 = vmatprep.subr.mxu0 0.0
    %4159 = vmatpush1.msra.mxu0 0.0
    %4160 = vmatprep.subr.mxu0 0.0
    %4161 = vmatpush1.msra.mxu0 0.0
    %4162 = vmatprep.subr.mxu0 0.0
    %4163 = vmatpush1.msra.mxu0 0.0
    %4164 = vmatprep.subr.mxu0 0.0
    %4165 = vmatpush1.msra.mxu0 0.0
    %4166 = vmatprep.subr.mxu0 0.0
    %4167 = vmatpush1.msra.mxu0 0.0
    %4168 = vmatprep.subr.mxu0 0.0
    %4169 = vmatpush1.msra.mxu0 0.0
    %4170 = vmatprep.subr.mxu0 0.0
    %4171 = vmatpush1.msra.mxu0 0.0
    %4172 = vmatprep.subr.mxu0 0.0
    %4173 = vmatpush1.msra.mxu0 0.0
    %4174 = vmatprep.subr.mxu0 0.0
    %4175 = vmatpush1.msra.mxu0 0.0
    %4176 = vmatprep.subr.mxu0 0.0
    %4177 = vmatpush1.msra.mxu0 0.0
    %4178 = vmatprep.subr.mxu0 0.0
    %4179 = vmatpush1.msra.mxu0 0.0
    %4180 = vmatprep.subr.mxu0 0.0
    %4181 = vmatpush1.msra.mxu0 0.0
    %4182 = vmatprep.subr.mxu0 0.0
    %4183 = vmatpush1.msra.mxu0 0.0
    %4184 = vmatprep.subr.mxu0 0.0
    %4185 = vmatpush1.msra.mxu0 0.0
    %4186 = vmatprep.subr.mxu0 0.0
    %4187 = vmatpush1.msra.mxu0 0.0
    %4188 = vmatprep.subr.mxu0 0.0
    %4189 = vmatpush1.msra.mxu0 0.0
    %4190 = vmatprep.subr.mxu0 0.0
    %4191 = vmatpush1.msra.mxu0 0.0
    %4192 = vmatprep.subr.mxu0 0.0
    %4193 = vmatpush1.msra.mxu0 0.0
    %4194 = vmatprep.subr.mxu0 0.0
    %4195 = vmatpush1.msra.mxu0 0.0
    %4196 = vmatprep.subr.mxu0 0.0
    %4197 = vmatpush1.msra.mxu0 0.0
    %4198 = vmatprep.subr.mxu0 0.0
    %4199 = vmatpush1.msra.mxu0 0.0
    %4200 = vmatprep.subr.mxu0 0.0
    %4201 = vmatpush1.msra.mxu0 0.0
    %4202 = vmatprep.subr.mxu0 0.0
    %4203 = vmatpush1.msra.mxu0 0.0
    %4204 = vmatprep.subr.mxu0 0.0
    %4205 = vmatpush1.msra.mxu0 0.0
    %4206 = vmatprep.subr.mxu0 0.0
    %4207 = vmatpush1.msra.mxu0 0.0
    %4208 = vmatprep.subr.mxu0 0.0
    %4209 = vmatpush1.msra.mxu0 0.0
    %4210 = vmatprep.subr.mxu0 0.0
    %4211 = vmatpush1.msra.mxu0 0.0
    %4212 = vmatprep.mubr.f32.mxu0 0.0
    %v4213 = vand.u32 %v4145, 4294901760
    %v4214 = vsub.f32 %v4145, %v4213
    %v4215 = vand.u32 %v4214, 4294901760
    %v4216 = vsub.f32 %v4214, %v4215
    %v4217 = vand.u32 %v4216, 4294901760
    %4218 = vmatmul.mubr.f32.gmra.mrb[0].mxu0 %v4217
    %v4219 = vpop.f32.mrb[0].mxu0
    %v4220 = vadd.f32 0.0, %v4219
    %v4221 = vpop.f32.mrb[0].mxu0
    %4222 = vdwg.mxu0
    %4223 = vmatprep.subr.mxu0 0.0
    %v4224 = vand.u32 %v51, 4294901760
    %v4225 = vsub.f32 %v51, %v4224
    %v4226 = vand.u32 %v4225, 4294901760
    %v4227 = vsub.f32 %v4225, %v4226
    %v4228 = vand.u32 %v4227, 4294901760
    %4229 = vmatpush1.msra.mxu0 %v4228
    %4230 = vmatprep.subr.mxu0 0.0
    %4231 = vmatpush1.msra.mxu0 0.0
    %4232 = vmatprep.subr.mxu0 0.0
    %4233 = vmatpush1.msra.mxu0 0.0
    %4234 = vmatprep.subr.mxu0 0.0
    %4235 = vmatpush1.msra.mxu0 0.0
    %4236 = vmatprep.subr.mxu0 0.0
    %4237 = vmatpush1.msra.mxu0 0.0
    %4238 = vmatprep.subr.mxu0 0.0
    %4239 = vmatpush1.msra.mxu0 0.0
    %4240 = vmatprep.subr.mxu0 0.0
    %4241 = vmatpush1.msra.mxu0 0.0
    %4242 = vmatprep.subr.mxu0 0.0
    %4243 = vmatpush1.msra.mxu0 0.0
    %4244 = vmatprep.subr.mxu0 0.0
    %4245 = vmatpush1.msra.mxu0 0.0
    %4246 = vmatprep.subr.mxu0 0.0
    %4247 = vmatpush1.msra.mxu0 0.0
    %4248 = vmatprep.subr.mxu0 0.0
    %4249 = vmatpush1.msra.mxu0 0.0
    %4250 = vmatprep.subr.mxu0 0.0
    %4251 = vmatpush1.msra.mxu0 0.0
    %4252 = vmatprep.subr.mxu0 0.0
    %4253 = vmatpush1.msra.mxu0 0.0
    %4254 = vmatprep.subr.mxu0 0.0
    %4255 = vmatpush1.msra.mxu0 0.0
    %4256 = vmatprep.subr.mxu0 0.0
    %4257 = vmatpush1.msra.mxu0 0.0
    %4258 = vmatprep.subr.mxu0 0.0
    %4259 = vmatpush1.msra.mxu0 0.0
    %4260 = vmatprep.subr.mxu0 0.0
    %4261 = vmatpush1.msra.mxu0 0.0
    %4262 = vmatprep.subr.mxu0 0.0
    %4263 = vmatpush1.msra.mxu0 0.0
    %4264 = vmatprep.subr.mxu0 0.0
    %4265 = vmatpush1.msra.mxu0 0.0
    %4266 = vmatprep.subr.mxu0 0.0
    %4267 = vmatpush1.msra.mxu0 0.0
    %4268 = vmatprep.subr.mxu0 0.0
    %4269 = vmatpush1.msra.mxu0 0.0
    %4270 = vmatprep.subr.mxu0 0.0
    %4271 = vmatpush1.msra.mxu0 0.0
    %4272 = vmatprep.subr.mxu0 0.0
    %4273 = vmatpush1.msra.mxu0 0.0
    %4274 = vmatprep.subr.mxu0 0.0
    %4275 = vmatpush1.msra.mxu0 0.0
    %4276 = vmatprep.subr.mxu0 0.0
    %4277 = vmatpush1.msra.mxu0 0.0
    %4278 = vmatprep.subr.mxu0 0.0
    %4279 = vmatpush1.msra.mxu0 0.0
    %4280 = vmatprep.subr.mxu0 0.0
    %4281 = vmatpush1.msra.mxu0 0.0
    %4282 = vmatprep.subr.mxu0 0.0
    %4283 = vmatpush1.msra.mxu0 0.0
    %4284 = vmatprep.subr.mxu0 0.0
    %4285 = vmatpush1.msra.mxu0 0.0
    %4286 = vmatprep.subr.mxu0 0.0
    %4287 = vmatpush1.msra.mxu0 0.0
    %4288 = vmatprep.subr.mxu0 0.0
    %4289 = vmatpush1.msra.mxu0 0.0
    %4290 = vmatprep.subr.mxu0 0.0
    %4291 = vmatpush1.msra.mxu0 0.0
    %4292 = vmatprep.mubr.f32.mxu0 0.0
    %v4293 = vand.u32 %v4145, 4294901760
    %4294 = vmatmul.mubr.f32.gmra.mrb[0].mxu0 %v4293
    %v4295 = vpop.f32.mrb[0].mxu0
    %v4296 = vadd.f32 %v4220, %v4295
    %v4297 = vpop.f32.mrb[0].mxu0
    %4298 = vdwg.mxu0
    %4299 = vmatprep.subr.mxu0 0.0
    %v4300 = vand.u32 %v51, 4294901760
    %v4301 = vsub.f32 %v51, %v4300
    %4302 = vmatpush1.msra.mxu0 %v4301
    %4303 = vmatprep.subr.mxu0 0.0
    %4304 = vmatpush1.msra.mxu0 0.0
    %4305 = vmatprep.subr.mxu0 0.0
    %4306 = vmatpush1.msra.mxu0 0.0
    %4307 = vmatprep.subr.mxu0 0.0
    %4308 = vmatpush1.msra.mxu0 0.0
    %4309 = vmatprep.subr.mxu0 0.0
    %4310 = vmatpush1.msra.mxu0 0.0
    %4311 = vmatprep.subr.mxu0 0.0
    %4312 = vmatpush1.msra.mxu0 0.0
    %4313 = vmatprep.subr.mxu0 0.0
    %4314 = vmatpush1.msra.mxu0 0.0
    %4315 = vmatprep.subr.mxu0 0.0
    %4316 = vmatpush1.msra.mxu0 0.0
    %4317 = vmatprep.subr.mxu0 0.0
    %4318 = vmatpush1.msra.mxu0 0.0
    %4319 = vmatprep.subr.mxu0 0.0
    %4320 = vmatpush1.msra.mxu0 0.0
    %4321 = vmatprep.subr.mxu0 0.0
    %4322 = vmatpush1.msra.mxu0 0.0
    %4323 = vmatprep.subr.mxu0 0.0
    %4324 = vmatpush1.msra.mxu0 0.0
    %4325 = vmatprep.subr.mxu0 0.0
    %4326 = vmatpush1.msra.mxu0 0.0
    %4327 = vmatprep.subr.mxu0 0.0
    %4328 = vmatpush1.msra.mxu0 0.0
    %4329 = vmatprep.subr.mxu0 0.0
    %4330 = vmatpush1.msra.mxu0 0.0
    %4331 = vmatprep.subr.mxu0 0.0
    %4332 = vmatpush1.msra.mxu0 0.0
    %4333 = vmatprep.subr.mxu0 0.0
    %4334 = vmatpush1.msra.mxu0 0.0
    %4335 = vmatprep.subr.mxu0 0.0
    %4336 = vmatpush1.msra.mxu0 0.0
    %4337 = vmatprep.subr.mxu0 0.0
    %4338 = vmatpush1.msra.mxu0 0.0
    %4339 = vmatprep.subr.mxu0 0.0
    %4340 = vmatpush1.msra.mxu0 0.0
    %4341 = vmatprep.subr.mxu0 0.0
    %4342 = vmatpush1.msra.mxu0 0.0
    %4343 = vmatprep.subr.mxu0 0.0
    %4344 = vmatpush1.msra.mxu0 0.0
    %4345 = vmatprep.subr.mxu0 0.0
    %4346 = vmatpush1.msra.mxu0 0.0
    %4347 = vmatprep.subr.mxu0 0.0
    %4348 = vmatpush1.msra.mxu0 0.0
    %4349 = vmatprep.subr.mxu0 0.0
    %4350 = vmatpush1.msra.mxu0 0.0
    %4351 = vmatprep.subr.mxu0 0.0
    %4352 = vmatpush1.msra.mxu0 0.0
    %4353 = vmatprep.subr.mxu0 0.0
    %4354 = vmatpush1.msra.mxu0 0.0
    %4355 = vmatprep.subr.mxu0 0.0
    %4356 = vmatpush1.msra.mxu0 0.0
    %4357 = vmatprep.subr.mxu0 0.0
    %4358 = vmatpush1.msra.mxu0 0.0
    %4359 = vmatprep.subr.mxu0 0.0
    %4360 = vmatpush1.msra.mxu0 0.0
    %4361 = vmatprep.subr.mxu0 0.0
    %4362 = vmatpush1.msra.mxu0 0.0
    %4363 = vmatprep.subr.mxu0 0.0
    %4364 = vmatpush1.msra.mxu0 0.0
    %4365 = vmatprep.mubr.f32.mxu0 0.0
    %v4366 = vand.u32 %v4145, 4294901760
    %v4367 = vsub.f32 %v4145, %v4366
    %4368 = vmatmul.mubr.f32.gmra.mrb[0].mxu0 %v4367
    %v4369 = vpop.f32.mrb[0].mxu0
    %v4370 = vadd.f32 %v4296, %v4369
    %v4371 = vpop.f32.mrb[0].mxu0
    %4372 = vdwg.mxu0
    %4373 = vmatprep.subr.mxu0 0.0
    %v4374 = vand.u32 %v51, 4294901760
    %4375 = vmatpush1.msra.mxu0 %v4374
    %4376 = vmatprep.subr.mxu0 0.0
    %4377 = vmatpush1.msra.mxu0 0.0
    %4378 = vmatprep.subr.mxu0 0.0
    %4379 = vmatpush1.msra.mxu0 0.0
    %4380 = vmatprep.subr.mxu0 0.0
    %4381 = vmatpush1.msra.mxu0 0.0
    %4382 = vmatprep.subr.mxu0 0.0
    %4383 = vmatpush1.msra.mxu0 0.0
    %4384 = vmatprep.subr.mxu0 0.0
    %4385 = vmatpush1.msra.mxu0 0.0
    %4386 = vmatprep.subr.mxu0 0.0
    %4387 = vmatpush1.msra.mxu0 0.0
    %4388 = vmatprep.subr.mxu0 0.0
    %4389 = vmatpush1.msra.mxu0 0.0
    %4390 = vmatprep.subr.mxu0 0.0
    %4391 = vmatpush1.msra.mxu0 0.0
    %4392 = vmatprep.subr.mxu0 0.0
    %4393 = vmatpush1.msra.mxu0 0.0
    %4394 = vmatprep.subr.mxu0 0.0
    %4395 = vmatpush1.msra.mxu0 0.0
    %4396 = vmatprep.subr.mxu0 0.0
    %4397 = vmatpush1.msra.mxu0 0.0
    %4398 = vmatprep.subr.mxu0 0.0
    %4399 = vmatpush1.msra.mxu0 0.0
    %4400 = vmatprep.subr.mxu0 0.0
    %4401 = vmatpush1.msra.mxu0 0.0
    %4402 = vmatprep.subr.mxu0 0.0
    %4403 = vmatpush1.msra.mxu0 0.0
    %4404 = vmatprep.subr.mxu0 0.0
    %4405 = vmatpush1.msra.mxu0 0.0
    %4406 = vmatprep.subr.mxu0 0.0
    %4407 = vmatpush1.msra.mxu0 0.0
    %4408 = vmatprep.subr.mxu0 0.0
    %4409 = vmatpush1.msra.mxu0 0.0
    %4410 = vmatprep.subr.mxu0 0.0
    %4411 = vmatpush1.msra.mxu0 0.0
    %4412 = vmatprep.subr.mxu0 0.0
    %4413 = vmatpush1.msra.mxu0 0.0
    %4414 = vmatprep.subr.mxu0 0.0
    %4415 = vmatpush1.msra.mxu0 0.0
    %4416 = vmatprep.subr.mxu0 0.0
    %4417 = vmatpush1.msra.mxu0 0.0
    %4418 = vmatprep.subr.mxu0 0.0
    %4419 = vmatpush1.msra.mxu0 0.0
    %4420 = vmatprep.subr.mxu0 0.0
    %4421 = vmatpush1.msra.mxu0 0.0
    %4422 = vmatprep.subr.mxu0 0.0
    %4423 = vmatpush1.msra.mxu0 0.0
    %4424 = vmatprep.subr.mxu0 0.0
    %4425 = vmatpush1.msra.mxu0 0.0
    %4426 = vmatprep.subr.mxu0 0.0
    %4427 = vmatpush1.msra.mxu0 0.0
    %4428 = vmatprep.subr.mxu0 0.0
    %4429 = vmatpush1.msra.mxu0 0.0
    %4430 = vmatprep.subr.mxu0 0.0
    %4431 = vmatpush1.msra.mxu0 0.0
    %4432 = vmatprep.subr.mxu0 0.0
    %4433 = vmatpush1.msra.mxu0 0.0
    %4434 = vmatprep.subr.mxu0 0.0
    %4435 = vmatpush1.msra.mxu0 0.0
    %4436 = vmatprep.subr.mxu0 0.0
    %4437 = vmatpush1.msra.mxu0 0.0
    %4438 = vmatprep.mubr.f32.mxu0 0.0
    %v4439 = vand.u32 %v4145, 4294901760
    %v4440 = vsub.f32 %v4145, %v4439
    %v4441 = vand.u32 %v4440, 4294901760
    %4442 = vmatmul.mubr.f32.gmra.mrb[0].mxu0 %v4441
    %v4443 = vpop.f32.mrb[0].mxu0
    %v4444 = vadd.f32 %v4370, %v4443
    %v4445 = vpop.f32.mrb[0].mxu0
    %4446 = vdwg.mxu0
    %4447 = vmatprep.subr.mxu0 0.0
    %v4448 = vand.u32 %v51, 4294901760
    %v4449 = vsub.f32 %v51, %v4448
    %v4450 = vand.u32 %v4449, 4294901760
    %4451 = vmatpush1.msra.mxu0 %v4450
    %4452 = vmatprep.subr.mxu0 0.0
    %4453 = vmatpush1.msra.mxu0 0.0
    %4454 = vmatprep.subr.mxu0 0.0
    %4455 = vmatpush1.msra.mxu0 0.0
    %4456 = vmatprep.subr.mxu0 0.0
    %4457 = vmatpush1.msra.mxu0 0.0
    %4458 = vmatprep.subr.mxu0 0.0
    %4459 = vmatpush1.msra.mxu0 0.0
    %4460 = vmatprep.subr.mxu0 0.0
    %4461 = vmatpush1.msra.mxu0 0.0
    %4462 = vmatprep.subr.mxu0 0.0
    %4463 = vmatpush1.msra.mxu0 0.0
    %4464 = vmatprep.subr.mxu0 0.0
    %4465 = vmatpush1.msra.mxu0 0.0
    %4466 = vmatprep.subr.mxu0 0.0
    %4467 = vmatpush1.msra.mxu0 0.0
    %4468 = vmatprep.subr.mxu0 0.0
    %4469 = vmatpush1.msra.mxu0 0.0
    %4470 = vmatprep.subr.mxu0 0.0
    %4471 = vmatpush1.msra.mxu0 0.0
    %4472 = vmatprep.subr.mxu0 0.0
    %4473 = vmatpush1.msra.mxu0 0.0
    %4474 = vmatprep.subr.mxu0 0.0
    %4475 = vmatpush1.msra.mxu0 0.0
    %4476 = vmatprep.subr.mxu0 0.0
    %4477 = vmatpush1.msra.mxu0 0.0
    %4478 = vmatprep.subr.mxu0 0.0
    %4479 = vmatpush1.msra.mxu0 0.0
    %4480 = vmatprep.subr.mxu0 0.0
    %4481 = vmatpush1.msra.mxu0 0.0
    %4482 = vmatprep.subr.mxu0 0.0
    %4483 = vmatpush1.msra.mxu0 0.0
    %4484 = vmatprep.subr.mxu0 0.0
    %4485 = vmatpush1.msra.mxu0 0.0
    %4486 = vmatprep.subr.mxu0 0.0
    %4487 = vmatpush1.msra.mxu0 0.0
    %4488 = vmatprep.subr.mxu0 0.0
    %4489 = vmatpush1.msra.mxu0 0.0
    %4490 = vmatprep.subr.mxu0 0.0
    %4491 = vmatpush1.msra.mxu0 0.0
    %4492 = vmatprep.subr.mxu0 0.0
    %4493 = vmatpush1.msra.mxu0 0.0
    %4494 = vmatprep.subr.mxu0 0.0
    %4495 = vmatpush1.msra.mxu0 0.0
    %4496 = vmatprep.subr.mxu0 0.0
    %4497 = vmatpush1.msra.mxu0 0.0
    %4498 = vmatprep.subr.mxu0 0.0
    %4499 = vmatpush1.msra.mxu0 0.0
    %4500 = vmatprep.subr.mxu0 0.0
    %4501 = vmatpush1.msra.mxu0 0.0
    %4502 = vmatprep.subr.mxu0 0.0
    %4503 = vmatpush1.msra.mxu0 0.0
    %4504 = vmatprep.subr.mxu0 0.0
    %4505 = vmatpush1.msra.mxu0 0.0
    %4506 = vmatprep.subr.mxu0 0.0
    %4507 = vmatpush1.msra.mxu0 0.0
    %4508 = vmatprep.subr.mxu0 0.0
    %4509 = vmatpush1.msra.mxu0 0.0
    %4510 = vmatprep.subr.mxu0 0.0
    %4511 = vmatpush1.msra.mxu0 0.0
    %4512 = vmatprep.subr.mxu0 0.0
    %4513 = vmatpush1.msra.mxu0 0.0
    %4514 = vmatprep.mubr.f32.mxu0 0.0
    %v4515 = vand.u32 %v4145, 4294901760
    %4516 = vmatmul.mubr.f32.gmra.mrb[0].mxu0 %v4515
    %v4517 = vpop.f32.mrb[0].mxu0
    %v4518 = vadd.f32 %v4444, %v4517
    %v4519 = vpop.f32.mrb[0].mxu0
    %4520 = vdwg.mxu0
    %4521 = vmatprep.subr.mxu0 0.0
    %v4522 = vand.u32 %v51, 4294901760
    %4523 = vmatpush1.msra.mxu0 %v4522
    %4524 = vmatprep.subr.mxu0 0.0
    %4525 = vmatpush1.msra.mxu0 0.0
    %4526 = vmatprep.subr.mxu0 0.0
    %4527 = vmatpush1.msra.mxu0 0.0
    %4528 = vmatprep.subr.mxu0 0.0
    %4529 = vmatpush1.msra.mxu0 0.0
    %4530 = vmatprep.subr.mxu0 0.0
    %4531 = vmatpush1.msra.mxu0 0.0
    %4532 = vmatprep.subr.mxu0 0.0
    %4533 = vmatpush1.msra.mxu0 0.0
    %4534 = vmatprep.subr.mxu0 0.0
    %4535 = vmatpush1.msra.mxu0 0.0
    %4536 = vmatprep.subr.mxu0 0.0
    %4537 = vmatpush1.msra.mxu0 0.0
    %4538 = vmatprep.subr.mxu0 0.0
    %4539 = vmatpush1.msra.mxu0 0.0
    %4540 = vmatprep.subr.mxu0 0.0
    %4541 = vmatpush1.msra.mxu0 0.0
    %4542 = vmatprep.subr.mxu0 0.0
    %4543 = vmatpush1.msra.mxu0 0.0
    %4544 = vmatprep.subr.mxu0 0.0
    %4545 = vmatpush1.msra.mxu0 0.0
    %4546 = vmatprep.subr.mxu0 0.0
    %4547 = vmatpush1.msra.mxu0 0.0
    %4548 = vmatprep.subr.mxu0 0.0
    %4549 = vmatpush1.msra.mxu0 0.0
    %4550 = vmatprep.subr.mxu0 0.0
    %4551 = vmatpush1.msra.mxu0 0.0
    %4552 = vmatprep.subr.mxu0 0.0
    %4553 = vmatpush1.msra.mxu0 0.0
    %4554 = vmatprep.subr.mxu0 0.0
    %4555 = vmatpush1.msra.mxu0 0.0
    %4556 = vmatprep.subr.mxu0 0.0
    %4557 = vmatpush1.msra.mxu0 0.0
    %4558 = vmatprep.subr.mxu0 0.0
    %4559 = vmatpush1.msra.mxu0 0.0
    %4560 = vmatprep.subr.mxu0 0.0
    %4561 = vmatpush1.msra.mxu0 0.0
    %4562 = vmatprep.subr.mxu0 0.0
    %4563 = vmatpush1.msra.mxu0 0.0
    %4564 = vmatprep.subr.mxu0 0.0
    %4565 = vmatpush1.msra.mxu0 0.0
    %4566 = vmatprep.subr.mxu0 0.0
    %4567 = vmatpush1.msra.mxu0 0.0
    %4568 = vmatprep.subr.mxu0 0.0
    %4569 = vmatpush1.msra.mxu0 0.0
    %4570 = vmatprep.subr.mxu0 0.0
    %4571 = vmatpush1.msra.mxu0 0.0
    %4572 = vmatprep.subr.mxu0 0.0
    %4573 = vmatpush1.msra.mxu0 0.0
    %4574 = vmatprep.subr.mxu0 0.0
    %4575 = vmatpush1.msra.mxu0 0.0
    %4576 = vmatprep.subr.mxu0 0.0
    %4577 = vmatpush1.msra.mxu0 0.0
    %4578 = vmatprep.subr.mxu0 0.0
    %4579 = vmatpush1.msra.mxu0 0.0
    %4580 = vmatprep.subr.mxu0 0.0
    %4581 = vmatpush1.msra.mxu0 0.0
    %4582 = vmatprep.subr.mxu0 0.0
    %4583 = vmatpush1.msra.mxu0 0.0
    %4584 = vmatprep.subr.mxu0 0.0
    %4585 = vmatpush1.msra.mxu0 0.0
    %4586 = vmatprep.mubr.f32.mxu0 0.0
    %v4587 = vand.u32 %v4145, 4294901760
    %4588 = vmatmul.mubr.f32.gmra.mrb[0].mxu0 %v4587
    %v4589 = vpop.f32.mrb[0].mxu0
    %v4590 = vadd.f32 %v4518, %v4589
    %v4591 = vpop.f32.mrb[0].mxu0
    %4592 = vdwg.mxu0
    %v4593 = vadd.f32 %v966, %v4590
    %v4594 = vtanh.pop %v4593
    %v4596 = vsel %vm66, %v4594, 0
    %4598 = vmatprep.subr.mxu0 0.0
    %v4599 = vand.u32 %v51, 4294901760
    %4600 = vmatpush1.msra.mxu0 %v4599
    %4601 = vmatprep.subr.mxu0 0.0
    %4602 = vmatpush1.msra.mxu0 0.0
    %4603 = vmatprep.subr.mxu0 0.0
    %4604 = vmatpush1.msra.mxu0 0.0
    %4605 = vmatprep.subr.mxu0 0.0
    %4606 = vmatpush1.msra.mxu0 0.0
    %4607 = vmatprep.subr.mxu0 0.0
    %4608 = vmatpush1.msra.mxu0 0.0
    %4609 = vmatprep.subr.mxu0 0.0
    %4610 = vmatpush1.msra.mxu0 0.0
    %4611 = vmatprep.subr.mxu0 0.0
    %4612 = vmatpush1.msra.mxu0 0.0
    %4613 = vmatprep.subr.mxu0 0.0
    %4614 = vmatpush1.msra.mxu0 0.0
    %4615 = vmatprep.subr.mxu0 0.0
    %4616 = vmatpush1.msra.mxu0 0.0
    %4617 = vmatprep.subr.mxu0 0.0
    %4618 = vmatpush1.msra.mxu0 0.0
    %4619 = vmatprep.subr.mxu0 0.0
    %4620 = vmatpush1.msra.mxu0 0.0
    %4621 = vmatprep.subr.mxu0 0.0
    %4622 = vmatpush1.msra.mxu0 0.0
    %4623 = vmatprep.subr.mxu0 0.0
    %4624 = vmatpush1.msra.mxu0 0.0
    %4625 = vmatprep.subr.mxu0 0.0
    %4626 = vmatpush1.msra.mxu0 0.0
    %4627 = vmatprep.subr.mxu0 0.0
    %4628 = vmatpush1.msra.mxu0 0.0
    %4629 = vmatprep.subr.mxu0 0.0
    %4630 = vmatpush1.msra.mxu0 0.0
    %4631 = vmatprep.subr.mxu0 0.0
    %4632 = vmatpush1.msra.mxu0 0.0
    %4633 = vmatprep.subr.mxu0 0.0
    %4634 = vmatpush1.msra.mxu0 0.0
    %4635 = vmatprep.subr.mxu0 0.0
    %4636 = vmatpush1.msra.mxu0 0.0
    %4637 = vmatprep.subr.mxu0 0.0
    %4638 = vmatpush1.msra.mxu0 0.0
    %4639 = vmatprep.subr.mxu0 0.0
    %4640 = vmatpush1.msra.mxu0 0.0
    %4641 = vmatprep.subr.mxu0 0.0
    %4642 = vmatpush1.msra.mxu0 0.0
    %4643 = vmatprep.subr.mxu0 0.0
    %4644 = vmatpush1.msra.mxu0 0.0
    %4645 = vmatprep.subr.mxu0 0.0
    %4646 = vmatpush1.msra.mxu0 0.0
    %4647 = vmatprep.subr.mxu0 0.0
    %4648 = vmatpush1.msra.mxu0 0.0
    %4649 = vmatprep.subr.mxu0 0.0
    %4650 = vmatpush1.msra.mxu0 0.0
    %4651 = vmatprep.subr.mxu0 0.0
    %4652 = vmatpush1.msra.mxu0 0.0
    %4653 = vmatprep.subr.mxu0 0.0
    %4654 = vmatpush1.msra.mxu0 0.0
    %4655 = vmatprep.subr.mxu0 0.0
    %4656 = vmatpush1.msra.mxu0 0.0
    %4657 = vmatprep.subr.mxu0 0.0
    %4658 = vmatpush1.msra.mxu0 0.0
    %4659 = vmatprep.subr.mxu0 0.0
    %4660 = vmatpush1.msra.mxu0 0.0
    %4661 = vmatprep.subr.mxu0 0.0
    %4662 = vmatpush1.msra.mxu0 0.0
    %4663 = vmatprep.mubr.f32.mxu0 0.0
    %v4664 = vand.u32 %v4596, 4294901760
    %v4665 = vsub.f32 %v4596, %v4664
    %v4666 = vand.u32 %v4665, 4294901760
    %v4667 = vsub.f32 %v4665, %v4666
    %v4668 = vand.u32 %v4667, 4294901760
    %4669 = vmatmul.mubr.f32.gmra.mrb[0].mxu0 %v4668
    %v4670 = vpop.f32.mrb[0].mxu0
    %v4671 = vadd.f32 0.0, %v4670
    %v4672 = vpop.f32.mrb[0].mxu0
    %4673 = vdwg.mxu0
    %4674 = vmatprep.subr.mxu0 0.0
    %v4675 = vand.u32 %v51, 4294901760
    %v4676 = vsub.f32 %v51, %v4675
    %v4677 = vand.u32 %v4676, 4294901760
    %v4678 = vsub.f32 %v4676, %v4677
    %v4679 = vand.u32 %v4678, 4294901760
    %4680 = vmatpush1.msra.mxu0 %v4679
    %4681 = vmatprep.subr.mxu0 0.0
    %4682 = vmatpush1.msra.mxu0 0.0
    %4683 = vmatprep.subr.mxu0 0.0
    %4684 = vmatpush1.msra.mxu0 0.0
    %4685 = vmatprep.subr.mxu0 0.0
    %4686 = vmatpush1.msra.mxu0 0.0
    %4687 = vmatprep.subr.mxu0 0.0
    %4688 = vmatpush1.msra.mxu0 0.0
    %4689 = vmatprep.subr.mxu0 0.0
    %4690 = vmatpush1.msra.mxu0 0.0
    %4691 = vmatprep.subr.mxu0 0.0
    %4692 = vmatpush1.msra.mxu0 0.0
    %4693 = vmatprep.subr.mxu0 0.0
    %4694 = vmatpush1.msra.mxu0 0.0
    %4695 = vmatprep.subr.mxu0 0.0
    %4696 = vmatpush1.msra.mxu0 0.0
    %4697 = vmatprep.subr.mxu0 0.0
    %4698 = vmatpush1.msra.mxu0 0.0
    %4699 = vmatprep.subr.mxu0 0.0
    %4700 = vmatpush1.msra.mxu0 0.0
    %4701 = vmatprep.subr.mxu0 0.0
    %4702 = vmatpush1.msra.mxu0 0.0
    %4703 = vmatprep.subr.mxu0 0.0
    %4704 = vmatpush1.msra.mxu0 0.0
    %4705 = vmatprep.subr.mxu0 0.0
    %4706 = vmatpush1.msra.mxu0 0.0
    %4707 = vmatprep.subr.mxu0 0.0
    %4708 = vmatpush1.msra.mxu0 0.0
    %4709 = vmatprep.subr.mxu0 0.0
    %4710 = vmatpush1.msra.mxu0 0.0
    %4711 = vmatprep.subr.mxu0 0.0
    %4712 = vmatpush1.msra.mxu0 0.0
    %4713 = vmatprep.subr.mxu0 0.0
    %4714 = vmatpush1.msra.mxu0 0.0
    %4715 = vmatprep.subr.mxu0 0.0
    %4716 = vmatpush1.msra.mxu0 0.0
    %4717 = vmatprep.subr.mxu0 0.0
    %4718 = vmatpush1.msra.mxu0 0.0
    %4719 = vmatprep.subr.mxu0 0.0
    %4720 = vmatpush1.msra.mxu0 0.0
    %4721 = vmatprep.subr.mxu0 0.0
    %4722 = vmatpush1.msra.mxu0 0.0
    %4723 = vmatprep.subr.mxu0 0.0
    %4724 = vmatpush1.msra.mxu0 0.0
    %4725 = vmatprep.subr.mxu0 0.0
    %4726 = vmatpush1.msra.mxu0 0.0
    %4727 = vmatprep.subr.mxu0 0.0
    %4728 = vmatpush1.msra.mxu0 0.0
    %4729 = vmatprep.subr.mxu0 0.0
    %4730 = vmatpush1.msra.mxu0 0.0
    %4731 = vmatprep.subr.mxu0 0.0
    %4732 = vmatpush1.msra.mxu0 0.0
    %4733 = vmatprep.subr.mxu0 0.0
    %4734 = vmatpush1.msra.mxu0 0.0
    %4735 = vmatprep.subr.mxu0 0.0
    %4736 = vmatpush1.msra.mxu0 0.0
    %4737 = vmatprep.subr.mxu0 0.0
    %4738 = vmatpush1.msra.mxu0 0.0
    %4739 = vmatprep.subr.mxu0 0.0
    %4740 = vmatpush1.msra.mxu0 0.0
    %4741 = vmatprep.subr.mxu0 0.0
    %4742 = vmatpush1.msra.mxu0 0.0
    %4743 = vmatprep.mubr.f32.mxu0 0.0
    %v4744 = vand.u32 %v4596, 4294901760
    %4745 = vmatmul.mubr.f32.gmra.mrb[0].mxu0 %v4744
    %v4746 = vpop.f32.mrb[0].mxu0
    %v4747 = vadd.f32 %v4671, %v4746
    %v4748 = vpop.f32.mrb[0].mxu0
    %4749 = vdwg.mxu0
    %4750 = vmatprep.subr.mxu0 0.0
    %v4751 = vand.u32 %v51, 4294901760
    %v4752 = vsub.f32 %v51, %v4751
    %4753 = vmatpush1.msra.mxu0 %v4752
    %4754 = vmatprep.subr.mxu0 0.0
    %4755 = vmatpush1.msra.mxu0 0.0
    %4756 = vmatprep.subr.mxu0 0.0
    %4757 = vmatpush1.msra.mxu0 0.0
    %4758 = vmatprep.subr.mxu0 0.0
    %4759 = vmatpush1.msra.mxu0 0.0
    %4760 = vmatprep.subr.mxu0 0.0
    %4761 = vmatpush1.msra.mxu0 0.0
    %4762 = vmatprep.subr.mxu0 0.0
    %4763 = vmatpush1.msra.mxu0 0.0
    %4764 = vmatprep.subr.mxu0 0.0
    %4765 = vmatpush1.msra.mxu0 0.0
    %4766 = vmatprep.subr.mxu0 0.0
    %4767 = vmatpush1.msra.mxu0 0.0
    %4768 = vmatprep.subr.mxu0 0.0
    %4769 = vmatpush1.msra.mxu0 0.0
    %4770 = vmatprep.subr.mxu0 0.0
    %4771 = vmatpush1.msra.mxu0 0.0
    %4772 = vmatprep.subr.mxu0 0.0
    %4773 = vmatpush1.msra.mxu0 0.0
    %4774 = vmatprep.subr.mxu0 0.0
    %4775 = vmatpush1.msra.mxu0 0.0
    %4776 = vmatprep.subr.mxu0 0.0
    %4777 = vmatpush1.msra.mxu0 0.0
    %4778 = vmatprep.subr.mxu0 0.0
    %4779 = vmatpush1.msra.mxu0 0.0
    %4780 = vmatprep.subr.mxu0 0.0
    %4781 = vmatpush1.msra.mxu0 0.0
    %4782 = vmatprep.subr.mxu0 0.0
    %4783 = vmatpush1.msra.mxu0 0.0
    %4784 = vmatprep.subr.mxu0 0.0
    %4785 = vmatpush1.msra.mxu0 0.0
    %4786 = vmatprep.subr.mxu0 0.0
    %4787 = vmatpush1.msra.mxu0 0.0
    %4788 = vmatprep.subr.mxu0 0.0
    %4789 = vmatpush1.msra.mxu0 0.0
    %4790 = vmatprep.subr.mxu0 0.0
    %4791 = vmatpush1.msra.mxu0 0.0
    %4792 = vmatprep.subr.mxu0 0.0
    %4793 = vmatpush1.msra.mxu0 0.0
    %4794 = vmatprep.subr.mxu0 0.0
    %4795 = vmatpush1.msra.mxu0 0.0
    %4796 = vmatprep.subr.mxu0 0.0
    %4797 = vmatpush1.msra.mxu0 0.0
    %4798 = vmatprep.subr.mxu0 0.0
    %4799 = vmatpush1.msra.mxu0 0.0
    %4800 = vmatprep.subr.mxu0 0.0
    %4801 = vmatpush1.msra.mxu0 0.0
    %4802 = vmatprep.subr.mxu0 0.0
    %4803 = vmatpush1.msra.mxu0 0.0
    %4804 = vmatprep.subr.mxu0 0.0
    %4805 = vmatpush1.msra.mxu0 0.0
    %4806 = vmatprep.subr.mxu0 0.0
    %4807 = vmatpush1.msra.mxu0 0.0
    %4808 = vmatprep.subr.mxu0 0.0
    %4809 = vmatpush1.msra.mxu0 0.0
    %4810 = vmatprep.subr.mxu0 0.0
    %4811 = vmatpush1.msra.mxu0 0.0
    %4812 = vmatprep.subr.mxu0 0.0
    %4813 = vmatpush1.msra.mxu0 0.0
    %4814 = vmatprep.subr.mxu0 0.0
    %4815 = vmatpush1.msra.mxu0 0.0
    %4816 = vmatprep.mubr.f32.mxu0 0.0
    %v4817 = vand.u32 %v4596, 4294901760
    %v4818 = vsub.f32 %v4596, %v4817
    %4819 = vmatmul.mubr.f32.gmra.mrb[0].mxu0 %v4818
    %v4820 = vpop.f32.mrb[0].mxu0
    %v4821 = vadd.f32 %v4747, %v4820
    %v4822 = vpop.f32.mrb[0].mxu0
    %4823 = vdwg.mxu0
    %4824 = vmatprep.subr.mxu0 0.0
    %v4825 = vand.u32 %v51, 4294901760
    %4826 = vmatpush1.msra.mxu0 %v4825
    %4827 = vmatprep.subr.mxu0 0.0
    %4828 = vmatpush1.msra.mxu0 0.0
    %4829 = vmatprep.subr.mxu0 0.0
    %4830 = vmatpush1.msra.mxu0 0.0
    %4831 = vmatprep.subr.mxu0 0.0
    %4832 = vmatpush1.msra.mxu0 0.0
    %4833 = vmatprep.subr.mxu0 0.0
    %4834 = vmatpush1.msra.mxu0 0.0
    %4835 = vmatprep.subr.mxu0 0.0
    %4836 = vmatpush1.msra.mxu0 0.0
    %4837 = vmatprep.subr.mxu0 0.0
    %4838 = vmatpush1.msra.mxu0 0.0
    %4839 = vmatprep.subr.mxu0 0.0
    %4840 = vmatpush1.msra.mxu0 0.0
    %4841 = vmatprep.subr.mxu0 0.0
    %4842 = vmatpush1.msra.mxu0 0.0
    %4843 = vmatprep.subr.mxu0 0.0
    %4844 = vmatpush1.msra.mxu0 0.0
    %4845 = vmatprep.subr.mxu0 0.0
    %4846 = vmatpush1.msra.mxu0 0.0
    %4847 = vmatprep.subr.mxu0 0.0
    %4848 = vmatpush1.msra.mxu0 0.0
    %4849 = vmatprep.subr.mxu0 0.0
    %4850 = vmatpush1.msra.mxu0 0.0
    %4851 = vmatprep.subr.mxu0 0.0
    %4852 = vmatpush1.msra.mxu0 0.0
    %4853 = vmatprep.subr.mxu0 0.0
    %4854 = vmatpush1.msra.mxu0 0.0
    %4855 = vmatprep.subr.mxu0 0.0
    %4856 = vmatpush1.msra.mxu0 0.0
    %4857 = vmatprep.subr.mxu0 0.0
    %4858 = vmatpush1.msra.mxu0 0.0
    %4859 = vmatprep.subr.mxu0 0.0
    %4860 = vmatpush1.msra.mxu0 0.0
    %4861 = vmatprep.subr.mxu0 0.0
    %4862 = vmatpush1.msra.mxu0 0.0
    %4863 = vmatprep.subr.mxu0 0.0
    %4864 = vmatpush1.msra.mxu0 0.0
    %4865 = vmatprep.subr.mxu0 0.0
    %4866 = vmatpush1.msra.mxu0 0.0
    %4867 = vmatprep.subr.mxu0 0.0
    %4868 = vmatpush1.msra.mxu0 0.0
    %4869 = vmatprep.subr.mxu0 0.0
    %4870 = vmatpush1.msra.mxu0 0.0
    %4871 = vmatprep.subr.mxu0 0.0
    %4872 = vmatpush1.msra.mxu0 0.0
    %4873 = vmatprep.subr.mxu0 0.0
    %4874 = vmatpush1.msra.mxu0 0.0
    %4875 = vmatprep.subr.mxu0 0.0
    %4876 = vmatpush1.msra.mxu0 0.0
    %4877 = vmatprep.subr.mxu0 0.0
    %4878 = vmatpush1.msra.mxu0 0.0
    %4879 = vmatprep.subr.mxu0 0.0
    %4880 = vmatpush1.msra.mxu0 0.0
    %4881 = vmatprep.subr.mxu0 0.0
    %4882 = vmatpush1.msra.mxu0 0.0
    %4883 = vmatprep.subr.mxu0 0.0
    %4884 = vmatpush1.msra.mxu0 0.0
    %4885 = vmatprep.subr.mxu0 0.0
    %4886 = vmatpush1.msra.mxu0 0.0
    %4887 = vmatprep.subr.mxu0 0.0
    %4888 = vmatpush1.msra.mxu0 0.0
    %4889 = vmatprep.mubr.f32.mxu0 0.0
    %v4890 = vand.u32 %v4596, 4294901760
    %v4891 = vsub.f32 %v4596, %v4890
    %v4892 = vand.u32 %v4891, 4294901760
    %4893 = vmatmul.mubr.f32.gmra.mrb[0].mxu0 %v4892
    %v4894 = vpop.f32.mrb[0].mxu0
    %v4895 = vadd.f32 %v4821, %v4894
    %v4896 = vpop.f32.mrb[0].mxu0
    %4897 = vdwg.mxu0
    %4898 = vmatprep.subr.mxu0 0.0
    %v4899 = vand.u32 %v51, 4294901760
    %v4900 = vsub.f32 %v51, %v4899
    %v4901 = vand.u32 %v4900, 4294901760
    %4902 = vmatpush1.msra.mxu0 %v4901
    %4903 = vmatprep.subr.mxu0 0.0
    %4904 = vmatpush1.msra.mxu0 0.0
    %4905 = vmatprep.subr.mxu0 0.0
    %4906 = vmatpush1.msra.mxu0 0.0
    %4907 = vmatprep.subr.mxu0 0.0
    %4908 = vmatpush1.msra.mxu0 0.0
    %4909 = vmatprep.subr.mxu0 0.0
    %4910 = vmatpush1.msra.mxu0 0.0
    %4911 = vmatprep.subr.mxu0 0.0
    %4912 = vmatpush1.msra.mxu0 0.0
    %4913 = vmatprep.subr.mxu0 0.0
    %4914 = vmatpush1.msra.mxu0 0.0
    %4915 = vmatprep.subr.mxu0 0.0
    %4916 = vmatpush1.msra.mxu0 0.0
    %4917 = vmatprep.subr.mxu0 0.0
    %4918 = vmatpush1.msra.mxu0 0.0
    %4919 = vmatprep.subr.mxu0 0.0
    %4920 = vmatpush1.msra.mxu0 0.0
    %4921 = vmatprep.subr.mxu0 0.0
    %4922 = vmatpush1.msra.mxu0 0.0
    %4923 = vmatprep.subr.mxu0 0.0
    %4924 = vmatpush1.msra.mxu0 0.0
    %4925 = vmatprep.subr.mxu0 0.0
    %4926 = vmatpush1.msra.mxu0 0.0
    %4927 = vmatprep.subr.mxu0 0.0
    %4928 = vmatpush1.msra.mxu0 0.0
    %4929 = vmatprep.subr.mxu0 0.0
    %4930 = vmatpush1.msra.mxu0 0.0
    %4931 = vmatprep.subr.mxu0 0.0
    %4932 = vmatpush1.msra.mxu0 0.0
    %4933 = vmatprep.subr.mxu0 0.0
    %4934 = vmatpush1.msra.mxu0 0.0
    %4935 = vmatprep.subr.mxu0 0.0
    %4936 = vmatpush1.msra.mxu0 0.0
    %4937 = vmatprep.subr.mxu0 0.0
    %4938 = vmatpush1.msra.mxu0 0.0
    %4939 = vmatprep.subr.mxu0 0.0
    %4940 = vmatpush1.msra.mxu0 0.0
    %4941 = vmatprep.subr.mxu0 0.0
    %4942 = vmatpush1.msra.mxu0 0.0
    %4943 = vmatprep.subr.mxu0 0.0
    %4944 = vmatpush1.msra.mxu0 0.0
    %4945 = vmatprep.subr.mxu0 0.0
    %4946 = vmatpush1.msra.mxu0 0.0
    %4947 = vmatprep.subr.mxu0 0.0
    %4948 = vmatpush1.msra.mxu0 0.0
    %4949 = vmatprep.subr.mxu0 0.0
    %4950 = vmatpush1.msra.mxu0 0.0
    %4951 = vmatprep.subr.mxu0 0.0
    %4952 = vmatpush1.msra.mxu0 0.0
    %4953 = vmatprep.subr.mxu0 0.0
    %4954 = vmatpush1.msra.mxu0 0.0
    %4955 = vmatprep.subr.mxu0 0.0
    %4956 = vmatpush1.msra.mxu0 0.0
    %4957 = vmatprep.subr.mxu0 0.0
    %4958 = vmatpush1.msra.mxu0 0.0
    %4959 = vmatprep.subr.mxu0 0.0
    %4960 = vmatpush1.msra.mxu0 0.0
    %4961 = vmatprep.subr.mxu0 0.0
    %4962 = vmatpush1.msra.mxu0 0.0
    %4963 = vmatprep.subr.mxu0 0.0
    %4964 = vmatpush1.msra.mxu0 0.0
    %4965 = vmatprep.mubr.f32.mxu0 0.0
    %v4966 = vand.u32 %v4596, 4294901760
    %4967 = vmatmul.mubr.f32.gmra.mrb[0].mxu0 %v4966
    %v4968 = vpop.f32.mrb[0].mxu0
    %v4969 = vadd.f32 %v4895, %v4968
    %v4970 = vpop.f32.mrb[0].mxu0
    %4971 = vdwg.mxu0
    %4972 = vmatprep.subr.mxu0 0.0
    %v4973 = vand.u32 %v51, 4294901760
    %4974 = vmatpush1.msra.mxu0 %v4973
    %4975 = vmatprep.subr.mxu0 0.0
    %4976 = vmatpush1.msra.mxu0 0.0
    %4977 = vmatprep.subr.mxu0 0.0
    %4978 = vmatpush1.msra.mxu0 0.0
    %4979 = vmatprep.subr.mxu0 0.0
    %4980 = vmatpush1.msra.mxu0 0.0
    %4981 = vmatprep.subr.mxu0 0.0
    %4982 = vmatpush1.msra.mxu0 0.0
    %4983 = vmatprep.subr.mxu0 0.0
    %4984 = vmatpush1.msra.mxu0 0.0
    %4985 = vmatprep.subr.mxu0 0.0
    %4986 = vmatpush1.msra.mxu0 0.0
    %4987 = vmatprep.subr.mxu0 0.0
    %4988 = vmatpush1.msra.mxu0 0.0
    %4989 = vmatprep.subr.mxu0 0.0
    %4990 = vmatpush1.msra.mxu0 0.0
    %4991 = vmatprep.subr.mxu0 0.0
    %4992 = vmatpush1.msra.mxu0 0.0
    %4993 = vmatprep.subr.mxu0 0.0
    %4994 = vmatpush1.msra.mxu0 0.0
    %4995 = vmatprep.subr.mxu0 0.0
    %4996 = vmatpush1.msra.mxu0 0.0
    %4997 = vmatprep.subr.mxu0 0.0
    %4998 = vmatpush1.msra.mxu0 0.0
    %4999 = vmatprep.subr.mxu0 0.0
    %5000 = vmatpush1.msra.mxu0 0.0
    %5001 = vmatprep.subr.mxu0 0.0
    %5002 = vmatpush1.msra.mxu0 0.0
    %5003 = vmatprep.subr.mxu0 0.0
    %5004 = vmatpush1.msra.mxu0 0.0
    %5005 = vmatprep.subr.mxu0 0.0
    %5006 = vmatpush1.msra.mxu0 0.0
    %5007 = vmatprep.subr.mxu0 0.0
    %5008 = vmatpush1.msra.mxu0 0.0
    %5009 = vmatprep.subr.mxu0 0.0
    %5010 = vmatpush1.msra.mxu0 0.0
    %5011 = vmatprep.subr.mxu0 0.0
    %5012 = vmatpush1.msra.mxu0 0.0
    %5013 = vmatprep.subr.mxu0 0.0
    %5014 = vmatpush1.msra.mxu0 0.0
    %5015 = vmatprep.subr.mxu0 0.0
    %5016 = vmatpush1.msra.mxu0 0.0
    %5017 = vmatprep.subr.mxu0 0.0
    %5018 = vmatpush1.msra.mxu0 0.0
    %5019 = vmatprep.subr.mxu0 0.0
    %5020 = vmatpush1.msra.mxu0 0.0
    %5021 = vmatprep.subr.mxu0 0.0
    %5022 = vmatpush1.msra.mxu0 0.0
    %5023 = vmatprep.subr.mxu0 0.0
    %5024 = vmatpush1.msra.mxu0 0.0
    %5025 = vmatprep.subr.mxu0 0.0
    %5026 = vmatpush1.msra.mxu0 0.0
    %5027 = vmatprep.subr.mxu0 0.0
    %5028 = vmatpush1.msra.mxu0 0.0
    %5029 = vmatprep.subr.mxu0 0.0
    %5030 = vmatpush1.msra.mxu0 0.0
    %5031 = vmatprep.subr.mxu0 0.0
    %5032 = vmatpush1.msra.mxu0 0.0
    %5033 = vmatprep.subr.mxu0 0.0
    %5034 = vmatpush1.msra.mxu0 0.0
    %5035 = vmatprep.subr.mxu0 0.0
    %5036 = vmatpush1.msra.mxu0 0.0
    %5037 = vmatprep.mubr.f32.mxu0 0.0
    %v5038 = vand.u32 %v4596, 4294901760
    %5039 = vmatmul.mubr.f32.gmra.mrb[0].mxu0 %v5038
    %v5040 = vpop.f32.mrb[0].mxu0
    %v5041 = vadd.f32 %v4969, %v5040
    %v5042 = vpop.f32.mrb[0].mxu0
    %5043 = vdwg.mxu0
    %v5044 = vadd.f32 %v1420, %v5041
    %v5045 = vtanh.pop %v5044
    %v5047 = vsel %vm66, %v5045, 0
    %5049 = vmatprep.subr.mxu0 0.0
    %v5050 = vand.u32 %v51, 4294901760
    %5051 = vmatpush1.msra.mxu0 %v5050
    %5052 = vmatprep.subr.mxu0 0.0
    %5053 = vmatpush1.msra.mxu0 0.0
    %5054 = vmatprep.subr.mxu0 0.0
    %5055 = vmatpush1.msra.mxu0 0.0
    %5056 = vmatprep.subr.mxu0 0.0
    %5057 = vmatpush1.msra.mxu0 0.0
    %5058 = vmatprep.subr.mxu0 0.0
    %5059 = vmatpush1.msra.mxu0 0.0
    %5060 = vmatprep.subr.mxu0 0.0
    %5061 = vmatpush1.msra.mxu0 0.0
    %5062 = vmatprep.subr.mxu0 0.0
    %5063 = vmatpush1.msra.mxu0 0.0
    %5064 = vmatprep.subr.mxu0 0.0
    %5065 = vmatpush1.msra.mxu0 0.0
    %5066 = vmatprep.subr.mxu0 0.0
    %5067 = vmatpush1.msra.mxu0 0.0
    %5068 = vmatprep.subr.mxu0 0.0
    %5069 = vmatpush1.msra.mxu0 0.0
    %5070 = vmatprep.subr.mxu0 0.0
    %5071 = vmatpush1.msra.mxu0 0.0
    %5072 = vmatprep.subr.mxu0 0.0
    %5073 = vmatpush1.msra.mxu0 0.0
    %5074 = vmatprep.subr.mxu0 0.0
    %5075 = vmatpush1.msra.mxu0 0.0
    %5076 = vmatprep.subr.mxu0 0.0
    %5077 = vmatpush1.msra.mxu0 0.0
    %5078 = vmatprep.subr.mxu0 0.0
    %5079 = vmatpush1.msra.mxu0 0.0
    %5080 = vmatprep.subr.mxu0 0.0
    %5081 = vmatpush1.msra.mxu0 0.0
    %5082 = vmatprep.subr.mxu0 0.0
    %5083 = vmatpush1.msra.mxu0 0.0
    %5084 = vmatprep.subr.mxu0 0.0
    %5085 = vmatpush1.msra.mxu0 0.0
    %5086 = vmatprep.subr.mxu0 0.0
    %5087 = vmatpush1.msra.mxu0 0.0
    %5088 = vmatprep.subr.mxu0 0.0
    %5089 = vmatpush1.msra.mxu0 0.0
    %5090 = vmatprep.subr.mxu0 0.0
    %5091 = vmatpush1.msra.mxu0 0.0
    %5092 = vmatprep.subr.mxu0 0.0
    %5093 = vmatpush1.msra.mxu0 0.0
    %5094 = vmatprep.subr.mxu0 0.0
    %5095 = vmatpush1.msra.mxu0 0.0
    %5096 = vmatprep.subr.mxu0 0.0
    %5097 = vmatpush1.msra.mxu0 0.0
    %5098 = vmatprep.subr.mxu0 0.0
    %5099 = vmatpush1.msra.mxu0 0.0
    %5100 = vmatprep.subr.mxu0 0.0
    %5101 = vmatpush1.msra.mxu0 0.0
    %5102 = vmatprep.subr.mxu0 0.0
    %5103 = vmatpush1.msra.mxu0 0.0
    %5104 = vmatprep.subr.mxu0 0.0
    %5105 = vmatpush1.msra.mxu0 0.0
    %5106 = vmatprep.subr.mxu0 0.0
    %5107 = vmatpush1.msra.mxu0 0.0
    %5108 = vmatprep.subr.mxu0 0.0
    %5109 = vmatpush1.msra.mxu0 0.0
    %5110 = vmatprep.subr.mxu0 0.0
    %5111 = vmatpush1.msra.mxu0 0.0
    %5112 = vmatprep.subr.mxu0 0.0
    %5113 = vmatpush1.msra.mxu0 0.0
    %5114 = vmatprep.mubr.f32.mxu0 0.0
    %v5115 = vand.u32 %v5047, 4294901760
    %v5116 = vsub.f32 %v5047, %v5115
    %v5117 = vand.u32 %v5116, 4294901760
    %v5118 = vsub.f32 %v5116, %v5117
    %v5119 = vand.u32 %v5118, 4294901760
    %5120 = vmatmul.mubr.f32.gmra.mrb[0].mxu0 %v5119
    %v5121 = vpop.f32.mrb[0].mxu0
    %v5122 = vadd.f32 0.0, %v5121
    %v5123 = vpop.f32.mrb[0].mxu0
    %5124 = vdwg.mxu0
    %5125 = vmatprep.subr.mxu0 0.0
    %v5126 = vand.u32 %v51, 4294901760
    %v5127 = vsub.f32 %v51, %v5126
    %v5128 = vand.u32 %v5127, 4294901760
    %v5129 = vsub.f32 %v5127, %v5128
    %v5130 = vand.u32 %v5129, 4294901760
    %5131 = vmatpush1.msra.mxu0 %v5130
    %5132 = vmatprep.subr.mxu0 0.0
    %5133 = vmatpush1.msra.mxu0 0.0
    %5134 = vmatprep.subr.mxu0 0.0
    %5135 = vmatpush1.msra.mxu0 0.0
    %5136 = vmatprep.subr.mxu0 0.0
    %5137 = vmatpush1.msra.mxu0 0.0
    %5138 = vmatprep.subr.mxu0 0.0
    %5139 = vmatpush1.msra.mxu0 0.0
    %5140 = vmatprep.subr.mxu0 0.0
    %5141 = vmatpush1.msra.mxu0 0.0
    %5142 = vmatprep.subr.mxu0 0.0
    %5143 = vmatpush1.msra.mxu0 0.0
    %5144 = vmatprep.subr.mxu0 0.0
    %5145 = vmatpush1.msra.mxu0 0.0
    %5146 = vmatprep.subr.mxu0 0.0
    %5147 = vmatpush1.msra.mxu0 0.0
    %5148 = vmatprep.subr.mxu0 0.0
    %5149 = vmatpush1.msra.mxu0 0.0
    %5150 = vmatprep.subr.mxu0 0.0
    %5151 = vmatpush1.msra.mxu0 0.0
    %5152 = vmatprep.subr.mxu0 0.0
    %5153 = vmatpush1.msra.mxu0 0.0
    %5154 = vmatprep.subr.mxu0 0.0
    %5155 = vmatpush1.msra.mxu0 0.0
    %5156 = vmatprep.subr.mxu0 0.0
    %5157 = vmatpush1.msra.mxu0 0.0
    %5158 = vmatprep.subr.mxu0 0.0
    %5159 = vmatpush1.msra.mxu0 0.0
    %5160 = vmatprep.subr.mxu0 0.0
    %5161 = vmatpush1.msra.mxu0 0.0
    %5162 = vmatprep.subr.mxu0 0.0
    %5163 = vmatpush1.msra.mxu0 0.0
    %5164 = vmatprep.subr.mxu0 0.0
    %5165 = vmatpush1.msra.mxu0 0.0
    %5166 = vmatprep.subr.mxu0 0.0
    %5167 = vmatpush1.msra.mxu0 0.0
    %5168 = vmatprep.subr.mxu0 0.0
    %5169 = vmatpush1.msra.mxu0 0.0
    %5170 = vmatprep.subr.mxu0 0.0
    %5171 = vmatpush1.msra.mxu0 0.0
    %5172 = vmatprep.subr.mxu0 0.0
    %5173 = vmatpush1.msra.mxu0 0.0
    %5174 = vmatprep.subr.mxu0 0.0
    %5175 = vmatpush1.msra.mxu0 0.0
    %5176 = vmatprep.subr.mxu0 0.0
    %5177 = vmatpush1.msra.mxu0 0.0
    %5178 = vmatprep.subr.mxu0 0.0
    %5179 = vmatpush1.msra.mxu0 0.0
    %5180 = vmatprep.subr.mxu0 0.0
    %5181 = vmatpush1.msra.mxu0 0.0
    %5182 = vmatprep.subr.mxu0 0.0
    %5183 = vmatpush1.msra.mxu0 0.0
    %5184 = vmatprep.subr.mxu0 0.0
    %5185 = vmatpush1.msra.mxu0 0.0
    %5186 = vmatprep.subr.mxu0 0.0
    %5187 = vmatpush1.msra.mxu0 0.0
    %5188 = vmatprep.subr.mxu0 0.0
    %5189 = vmatpush1.msra.mxu0 0.0
    %5190 = vmatprep.subr.mxu0 0.0
    %5191 = vmatpush1.msra.mxu0 0.0
    %5192 = vmatprep.subr.mxu0 0.0
    %5193 = vmatpush1.msra.mxu0 0.0
    %5194 = vmatprep.mubr.f32.mxu0 0.0
    %v5195 = vand.u32 %v5047, 4294901760
    %5196 = vmatmul.mubr.f32.gmra.mrb[0].mxu0 %v5195
    %v5197 = vpop.f32.mrb[0].mxu0
    %v5198 = vadd.f32 %v5122, %v5197
    %v5199 = vpop.f32.mrb[0].mxu0
    %5200 = vdwg.mxu0
    %5201 = vmatprep.subr.mxu0 0.0
    %v5202 = vand.u32 %v51, 4294901760
    %v5203 = vsub.f32 %v51, %v5202
    %5204 = vmatpush1.msra.mxu0 %v5203
    %5205 = vmatprep.subr.mxu0 0.0
    %5206 = vmatpush1.msra.mxu0 0.0
    %5207 = vmatprep.subr.mxu0 0.0
    %5208 = vmatpush1.msra.mxu0 0.0
    %5209 = vmatprep.subr.mxu0 0.0
    %5210 = vmatpush1.msra.mxu0 0.0
    %5211 = vmatprep.subr.mxu0 0.0
    %5212 = vmatpush1.msra.mxu0 0.0
    %5213 = vmatprep.subr.mxu0 0.0
    %5214 = vmatpush1.msra.mxu0 0.0
    %5215 = vmatprep.subr.mxu0 0.0
    %5216 = vmatpush1.msra.mxu0 0.0
    %5217 = vmatprep.subr.mxu0 0.0
    %5218 = vmatpush1.msra.mxu0 0.0
    %5219 = vmatprep.subr.mxu0 0.0
    %5220 = vmatpush1.msra.mxu0 0.0
    %5221 = vmatprep.subr.mxu0 0.0
    %5222 = vmatpush1.msra.mxu0 0.0
    %5223 = vmatprep.subr.mxu0 0.0
    %5224 = vmatpush1.msra.mxu0 0.0
    %5225 = vmatprep.subr.mxu0 0.0
    %5226 = vmatpush1.msra.mxu0 0.0
    %5227 = vmatprep.subr.mxu0 0.0
    %5228 = vmatpush1.msra.mxu0 0.0
    %5229 = vmatprep.subr.mxu0 0.0
    %5230 = vmatpush1.msra.mxu0 0.0
    %5231 = vmatprep.subr.mxu0 0.0
    %5232 = vmatpush1.msra.mxu0 0.0
    %5233 = vmatprep.subr.mxu0 0.0
    %5234 = vmatpush1.msra.mxu0 0.0
    %5235 = vmatprep.subr.mxu0 0.0
    %5236 = vmatpush1.msra.mxu0 0.0
    %5237 = vmatprep.subr.mxu0 0.0
    %5238 = vmatpush1.msra.mxu0 0.0
    %5239 = vmatprep.subr.mxu0 0.0
    %5240 = vmatpush1.msra.mxu0 0.0
    %5241 = vmatprep.subr.mxu0 0.0
    %5242 = vmatpush1.msra.mxu0 0.0
    %5243 = vmatprep.subr.mxu0 0.0
    %5244 = vmatpush1.msra.mxu0 0.0
    %5245 = vmatprep.subr.mxu0 0.0
    %5246 = vmatpush1.msra.mxu0 0.0
    %5247 = vmatprep.subr.mxu0 0.0
    %5248 = vmatpush1.msra.mxu0 0.0
    %5249 = vmatprep.subr.mxu0 0.0
    %5250 = vmatpush1.msra.mxu0 0.0
    %5251 = vmatprep.subr.mxu0 0.0
    %5252 = vmatpush1.msra.mxu0 0.0
    %5253 = vmatprep.subr.mxu0 0.0
    %5254 = vmatpush1.msra.mxu0 0.0
    %5255 = vmatprep.subr.mxu0 0.0
    %5256 = vmatpush1.msra.mxu0 0.0
    %5257 = vmatprep.subr.mxu0 0.0
    %5258 = vmatpush1.msra.mxu0 0.0
    %5259 = vmatprep.subr.mxu0 0.0
    %5260 = vmatpush1.msra.mxu0 0.0
    %5261 = vmatprep.subr.mxu0 0.0
    %5262 = vmatpush1.msra.mxu0 0.0
    %5263 = vmatprep.subr.mxu0 0.0
    %5264 = vmatpush1.msra.mxu0 0.0
    %5265 = vmatprep.subr.mxu0 0.0
    %5266 = vmatpush1.msra.mxu0 0.0
    %5267 = vmatprep.mubr.f32.mxu0 0.0
    %v5268 = vand.u32 %v5047, 4294901760
    %v5269 = vsub.f32 %v5047, %v5268
    %5270 = vmatmul.mubr.f32.gmra.mrb[0].mxu0 %v5269
    %v5271 = vpop.f32.mrb[0].mxu0
    %v5272 = vadd.f32 %v5198, %v5271
    %v5273 = vpop.f32.mrb[0].mxu0
    %5274 = vdwg.mxu0
    %5275 = vmatprep.subr.mxu0 0.0
    %v5276 = vand.u32 %v51, 4294901760
    %5277 = vmatpush1.msra.mxu0 %v5276
    %5278 = vmatprep.subr.mxu0 0.0
    %5279 = vmatpush1.msra.mxu0 0.0
    %5280 = vmatprep.subr.mxu0 0.0
    %5281 = vmatpush1.msra.mxu0 0.0
    %5282 = vmatprep.subr.mxu0 0.0
    %5283 = vmatpush1.msra.mxu0 0.0
    %5284 = vmatprep.subr.mxu0 0.0
    %5285 = vmatpush1.msra.mxu0 0.0
    %5286 = vmatprep.subr.mxu0 0.0
    %5287 = vmatpush1.msra.mxu0 0.0
    %5288 = vmatprep.subr.mxu0 0.0
    %5289 = vmatpush1.msra.mxu0 0.0
    %5290 = vmatprep.subr.mxu0 0.0
    %5291 = vmatpush1.msra.mxu0 0.0
    %5292 = vmatprep.subr.mxu0 0.0
    %5293 = vmatpush1.msra.mxu0 0.0
    %5294 = vmatprep.subr.mxu0 0.0
    %5295 = vmatpush1.msra.mxu0 0.0
    %5296 = vmatprep.subr.mxu0 0.0
    %5297 = vmatpush1.msra.mxu0 0.0
    %5298 = vmatprep.subr.mxu0 0.0
    %5299 = vmatpush1.msra.mxu0 0.0
    %5300 = vmatprep.subr.mxu0 0.0
    %5301 = vmatpush1.msra.mxu0 0.0
    %5302 = vmatprep.subr.mxu0 0.0
    %5303 = vmatpush1.msra.mxu0 0.0
    %5304 = vmatprep.subr.mxu0 0.0
    %5305 = vmatpush1.msra.mxu0 0.0
    %5306 = vmatprep.subr.mxu0 0.0
    %5307 = vmatpush1.msra.mxu0 0.0
    %5308 = vmatprep.subr.mxu0 0.0
    %5309 = vmatpush1.msra.mxu0 0.0
    %5310 = vmatprep.subr.mxu0 0.0
    %5311 = vmatpush1.msra.mxu0 0.0
    %5312 = vmatprep.subr.mxu0 0.0
    %5313 = vmatpush1.msra.mxu0 0.0
    %5314 = vmatprep.subr.mxu0 0.0
    %5315 = vmatpush1.msra.mxu0 0.0
    %5316 = vmatprep.subr.mxu0 0.0
    %5317 = vmatpush1.msra.mxu0 0.0
    %5318 = vmatprep.subr.mxu0 0.0
    %5319 = vmatpush1.msra.mxu0 0.0
    %5320 = vmatprep.subr.mxu0 0.0
    %5321 = vmatpush1.msra.mxu0 0.0
    %5322 = vmatprep.subr.mxu0 0.0
    %5323 = vmatpush1.msra.mxu0 0.0
    %5324 = vmatprep.subr.mxu0 0.0
    %5325 = vmatpush1.msra.mxu0 0.0
    %5326 = vmatprep.subr.mxu0 0.0
    %5327 = vmatpush1.msra.mxu0 0.0
    %5328 = vmatprep.subr.mxu0 0.0
    %5329 = vmatpush1.msra.mxu0 0.0
    %5330 = vmatprep.subr.mxu0 0.0
    %5331 = vmatpush1.msra.mxu0 0.0
    %5332 = vmatprep.subr.mxu0 0.0
    %5333 = vmatpush1.msra.mxu0 0.0
    %5334 = vmatprep.subr.mxu0 0.0
    %5335 = vmatpush1.msra.mxu0 0.0
    %5336 = vmatprep.subr.mxu0 0.0
    %5337 = vmatpush1.msra.mxu0 0.0
    %5338 = vmatprep.subr.mxu0 0.0
    %5339 = vmatpush1.msra.mxu0 0.0
    %5340 = vmatprep.mubr.f32.mxu0 0.0
    %v5341 = vand.u32 %v5047, 4294901760
    %v5342 = vsub.f32 %v5047, %v5341
    %v5343 = vand.u32 %v5342, 4294901760
    %5344 = vmatmul.mubr.f32.gmra.mrb[0].mxu0 %v5343
    %v5345 = vpop.f32.mrb[0].mxu0
    %v5346 = vadd.f32 %v5272, %v5345
    %v5347 = vpop.f32.mrb[0].mxu0
    %5348 = vdwg.mxu0
    %5349 = vmatprep.subr.mxu0 0.0
    %v5350 = vand.u32 %v51, 4294901760
    %v5351 = vsub.f32 %v51, %v5350
    %v5352 = vand.u32 %v5351, 4294901760
    %5353 = vmatpush1.msra.mxu0 %v5352
    %5354 = vmatprep.subr.mxu0 0.0
    %5355 = vmatpush1.msra.mxu0 0.0
    %5356 = vmatprep.subr.mxu0 0.0
    %5357 = vmatpush1.msra.mxu0 0.0
    %5358 = vmatprep.subr.mxu0 0.0
    %5359 = vmatpush1.msra.mxu0 0.0
    %5360 = vmatprep.subr.mxu0 0.0
    %5361 = vmatpush1.msra.mxu0 0.0
    %5362 = vmatprep.subr.mxu0 0.0
    %5363 = vmatpush1.msra.mxu0 0.0
    %5364 = vmatprep.subr.mxu0 0.0
    %5365 = vmatpush1.msra.mxu0 0.0
    %5366 = vmatprep.subr.mxu0 0.0
    %5367 = vmatpush1.msra.mxu0 0.0
    %5368 = vmatprep.subr.mxu0 0.0
    %5369 = vmatpush1.msra.mxu0 0.0
    %5370 = vmatprep.subr.mxu0 0.0
    %5371 = vmatpush1.msra.mxu0 0.0
    %5372 = vmatprep.subr.mxu0 0.0
    %5373 = vmatpush1.msra.mxu0 0.0
    %5374 = vmatprep.subr.mxu0 0.0
    %5375 = vmatpush1.msra.mxu0 0.0
    %5376 = vmatprep.subr.mxu0 0.0
    %5377 = vmatpush1.msra.mxu0 0.0
    %5378 = vmatprep.subr.mxu0 0.0
    %5379 = vmatpush1.msra.mxu0 0.0
    %5380 = vmatprep.subr.mxu0 0.0
    %5381 = vmatpush1.msra.mxu0 0.0
    %5382 = vmatprep.subr.mxu0 0.0
    %5383 = vmatpush1.msra.mxu0 0.0
    %5384 = vmatprep.subr.mxu0 0.0
    %5385 = vmatpush1.msra.mxu0 0.0
    %5386 = vmatprep.subr.mxu0 0.0
    %5387 = vmatpush1.msra.mxu0 0.0
    %5388 = vmatprep.subr.mxu0 0.0
    %5389 = vmatpush1.msra.mxu0 0.0
    %5390 = vmatprep.subr.mxu0 0.0
    %5391 = vmatpush1.msra.mxu0 0.0
    %5392 = vmatprep.subr.mxu0 0.0
    %5393 = vmatpush1.msra.mxu0 0.0
    %5394 = vmatprep.subr.mxu0 0.0
    %5395 = vmatpush1.msra.mxu0 0.0
    %5396 = vmatprep.subr.mxu0 0.0
    %5397 = vmatpush1.msra.mxu0 0.0
    %5398 = vmatprep.subr.mxu0 0.0
    %5399 = vmatpush1.msra.mxu0 0.0
    %5400 = vmatprep.subr.mxu0 0.0
    %5401 = vmatpush1.msra.mxu0 0.0
    %5402 = vmatprep.subr.mxu0 0.0
    %5403 = vmatpush1.msra.mxu0 0.0
    %5404 = vmatprep.subr.mxu0 0.0
    %5405 = vmatpush1.msra.mxu0 0.0
    %5406 = vmatprep.subr.mxu0 0.0
    %5407 = vmatpush1.msra.mxu0 0.0
    %5408 = vmatprep.subr.mxu0 0.0
    %5409 = vmatpush1.msra.mxu0 0.0
    %5410 = vmatprep.subr.mxu0 0.0
    %5411 = vmatpush1.msra.mxu0 0.0
    %5412 = vmatprep.subr.mxu0 0.0
    %5413 = vmatpush1.msra.mxu0 0.0
    %5414 = vmatprep.subr.mxu0 0.0
    %5415 = vmatpush1.msra.mxu0 0.0
    %5416 = vmatprep.mubr.f32.mxu0 0.0
    %v5417 = vand.u32 %v5047, 4294901760
    %5418 = vmatmul.mubr.f32.gmra.mrb[0].mxu0 %v5417
    %v5419 = vpop.f32.mrb[0].mxu0
    %v5420 = vadd.f32 %v5346, %v5419
    %v5421 = vpop.f32.mrb[0].mxu0
    %5422 = vdwg.mxu0
    %5423 = vmatprep.subr.mxu0 0.0
    %v5424 = vand.u32 %v51, 4294901760
    %5425 = vmatpush1.msra.mxu0 %v5424
    %5426 = vmatprep.subr.mxu0 0.0
    %5427 = vmatpush1.msra.mxu0 0.0
    %5428 = vmatprep.subr.mxu0 0.0
    %5429 = vmatpush1.msra.mxu0 0.0
    %5430 = vmatprep.subr.mxu0 0.0
    %5431 = vmatpush1.msra.mxu0 0.0
    %5432 = vmatprep.subr.mxu0 0.0
    %5433 = vmatpush1.msra.mxu0 0.0
    %5434 = vmatprep.subr.mxu0 0.0
    %5435 = vmatpush1.msra.mxu0 0.0
    %5436 = vmatprep.subr.mxu0 0.0
    %5437 = vmatpush1.msra.mxu0 0.0
    %5438 = vmatprep.subr.mxu0 0.0
    %5439 = vmatpush1.msra.mxu0 0.0
    %5440 = vmatprep.subr.mxu0 0.0
    %5441 = vmatpush1.msra.mxu0 0.0
    %5442 = vmatprep.subr.mxu0 0.0
    %5443 = vmatpush1.msra.mxu0 0.0
    %5444 = vmatprep.subr.mxu0 0.0
    %5445 = vmatpush1.msra.mxu0 0.0
    %5446 = vmatprep.subr.mxu0 0.0
    %5447 = vmatpush1.msra.mxu0 0.0
    %5448 = vmatprep.subr.mxu0 0.0
    %5449 = vmatpush1.msra.mxu0 0.0
    %5450 = vmatprep.subr.mxu0 0.0
    %5451 = vmatpush1.msra.mxu0 0.0
    %5452 = vmatprep.subr.mxu0 0.0
    %5453 = vmatpush1.msra.mxu0 0.0
    %5454 = vmatprep.subr.mxu0 0.0
    %5455 = vmatpush1.msra.mxu0 0.0
    %5456 = vmatprep.subr.mxu0 0.0
    %5457 = vmatpush1.msra.mxu0 0.0
    %5458 = vmatprep.subr.mxu0 0.0
    %5459 = vmatpush1.msra.mxu0 0.0
    %5460 = vmatprep.subr.mxu0 0.0
    %5461 = vmatpush1.msra.mxu0 0.0
    %5462 = vmatprep.subr.mxu0 0.0
    %5463 = vmatpush1.msra.mxu0 0.0
    %5464 = vmatprep.subr.mxu0 0.0
    %5465 = vmatpush1.msra.mxu0 0.0
    %5466 = vmatprep.subr.mxu0 0.0
    %5467 = vmatpush1.msra.mxu0 0.0
    %5468 = vmatprep.subr.mxu0 0.0
    %5469 = vmatpush1.msra.mxu0 0.0
    %5470 = vmatprep.subr.mxu0 0.0
    %5471 = vmatpush1.msra.mxu0 0.0
    %5472 = vmatprep.subr.mxu0 0.0
    %5473 = vmatpush1.msra.mxu0 0.0
    %5474 = vmatprep.subr.mxu0 0.0
    %5475 = vmatpush1.msra.mxu0 0.0
    %5476 = vmatprep.subr.mxu0 0.0
    %5477 = vmatpush1.msra.mxu0 0.0
    %5478 = vmatprep.subr.mxu0 0.0
    %5479 = vmatpush1.msra.mxu0 0.0
    %5480 = vmatprep.subr.mxu0 0.0
    %5481 = vmatpush1.msra.mxu0 0.0
    %5482 = vmatprep.subr.mxu0 0.0
    %5483 = vmatpush1.msra.mxu0 0.0
    %5484 = vmatprep.subr.mxu0 0.0
    %5485 = vmatpush1.msra.mxu0 0.0
    %5486 = vmatprep.subr.mxu0 0.0
    %5487 = vmatpush1.msra.mxu0 0.0
    %5488 = vmatprep.mubr.f32.mxu0 0.0
    %v5489 = vand.u32 %v5047, 4294901760
    %5490 = vmatmul.mubr.f32.gmra.mrb[0].mxu0 %v5489
    %v5491 = vpop.f32.mrb[0].mxu0
    %v5492 = vadd.f32 %v5420, %v5491
    %v5493 = vpop.f32.mrb[0].mxu0
    %5494 = vdwg.mxu0
    %v5495 = vadd.f32 %v1874, %v5492
    %v5496 = vtanh.pop %v5495
    %v5498 = vsel %vm66, %v5496, 0
    %5500 = vmatprep.subr.mxu0 0.0
    %v5501 = vand.u32 %v51, 4294901760
    %5502 = vmatpush1.msra.mxu0 %v5501
    %5503 = vmatprep.subr.mxu0 0.0
    %5504 = vmatpush1.msra.mxu0 0.0
    %5505 = vmatprep.subr.mxu0 0.0
    %5506 = vmatpush1.msra.mxu0 0.0
    %5507 = vmatprep.subr.mxu0 0.0
    %5508 = vmatpush1.msra.mxu0 0.0
    %5509 = vmatprep.subr.mxu0 0.0
    %5510 = vmatpush1.msra.mxu0 0.0
    %5511 = vmatprep.subr.mxu0 0.0
    %5512 = vmatpush1.msra.mxu0 0.0
    %5513 = vmatprep.subr.mxu0 0.0
    %5514 = vmatpush1.msra.mxu0 0.0
    %5515 = vmatprep.subr.mxu0 0.0
    %5516 = vmatpush1.msra.mxu0 0.0
    %5517 = vmatprep.subr.mxu0 0.0
    %5518 = vmatpush1.msra.mxu0 0.0
    %5519 = vmatprep.subr.mxu0 0.0
    %5520 = vmatpush1.msra.mxu0 0.0
    %5521 = vmatprep.subr.mxu0 0.0
    %5522 = vmatpush1.msra.mxu0 0.0
    %5523 = vmatprep.subr.mxu0 0.0
    %5524 = vmatpush1.msra.mxu0 0.0
    %5525 = vmatprep.subr.mxu0 0.0
    %5526 = vmatpush1.msra.mxu0 0.0
    %5527 = vmatprep.subr.mxu0 0.0
    %5528 = vmatpush1.msra.mxu0 0.0
    %5529 = vmatprep.subr.mxu0 0.0
    %5530 = vmatpush1.msra.mxu0 0.0
    %5531 = vmatprep.subr.mxu0 0.0
    %5532 = vmatpush1.msra.mxu0 0.0
    %5533 = vmatprep.subr.mxu0 0.0
    %5534 = vmatpush1.msra.mxu0 0.0
    %5535 = vmatprep.subr.mxu0 0.0
    %5536 = vmatpush1.msra.mxu0 0.0
    %5537 = vmatprep.subr.mxu0 0.0
    %5538 = vmatpush1.msra.mxu0 0.0
    %5539 = vmatprep.subr.mxu0 0.0
    %5540 = vmatpush1.msra.mxu0 0.0
    %5541 = vmatprep.subr.mxu0 0.0
    %5542 = vmatpush1.msra.mxu0 0.0
    %5543 = vmatprep.subr.mxu0 0.0
    %5544 = vmatpush1.msra.mxu0 0.0
    %5545 = vmatprep.subr.mxu0 0.0
    %5546 = vmatpush1.msra.mxu0 0.0
    %5547 = vmatprep.subr.mxu0 0.0
    %5548 = vmatpush1.msra.mxu0 0.0
    %5549 = vmatprep.subr.mxu0 0.0
    %5550 = vmatpush1.msra.mxu0 0.0
    %5551 = vmatprep.subr.mxu0 0.0
    %5552 = vmatpush1.msra.mxu0 0.0
    %5553 = vmatprep.subr.mxu0 0.0
    %5554 = vmatpush1.msra.mxu0 0.0
    %5555 = vmatprep.subr.mxu0 0.0
    %5556 = vmatpush1.msra.mxu0 0.0
    %5557 = vmatprep.subr.mxu0 0.0
    %5558 = vmatpush1.msra.mxu0 0.0
    %5559 = vmatprep.subr.mxu0 0.0
    %5560 = vmatpush1.msra.mxu0 0.0
    %5561 = vmatprep.subr.mxu0 0.0
    %5562 = vmatpush1.msra.mxu0 0.0
    %5563 = vmatprep.subr.mxu0 0.0
    %5564 = vmatpush1.msra.mxu0 0.0
    %5565 = vmatprep.mubr.f32.mxu0 0.0
    %v5566 = vand.u32 %v5498, 4294901760
    %v5567 = vsub.f32 %v5498, %v5566
    %v5568 = vand.u32 %v5567, 4294901760
    %v5569 = vsub.f32 %v5567, %v5568
    %v5570 = vand.u32 %v5569, 4294901760
    %5571 = vmatmul.mubr.f32.gmra.mrb[0].mxu0 %v5570
    %v5572 = vpop.f32.mrb[0].mxu0
    %v5573 = vadd.f32 0.0, %v5572
    %v5574 = vpop.f32.mrb[0].mxu0
    %5575 = vdwg.mxu0
    %5576 = vmatprep.subr.mxu0 0.0
    %v5577 = vand.u32 %v51, 4294901760
    %v5578 = vsub.f32 %v51, %v5577
    %v5579 = vand.u32 %v5578, 4294901760
    %v5580 = vsub.f32 %v5578, %v5579
    %v5581 = vand.u32 %v5580, 4294901760
    %5582 = vmatpush1.msra.mxu0 %v5581
    %5583 = vmatprep.subr.mxu0 0.0
    %5584 = vmatpush1.msra.mxu0 0.0
    %5585 = vmatprep.subr.mxu0 0.0
    %5586 = vmatpush1.msra.mxu0 0.0
    %5587 = vmatprep.subr.mxu0 0.0
    %5588 = vmatpush1.msra.mxu0 0.0
    %5589 = vmatprep.subr.mxu0 0.0
    %5590 = vmatpush1.msra.mxu0 0.0
    %5591 = vmatprep.subr.mxu0 0.0
    %5592 = vmatpush1.msra.mxu0 0.0
    %5593 = vmatprep.subr.mxu0 0.0
    %5594 = vmatpush1.msra.mxu0 0.0
    %5595 = vmatprep.subr.mxu0 0.0
    %5596 = vmatpush1.msra.mxu0 0.0
    %5597 = vmatprep.subr.mxu0 0.0
    %5598 = vmatpush1.msra.mxu0 0.0
    %5599 = vmatprep.subr.mxu0 0.0
    %5600 = vmatpush1.msra.mxu0 0.0
    %5601 = vmatprep.subr.mxu0 0.0
    %5602 = vmatpush1.msra.mxu0 0.0
    %5603 = vmatprep.subr.mxu0 0.0
    %5604 = vmatpush1.msra.mxu0 0.0
    %5605 = vmatprep.subr.mxu0 0.0
    %5606 = vmatpush1.msra.mxu0 0.0
    %5607 = vmatprep.subr.mxu0 0.0
    %5608 = vmatpush1.msra.mxu0 0.0
    %5609 = vmatprep.subr.mxu0 0.0
    %5610 = vmatpush1.msra.mxu0 0.0
    %5611 = vmatprep.subr.mxu0 0.0
    %5612 = vmatpush1.msra.mxu0 0.0
    %5613 = vmatprep.subr.mxu0 0.0
    %5614 = vmatpush1.msra.mxu0 0.0
    %5615 = vmatprep.subr.mxu0 0.0
    %5616 = vmatpush1.msra.mxu0 0.0
    %5617 = vmatprep.subr.mxu0 0.0
    %5618 = vmatpush1.msra.mxu0 0.0
    %5619 = vmatprep.subr.mxu0 0.0
    %5620 = vmatpush1.msra.mxu0 0.0
    %5621 = vmatprep.subr.mxu0 0.0
    %5622 = vmatpush1.msra.mxu0 0.0
    %5623 = vmatprep.subr.mxu0 0.0
    %5624 = vmatpush1.msra.mxu0 0.0
    %5625 = vmatprep.subr.mxu0 0.0
    %5626 = vmatpush1.msra.mxu0 0.0
    %5627 = vmatprep.subr.mxu0 0.0
    %5628 = vmatpush1.msra.mxu0 0.0
    %5629 = vmatprep.subr.mxu0 0.0
    %5630 = vmatpush1.msra.mxu0 0.0
    %5631 = vmatprep.subr.mxu0 0.0
    %5632 = vmatpush1.msra.mxu0 0.0
    %5633 = vmatprep.subr.mxu0 0.0
    %5634 = vmatpush1.msra.mxu0 0.0
    %5635 = vmatprep.subr.mxu0 0.0
    %5636 = vmatpush1.msra.mxu0 0.0
    %5637 = vmatprep.subr.mxu0 0.0
    %5638 = vmatpush1.msra.mxu0 0.0
    %5639 = vmatprep.subr.mxu0 0.0
    %5640 = vmatpush1.msra.mxu0 0.0
    %5641 = vmatprep.subr.mxu0 0.0
    %5642 = vmatpush1.msra.mxu0 0.0
    %5643 = vmatprep.subr.mxu0 0.0
    %5644 = vmatpush1.msra.mxu0 0.0
    %5645 = vmatprep.mubr.f32.mxu0 0.0
    %v5646 = vand.u32 %v5498, 4294901760
    %5647 = vmatmul.mubr.f32.gmra.mrb[0].mxu0 %v5646
    %v5648 = vpop.f32.mrb[0].mxu0
    %v5649 = vadd.f32 %v5573, %v5648
    %v5650 = vpop.f32.mrb[0].mxu0
    %5651 = vdwg.mxu0
    %5652 = vmatprep.subr.mxu0 0.0
    %v5653 = vand.u32 %v51, 4294901760
    %v5654 = vsub.f32 %v51, %v5653
    %5655 = vmatpush1.msra.mxu0 %v5654
    %5656 = vmatprep.subr.mxu0 0.0
    %5657 = vmatpush1.msra.mxu0 0.0
    %5658 = vmatprep.subr.mxu0 0.0
    %5659 = vmatpush1.msra.mxu0 0.0
    %5660 = vmatprep.subr.mxu0 0.0
    %5661 = vmatpush1.msra.mxu0 0.0
    %5662 = vmatprep.subr.mxu0 0.0
    %5663 = vmatpush1.msra.mxu0 0.0
    %5664 = vmatprep.subr.mxu0 0.0
    %5665 = vmatpush1.msra.mxu0 0.0
    %5666 = vmatprep.subr.mxu0 0.0
    %5667 = vmatpush1.msra.mxu0 0.0
    %5668 = vmatprep.subr.mxu0 0.0
    %5669 = vmatpush1.msra.mxu0 0.0
    %5670 = vmatprep.subr.mxu0 0.0
    %5671 = vmatpush1.msra.mxu0 0.0
    %5672 = vmatprep.subr.mxu0 0.0
    %5673 = vmatpush1.msra.mxu0 0.0
    %5674 = vmatprep.subr.mxu0 0.0
    %5675 = vmatpush1.msra.mxu0 0.0
    %5676 = vmatprep.subr.mxu0 0.0
    %5677 = vmatpush1.msra.mxu0 0.0
    %5678 = vmatprep.subr.mxu0 0.0
    %5679 = vmatpush1.msra.mxu0 0.0
    %5680 = vmatprep.subr.mxu0 0.0
    %5681 = vmatpush1.msra.mxu0 0.0
    %5682 = vmatprep.subr.mxu0 0.0
    %5683 = vmatpush1.msra.mxu0 0.0
    %5684 = vmatprep.subr.mxu0 0.0
    %5685 = vmatpush1.msra.mxu0 0.0
    %5686 = vmatprep.subr.mxu0 0.0
    %5687 = vmatpush1.msra.mxu0 0.0
    %5688 = vmatprep.subr.mxu0 0.0
    %5689 = vmatpush1.msra.mxu0 0.0
    %5690 = vmatprep.subr.mxu0 0.0
    %5691 = vmatpush1.msra.mxu0 0.0
    %5692 = vmatprep.subr.mxu0 0.0
    %5693 = vmatpush1.msra.mxu0 0.0
    %5694 = vmatprep.subr.mxu0 0.0
    %5695 = vmatpush1.msra.mxu0 0.0
    %5696 = vmatprep.subr.mxu0 0.0
    %5697 = vmatpush1.msra.mxu0 0.0
    %5698 = vmatprep.subr.mxu0 0.0
    %5699 = vmatpush1.msra.mxu0 0.0
    %5700 = vmatprep.subr.mxu0 0.0
    %5701 = vmatpush1.msra.mxu0 0.0
    %5702 = vmatprep.subr.mxu0 0.0
    %5703 = vmatpush1.msra.mxu0 0.0
    %5704 = vmatprep.subr.mxu0 0.0
    %5705 = vmatpush1.msra.mxu0 0.0
    %5706 = vmatprep.subr.mxu0 0.0
    %5707 = vmatpush1.msra.mxu0 0.0
    %5708 = vmatprep.subr.mxu0 0.0
    %5709 = vmatpush1.msra.mxu0 0.0
    %5710 = vmatprep.subr.mxu0 0.0
    %5711 = vmatpush1.msra.mxu0 0.0
    %5712 = vmatprep.subr.mxu0 0.0
    %5713 = vmatpush1.msra.mxu0 0.0
    %5714 = vmatprep.subr.mxu0 0.0
    %5715 = vmatpush1.msra.mxu0 0.0
    %5716 = vmatprep.subr.mxu0 0.0
    %5717 = vmatpush1.msra.mxu0 0.0
    %5718 = vmatprep.mubr.f32.mxu0 0.0
    %v5719 = vand.u32 %v5498, 4294901760
    %v5720 = vsub.f32 %v5498, %v5719
    %5721 = vmatmul.mubr.f32.gmra.mrb[0].mxu0 %v5720
    %v5722 = vpop.f32.mrb[0].mxu0
    %v5723 = vadd.f32 %v5649, %v5722
    %v5724 = vpop.f32.mrb[0].mxu0
    %5725 = vdwg.mxu0
    %5726 = vmatprep.subr.mxu0 0.0
    %v5727 = vand.u32 %v51, 4294901760
    %5728 = vmatpush1.msra.mxu0 %v5727
    %5729 = vmatprep.subr.mxu0 0.0
    %5730 = vmatpush1.msra.mxu0 0.0
    %5731 = vmatprep.subr.mxu0 0.0
    %5732 = vmatpush1.msra.mxu0 0.0
    %5733 = vmatprep.subr.mxu0 0.0
    %5734 = vmatpush1.msra.mxu0 0.0
    %5735 = vmatprep.subr.mxu0 0.0
    %5736 = vmatpush1.msra.mxu0 0.0
    %5737 = vmatprep.subr.mxu0 0.0
    %5738 = vmatpush1.msra.mxu0 0.0
    %5739 = vmatprep.subr.mxu0 0.0
    %5740 = vmatpush1.msra.mxu0 0.0
    %5741 = vmatprep.subr.mxu0 0.0
    %5742 = vmatpush1.msra.mxu0 0.0
    %5743 = vmatprep.subr.mxu0 0.0
    %5744 = vmatpush1.msra.mxu0 0.0
    %5745 = vmatprep.subr.mxu0 0.0
    %5746 = vmatpush1.msra.mxu0 0.0
    %5747 = vmatprep.subr.mxu0 0.0
    %5748 = vmatpush1.msra.mxu0 0.0
    %5749 = vmatprep.subr.mxu0 0.0
    %5750 = vmatpush1.msra.mxu0 0.0
    %5751 = vmatprep.subr.mxu0 0.0
    %5752 = vmatpush1.msra.mxu0 0.0
    %5753 = vmatprep.subr.mxu0 0.0
    %5754 = vmatpush1.msra.mxu0 0.0
    %5755 = vmatprep.subr.mxu0 0.0
    %5756 = vmatpush1.msra.mxu0 0.0
    %5757 = vmatprep.subr.mxu0 0.0
    %5758 = vmatpush1.msra.mxu0 0.0
    %5759 = vmatprep.subr.mxu0 0.0
    %5760 = vmatpush1.msra.mxu0 0.0
    %5761 = vmatprep.subr.mxu0 0.0
    %5762 = vmatpush1.msra.mxu0 0.0
    %5763 = vmatprep.subr.mxu0 0.0
    %5764 = vmatpush1.msra.mxu0 0.0
    %5765 = vmatprep.subr.mxu0 0.0
    %5766 = vmatpush1.msra.mxu0 0.0
    %5767 = vmatprep.subr.mxu0 0.0
    %5768 = vmatpush1.msra.mxu0 0.0
    %5769 = vmatprep.subr.mxu0 0.0
    %5770 = vmatpush1.msra.mxu0 0.0
    %5771 = vmatprep.subr.mxu0 0.0
    %5772 = vmatpush1.msra.mxu0 0.0
    %5773 = vmatprep.subr.mxu0 0.0
    %5774 = vmatpush1.msra.mxu0 0.0
    %5775 = vmatprep.subr.mxu0 0.0
    %5776 = vmatpush1.msra.mxu0 0.0
    %5777 = vmatprep.subr.mxu0 0.0
    %5778 = vmatpush1.msra.mxu0 0.0
    %5779 = vmatprep.subr.mxu0 0.0
    %5780 = vmatpush1.msra.mxu0 0.0
    %5781 = vmatprep.subr.mxu0 0.0
    %5782 = vmatpush1.msra.mxu0 0.0
    %5783 = vmatprep.subr.mxu0 0.0
    %5784 = vmatpush1.msra.mxu0 0.0
    %5785 = vmatprep.subr.mxu0 0.0
    %5786 = vmatpush1.msra.mxu0 0.0
    %5787 = vmatprep.subr.mxu0 0.0
    %5788 = vmatpush1.msra.mxu0 0.0
    %5789 = vmatprep.subr.mxu0 0.0
    %5790 = vmatpush1.msra.mxu0 0.0
    %5791 = vmatprep.mubr.f32.mxu0 0.0
    %v5792 = vand.u32 %v5498, 4294901760
    %v5793 = vsub.f32 %v5498, %v5792
    %v5794 = vand.u32 %v5793, 4294901760
    %5795 = vmatmul.mubr.f32.gmra.mrb[0].mxu0 %v5794
    %v5796 = vpop.f32.mrb[0].mxu0
    %v5797 = vadd.f32 %v5723, %v5796
    %v5798 = vpop.f32.mrb[0].mxu0
    %5799 = vdwg.mxu0
    %5800 = vmatprep.subr.mxu0 0.0
    %v5801 = vand.u32 %v51, 4294901760
    %v5802 = vsub.f32 %v51, %v5801
    %v5803 = vand.u32 %v5802, 4294901760
    %5804 = vmatpush1.msra.mxu0 %v5803
    %5805 = vmatprep.subr.mxu0 0.0
    %5806 = vmatpush1.msra.mxu0 0.0
    %5807 = vmatprep.subr.mxu0 0.0
    %5808 = vmatpush1.msra.mxu0 0.0
    %5809 = vmatprep.subr.mxu0 0.0
    %5810 = vmatpush1.msra.mxu0 0.0
    %5811 = vmatprep.subr.mxu0 0.0
    %5812 = vmatpush1.msra.mxu0 0.0
    %5813 = vmatprep.subr.mxu0 0.0
    %5814 = vmatpush1.msra.mxu0 0.0
    %5815 = vmatprep.subr.mxu0 0.0
    %5816 = vmatpush1.msra.mxu0 0.0
    %5817 = vmatprep.subr.mxu0 0.0
    %5818 = vmatpush1.msra.mxu0 0.0
    %5819 = vmatprep.subr.mxu0 0.0
    %5820 = vmatpush1.msra.mxu0 0.0
    %5821 = vmatprep.subr.mxu0 0.0
    %5822 = vmatpush1.msra.mxu0 0.0
    %5823 = vmatprep.subr.mxu0 0.0
    %5824 = vmatpush1.msra.mxu0 0.0
    %5825 = vmatprep.subr.mxu0 0.0
    %5826 = vmatpush1.msra.mxu0 0.0
    %5827 = vmatprep.subr.mxu0 0.0
    %5828 = vmatpush1.msra.mxu0 0.0
    %5829 = vmatprep.subr.mxu0 0.0
    %5830 = vmatpush1.msra.mxu0 0.0
    %5831 = vmatprep.subr.mxu0 0.0
    %5832 = vmatpush1.msra.mxu0 0.0
    %5833 = vmatprep.subr.mxu0 0.0
    %5834 = vmatpush1.msra.mxu0 0.0
    %5835 = vmatprep.subr.mxu0 0.0
    %5836 = vmatpush1.msra.mxu0 0.0
    %5837 = vmatprep.subr.mxu0 0.0
    %5838 = vmatpush1.msra.mxu0 0.0
    %5839 = vmatprep.subr.mxu0 0.0
    %5840 = vmatpush1.msra.mxu0 0.0
    %5841 = vmatprep.subr.mxu0 0.0
    %5842 = vmatpush1.msra.mxu0 0.0
    %5843 = vmatprep.subr.mxu0 0.0
    %5844 = vmatpush1.msra.mxu0 0.0
    %5845 = vmatprep.subr.mxu0 0.0
    %5846 = vmatpush1.msra.mxu0 0.0
    %5847 = vmatprep.subr.mxu0 0.0
    %5848 = vmatpush1.msra.mxu0 0.0
    %5849 = vmatprep.subr.mxu0 0.0
    %5850 = vmatpush1.msra.mxu0 0.0
    %5851 = vmatprep.subr.mxu0 0.0
    %5852 = vmatpush1.msra.mxu0 0.0
    %5853 = vmatprep.subr.mxu0 0.0
    %5854 = vmatpush1.msra.mxu0 0.0
    %5855 = vmatprep.subr.mxu0 0.0
    %5856 = vmatpush1.msra.mxu0 0.0
    %5857 = vmatprep.subr.mxu0 0.0
    %5858 = vmatpush1.msra.mxu0 0.0
    %5859 = vmatprep.subr.mxu0 0.0
    %5860 = vmatpush1.msra.mxu0 0.0
    %5861 = vmatprep.subr.mxu0 0.0
    %5862 = vmatpush1.msra.mxu0 0.0
    %5863 = vmatprep.subr.mxu0 0.0
    %5864 = vmatpush1.msra.mxu0 0.0
    %5865 = vmatprep.subr.mxu0 0.0
    %5866 = vmatpush1.msra.mxu0 0.0
    %5867 = vmatprep.mubr.f32.mxu0 0.0
    %v5868 = vand.u32 %v5498, 4294901760
    %5869 = vmatmul.mubr.f32.gmra.mrb[0].mxu0 %v5868
    %v5870 = vpop.f32.mrb[0].mxu0
    %v5871 = vadd.f32 %v5797, %v5870
    %v5872 = vpop.f32.mrb[0].mxu0
    %5873 = vdwg.mxu0
    %5874 = vmatprep.subr.mxu0 0.0
    %v5875 = vand.u32 %v51, 4294901760
    %5876 = vmatpush1.msra.mxu0 %v5875
    %5877 = vmatprep.subr.mxu0 0.0
    %5878 = vmatpush1.msra.mxu0 0.0
    %5879 = vmatprep.subr.mxu0 0.0
    %5880 = vmatpush1.msra.mxu0 0.0
    %5881 = vmatprep.subr.mxu0 0.0
    %5882 = vmatpush1.msra.mxu0 0.0
    %5883 = vmatprep.subr.mxu0 0.0
    %5884 = vmatpush1.msra.mxu0 0.0
    %5885 = vmatprep.subr.mxu0 0.0
    %5886 = vmatpush1.msra.mxu0 0.0
    %5887 = vmatprep.subr.mxu0 0.0
    %5888 = vmatpush1.msra.mxu0 0.0
    %5889 = vmatprep.subr.mxu0 0.0
    %5890 = vmatpush1.msra.mxu0 0.0
    %5891 = vmatprep.subr.mxu0 0.0
    %5892 = vmatpush1.msra.mxu0 0.0
    %5893 = vmatprep.subr.mxu0 0.0
    %5894 = vmatpush1.msra.mxu0 0.0
    %5895 = vmatprep.subr.mxu0 0.0
    %5896 = vmatpush1.msra.mxu0 0.0
    %5897 = vmatprep.subr.mxu0 0.0
    %5898 = vmatpush1.msra.mxu0 0.0
    %5899 = vmatprep.subr.mxu0 0.0
    %5900 = vmatpush1.msra.mxu0 0.0
    %5901 = vmatprep.subr.mxu0 0.0
    %5902 = vmatpush1.msra.mxu0 0.0
    %5903 = vmatprep.subr.mxu0 0.0
    %5904 = vmatpush1.msra.mxu0 0.0
    %5905 = vmatprep.subr.mxu0 0.0
    %5906 = vmatpush1.msra.mxu0 0.0
    %5907 = vmatprep.subr.mxu0 0.0
    %5908 = vmatpush1.msra.mxu0 0.0
    %5909 = vmatprep.subr.mxu0 0.0
    %5910 = vmatpush1.msra.mxu0 0.0
    %5911 = vmatprep.subr.mxu0 0.0
    %5912 = vmatpush1.msra.mxu0 0.0
    %5913 = vmatprep.subr.mxu0 0.0
    %5914 = vmatpush1.msra.mxu0 0.0
    %5915 = vmatprep.subr.mxu0 0.0
    %5916 = vmatpush1.msra.mxu0 0.0
    %5917 = vmatprep.subr.mxu0 0.0
    %5918 = vmatpush1.msra.mxu0 0.0
    %5919 = vmatprep.subr.mxu0 0.0
    %5920 = vmatpush1.msra.mxu0 0.0
    %5921 = vmatprep.subr.mxu0 0.0
    %5922 = vmatpush1.msra.mxu0 0.0
    %5923 = vmatprep.subr.mxu0 0.0
    %5924 = vmatpush1.msra.mxu0 0.0
    %5925 = vmatprep.subr.mxu0 0.0
    %5926 = vmatpush1.msra.mxu0 0.0
    %5927 = vmatprep.subr.mxu0 0.0
    %5928 = vmatpush1.msra.mxu0 0.0
    %5929 = vmatprep.subr.mxu0 0.0
    %5930 = vmatpush1.msra.mxu0 0.0
    %5931 = vmatprep.subr.mxu0 0.0
    %5932 = vmatpush1.msra.mxu0 0.0
    %5933 = vmatprep.subr.mxu0 0.0
    %5934 = vmatpush1.msra.mxu0 0.0
    %5935 = vmatprep.subr.mxu0 0.0
    %5936 = vmatpush1.msra.mxu0 0.0
    %5937 = vmatprep.subr.mxu0 0.0
    %5938 = vmatpush1.msra.mxu0 0.0
    %5939 = vmatprep.mubr.f32.mxu0 0.0
    %v5940 = vand.u32 %v5498, 4294901760
    %5941 = vmatmul.mubr.f32.gmra.mrb[0].mxu0 %v5940
    %v5942 = vpop.f32.mrb[0].mxu0
    %v5943 = vadd.f32 %v5871, %v5942
    %v5944 = vpop.f32.mrb[0].mxu0
    %5945 = vdwg.mxu0
    %v5946 = vadd.f32 %v2328, %v5943
    %v5947 = vtanh.pop %v5946
    %v5949 = vsel %vm66, %v5947, 0
    %5951 = vmatprep.subr.mxu0 0.0
    %v5952 = vand.u32 %v51, 4294901760
    %5953 = vmatpush1.msra.mxu0 %v5952
    %5954 = vmatprep.subr.mxu0 0.0
    %5955 = vmatpush1.msra.mxu0 0.0
    %5956 = vmatprep.subr.mxu0 0.0
    %5957 = vmatpush1.msra.mxu0 0.0
    %5958 = vmatprep.subr.mxu0 0.0
    %5959 = vmatpush1.msra.mxu0 0.0
    %5960 = vmatprep.subr.mxu0 0.0
    %5961 = vmatpush1.msra.mxu0 0.0
    %5962 = vmatprep.subr.mxu0 0.0
    %5963 = vmatpush1.msra.mxu0 0.0
    %5964 = vmatprep.subr.mxu0 0.0
    %5965 = vmatpush1.msra.mxu0 0.0
    %5966 = vmatprep.subr.mxu0 0.0
    %5967 = vmatpush1.msra.mxu0 0.0
    %5968 = vmatprep.subr.mxu0 0.0
    %5969 = vmatpush1.msra.mxu0 0.0
    %5970 = vmatprep.subr.mxu0 0.0
    %5971 = vmatpush1.msra.mxu0 0.0
    %5972 = vmatprep.subr.mxu0 0.0
    %5973 = vmatpush1.msra.mxu0 0.0
    %5974 = vmatprep.subr.mxu0 0.0
    %5975 = vmatpush1.msra.mxu0 0.0
    %5976 = vmatprep.subr.mxu0 0.0
    %5977 = vmatpush1.msra.mxu0 0.0
    %5978 = vmatprep.subr.mxu0 0.0
    %5979 = vmatpush1.msra.mxu0 0.0
    %5980 = vmatprep.subr.mxu0 0.0
    %5981 = vmatpush1.msra.mxu0 0.0
    %5982 = vmatprep.subr.mxu0 0.0
    %5983 = vmatpush1.msra.mxu0 0.0
    %5984 = vmatprep.subr.mxu0 0.0
    %5985 = vmatpush1.msra.mxu0 0.0
    %5986 = vmatprep.subr.mxu0 0.0
    %5987 = vmatpush1.msra.mxu0 0.0
    %5988 = vmatprep.subr.mxu0 0.0
    %5989 = vmatpush1.msra.mxu0 0.0
    %5990 = vmatprep.subr.mxu0 0.0
    %5991 = vmatpush1.msra.mxu0 0.0
    %5992 = vmatprep.subr.mxu0 0.0
    %5993 = vmatpush1.msra.mxu0 0.0
    %5994 = vmatprep.subr.mxu0 0.0
    %5995 = vmatpush1.msra.mxu0 0.0
    %5996 = vmatprep.subr.mxu0 0.0
    %5997 = vmatpush1.msra.mxu0 0.0
    %5998 = vmatprep.subr.mxu0 0.0
    %5999 = vmatpush1.msra.mxu0 0.0
    %6000 = vmatprep.subr.mxu0 0.0
    %6001 = vmatpush1.msra.mxu0 0.0
    %6002 = vmatprep.subr.mxu0 0.0
    %6003 = vmatpush1.msra.mxu0 0.0
    %6004 = vmatprep.subr.mxu0 0.0
    %6005 = vmatpush1.msra.mxu0 0.0
    %6006 = vmatprep.subr.mxu0 0.0
    %6007 = vmatpush1.msra.mxu0 0.0
    %6008 = vmatprep.subr.mxu0 0.0
    %6009 = vmatpush1.msra.mxu0 0.0
    %6010 = vmatprep.subr.mxu0 0.0
    %6011 = vmatpush1.msra.mxu0 0.0
    %6012 = vmatprep.subr.mxu0 0.0
    %6013 = vmatpush1.msra.mxu0 0.0
    %6014 = vmatprep.subr.mxu0 0.0
    %6015 = vmatpush1.msra.mxu0 0.0
    %6016 = vmatprep.mubr.f32.mxu0 0.0
    %v6017 = vand.u32 %v5949, 4294901760
    %v6018 = vsub.f32 %v5949, %v6017
    %v6019 = vand.u32 %v6018, 4294901760
    %v6020 = vsub.f32 %v6018, %v6019
    %v6021 = vand.u32 %v6020, 4294901760
    %6022 = vmatmul.mubr.f32.gmra.mrb[0].mxu0 %v6021
    %v6023 = vpop.f32.mrb[0].mxu0
    %v6024 = vadd.f32 0.0, %v6023
    %v6025 = vpop.f32.mrb[0].mxu0
    %6026 = vdwg.mxu0
    %6027 = vmatprep.subr.mxu0 0.0
    %v6028 = vand.u32 %v51, 4294901760
    %v6029 = vsub.f32 %v51, %v6028
    %v6030 = vand.u32 %v6029, 4294901760
    %v6031 = vsub.f32 %v6029, %v6030
    %v6032 = vand.u32 %v6031, 4294901760
    %6033 = vmatpush1.msra.mxu0 %v6032
    %6034 = vmatprep.subr.mxu0 0.0
    %6035 = vmatpush1.msra.mxu0 0.0
    %6036 = vmatprep.subr.mxu0 0.0
    %6037 = vmatpush1.msra.mxu0 0.0
    %6038 = vmatprep.subr.mxu0 0.0
    %6039 = vmatpush1.msra.mxu0 0.0
    %6040 = vmatprep.subr.mxu0 0.0
    %6041 = vmatpush1.msra.mxu0 0.0
    %6042 = vmatprep.subr.mxu0 0.0
    %6043 = vmatpush1.msra.mxu0 0.0
    %6044 = vmatprep.subr.mxu0 0.0
    %6045 = vmatpush1.msra.mxu0 0.0
    %6046 = vmatprep.subr.mxu0 0.0
    %6047 = vmatpush1.msra.mxu0 0.0
    %6048 = vmatprep.subr.mxu0 0.0
    %6049 = vmatpush1.msra.mxu0 0.0
    %6050 = vmatprep.subr.mxu0 0.0
    %6051 = vmatpush1.msra.mxu0 0.0
    %6052 = vmatprep.subr.mxu0 0.0
    %6053 = vmatpush1.msra.mxu0 0.0
    %6054 = vmatprep.subr.mxu0 0.0
    %6055 = vmatpush1.msra.mxu0 0.0
    %6056 = vmatprep.subr.mxu0 0.0
    %6057 = vmatpush1.msra.mxu0 0.0
    %6058 = vmatprep.subr.mxu0 0.0
    %6059 = vmatpush1.msra.mxu0 0.0
    %6060 = vmatprep.subr.mxu0 0.0
    %6061 = vmatpush1.msra.mxu0 0.0
    %6062 = vmatprep.subr.mxu0 0.0
    %6063 = vmatpush1.msra.mxu0 0.0
    %6064 = vmatprep.subr.mxu0 0.0
    %6065 = vmatpush1.msra.mxu0 0.0
    %6066 = vmatprep.subr.mxu0 0.0
    %6067 = vmatpush1.msra.mxu0 0.0
    %6068 = vmatprep.subr.mxu0 0.0
    %6069 = vmatpush1.msra.mxu0 0.0
    %6070 = vmatprep.subr.mxu0 0.0
    %6071 = vmatpush1.msra.mxu0 0.0
    %6072 = vmatprep.subr.mxu0 0.0
    %6073 = vmatpush1.msra.mxu0 0.0
    %6074 = vmatprep.subr.mxu0 0.0
    %6075 = vmatpush1.msra.mxu0 0.0
    %6076 = vmatprep.subr.mxu0 0.0
    %6077 = vmatpush1.msra.mxu0 0.0
    %6078 = vmatprep.subr.mxu0 0.0
    %6079 = vmatpush1.msra.mxu0 0.0
    %6080 = vmatprep.subr.mxu0 0.0
    %6081 = vmatpush1.msra.mxu0 0.0
    %6082 = vmatprep.subr.mxu0 0.0
    %6083 = vmatpush1.msra.mxu0 0.0
    %6084 = vmatprep.subr.mxu0 0.0
    %6085 = vmatpush1.msra.mxu0 0.0
    %6086 = vmatprep.subr.mxu0 0.0
    %6087 = vmatpush1.msra.mxu0 0.0
    %6088 = vmatprep.subr.mxu0 0.0
    %6089 = vmatpush1.msra.mxu0 0.0
    %6090 = vmatprep.subr.mxu0 0.0
    %6091 = vmatpush1.msra.mxu0 0.0
    %6092 = vmatprep.subr.mxu0 0.0
    %6093 = vmatpush1.msra.mxu0 0.0
    %6094 = vmatprep.subr.mxu0 0.0
    %6095 = vmatpush1.msra.mxu0 0.0
    %6096 = vmatprep.mubr.f32.mxu0 0.0
    %v6097 = vand.u32 %v5949, 4294901760
    %6098 = vmatmul.mubr.f32.gmra.mrb[0].mxu0 %v6097
    %v6099 = vpop.f32.mrb[0].mxu0
    %v6100 = vadd.f32 %v6024, %v6099
    %v6101 = vpop.f32.mrb[0].mxu0
    %6102 = vdwg.mxu0
    %6103 = vmatprep.subr.mxu0 0.0
    %v6104 = vand.u32 %v51, 4294901760
    %v6105 = vsub.f32 %v51, %v6104
    %6106 = vmatpush1.msra.mxu0 %v6105
    %6107 = vmatprep.subr.mxu0 0.0
    %6108 = vmatpush1.msra.mxu0 0.0
    %6109 = vmatprep.subr.mxu0 0.0
    %6110 = vmatpush1.msra.mxu0 0.0
    %6111 = vmatprep.subr.mxu0 0.0
    %6112 = vmatpush1.msra.mxu0 0.0
    %6113 = vmatprep.subr.mxu0 0.0
    %6114 = vmatpush1.msra.mxu0 0.0
    %6115 = vmatprep.subr.mxu0 0.0
    %6116 = vmatpush1.msra.mxu0 0.0
    %6117 = vmatprep.subr.mxu0 0.0
    %6118 = vmatpush1.msra.mxu0 0.0
    %6119 = vmatprep.subr.mxu0 0.0
    %6120 = vmatpush1.msra.mxu0 0.0
    %6121 = vmatprep.subr.mxu0 0.0
    %6122 = vmatpush1.msra.mxu0 0.0
    %6123 = vmatprep.subr.mxu0 0.0
    %6124 = vmatpush1.msra.mxu0 0.0
    %6125 = vmatprep.subr.mxu0 0.0
    %6126 = vmatpush1.msra.mxu0 0.0
    %6127 = vmatprep.subr.mxu0 0.0
    %6128 = vmatpush1.msra.mxu0 0.0
    %6129 = vmatprep.subr.mxu0 0.0
    %6130 = vmatpush1.msra.mxu0 0.0
    %6131 = vmatprep.subr.mxu0 0.0
    %6132 = vmatpush1.msra.mxu0 0.0
    %6133 = vmatprep.subr.mxu0 0.0
    %6134 = vmatpush1.msra.mxu0 0.0
    %6135 = vmatprep.subr.mxu0 0.0
    %6136 = vmatpush1.msra.mxu0 0.0
    %6137 = vmatprep.subr.mxu0 0.0
    %6138 = vmatpush1.msra.mxu0 0.0
    %6139 = vmatprep.subr.mxu0 0.0
    %6140 = vmatpush1.msra.mxu0 0.0
    %6141 = vmatprep.subr.mxu0 0.0
    %6142 = vmatpush1.msra.mxu0 0.0
    %6143 = vmatprep.subr.mxu0 0.0
    %6144 = vmatpush1.msra.mxu0 0.0
    %6145 = vmatprep.subr.mxu0 0.0
    %6146 = vmatpush1.msra.mxu0 0.0
    %6147 = vmatprep.subr.mxu0 0.0
    %6148 = vmatpush1.msra.mxu0 0.0
    %6149 = vmatprep.subr.mxu0 0.0
    %6150 = vmatpush1.msra.mxu0 0.0
    %6151 = vmatprep.subr.mxu0 0.0
    %6152 = vmatpush1.msra.mxu0 0.0
    %6153 = vmatprep.subr.mxu0 0.0
    %6154 = vmatpush1.msra.mxu0 0.0
    %6155 = vmatprep.subr.mxu0 0.0
    %6156 = vmatpush1.msra.mxu0 0.0
    %6157 = vmatprep.subr.mxu0 0.0
    %6158 = vmatpush1.msra.mxu0 0.0
    %6159 = vmatprep.subr.mxu0 0.0
    %6160 = vmatpush1.msra.mxu0 0.0
    %6161 = vmatprep.subr.mxu0 0.0
    %6162 = vmatpush1.msra.mxu0 0.0
    %6163 = vmatprep.subr.mxu0 0.0
    %6164 = vmatpush1.msra.mxu0 0.0
    %6165 = vmatprep.subr.mxu0 0.0
    %6166 = vmatpush1.msra.mxu0 0.0
    %6167 = vmatprep.subr.mxu0 0.0
    %6168 = vmatpush1.msra.mxu0 0.0
    %6169 = vmatprep.mubr.f32.mxu0 0.0
    %v6170 = vand.u32 %v5949, 4294901760
    %v6171 = vsub.f32 %v5949, %v6170
    %6172 = vmatmul.mubr.f32.gmra.mrb[0].mxu0 %v6171
    %v6173 = vpop.f32.mrb[0].mxu0
    %v6174 = vadd.f32 %v6100, %v6173
    %v6175 = vpop.f32.mrb[0].mxu0
    %6176 = vdwg.mxu0
    %6177 = vmatprep.subr.mxu0 0.0
    %v6178 = vand.u32 %v51, 4294901760
    %6179 = vmatpush1.msra.mxu0 %v6178
    %6180 = vmatprep.subr.mxu0 0.0
    %6181 = vmatpush1.msra.mxu0 0.0
    %6182 = vmatprep.subr.mxu0 0.0
    %6183 = vmatpush1.msra.mxu0 0.0
    %6184 = vmatprep.subr.mxu0 0.0
    %6185 = vmatpush1.msra.mxu0 0.0
    %6186 = vmatprep.subr.mxu0 0.0
    %6187 = vmatpush1.msra.mxu0 0.0
    %6188 = vmatprep.subr.mxu0 0.0
    %6189 = vmatpush1.msra.mxu0 0.0
    %6190 = vmatprep.subr.mxu0 0.0
    %6191 = vmatpush1.msra.mxu0 0.0
    %6192 = vmatprep.subr.mxu0 0.0
    %6193 = vmatpush1.msra.mxu0 0.0
    %6194 = vmatprep.subr.mxu0 0.0
    %6195 = vmatpush1.msra.mxu0 0.0
    %6196 = vmatprep.subr.mxu0 0.0
    %6197 = vmatpush1.msra.mxu0 0.0
    %6198 = vmatprep.subr.mxu0 0.0
    %6199 = vmatpush1.msra.mxu0 0.0
    %6200 = vmatprep.subr.mxu0 0.0
    %6201 = vmatpush1.msra.mxu0 0.0
    %6202 = vmatprep.subr.mxu0 0.0
    %6203 = vmatpush1.msra.mxu0 0.0
    %6204 = vmatprep.subr.mxu0 0.0
    %6205 = vmatpush1.msra.mxu0 0.0
    %6206 = vmatprep.subr.mxu0 0.0
    %6207 = vmatpush1.msra.mxu0 0.0
    %6208 = vmatprep.subr.mxu0 0.0
    %6209 = vmatpush1.msra.mxu0 0.0
    %6210 = vmatprep.subr.mxu0 0.0
    %6211 = vmatpush1.msra.mxu0 0.0
    %6212 = vmatprep.subr.mxu0 0.0
    %6213 = vmatpush1.msra.mxu0 0.0
    %6214 = vmatprep.subr.mxu0 0.0
    %6215 = vmatpush1.msra.mxu0 0.0
    %6216 = vmatprep.subr.mxu0 0.0
    %6217 = vmatpush1.msra.mxu0 0.0
    %6218 = vmatprep.subr.mxu0 0.0
    %6219 = vmatpush1.msra.mxu0 0.0
    %6220 = vmatprep.subr.mxu0 0.0
    %6221 = vmatpush1.msra.mxu0 0.0
    %6222 = vmatprep.subr.mxu0 0.0
    %6223 = vmatpush1.msra.mxu0 0.0
    %6224 = vmatprep.subr.mxu0 0.0
    %6225 = vmatpush1.msra.mxu0 0.0
    %6226 = vmatprep.subr.mxu0 0.0
    %6227 = vmatpush1.msra.mxu0 0.0
    %6228 = vmatprep.subr.mxu0 0.0
    %6229 = vmatpush1.msra.mxu0 0.0
    %6230 = vmatprep.subr.mxu0 0.0
    %6231 = vmatpush1.msra.mxu0 0.0
    %6232 = vmatprep.subr.mxu0 0.0
    %6233 = vmatpush1.msra.mxu0 0.0
    %6234 = vmatprep.subr.mxu0 0.0
    %6235 = vmatpush1.msra.mxu0 0.0
    %6236 = vmatprep.subr.mxu0 0.0
    %6237 = vmatpush1.msra.mxu0 0.0
    %6238 = vmatprep.subr.mxu0 0.0
    %6239 = vmatpush1.msra.mxu0 0.0
    %6240 = vmatprep.subr.mxu0 0.0
    %6241 = vmatpush1.msra.mxu0 0.0
    %6242 = vmatprep.mubr.f32.mxu0 0.0
    %v6243 = vand.u32 %v5949, 4294901760
    %v6244 = vsub.f32 %v5949, %v6243
    %v6245 = vand.u32 %v6244, 4294901760
    %6246 = vmatmul.mubr.f32.gmra.mrb[0].mxu0 %v6245
    %v6247 = vpop.f32.mrb[0].mxu0
    %v6248 = vadd.f32 %v6174, %v6247
    %v6249 = vpop.f32.mrb[0].mxu0
    %6250 = vdwg.mxu0
    %6251 = vmatprep.subr.mxu0 0.0
    %v6252 = vand.u32 %v51, 4294901760
    %v6253 = vsub.f32 %v51, %v6252
    %v6254 = vand.u32 %v6253, 4294901760
    %6255 = vmatpush1.msra.mxu0 %v6254
    %6256 = vmatprep.subr.mxu0 0.0
    %6257 = vmatpush1.msra.mxu0 0.0
    %6258 = vmatprep.subr.mxu0 0.0
    %6259 = vmatpush1.msra.mxu0 0.0
    %6260 = vmatprep.subr.mxu0 0.0
    %6261 = vmatpush1.msra.mxu0 0.0
    %6262 = vmatprep.subr.mxu0 0.0
    %6263 = vmatpush1.msra.mxu0 0.0
    %6264 = vmatprep.subr.mxu0 0.0
    %6265 = vmatpush1.msra.mxu0 0.0
    %6266 = vmatprep.subr.mxu0 0.0
    %6267 = vmatpush1.msra.mxu0 0.0
    %6268 = vmatprep.subr.mxu0 0.0
    %6269 = vmatpush1.msra.mxu0 0.0
    %6270 = vmatprep.subr.mxu0 0.0
    %6271 = vmatpush1.msra.mxu0 0.0
    %6272 = vmatprep.subr.mxu0 0.0
    %6273 = vmatpush1.msra.mxu0 0.0
    %6274 = vmatprep.subr.mxu0 0.0
    %6275 = vmatpush1.msra.mxu0 0.0
    %6276 = vmatprep.subr.mxu0 0.0
    %6277 = vmatpush1.msra.mxu0 0.0
    %6278 = vmatprep.subr.mxu0 0.0
    %6279 = vmatpush1.msra.mxu0 0.0
    %6280 = vmatprep.subr.mxu0 0.0
    %6281 = vmatpush1.msra.mxu0 0.0
    %6282 = vmatprep.subr.mxu0 0.0
    %6283 = vmatpush1.msra.mxu0 0.0
    %6284 = vmatprep.subr.mxu0 0.0
    %6285 = vmatpush1.msra.mxu0 0.0
    %6286 = vmatprep.subr.mxu0 0.0
    %6287 = vmatpush1.msra.mxu0 0.0
    %6288 = vmatprep.subr.mxu0 0.0
    %6289 = vmatpush1.msra.mxu0 0.0
    %6290 = vmatprep.subr.mxu0 0.0
    %6291 = vmatpush1.msra.mxu0 0.0
    %6292 = vmatprep.subr.mxu0 0.0
    %6293 = vmatpush1.msra.mxu0 0.0
    %6294 = vmatprep.subr.mxu0 0.0
    %6295 = vmatpush1.msra.mxu0 0.0
    %6296 = vmatprep.subr.mxu0 0.0
    %6297 = vmatpush1.msra.mxu0 0.0
    %6298 = vmatprep.subr.mxu0 0.0
    %6299 = vmatpush1.msra.mxu0 0.0
    %6300 = vmatprep.subr.mxu0 0.0
    %6301 = vmatpush1.msra.mxu0 0.0
    %6302 = vmatprep.subr.mxu0 0.0
    %6303 = vmatpush1.msra.mxu0 0.0
    %6304 = vmatprep.subr.mxu0 0.0
    %6305 = vmatpush1.msra.mxu0 0.0
    %6306 = vmatprep.subr.mxu0 0.0
    %6307 = vmatpush1.msra.mxu0 0.0
    %6308 = vmatprep.subr.mxu0 0.0
    %6309 = vmatpush1.msra.mxu0 0.0
    %6310 = vmatprep.subr.mxu0 0.0
    %6311 = vmatpush1.msra.mxu0 0.0
    %6312 = vmatprep.subr.mxu0 0.0
    %6313 = vmatpush1.msra.mxu0 0.0
    %6314 = vmatprep.subr.mxu0 0.0
    %6315 = vmatpush1.msra.mxu0 0.0
    %6316 = vmatprep.subr.mxu0 0.0
    %6317 = vmatpush1.msra.mxu0 0.0
    %6318 = vmatprep.mubr.f32.mxu0 0.0
    %v6319 = vand.u32 %v5949, 4294901760
    %6320 = vmatmul.mubr.f32.gmra.mrb[0].mxu0 %v6319
    %v6321 = vpop.f32.mrb[0].mxu0
    %v6322 = vadd.f32 %v6248, %v6321
    %v6323 = vpop.f32.mrb[0].mxu0
    %6324 = vdwg.mxu0
    %6325 = vmatprep.subr.mxu0 0.0
    %v6326 = vand.u32 %v51, 4294901760
    %6327 = vmatpush1.msra.mxu0 %v6326
    %6328 = vmatprep.subr.mxu0 0.0
    %6329 = vmatpush1.msra.mxu0 0.0
    %6330 = vmatprep.subr.mxu0 0.0
    %6331 = vmatpush1.msra.mxu0 0.0
    %6332 = vmatprep.subr.mxu0 0.0
    %6333 = vmatpush1.msra.mxu0 0.0
    %6334 = vmatprep.subr.mxu0 0.0
    %6335 = vmatpush1.msra.mxu0 0.0
    %6336 = vmatprep.subr.mxu0 0.0
    %6337 = vmatpush1.msra.mxu0 0.0
    %6338 = vmatprep.subr.mxu0 0.0
    %6339 = vmatpush1.msra.mxu0 0.0
    %6340 = vmatprep.subr.mxu0 0.0
    %6341 = vmatpush1.msra.mxu0 0.0
    %6342 = vmatprep.subr.mxu0 0.0
    %6343 = vmatpush1.msra.mxu0 0.0
    %6344 = vmatprep.subr.mxu0 0.0
    %6345 = vmatpush1.msra.mxu0 0.0
    %6346 = vmatprep.subr.mxu0 0.0
    %6347 = vmatpush1.msra.mxu0 0.0
    %6348 = vmatprep.subr.mxu0 0.0
    %6349 = vmatpush1.msra.mxu0 0.0
    %6350 = vmatprep.subr.mxu0 0.0
    %6351 = vmatpush1.msra.mxu0 0.0
    %6352 = vmatprep.subr.mxu0 0.0
    %6353 = vmatpush1.msra.mxu0 0.0
    %6354 = vmatprep.subr.mxu0 0.0
    %6355 = vmatpush1.msra.mxu0 0.0
    %6356 = vmatprep.subr.mxu0 0.0
    %6357 = vmatpush1.msra.mxu0 0.0
    %6358 = vmatprep.subr.mxu0 0.0
    %6359 = vmatpush1.msra.mxu0 0.0
    %6360 = vmatprep.subr.mxu0 0.0
    %6361 = vmatpush1.msra.mxu0 0.0
    %6362 = vmatprep.subr.mxu0 0.0
    %6363 = vmatpush1.msra.mxu0 0.0
    %6364 = vmatprep.subr.mxu0 0.0
    %6365 = vmatpush1.msra.mxu0 0.0
    %6366 = vmatprep.subr.mxu0 0.0
    %6367 = vmatpush1.msra.mxu0 0.0
    %6368 = vmatprep.subr.mxu0 0.0
    %6369 = vmatpush1.msra.mxu0 0.0
    %6370 = vmatprep.subr.mxu0 0.0
    %6371 = vmatpush1.msra.mxu0 0.0
    %6372 = vmatprep.subr.mxu0 0.0
    %6373 = vmatpush1.msra.mxu0 0.0
    %6374 = vmatprep.subr.mxu0 0.0
    %6375 = vmatpush1.msra.mxu0 0.0
    %6376 = vmatprep.subr.mxu0 0.0
    %6377 = vmatpush1.msra.mxu0 0.0
    %6378 = vmatprep.subr.mxu0 0.0
    %6379 = vmatpush1.msra.mxu0 0.0
    %6380 = vmatprep.subr.mxu0 0.0
    %6381 = vmatpush1.msra.mxu0 0.0
    %6382 = vmatprep.subr.mxu0 0.0
    %6383 = vmatpush1.msra.mxu0 0.0
    %6384 = vmatprep.subr.mxu0 0.0
    %6385 = vmatpush1.msra.mxu0 0.0
    %6386 = vmatprep.subr.mxu0 0.0
    %6387 = vmatpush1.msra.mxu0 0.0
    %6388 = vmatprep.subr.mxu0 0.0
    %6389 = vmatpush1.msra.mxu0 0.0
    %6390 = vmatprep.mubr.f32.mxu0 0.0
    %v6391 = vand.u32 %v5949, 4294901760
    %6392 = vmatmul.mubr.f32.gmra.mrb[0].mxu0 %v6391
    %v6393 = vpop.f32.mrb[0].mxu0
    %v6394 = vadd.f32 %v6322, %v6393
    %v6395 = vpop.f32.mrb[0].mxu0
    %6396 = vdwg.mxu0
    %v6397 = vadd.f32 %v2782, %v6394
    %v6398 = vtanh.pop %v6397
    %v6400 = vsel %vm66, %v6398, 0
    %6402 = vmatprep.subr.mxu0 0.0
    %v6403 = vand.u32 %v51, 4294901760
    %6404 = vmatpush1.msra.mxu0 %v6403
    %6405 = vmatprep.subr.mxu0 0.0
    %6406 = vmatpush1.msra.mxu0 0.0
    %6407 = vmatprep.subr.mxu0 0.0
    %6408 = vmatpush1.msra.mxu0 0.0
    %6409 = vmatprep.subr.mxu0 0.0
    %6410 = vmatpush1.msra.mxu0 0.0
    %6411 = vmatprep.subr.mxu0 0.0
    %6412 = vmatpush1.msra.mxu0 0.0
    %6413 = vmatprep.subr.mxu0 0.0
    %6414 = vmatpush1.msra.mxu0 0.0
    %6415 = vmatprep.subr.mxu0 0.0
    %6416 = vmatpush1.msra.mxu0 0.0
    %6417 = vmatprep.subr.mxu0 0.0
    %6418 = vmatpush1.msra.mxu0 0.0
    %6419 = vmatprep.subr.mxu0 0.0
    %6420 = vmatpush1.msra.mxu0 0.0
    %6421 = vmatprep.subr.mxu0 0.0
    %6422 = vmatpush1.msra.mxu0 0.0
    %6423 = vmatprep.subr.mxu0 0.0
    %6424 = vmatpush1.msra.mxu0 0.0
    %6425 = vmatprep.subr.mxu0 0.0
    %6426 = vmatpush1.msra.mxu0 0.0
    %6427 = vmatprep.subr.mxu0 0.0
    %6428 = vmatpush1.msra.mxu0 0.0
    %6429 = vmatprep.subr.mxu0 0.0
    %6430 = vmatpush1.msra.mxu0 0.0
    %6431 = vmatprep.subr.mxu0 0.0
    %6432 = vmatpush1.msra.mxu0 0.0
    %6433 = vmatprep.subr.mxu0 0.0
    %6434 = vmatpush1.msra.mxu0 0.0
    %6435 = vmatprep.subr.mxu0 0.0
    %6436 = vmatpush1.msra.mxu0 0.0
    %6437 = vmatprep.subr.mxu0 0.0
    %6438 = vmatpush1.msra.mxu0 0.0
    %6439 = vmatprep.subr.mxu0 0.0
    %6440 = vmatpush1.msra.mxu0 0.0
    %6441 = vmatprep.subr.mxu0 0.0
    %6442 = vmatpush1.msra.mxu0 0.0
    %6443 = vmatprep.subr.mxu0 0.0
    %6444 = vmatpush1.msra.mxu0 0.0
    %6445 = vmatprep.subr.mxu0 0.0
    %6446 = vmatpush1.msra.mxu0 0.0
    %6447 = vmatprep.subr.mxu0 0.0
    %6448 = vmatpush1.msra.mxu0 0.0
    %6449 = vmatprep.subr.mxu0 0.0
    %6450 = vmatpush1.msra.mxu0 0.0
    %6451 = vmatprep.subr.mxu0 0.0
    %6452 = vmatpush1.msra.mxu0 0.0
    %6453 = vmatprep.subr.mxu0 0.0
    %6454 = vmatpush1.msra.mxu0 0.0
    %6455 = vmatprep.subr.mxu0 0.0
    %6456 = vmatpush1.msra.mxu0 0.0
    %6457 = vmatprep.subr.mxu0 0.0
    %6458 = vmatpush1.msra.mxu0 0.0
    %6459 = vmatprep.subr.mxu0 0.0
    %6460 = vmatpush1.msra.mxu0 0.0
    %6461 = vmatprep.subr.mxu0 0.0
    %6462 = vmatpush1.msra.mxu0 0.0
    %6463 = vmatprep.subr.mxu0 0.0
    %6464 = vmatpush1.msra.mxu0 0.0
    %6465 = vmatprep.subr.mxu0 0.0
    %6466 = vmatpush1.msra.mxu0 0.0
    %6467 = vmatprep.mubr.f32.mxu0 0.0
    %v6468 = vand.u32 %v6400, 4294901760
    %v6469 = vsub.f32 %v6400, %v6468
    %v6470 = vand.u32 %v6469, 4294901760
    %v6471 = vsub.f32 %v6469, %v6470
    %v6472 = vand.u32 %v6471, 4294901760
    %6473 = vmatmul.mubr.f32.gmra.mrb[0].mxu0 %v6472
    %v6474 = vpop.f32.mrb[0].mxu0
    %v6475 = vadd.f32 0.0, %v6474
    %v6476 = vpop.f32.mrb[0].mxu0
    %6477 = vdwg.mxu0
    %6478 = vmatprep.subr.mxu0 0.0
    %v6479 = vand.u32 %v51, 4294901760
    %v6480 = vsub.f32 %v51, %v6479
    %v6481 = vand.u32 %v6480, 4294901760
    %v6482 = vsub.f32 %v6480, %v6481
    %v6483 = vand.u32 %v6482, 4294901760
    %6484 = vmatpush1.msra.mxu0 %v6483
    %6485 = vmatprep.subr.mxu0 0.0
    %6486 = vmatpush1.msra.mxu0 0.0
    %6487 = vmatprep.subr.mxu0 0.0
    %6488 = vmatpush1.msra.mxu0 0.0
    %6489 = vmatprep.subr.mxu0 0.0
    %6490 = vmatpush1.msra.mxu0 0.0
    %6491 = vmatprep.subr.mxu0 0.0
    %6492 = vmatpush1.msra.mxu0 0.0
    %6493 = vmatprep.subr.mxu0 0.0
    %6494 = vmatpush1.msra.mxu0 0.0
    %6495 = vmatprep.subr.mxu0 0.0
    %6496 = vmatpush1.msra.mxu0 0.0
    %6497 = vmatprep.subr.mxu0 0.0
    %6498 = vmatpush1.msra.mxu0 0.0
    %6499 = vmatprep.subr.mxu0 0.0
    %6500 = vmatpush1.msra.mxu0 0.0
    %6501 = vmatprep.subr.mxu0 0.0
    %6502 = vmatpush1.msra.mxu0 0.0
    %6503 = vmatprep.subr.mxu0 0.0
    %6504 = vmatpush1.msra.mxu0 0.0
    %6505 = vmatprep.subr.mxu0 0.0
    %6506 = vmatpush1.msra.mxu0 0.0
    %6507 = vmatprep.subr.mxu0 0.0
    %6508 = vmatpush1.msra.mxu0 0.0
    %6509 = vmatprep.subr.mxu0 0.0
    %6510 = vmatpush1.msra.mxu0 0.0
    %6511 = vmatprep.subr.mxu0 0.0
    %6512 = vmatpush1.msra.mxu0 0.0
    %6513 = vmatprep.subr.mxu0 0.0
    %6514 = vmatpush1.msra.mxu0 0.0
    %6515 = vmatprep.subr.mxu0 0.0
    %6516 = vmatpush1.msra.mxu0 0.0
    %6517 = vmatprep.subr.mxu0 0.0
    %6518 = vmatpush1.msra.mxu0 0.0
    %6519 = vmatprep.subr.mxu0 0.0
    %6520 = vmatpush1.msra.mxu0 0.0
    %6521 = vmatprep.subr.mxu0 0.0
    %6522 = vmatpush1.msra.mxu0 0.0
    %6523 = vmatprep.subr.mxu0 0.0
    %6524 = vmatpush1.msra.mxu0 0.0
    %6525 = vmatprep.subr.mxu0 0.0
    %6526 = vmatpush1.msra.mxu0 0.0
    %6527 = vmatprep.subr.mxu0 0.0
    %6528 = vmatpush1.msra.mxu0 0.0
    %6529 = vmatprep.subr.mxu0 0.0
    %6530 = vmatpush1.msra.mxu0 0.0
    %6531 = vmatprep.subr.mxu0 0.0
    %6532 = vmatpush1.msra.mxu0 0.0
    %6533 = vmatprep.subr.mxu0 0.0
    %6534 = vmatpush1.msra.mxu0 0.0
    %6535 = vmatprep.subr.mxu0 0.0
    %6536 = vmatpush1.msra.mxu0 0.0
    %6537 = vmatprep.subr.mxu0 0.0
    %6538 = vmatpush1.msra.mxu0 0.0
    %6539 = vmatprep.subr.mxu0 0.0
    %6540 = vmatpush1.msra.mxu0 0.0
    %6541 = vmatprep.subr.mxu0 0.0
    %6542 = vmatpush1.msra.mxu0 0.0
    %6543 = vmatprep.subr.mxu0 0.0
    %6544 = vmatpush1.msra.mxu0 0.0
    %6545 = vmatprep.subr.mxu0 0.0
    %6546 = vmatpush1.msra.mxu0 0.0
    %6547 = vmatprep.mubr.f32.mxu0 0.0
    %v6548 = vand.u32 %v6400, 4294901760
    %6549 = vmatmul.mubr.f32.gmra.mrb[0].mxu0 %v6548
    %v6550 = vpop.f32.mrb[0].mxu0
    %v6551 = vadd.f32 %v6475, %v6550
    %v6552 = vpop.f32.mrb[0].mxu0
    %6553 = vdwg.mxu0
    %6554 = vmatprep.subr.mxu0 0.0
    %v6555 = vand.u32 %v51, 4294901760
    %v6556 = vsub.f32 %v51, %v6555
    %6557 = vmatpush1.msra.mxu0 %v6556
    %6558 = vmatprep.subr.mxu0 0.0
    %6559 = vmatpush1.msra.mxu0 0.0
    %6560 = vmatprep.subr.mxu0 0.0
    %6561 = vmatpush1.msra.mxu0 0.0
    %6562 = vmatprep.subr.mxu0 0.0
    %6563 = vmatpush1.msra.mxu0 0.0
    %6564 = vmatprep.subr.mxu0 0.0
    %6565 = vmatpush1.msra.mxu0 0.0
    %6566 = vmatprep.subr.mxu0 0.0
    %6567 = vmatpush1.msra.mxu0 0.0
    %6568 = vmatprep.subr.mxu0 0.0
    %6569 = vmatpush1.msra.mxu0 0.0
    %6570 = vmatprep.subr.mxu0 0.0
    %6571 = vmatpush1.msra.mxu0 0.0
    %6572 = vmatprep.subr.mxu0 0.0
    %6573 = vmatpush1.msra.mxu0 0.0
    %6574 = vmatprep.subr.mxu0 0.0
    %6575 = vmatpush1.msra.mxu0 0.0
    %6576 = vmatprep.subr.mxu0 0.0
    %6577 = vmatpush1.msra.mxu0 0.0
    %6578 = vmatprep.subr.mxu0 0.0
    %6579 = vmatpush1.msra.mxu0 0.0
    %6580 = vmatprep.subr.mxu0 0.0
    %6581 = vmatpush1.msra.mxu0 0.0
    %6582 = vmatprep.subr.mxu0 0.0
    %6583 = vmatpush1.msra.mxu0 0.0
    %6584 = vmatprep.subr.mxu0 0.0
    %6585 = vmatpush1.msra.mxu0 0.0
    %6586 = vmatprep.subr.mxu0 0.0
    %6587 = vmatpush1.msra.mxu0 0.0
    %6588 = vmatprep.subr.mxu0 0.0
    %6589 = vmatpush1.msra.mxu0 0.0
    %6590 = vmatprep.subr.mxu0 0.0
    %6591 = vmatpush1.msra.mxu0 0.0
    %6592 = vmatprep.subr.mxu0 0.0
    %6593 = vmatpush1.msra.mxu0 0.0
    %6594 = vmatprep.subr.mxu0 0.0
    %6595 = vmatpush1.msra.mxu0 0.0
    %6596 = vmatprep.subr.mxu0 0.0
    %6597 = vmatpush1.msra.mxu0 0.0
    %6598 = vmatprep.subr.mxu0 0.0
    %6599 = vmatpush1.msra.mxu0 0.0
    %6600 = vmatprep.subr.mxu0 0.0
    %6601 = vmatpush1.msra.mxu0 0.0
    %6602 = vmatprep.subr.mxu0 0.0
    %6603 = vmatpush1.msra.mxu0 0.0
    %6604 = vmatprep.subr.mxu0 0.0
    %6605 = vmatpush1.msra.mxu0 0.0
    %6606 = vmatprep.subr.mxu0 0.0
    %6607 = vmatpush1.msra.mxu0 0.0
    %6608 = vmatprep.subr.mxu0 0.0
    %6609 = vmatpush1.msra.mxu0 0.0
    %6610 = vmatprep.subr.mxu0 0.0
    %6611 = vmatpush1.msra.mxu0 0.0
    %6612 = vmatprep.subr.mxu0 0.0
    %6613 = vmatpush1.msra.mxu0 0.0
    %6614 = vmatprep.subr.mxu0 0.0
    %6615 = vmatpush1.msra.mxu0 0.0
    %6616 = vmatprep.subr.mxu0 0.0
    %6617 = vmatpush1.msra.mxu0 0.0
    %6618 = vmatprep.subr.mxu0 0.0
    %6619 = vmatpush1.msra.mxu0 0.0
    %6620 = vmatprep.mubr.f32.mxu0 0.0
    %v6621 = vand.u32 %v6400, 4294901760
    %v6622 = vsub.f32 %v6400, %v6621
    %6623 = vmatmul.mubr.f32.gmra.mrb[0].mxu0 %v6622
    %v6624 = vpop.f32.mrb[0].mxu0
    %v6625 = vadd.f32 %v6551, %v6624
    %v6626 = vpop.f32.mrb[0].mxu0
    %6627 = vdwg.mxu0
    %6628 = vmatprep.subr.mxu0 0.0
    %v6629 = vand.u32 %v51, 4294901760
    %6630 = vmatpush1.msra.mxu0 %v6629
    %6631 = vmatprep.subr.mxu0 0.0
    %6632 = vmatpush1.msra.mxu0 0.0
    %6633 = vmatprep.subr.mxu0 0.0
    %6634 = vmatpush1.msra.mxu0 0.0
    %6635 = vmatprep.subr.mxu0 0.0
    %6636 = vmatpush1.msra.mxu0 0.0
    %6637 = vmatprep.subr.mxu0 0.0
    %6638 = vmatpush1.msra.mxu0 0.0
    %6639 = vmatprep.subr.mxu0 0.0
    %6640 = vmatpush1.msra.mxu0 0.0
    %6641 = vmatprep.subr.mxu0 0.0
    %6642 = vmatpush1.msra.mxu0 0.0
    %6643 = vmatprep.subr.mxu0 0.0
    %6644 = vmatpush1.msra.mxu0 0.0
    %6645 = vmatprep.subr.mxu0 0.0
    %6646 = vmatpush1.msra.mxu0 0.0
    %6647 = vmatprep.subr.mxu0 0.0
    %6648 = vmatpush1.msra.mxu0 0.0
    %6649 = vmatprep.subr.mxu0 0.0
    %6650 = vmatpush1.msra.mxu0 0.0
    %6651 = vmatprep.subr.mxu0 0.0
    %6652 = vmatpush1.msra.mxu0 0.0
    %6653 = vmatprep.subr.mxu0 0.0
    %6654 = vmatpush1.msra.mxu0 0.0
    %6655 = vmatprep.subr.mxu0 0.0
    %6656 = vmatpush1.msra.mxu0 0.0
    %6657 = vmatprep.subr.mxu0 0.0
    %6658 = vmatpush1.msra.mxu0 0.0
    %6659 = vmatprep.subr.mxu0 0.0
    %6660 = vmatpush1.msra.mxu0 0.0
    %6661 = vmatprep.subr.mxu0 0.0
    %6662 = vmatpush1.msra.mxu0 0.0
    %6663 = vmatprep.subr.mxu0 0.0
    %6664 = vmatpush1.msra.mxu0 0.0
    %6665 = vmatprep.subr.mxu0 0.0
    %6666 = vmatpush1.msra.mxu0 0.0
    %6667 = vmatprep.subr.mxu0 0.0
    %6668 = vmatpush1.msra.mxu0 0.0
    %6669 = vmatprep.subr.mxu0 0.0
    %6670 = vmatpush1.msra.mxu0 0.0
    %6671 = vmatprep.subr.mxu0 0.0
    %6672 = vmatpush1.msra.mxu0 0.0
    %6673 = vmatprep.subr.mxu0 0.0
    %6674 = vmatpush1.msra.mxu0 0.0
    %6675 = vmatprep.subr.mxu0 0.0
    %6676 = vmatpush1.msra.mxu0 0.0
    %6677 = vmatprep.subr.mxu0 0.0
    %6678 = vmatpush1.msra.mxu0 0.0
    %6679 = vmatprep.subr.mxu0 0.0
    %6680 = vmatpush1.msra.mxu0 0.0
    %6681 = vmatprep.subr.mxu0 0.0
    %6682 = vmatpush1.msra.mxu0 0.0
    %6683 = vmatprep.subr.mxu0 0.0
    %6684 = vmatpush1.msra.mxu0 0.0
    %6685 = vmatprep.subr.mxu0 0.0
    %6686 = vmatpush1.msra.mxu0 0.0
    %6687 = vmatprep.subr.mxu0 0.0
    %6688 = vmatpush1.msra.mxu0 0.0
    %6689 = vmatprep.subr.mxu0 0.0
    %6690 = vmatpush1.msra.mxu0 0.0
    %6691 = vmatprep.subr.mxu0 0.0
    %6692 = vmatpush1.msra.mxu0 0.0
    %6693 = vmatprep.mubr.f32.mxu0 0.0
    %v6694 = vand.u32 %v6400, 4294901760
    %v6695 = vsub.f32 %v6400, %v6694
    %v6696 = vand.u32 %v6695, 4294901760
    %6697 = vmatmul.mubr.f32.gmra.mrb[0].mxu0 %v6696
    %v6698 = vpop.f32.mrb[0].mxu0
    %v6699 = vadd.f32 %v6625, %v6698
    %v6700 = vpop.f32.mrb[0].mxu0
    %6701 = vdwg.mxu0
    %6702 = vmatprep.subr.mxu0 0.0
    %v6703 = vand.u32 %v51, 4294901760
    %v6704 = vsub.f32 %v51, %v6703
    %v6705 = vand.u32 %v6704, 4294901760
    %6706 = vmatpush1.msra.mxu0 %v6705
    %6707 = vmatprep.subr.mxu0 0.0
    %6708 = vmatpush1.msra.mxu0 0.0
    %6709 = vmatprep.subr.mxu0 0.0
    %6710 = vmatpush1.msra.mxu0 0.0
    %6711 = vmatprep.subr.mxu0 0.0
    %6712 = vmatpush1.msra.mxu0 0.0
    %6713 = vmatprep.subr.mxu0 0.0
    %6714 = vmatpush1.msra.mxu0 0.0
    %6715 = vmatprep.subr.mxu0 0.0
    %6716 = vmatpush1.msra.mxu0 0.0
    %6717 = vmatprep.subr.mxu0 0.0
    %6718 = vmatpush1.msra.mxu0 0.0
    %6719 = vmatprep.subr.mxu0 0.0
    %6720 = vmatpush1.msra.mxu0 0.0
    %6721 = vmatprep.subr.mxu0 0.0
    %6722 = vmatpush1.msra.mxu0 0.0
    %6723 = vmatprep.subr.mxu0 0.0
    %6724 = vmatpush1.msra.mxu0 0.0
    %6725 = vmatprep.subr.mxu0 0.0
    %6726 = vmatpush1.msra.mxu0 0.0
    %6727 = vmatprep.subr.mxu0 0.0
    %6728 = vmatpush1.msra.mxu0 0.0
    %6729 = vmatprep.subr.mxu0 0.0
    %6730 = vmatpush1.msra.mxu0 0.0
    %6731 = vmatprep.subr.mxu0 0.0
    %6732 = vmatpush1.msra.mxu0 0.0
    %6733 = vmatprep.subr.mxu0 0.0
    %6734 = vmatpush1.msra.mxu0 0.0
    %6735 = vmatprep.subr.mxu0 0.0
    %6736 = vmatpush1.msra.mxu0 0.0
    %6737 = vmatprep.subr.mxu0 0.0
    %6738 = vmatpush1.msra.mxu0 0.0
    %6739 = vmatprep.subr.mxu0 0.0
    %6740 = vmatpush1.msra.mxu0 0.0
    %6741 = vmatprep.subr.mxu0 0.0
    %6742 = vmatpush1.msra.mxu0 0.0
    %6743 = vmatprep.subr.mxu0 0.0
    %6744 = vmatpush1.msra.mxu0 0.0
    %6745 = vmatprep.subr.mxu0 0.0
    %6746 = vmatpush1.msra.mxu0 0.0
    %6747 = vmatprep.subr.mxu0 0.0
    %6748 = vmatpush1.msra.mxu0 0.0
    %6749 = vmatprep.subr.mxu0 0.0
    %6750 = vmatpush1.msra.mxu0 0.0
    %6751 = vmatprep.subr.mxu0 0.0
    %6752 = vmatpush1.msra.mxu0 0.0
    %6753 = vmatprep.subr.mxu0 0.0
    %6754 = vmatpush1.msra.mxu0 0.0
    %6755 = vmatprep.subr.mxu0 0.0
    %6756 = vmatpush1.msra.mxu0 0.0
    %6757 = vmatprep.subr.mxu0 0.0
    %6758 = vmatpush1.msra.mxu0 0.0
    %6759 = vmatprep.subr.mxu0 0.0
    %6760 = vmatpush1.msra.mxu0 0.0
    %6761 = vmatprep.subr.mxu0 0.0
    %6762 = vmatpush1.msra.mxu0 0.0
    %6763 = vmatprep.subr.mxu0 0.0
    %6764 = vmatpush1.msra.mxu0 0.0
    %6765 = vmatprep.subr.mxu0 0.0
    %6766 = vmatpush1.msra.mxu0 0.0
    %6767 = vmatprep.subr.mxu0 0.0
    %6768 = vmatpush1.msra.mxu0 0.0
    %6769 = vmatprep.mubr.f32.mxu0 0.0
    %v6770 = vand.u32 %v6400, 4294901760
    %6771 = vmatmul.mubr.f32.gmra.mrb[0].mxu0 %v6770
    %v6772 = vpop.f32.mrb[0].mxu0
    %v6773 = vadd.f32 %v6699, %v6772
    %v6774 = vpop.f32.mrb[0].mxu0
    %6775 = vdwg.mxu0
    %6776 = vmatprep.subr.mxu0 0.0
    %v6777 = vand.u32 %v51, 4294901760
    %6778 = vmatpush1.msra.mxu0 %v6777
    %6779 = vmatprep.subr.mxu0 0.0
    %6780 = vmatpush1.msra.mxu0 0.0
    %6781 = vmatprep.subr.mxu0 0.0
    %6782 = vmatpush1.msra.mxu0 0.0
    %6783 = vmatprep.subr.mxu0 0.0
    %6784 = vmatpush1.msra.mxu0 0.0
    %6785 = vmatprep.subr.mxu0 0.0
    %6786 = vmatpush1.msra.mxu0 0.0
    %6787 = vmatprep.subr.mxu0 0.0
    %6788 = vmatpush1.msra.mxu0 0.0
    %6789 = vmatprep.subr.mxu0 0.0
    %6790 = vmatpush1.msra.mxu0 0.0
    %6791 = vmatprep.subr.mxu0 0.0
    %6792 = vmatpush1.msra.mxu0 0.0
    %6793 = vmatprep.subr.mxu0 0.0
    %6794 = vmatpush1.msra.mxu0 0.0
    %6795 = vmatprep.subr.mxu0 0.0
    %6796 = vmatpush1.msra.mxu0 0.0
    %6797 = vmatprep.subr.mxu0 0.0
    %6798 = vmatpush1.msra.mxu0 0.0
    %6799 = vmatprep.subr.mxu0 0.0
    %6800 = vmatpush1.msra.mxu0 0.0
    %6801 = vmatprep.subr.mxu0 0.0
    %6802 = vmatpush1.msra.mxu0 0.0
    %6803 = vmatprep.subr.mxu0 0.0
    %6804 = vmatpush1.msra.mxu0 0.0
    %6805 = vmatprep.subr.mxu0 0.0
    %6806 = vmatpush1.msra.mxu0 0.0
    %6807 = vmatprep.subr.mxu0 0.0
    %6808 = vmatpush1.msra.mxu0 0.0
    %6809 = vmatprep.subr.mxu0 0.0
    %6810 = vmatpush1.msra.mxu0 0.0
    %6811 = vmatprep.subr.mxu0 0.0
    %6812 = vmatpush1.msra.mxu0 0.0
    %6813 = vmatprep.subr.mxu0 0.0
    %6814 = vmatpush1.msra.mxu0 0.0
    %6815 = vmatprep.subr.mxu0 0.0
    %6816 = vmatpush1.msra.mxu0 0.0
    %6817 = vmatprep.subr.mxu0 0.0
    %6818 = vmatpush1.msra.mxu0 0.0
    %6819 = vmatprep.subr.mxu0 0.0
    %6820 = vmatpush1.msra.mxu0 0.0
    %6821 = vmatprep.subr.mxu0 0.0
    %6822 = vmatpush1.msra.mxu0 0.0
    %6823 = vmatprep.subr.mxu0 0.0
    %6824 = vmatpush1.msra.mxu0 0.0
    %6825 = vmatprep.subr.mxu0 0.0
    %6826 = vmatpush1.msra.mxu0 0.0
    %6827 = vmatprep.subr.mxu0 0.0
    %6828 = vmatpush1.msra.mxu0 0.0
    %6829 = vmatprep.subr.mxu0 0.0
    %6830 = vmatpush1.msra.mxu0 0.0
    %6831 = vmatprep.subr.mxu0 0.0
    %6832 = vmatpush1.msra.mxu0 0.0
    %6833 = vmatprep.subr.mxu0 0.0
    %6834 = vmatpush1.msra.mxu0 0.0
    %6835 = vmatprep.subr.mxu0 0.0
    %6836 = vmatpush1.msra.mxu0 0.0
    %6837 = vmatprep.subr.mxu0 0.0
    %6838 = vmatpush1.msra.mxu0 0.0
    %6839 = vmatprep.subr.mxu0 0.0
    %6840 = vmatpush1.msra.mxu0 0.0
    %6841 = vmatprep.mubr.f32.mxu0 0.0
    %v6842 = vand.u32 %v6400, 4294901760
    %6843 = vmatmul.mubr.f32.gmra.mrb[0].mxu0 %v6842
    %v6844 = vpop.f32.mrb[0].mxu0
    %v6845 = vadd.f32 %v6773, %v6844
    %v6846 = vpop.f32.mrb[0].mxu0
    %6847 = vdwg.mxu0
    %v6848 = vadd.f32 %v3236, %v6845
    %v6849 = vtanh.pop %v6848
    %v6851 = vsel %vm66, %v6849, 0
    %6853 = vmatprep.subr.mxu0 0.0
    %v6854 = vand.u32 %v51, 4294901760
    %6855 = vmatpush1.msra.mxu0 %v6854
    %6856 = vmatprep.subr.mxu0 0.0
    %6857 = vmatpush1.msra.mxu0 0.0
    %6858 = vmatprep.subr.mxu0 0.0
    %6859 = vmatpush1.msra.mxu0 0.0
    %6860 = vmatprep.subr.mxu0 0.0
    %6861 = vmatpush1.msra.mxu0 0.0
    %6862 = vmatprep.subr.mxu0 0.0
    %6863 = vmatpush1.msra.mxu0 0.0
    %6864 = vmatprep.subr.mxu0 0.0
    %6865 = vmatpush1.msra.mxu0 0.0
    %6866 = vmatprep.subr.mxu0 0.0
    %6867 = vmatpush1.msra.mxu0 0.0
    %6868 = vmatprep.subr.mxu0 0.0
    %6869 = vmatpush1.msra.mxu0 0.0
    %6870 = vmatprep.subr.mxu0 0.0
    %6871 = vmatpush1.msra.mxu0 0.0
    %6872 = vmatprep.subr.mxu0 0.0
    %6873 = vmatpush1.msra.mxu0 0.0
    %6874 = vmatprep.subr.mxu0 0.0
    %6875 = vmatpush1.msra.mxu0 0.0
    %6876 = vmatprep.subr.mxu0 0.0
    %6877 = vmatpush1.msra.mxu0 0.0
    %6878 = vmatprep.subr.mxu0 0.0
    %6879 = vmatpush1.msra.mxu0 0.0
    %6880 = vmatprep.subr.mxu0 0.0
    %6881 = vmatpush1.msra.mxu0 0.0
    %6882 = vmatprep.subr.mxu0 0.0
    %6883 = vmatpush1.msra.mxu0 0.0
    %6884 = vmatprep.subr.mxu0 0.0
    %6885 = vmatpush1.msra.mxu0 0.0
    %6886 = vmatprep.subr.mxu0 0.0
    %6887 = vmatpush1.msra.mxu0 0.0
    %6888 = vmatprep.subr.mxu0 0.0
    %6889 = vmatpush1.msra.mxu0 0.0
    %6890 = vmatprep.subr.mxu0 0.0
    %6891 = vmatpush1.msra.mxu0 0.0
    %6892 = vmatprep.subr.mxu0 0.0
    %6893 = vmatpush1.msra.mxu0 0.0
    %6894 = vmatprep.subr.mxu0 0.0
    %6895 = vmatpush1.msra.mxu0 0.0
    %6896 = vmatprep.subr.mxu0 0.0
    %6897 = vmatpush1.msra.mxu0 0.0
    %6898 = vmatprep.subr.mxu0 0.0
    %6899 = vmatpush1.msra.mxu0 0.0
    %6900 = vmatprep.subr.mxu0 0.0
    %6901 = vmatpush1.msra.mxu0 0.0
    %6902 = vmatprep.subr.mxu0 0.0
    %6903 = vmatpush1.msra.mxu0 0.0
    %6904 = vmatprep.subr.mxu0 0.0
    %6905 = vmatpush1.msra.mxu0 0.0
    %6906 = vmatprep.subr.mxu0 0.0
    %6907 = vmatpush1.msra.mxu0 0.0
    %6908 = vmatprep.subr.mxu0 0.0
    %6909 = vmatpush1.msra.mxu0 0.0
    %6910 = vmatprep.subr.mxu0 0.0
    %6911 = vmatpush1.msra.mxu0 0.0
    %6912 = vmatprep.subr.mxu0 0.0
    %6913 = vmatpush1.msra.mxu0 0.0
    %6914 = vmatprep.subr.mxu0 0.0
    %6915 = vmatpush1.msra.mxu0 0.0
    %6916 = vmatprep.subr.mxu0 0.0
    %6917 = vmatpush1.msra.mxu0 0.0
    %6918 = vmatprep.mubr.f32.mxu0 0.0
    %v6919 = vand.u32 %v6851, 4294901760
    %v6920 = vsub.f32 %v6851, %v6919
    %v6921 = vand.u32 %v6920, 4294901760
    %v6922 = vsub.f32 %v6920, %v6921
    %v6923 = vand.u32 %v6922, 4294901760
    %6924 = vmatmul.mubr.f32.gmra.mrb[0].mxu0 %v6923
    %v6925 = vpop.f32.mrb[0].mxu0
    %v6926 = vadd.f32 0.0, %v6925
    %v6927 = vpop.f32.mrb[0].mxu0
    %6928 = vdwg.mxu0
    %6929 = vmatprep.subr.mxu0 0.0
    %v6930 = vand.u32 %v51, 4294901760
    %v6931 = vsub.f32 %v51, %v6930
    %v6932 = vand.u32 %v6931, 4294901760
    %v6933 = vsub.f32 %v6931, %v6932
    %v6934 = vand.u32 %v6933, 4294901760
    %6935 = vmatpush1.msra.mxu0 %v6934
    %6936 = vmatprep.subr.mxu0 0.0
    %6937 = vmatpush1.msra.mxu0 0.0
    %6938 = vmatprep.subr.mxu0 0.0
    %6939 = vmatpush1.msra.mxu0 0.0
    %6940 = vmatprep.subr.mxu0 0.0
    %6941 = vmatpush1.msra.mxu0 0.0
    %6942 = vmatprep.subr.mxu0 0.0
    %6943 = vmatpush1.msra.mxu0 0.0
    %6944 = vmatprep.subr.mxu0 0.0
    %6945 = vmatpush1.msra.mxu0 0.0
    %6946 = vmatprep.subr.mxu0 0.0
    %6947 = vmatpush1.msra.mxu0 0.0
    %6948 = vmatprep.subr.mxu0 0.0
    %6949 = vmatpush1.msra.mxu0 0.0
    %6950 = vmatprep.subr.mxu0 0.0
    %6951 = vmatpush1.msra.mxu0 0.0
    %6952 = vmatprep.subr.mxu0 0.0
    %6953 = vmatpush1.msra.mxu0 0.0
    %6954 = vmatprep.subr.mxu0 0.0
    %6955 = vmatpush1.msra.mxu0 0.0
    %6956 = vmatprep.subr.mxu0 0.0
    %6957 = vmatpush1.msra.mxu0 0.0
    %6958 = vmatprep.subr.mxu0 0.0
    %6959 = vmatpush1.msra.mxu0 0.0
    %6960 = vmatprep.subr.mxu0 0.0
    %6961 = vmatpush1.msra.mxu0 0.0
    %6962 = vmatprep.subr.mxu0 0.0
    %6963 = vmatpush1.msra.mxu0 0.0
    %6964 = vmatprep.subr.mxu0 0.0
    %6965 = vmatpush1.msra.mxu0 0.0
    %6966 = vmatprep.subr.mxu0 0.0
    %6967 = vmatpush1.msra.mxu0 0.0
    %6968 = vmatprep.subr.mxu0 0.0
    %6969 = vmatpush1.msra.mxu0 0.0
    %6970 = vmatprep.subr.mxu0 0.0
    %6971 = vmatpush1.msra.mxu0 0.0
    %6972 = vmatprep.subr.mxu0 0.0
    %6973 = vmatpush1.msra.mxu0 0.0
    %6974 = vmatprep.subr.mxu0 0.0
    %6975 = vmatpush1.msra.mxu0 0.0
    %6976 = vmatprep.subr.mxu0 0.0
    %6977 = vmatpush1.msra.mxu0 0.0
    %6978 = vmatprep.subr.mxu0 0.0
    %6979 = vmatpush1.msra.mxu0 0.0
    %6980 = vmatprep.subr.mxu0 0.0
    %6981 = vmatpush1.msra.mxu0 0.0
    %6982 = vmatprep.subr.mxu0 0.0
    %6983 = vmatpush1.msra.mxu0 0.0
    %6984 = vmatprep.subr.mxu0 0.0
    %6985 = vmatpush1.msra.mxu0 0.0
    %6986 = vmatprep.subr.mxu0 0.0
    %6987 = vmatpush1.msra.mxu0 0.0
    %6988 = vmatprep.subr.mxu0 0.0
    %6989 = vmatpush1.msra.mxu0 0.0
    %6990 = vmatprep.subr.mxu0 0.0
    %6991 = vmatpush1.msra.mxu0 0.0
    %6992 = vmatprep.subr.mxu0 0.0
    %6993 = vmatpush1.msra.mxu0 0.0
    %6994 = vmatprep.subr.mxu0 0.0
    %6995 = vmatpush1.msra.mxu0 0.0
    %6996 = vmatprep.subr.mxu0 0.0
    %6997 = vmatpush1.msra.mxu0 0.0
    %6998 = vmatprep.mubr.f32.mxu0 0.0
    %v6999 = vand.u32 %v6851, 4294901760
    %7000 = vmatmul.mubr.f32.gmra.mrb[0].mxu0 %v6999
    %v7001 = vpop.f32.mrb[0].mxu0
    %v7002 = vadd.f32 %v6926, %v7001
    %v7003 = vpop.f32.mrb[0].mxu0
    %7004 = vdwg.mxu0
    %7005 = vmatprep.subr.mxu0 0.0
    %v7006 = vand.u32 %v51, 4294901760
    %v7007 = vsub.f32 %v51, %v7006
    %7008 = vmatpush1.msra.mxu0 %v7007
    %7009 = vmatprep.subr.mxu0 0.0
    %7010 = vmatpush1.msra.mxu0 0.0
    %7011 = vmatprep.subr.mxu0 0.0
    %7012 = vmatpush1.msra.mxu0 0.0
    %7013 = vmatprep.subr.mxu0 0.0
    %7014 = vmatpush1.msra.mxu0 0.0
    %7015 = vmatprep.subr.mxu0 0.0
    %7016 = vmatpush1.msra.mxu0 0.0
    %7017 = vmatprep.subr.mxu0 0.0
    %7018 = vmatpush1.msra.mxu0 0.0
    %7019 = vmatprep.subr.mxu0 0.0
    %7020 = vmatpush1.msra.mxu0 0.0
    %7021 = vmatprep.subr.mxu0 0.0
    %7022 = vmatpush1.msra.mxu0 0.0
    %7023 = vmatprep.subr.mxu0 0.0
    %7024 = vmatpush1.msra.mxu0 0.0
    %7025 = vmatprep.subr.mxu0 0.0
    %7026 = vmatpush1.msra.mxu0 0.0
    %7027 = vmatprep.subr.mxu0 0.0
    %7028 = vmatpush1.msra.mxu0 0.0
    %7029 = vmatprep.subr.mxu0 0.0
    %7030 = vmatpush1.msra.mxu0 0.0
    %7031 = vmatprep.subr.mxu0 0.0
    %7032 = vmatpush1.msra.mxu0 0.0
    %7033 = vmatprep.subr.mxu0 0.0
    %7034 = vmatpush1.msra.mxu0 0.0
    %7035 = vmatprep.subr.mxu0 0.0
    %7036 = vmatpush1.msra.mxu0 0.0
    %7037 = vmatprep.subr.mxu0 0.0
    %7038 = vmatpush1.msra.mxu0 0.0
    %7039 = vmatprep.subr.mxu0 0.0
    %7040 = vmatpush1.msra.mxu0 0.0
    %7041 = vmatprep.subr.mxu0 0.0
    %7042 = vmatpush1.msra.mxu0 0.0
    %7043 = vmatprep.subr.mxu0 0.0
    %7044 = vmatpush1.msra.mxu0 0.0
    %7045 = vmatprep.subr.mxu0 0.0
    %7046 = vmatpush1.msra.mxu0 0.0
    %7047 = vmatprep.subr.mxu0 0.0
    %7048 = vmatpush1.msra.mxu0 0.0
    %7049 = vmatprep.subr.mxu0 0.0
    %7050 = vmatpush1.msra.mxu0 0.0
    %7051 = vmatprep.subr.mxu0 0.0
    %7052 = vmatpush1.msra.mxu0 0.0
    %7053 = vmatprep.subr.mxu0 0.0
    %7054 = vmatpush1.msra.mxu0 0.0
    %7055 = vmatprep.subr.mxu0 0.0
    %7056 = vmatpush1.msra.mxu0 0.0
    %7057 = vmatprep.subr.mxu0 0.0
    %7058 = vmatpush1.msra.mxu0 0.0
    %7059 = vmatprep.subr.mxu0 0.0
    %7060 = vmatpush1.msra.mxu0 0.0
    %7061 = vmatprep.subr.mxu0 0.0
    %7062 = vmatpush1.msra.mxu0 0.0
    %7063 = vmatprep.subr.mxu0 0.0
    %7064 = vmatpush1.msra.mxu0 0.0
    %7065 = vmatprep.subr.mxu0 0.0
    %7066 = vmatpush1.msra.mxu0 0.0
    %7067 = vmatprep.subr.mxu0 0.0
    %7068 = vmatpush1.msra.mxu0 0.0
    %7069 = vmatprep.subr.mxu0 0.0
    %7070 = vmatpush1.msra.mxu0 0.0
    %7071 = vmatprep.mubr.f32.mxu0 0.0
    %v7072 = vand.u32 %v6851, 4294901760
    %v7073 = vsub.f32 %v6851, %v7072
    %7074 = vmatmul.mubr.f32.gmra.mrb[0].mxu0 %v7073
    %v7075 = vpop.f32.mrb[0].mxu0
    %v7076 = vadd.f32 %v7002, %v7075
    %v7077 = vpop.f32.mrb[0].mxu0
    %7078 = vdwg.mxu0
    %7079 = vmatprep.subr.mxu0 0.0
    %v7080 = vand.u32 %v51, 4294901760
    %7081 = vmatpush1.msra.mxu0 %v7080
    %7082 = vmatprep.subr.mxu0 0.0
    %7083 = vmatpush1.msra.mxu0 0.0
    %7084 = vmatprep.subr.mxu0 0.0
    %7085 = vmatpush1.msra.mxu0 0.0
    %7086 = vmatprep.subr.mxu0 0.0
    %7087 = vmatpush1.msra.mxu0 0.0
    %7088 = vmatprep.subr.mxu0 0.0
    %7089 = vmatpush1.msra.mxu0 0.0
    %7090 = vmatprep.subr.mxu0 0.0
    %7091 = vmatpush1.msra.mxu0 0.0
    %7092 = vmatprep.subr.mxu0 0.0
    %7093 = vmatpush1.msra.mxu0 0.0
    %7094 = vmatprep.subr.mxu0 0.0
    %7095 = vmatpush1.msra.mxu0 0.0
    %7096 = vmatprep.subr.mxu0 0.0
    %7097 = vmatpush1.msra.mxu0 0.0
    %7098 = vmatprep.subr.mxu0 0.0
    %7099 = vmatpush1.msra.mxu0 0.0
    %7100 = vmatprep.subr.mxu0 0.0
    %7101 = vmatpush1.msra.mxu0 0.0
    %7102 = vmatprep.subr.mxu0 0.0
    %7103 = vmatpush1.msra.mxu0 0.0
    %7104 = vmatprep.subr.mxu0 0.0
    %7105 = vmatpush1.msra.mxu0 0.0
    %7106 = vmatprep.subr.mxu0 0.0
    %7107 = vmatpush1.msra.mxu0 0.0
    %7108 = vmatprep.subr.mxu0 0.0
    %7109 = vmatpush1.msra.mxu0 0.0
    %7110 = vmatprep.subr.mxu0 0.0
    %7111 = vmatpush1.msra.mxu0 0.0
    %7112 = vmatprep.subr.mxu0 0.0
    %7113 = vmatpush1.msra.mxu0 0.0
    %7114 = vmatprep.subr.mxu0 0.0
    %7115 = vmatpush1.msra.mxu0 0.0
    %7116 = vmatprep.subr.mxu0 0.0
    %7117 = vmatpush1.msra.mxu0 0.0
    %7118 = vmatprep.subr.mxu0 0.0
    %7119 = vmatpush1.msra.mxu0 0.0
    %7120 = vmatprep.subr.mxu0 0.0
    %7121 = vmatpush1.msra.mxu0 0.0
    %7122 = vmatprep.subr.mxu0 0.0
    %7123 = vmatpush1.msra.mxu0 0.0
    %7124 = vmatprep.subr.mxu0 0.0
    %7125 = vmatpush1.msra.mxu0 0.0
    %7126 = vmatprep.subr.mxu0 0.0
    %7127 = vmatpush1.msra.mxu0 0.0
    %7128 = vmatprep.subr.mxu0 0.0
    %7129 = vmatpush1.msra.mxu0 0.0
    %7130 = vmatprep.subr.mxu0 0.0
    %7131 = vmatpush1.msra.mxu0 0.0
    %7132 = vmatprep.subr.mxu0 0.0
    %7133 = vmatpush1.msra.mxu0 0.0
    %7134 = vmatprep.subr.mxu0 0.0
    %7135 = vmatpush1.msra.mxu0 0.0
    %7136 = vmatprep.subr.mxu0 0.0
    %7137 = vmatpush1.msra.mxu0 0.0
    %7138 = vmatprep.subr.mxu0 0.0
    %7139 = vmatpush1.msra.mxu0 0.0
    %7140 = vmatprep.subr.mxu0 0.0
    %7141 = vmatpush1.msra.mxu0 0.0
    %7142 = vmatprep.subr.mxu0 0.0
    %7143 = vmatpush1.msra.mxu0 0.0
    %7144 = vmatprep.mubr.f32.mxu0 0.0
    %v7145 = vand.u32 %v6851, 4294901760
    %v7146 = vsub.f32 %v6851, %v7145
    %v7147 = vand.u32 %v7146, 4294901760
    %7148 = vmatmul.mubr.f32.gmra.mrb[0].mxu0 %v7147
    %v7149 = vpop.f32.mrb[0].mxu0
    %v7150 = vadd.f32 %v7076, %v7149
    %v7151 = vpop.f32.mrb[0].mxu0
    %7152 = vdwg.mxu0
    %7153 = vmatprep.subr.mxu0 0.0
    %v7154 = vand.u32 %v51, 4294901760
    %v7155 = vsub.f32 %v51, %v7154
    %v7156 = vand.u32 %v7155, 4294901760
    %7157 = vmatpush1.msra.mxu0 %v7156
    %7158 = vmatprep.subr.mxu0 0.0
    %7159 = vmatpush1.msra.mxu0 0.0
    %7160 = vmatprep.subr.mxu0 0.0
    %7161 = vmatpush1.msra.mxu0 0.0
    %7162 = vmatprep.subr.mxu0 0.0
    %7163 = vmatpush1.msra.mxu0 0.0
    %7164 = vmatprep.subr.mxu0 0.0
    %7165 = vmatpush1.msra.mxu0 0.0
    %7166 = vmatprep.subr.mxu0 0.0
    %7167 = vmatpush1.msra.mxu0 0.0
    %7168 = vmatprep.subr.mxu0 0.0
    %7169 = vmatpush1.msra.mxu0 0.0
    %7170 = vmatprep.subr.mxu0 0.0
    %7171 = vmatpush1.msra.mxu0 0.0
    %7172 = vmatprep.subr.mxu0 0.0
    %7173 = vmatpush1.msra.mxu0 0.0
    %7174 = vmatprep.subr.mxu0 0.0
    %7175 = vmatpush1.msra.mxu0 0.0
    %7176 = vmatprep.subr.mxu0 0.0
    %7177 = vmatpush1.msra.mxu0 0.0
    %7178 = vmatprep.subr.mxu0 0.0
    %7179 = vmatpush1.msra.mxu0 0.0
    %7180 = vmatprep.subr.mxu0 0.0
    %7181 = vmatpush1.msra.mxu0 0.0
    %7182 = vmatprep.subr.mxu0 0.0
    %7183 = vmatpush1.msra.mxu0 0.0
    %7184 = vmatprep.subr.mxu0 0.0
    %7185 = vmatpush1.msra.mxu0 0.0
    %7186 = vmatprep.subr.mxu0 0.0
    %7187 = vmatpush1.msra.mxu0 0.0
    %7188 = vmatprep.subr.mxu0 0.0
    %7189 = vmatpush1.msra.mxu0 0.0
    %7190 = vmatprep.subr.mxu0 0.0
    %7191 = vmatpush1.msra.mxu0 0.0
    %7192 = vmatprep.subr.mxu0 0.0
    %7193 = vmatpush1.msra.mxu0 0.0
    %7194 = vmatprep.subr.mxu0 0.0
    %7195 = vmatpush1.msra.mxu0 0.0
    %7196 = vmatprep.subr.mxu0 0.0
    %7197 = vmatpush1.msra.mxu0 0.0
    %7198 = vmatprep.subr.mxu0 0.0
    %7199 = vmatpush1.msra.mxu0 0.0
    %7200 = vmatprep.subr.mxu0 0.0
    %7201 = vmatpush1.msra.mxu0 0.0
    %7202 = vmatprep.subr.mxu0 0.0
    %7203 = vmatpush1.msra.mxu0 0.0
    %7204 = vmatprep.subr.mxu0 0.0
    %7205 = vmatpush1.msra.mxu0 0.0
    %7206 = vmatprep.subr.mxu0 0.0
    %7207 = vmatpush1.msra.mxu0 0.0
    %7208 = vmatprep.subr.mxu0 0.0
    %7209 = vmatpush1.msra.mxu0 0.0
    %7210 = vmatprep.subr.mxu0 0.0
    %7211 = vmatpush1.msra.mxu0 0.0
    %7212 = vmatprep.subr.mxu0 0.0
    %7213 = vmatpush1.msra.mxu0 0.0
    %7214 = vmatprep.subr.mxu0 0.0
    %7215 = vmatpush1.msra.mxu0 0.0
    %7216 = vmatprep.subr.mxu0 0.0
    %7217 = vmatpush1.msra.mxu0 0.0
    %7218 = vmatprep.subr.mxu0 0.0
    %7219 = vmatpush1.msra.mxu0 0.0
    %7220 = vmatprep.mubr.f32.mxu0 0.0
    %v7221 = vand.u32 %v6851, 4294901760
    %7222 = vmatmul.mubr.f32.gmra.mrb[0].mxu0 %v7221
    %v7223 = vpop.f32.mrb[0].mxu0
    %v7224 = vadd.f32 %v7150, %v7223
    %v7225 = vpop.f32.mrb[0].mxu0
    %7226 = vdwg.mxu0
    %7227 = vmatprep.subr.mxu0 0.0
    %v7228 = vand.u32 %v51, 4294901760
    %7229 = vmatpush1.msra.mxu0 %v7228
    %7230 = vmatprep.subr.mxu0 0.0
    %7231 = vmatpush1.msra.mxu0 0.0
    %7232 = vmatprep.subr.mxu0 0.0
    %7233 = vmatpush1.msra.mxu0 0.0
    %7234 = vmatprep.subr.mxu0 0.0
    %7235 = vmatpush1.msra.mxu0 0.0
    %7236 = vmatprep.subr.mxu0 0.0
    %7237 = vmatpush1.msra.mxu0 0.0
    %7238 = vmatprep.subr.mxu0 0.0
    %7239 = vmatpush1.msra.mxu0 0.0
    %7240 = vmatprep.subr.mxu0 0.0
    %7241 = vmatpush1.msra.mxu0 0.0
    %7242 = vmatprep.subr.mxu0 0.0
    %7243 = vmatpush1.msra.mxu0 0.0
    %7244 = vmatprep.subr.mxu0 0.0
    %7245 = vmatpush1.msra.mxu0 0.0
    %7246 = vmatprep.subr.mxu0 0.0
    %7247 = vmatpush1.msra.mxu0 0.0
    %7248 = vmatprep.subr.mxu0 0.0
    %7249 = vmatpush1.msra.mxu0 0.0
    %7250 = vmatprep.subr.mxu0 0.0
    %7251 = vmatpush1.msra.mxu0 0.0
    %7252 = vmatprep.subr.mxu0 0.0
    %7253 = vmatpush1.msra.mxu0 0.0
    %7254 = vmatprep.subr.mxu0 0.0
    %7255 = vmatpush1.msra.mxu0 0.0
    %7256 = vmatprep.subr.mxu0 0.0
    %7257 = vmatpush1.msra.mxu0 0.0
    %7258 = vmatprep.subr.mxu0 0.0
    %7259 = vmatpush1.msra.mxu0 0.0
    %7260 = vmatprep.subr.mxu0 0.0
    %7261 = vmatpush1.msra.mxu0 0.0
    %7262 = vmatprep.subr.mxu0 0.0
    %7263 = vmatpush1.msra.mxu0 0.0
    %7264 = vmatprep.subr.mxu0 0.0
    %7265 = vmatpush1.msra.mxu0 0.0
    %7266 = vmatprep.subr.mxu0 0.0
    %7267 = vmatpush1.msra.mxu0 0.0
    %7268 = vmatprep.subr.mxu0 0.0
    %7269 = vmatpush1.msra.mxu0 0.0
    %7270 = vmatprep.subr.mxu0 0.0
    %7271 = vmatpush1.msra.mxu0 0.0
    %7272 = vmatprep.subr.mxu0 0.0
    %7273 = vmatpush1.msra.mxu0 0.0
    %7274 = vmatprep.subr.mxu0 0.0
    %7275 = vmatpush1.msra.mxu0 0.0
    %7276 = vmatprep.subr.mxu0 0.0
    %7277 = vmatpush1.msra.mxu0 0.0
    %7278 = vmatprep.subr.mxu0 0.0
    %7279 = vmatpush1.msra.mxu0 0.0
    %7280 = vmatprep.subr.mxu0 0.0
    %7281 = vmatpush1.msra.mxu0 0.0
    %7282 = vmatprep.subr.mxu0 0.0
    %7283 = vmatpush1.msra.mxu0 0.0
    %7284 = vmatprep.subr.mxu0 0.0
    %7285 = vmatpush1.msra.mxu0 0.0
    %7286 = vmatprep.subr.mxu0 0.0
    %7287 = vmatpush1.msra.mxu0 0.0
    %7288 = vmatprep.subr.mxu0 0.0
    %7289 = vmatpush1.msra.mxu0 0.0
    %7290 = vmatprep.subr.mxu0 0.0
    %7291 = vmatpush1.msra.mxu0 0.0
    %7292 = vmatprep.mubr.f32.mxu0 0.0
    %v7293 = vand.u32 %v6851, 4294901760
    %7294 = vmatmul.mubr.f32.gmra.mrb[0].mxu0 %v7293
    %v7295 = vpop.f32.mrb[0].mxu0
    %v7296 = vadd.f32 %v7224, %v7295
    %v7297 = vpop.f32.mrb[0].mxu0
    %7298 = vdwg.mxu0
    %v7299 = vadd.f32 %v3690, %v7296
    %v7300 = vtanh.pop %v7299
    %v7302 = vunpack.c.l.s4 1966171168
    %v7303 = vunpack.c.0.s8 %v7302
    %v7304 = vlaneseq
    %v7305 = vshrl.u32 %v7304, 7
    %v7306 = vsub.s32 %v7303, %v7305
    %v7307 = vrot.slane %v4143, %v7306
    %v7308 = vcombine.high %v7307, %v7307
    %v7310 = vunpack.c.l.s4 1966171168
    %v7311 = vunpack.c.0.s8 %v7310
    %v7312 = vlaneseq
    %v7313 = vshrl.u32 %v7312, 7
    %v7314 = vsub.s32 %v7311, %v7313
    %v7315 = vrot.slane %v7307, %v7314
    %v7317 = vunpack.c.l.s4 1966171168
    %v7318 = vunpack.c.0.s8 %v7317
    %v7319 = vlaneseq
    %v7320 = vshrl.u32 %v7319, 7
    %v7321 = vsub.s32 %v7318, %v7320
    %v7322 = vrot.slane %v7308, %v7321
    %vm7325 = vcmask 57344
    %7326 = vst.msk [vmem:[#allocation2] sm:$0x1] %vm7325, %v7315
    %7327 = vst.msk [vmem:[#allocation2 + $0x8] sm:$0x1] %vm7325, %v7322
    %v7329 = vunpack.c.l.s4 1966171168
    %v7330 = vunpack.c.0.s8 %v7329
    %v7331 = vlaneseq
    %v7332 = vshrl.u32 %v7331, 7
    %v7333 = vsub.s32 %v7330, %v7332
    %v7334 = vrot.slane %v4594, %v7333
    %v7335 = vcombine.high %v7334, %v7334
    %v7337 = vunpack.c.l.s4 1966171168
    %v7338 = vunpack.c.0.s8 %v7337
    %v7339 = vlaneseq
    %v7340 = vshrl.u32 %v7339, 7
    %v7341 = vsub.s32 %v7338, %v7340
    %v7342 = vrot.slane %v7334, %v7341
    %v7344 = vunpack.c.l.s4 1966171168
    %v7345 = vunpack.c.0.s8 %v7344
    %v7346 = vlaneseq
    %v7347 = vshrl.u32 %v7346, 7
    %v7348 = vsub.s32 %v7345, %v7347
    %v7349 = vrot.slane %v7335, %v7348
    %7352 = vst.msk [vmem:[#allocation2 + $0x1] sm:$0x1] %vm7325, %v7342
    %7353 = vst.msk [vmem:[#allocation2 + $0x9] sm:$0x1] %vm7325, %v7349
    %v7355 = vunpack.c.l.s4 1966171168
    %v7356 = vunpack.c.0.s8 %v7355
    %v7357 = vlaneseq
    %v7358 = vshrl.u32 %v7357, 7
    %v7359 = vsub.s32 %v7356, %v7358
    %v7360 = vrot.slane %v5045, %v7359
    %v7361 = vcombine.high %v7360, %v7360
    %v7363 = vunpack.c.l.s4 1966171168
    %v7364 = vunpack.c.0.s8 %v7363
    %v7365 = vlaneseq
    %v7366 = vshrl.u32 %v7365, 7
    %v7367 = vsub.s32 %v7364, %v7366
    %v7368 = vrot.slane %v7360, %v7367
    %v7370 = vunpack.c.l.s4 1966171168
    %v7371 = vunpack.c.0.s8 %v7370
    %v7372 = vlaneseq
    %v7373 = vshrl.u32 %v7372, 7
    %v7374 = vsub.s32 %v7371, %v7373
    %v7375 = vrot.slane %v7361, %v7374
    %7378 = vst.msk [vmem:[#allocation2 + $0x2] sm:$0x1] %vm7325, %v7368
    %7379 = vst.msk [vmem:[#allocation2 + $0xa] sm:$0x1] %vm7325, %v7375
    %v7381 = vunpack.c.l.s4 1966171168
    %v7382 = vunpack.c.0.s8 %v7381
    %v7383 = vlaneseq
    %v7384 = vshrl.u32 %v7383, 7
    %v7385 = vsub.s32 %v7382, %v7384
    %v7386 = vrot.slane %v5496, %v7385
    %v7387 = vcombine.high %v7386, %v7386
    %v7389 = vunpack.c.l.s4 1966171168
    %v7390 = vunpack.c.0.s8 %v7389
    %v7391 = vlaneseq
    %v7392 = vshrl.u32 %v7391, 7
    %v7393 = vsub.s32 %v7390, %v7392
    %v7394 = vrot.slane %v7386, %v7393
    %v7396 = vunpack.c.l.s4 1966171168
    %v7397 = vunpack.c.0.s8 %v7396
    %v7398 = vlaneseq
    %v7399 = vshrl.u32 %v7398, 7
    %v7400 = vsub.s32 %v7397, %v7399
    %v7401 = vrot.slane %v7387, %v7400
    %7404 = vst.msk [vmem:[#allocation2 + $0x3] sm:$0x1] %vm7325, %v7394
    %7405 = vst.msk [vmem:[#allocation2 + $0xb] sm:$0x1] %vm7325, %v7401
    %v7407 = vunpack.c.l.s4 1966171168
    %v7408 = vunpack.c.0.s8 %v7407
    %v7409 = vlaneseq
    %v7410 = vshrl.u32 %v7409, 7
    %v7411 = vsub.s32 %v7408, %v7410
    %v7412 = vrot.slane %v5947, %v7411
    %v7413 = vcombine.high %v7412, %v7412
    %v7415 = vunpack.c.l.s4 1966171168
    %v7416 = vunpack.c.0.s8 %v7415
    %v7417 = vlaneseq
    %v7418 = vshrl.u32 %v7417, 7
    %v7419 = vsub.s32 %v7416, %v7418
    %v7420 = vrot.slane %v7412, %v7419
    %v7422 = vunpack.c.l.s4 1966171168
    %v7423 = vunpack.c.0.s8 %v7422
    %v7424 = vlaneseq
    %v7425 = vshrl.u32 %v7424, 7
    %v7426 = vsub.s32 %v7423, %v7425
    %v7427 = vrot.slane %v7413, %v7426
    %7430 = vst.msk [vmem:[#allocation2 + $0x4] sm:$0x1] %vm7325, %v7420
    %7431 = vst.msk [vmem:[#allocation2 + $0xc] sm:$0x1] %vm7325, %v7427
    %v7433 = vunpack.c.l.s4 1966171168
    %v7434 = vunpack.c.0.s8 %v7433
    %v7435 = vlaneseq
    %v7436 = vshrl.u32 %v7435, 7
    %v7437 = vsub.s32 %v7434, %v7436
    %v7438 = vrot.slane %v6398, %v7437
    %v7439 = vcombine.high %v7438, %v7438
    %v7441 = vunpack.c.l.s4 1966171168
    %v7442 = vunpack.c.0.s8 %v7441
    %v7443 = vlaneseq
    %v7444 = vshrl.u32 %v7443, 7
    %v7445 = vsub.s32 %v7442, %v7444
    %v7446 = vrot.slane %v7438, %v7445
    %v7448 = vunpack.c.l.s4 1966171168
    %v7449 = vunpack.c.0.s8 %v7448
    %v7450 = vlaneseq
    %v7451 = vshrl.u32 %v7450, 7
    %v7452 = vsub.s32 %v7449, %v7451
    %v7453 = vrot.slane %v7439, %v7452
    %7456 = vst.msk [vmem:[#allocation2 + $0x5] sm:$0x1] %vm7325, %v7446
    %7457 = vst.msk [vmem:[#allocation2 + $0xd] sm:$0x1] %vm7325, %v7453
    %v7459 = vunpack.c.l.s4 1966171168
    %v7460 = vunpack.c.0.s8 %v7459
    %v7461 = vlaneseq
    %v7462 = vshrl.u32 %v7461, 7
    %v7463 = vsub.s32 %v7460, %v7462
    %v7464 = vrot.slane %v6849, %v7463
    %v7465 = vcombine.high %v7464, %v7464
    %v7467 = vunpack.c.l.s4 1966171168
    %v7468 = vunpack.c.0.s8 %v7467
    %v7469 = vlaneseq
    %v7470 = vshrl.u32 %v7469, 7
    %v7471 = vsub.s32 %v7468, %v7470
    %v7472 = vrot.slane %v7464, %v7471
    %v7474 = vunpack.c.l.s4 1966171168
    %v7475 = vunpack.c.0.s8 %v7474
    %v7476 = vlaneseq
    %v7477 = vshrl.u32 %v7476, 7
    %v7478 = vsub.s32 %v7475, %v7477
    %v7479 = vrot.slane %v7465, %v7478
    %7482 = vst.msk [vmem:[#allocation2 + $0x6] sm:$0x1] %vm7325, %v7472
    %7483 = vst.msk [vmem:[#allocation2 + $0xe] sm:$0x1] %vm7325, %v7479
    %v7486 = vunpack.c.l.s4 1966171168
    %v7487 = vunpack.c.0.s8 %v7486
    %v7488 = vlaneseq
    %v7489 = vshrl.u32 %v7488, 7
    %v7490 = vsub.s32 %v7487, %v7489
    %v7491 = vrot.slane %v7300, %v7490
    %v7492 = vcombine.high %v7491, %v7491
    %v7494 = vunpack.c.l.s4 1966171168
    %v7495 = vunpack.c.0.s8 %v7494
    %v7496 = vlaneseq
    %v7497 = vshrl.u32 %v7496, 7
    %v7498 = vsub.s32 %v7495, %v7497
    %v7499 = vrot.slane %v7491, %v7498
    %v7501 = vunpack.c.l.s4 1966171168
    %v7502 = vunpack.c.0.s8 %v7501
    %v7503 = vlaneseq
    %v7504 = vshrl.u32 %v7503, 7
    %v7505 = vsub.s32 %v7502, %v7504
    %v7506 = vrot.slane %v7492, %v7505
    %7509 = vst.msk [vmem:[#allocation2 + $0x7] sm:$0x1] %vm7325, %v7499
    %7510 = vst.msk [vmem:[#allocation2 + $0xf] sm:$0x1] %vm7325, %v7506
    %v7511 = vld [vmem:[#allocation2] sm:$0xff]
    %v7512 = vld [vmem:[#allocation2 + $0x8] sm:$0xff]
    %v7513 = vld [vmem:[%s2] sm:$0xff]
    %v7514 = vld [vmem:[%s2 + $0x8] sm:$0xff]
    %v7515 = vmul.f32 %v7513, %v7513
    %v7516 = vmul.f32 %v7514, %v7514
    %v7517 = vsub.f32 1.0, %v7515
    %v7518 = vsub.f32 1.0, %v7516
    %v7519 = vstv %s46
    %v7520 = vmul.f32 %v7519, %v7517
    %v7521 = vmul.f32 %v7519, %v7518
    %v7522 = vstv %s48
    %v7523 = vadd.f32 %v7520, %v7522
    %v7524 = vadd.f32 %v7521, %v7522
    %v7525 = vmul.f32 %v7511, %v7523
    %v7526 = vmul.f32 %v7512, %v7524
    %v7527 = vadd.f32 %v7511, %v7525
    %v7528 = vadd.f32 %v7512, %v7526
    %v7529 = vstv %s47
    %v7530 = vmul.f32 %v7529, %v7513
    %v7531 = vmul.f32 %v7529, %v7514
    %v7532 = vadd.f32 %v7527, %v7530
    %v7533 = vadd.f32 %v7528, %v7531
    %v7534 = vstv %s49
    %v7535 = vmul.f32 %v7534, %v7511
    %v7536 = vmul.f32 %v7534, %v7512
    %v7537 = vsub.f32 %v7513, %v7535
    %v7538 = vsub.f32 %v7514, %v7536
    %v7539 = vmul.f32 %v7537, %v7537
    %v7540 = vmul.f32 %v7538, %v7538
    %v7541 = vsub.f32 1.0, %v7539
    %v7542 = vsub.f32 1.0, %v7540
    %v7543 = vmul.f32 %v7519, %v7541
    %v7544 = vmul.f32 %v7519, %v7542
    %v7545 = vadd.f32 %v7543, %v7522
    %v7546 = vadd.f32 %v7544, %v7522
    %v7547 = vmul.f32 %v7532, %v7545
    %v7548 = vmul.f32 %v7533, %v7546
    %v7549 = vadd.f32 %v7532, %v7547
    %v7550 = vadd.f32 %v7533, %v7548
    %v7551 = vmul.f32 %v7529, %v7537
    %v7552 = vmul.f32 %v7529, %v7538
    %v7553 = vadd.f32 %v7549, %v7551
    %v7554 = vadd.f32 %v7550, %v7552
    %v7555 = vmul.f32 %v7534, %v7532
    %v7556 = vmul.f32 %v7534, %v7533
    %v7557 = vsub.f32 %v7537, %v7555
    %v7558 = vsub.f32 %v7538, %v7556
    %v7559 = vmul.f32 %v7557, %v7557
    %v7560 = vmul.f32 %v7558, %v7558
    %v7561 = vsub.f32 1.0, %v7559
    %v7562 = vsub.f32 1.0, %v7560
    %v7563 = vmul.f32 %v7519, %v7561
    %v7564 = vmul.f32 %v7519, %v7562
    %v7565 = vadd.f32 %v7563, %v7522
    %v7566 = vadd.f32 %v7564, %v7522
    %v7567 = vmul.f32 %v7553, %v7565
    %v7568 = vmul.f32 %v7554, %v7566
    %v7569 = vadd.f32 %v7553, %v7567
    %v7570 = vadd.f32 %v7554, %v7568
    %v7571 = vmul.f32 %v7529, %v7557
    %v7572 = vmul.f32 %v7529, %v7558
    %v7573 = vadd.f32 %v7569, %v7571
    %v7574 = vadd.f32 %v7570, %v7572
    %v7575 = vmul.f32 %v7534, %v7553
    %v7576 = vmul.f32 %v7534, %v7554
    %v7577 = vsub.f32 %v7557, %v7575
    %v7578 = vsub.f32 %v7558, %v7576
    %v7579 = vmul.f32 %v7577, %v7577
    %v7580 = vmul.f32 %v7578, %v7578
    %v7581 = vsub.f32 1.0, %v7579
    %v7582 = vsub.f32 1.0, %v7580
    %v7583 = vmul.f32 %v7519, %v7581
    %v7584 = vmul.f32 %v7519, %v7582
    %v7585 = vadd.f32 %v7583, %v7522
    %v7586 = vadd.f32 %v7584, %v7522
    %v7587 = vmul.f32 %v7573, %v7585
    %v7588 = vmul.f32 %v7574, %v7586
    %v7589 = vadd.f32 %v7573, %v7587
    %v7590 = vadd.f32 %v7574, %v7588
    %v7591 = vmul.f32 %v7529, %v7577
    %v7592 = vmul.f32 %v7529, %v7578
    %v7593 = vadd.f32 %v7589, %v7591
    %v7594 = vadd.f32 %v7590, %v7592
    %v7595 = vmul.f32 %v7534, %v7573
    %v7596 = vmul.f32 %v7534, %v7574
    %v7597 = vsub.f32 %v7577, %v7595
    %v7598 = vsub.f32 %v7578, %v7596
    %7599 = vst.msk [vmem:[#allocation7] sm:$0xff] %vm66, %v7593
    %7600 = vst.msk [vmem:[#allocation7 + $0x8] sm:$0xff] %vm66, %v7594
    %s7601 = scalar_lea.vmem [#allocation7], 16
    %7602 = vst.msk [vmem:[%s7601] sm:$0xff] %vm66, %v7597
    %7603 = vst.msk [vmem:[%s7601 + $0x8] sm:$0xff] %vm66, %v7598
    %v7604 = vld [vmem:[%s6] sm:$0xf]
    %v7605 = vld [vmem:[%s7] sm:$0xf]
    %7607 = vset.pattern.permute.xlu0 0
    %7608 = vperm.xlu0 %7607, %v7605
    %v7609 = vpop.permute.xlu0 %7608
    %v7612 = vsel %vm66, %v7604, 0
    %7614 = vmatprep.subr.mxu0 0.0
    %v7615 = vand.u32 %v7593, 4294901760
    %7616 = vmatpush1.msra.mxu0 %v7615
    %7617 = vmatprep.subr.mxu0 0.0
    %7618 = vmatpush1.msra.mxu0 0.0
    %7619 = vmatprep.subr.mxu0 0.0
    %7620 = vmatpush1.msra.mxu0 0.0
    %7621 = vmatprep.subr.mxu0 0.0
    %7622 = vmatpush1.msra.mxu0 0.0
    %7623 = vmatprep.subr.mxu0 0.0
    %7624 = vmatpush1.msra.mxu0 0.0
    %7625 = vmatprep.subr.mxu0 0.0
    %7626 = vmatpush1.msra.mxu0 0.0
    %7627 = vmatprep.subr.mxu0 0.0
    %7628 = vmatpush1.msra.mxu0 0.0
    %7629 = vmatprep.subr.mxu0 0.0
    %7630 = vmatpush1.msra.mxu0 0.0
    %7631 = vmatprep.subr.mxu0 0.0
    %7632 = vmatpush1.msra.mxu0 0.0
    %7633 = vmatprep.subr.mxu0 0.0
    %7634 = vmatpush1.msra.mxu0 0.0
    %7635 = vmatprep.subr.mxu0 0.0
    %7636 = vmatpush1.msra.mxu0 0.0
    %7637 = vmatprep.subr.mxu0 0.0
    %7638 = vmatpush1.msra.mxu0 0.0
    %7639 = vmatprep.subr.mxu0 0.0
    %7640 = vmatpush1.msra.mxu0 0.0
    %7641 = vmatprep.subr.mxu0 0.0
    %7642 = vmatpush1.msra.mxu0 0.0
    %7643 = vmatprep.subr.mxu0 0.0
    %7644 = vmatpush1.msra.mxu0 0.0
    %7645 = vmatprep.subr.mxu0 0.0
    %7646 = vmatpush1.msra.mxu0 0.0
    %7647 = vmatprep.subr.mxu0 0.0
    %7648 = vmatpush1.msra.mxu0 0.0
    %7649 = vmatprep.subr.mxu0 0.0
    %7650 = vmatpush1.msra.mxu0 0.0
    %7651 = vmatprep.subr.mxu0 0.0
    %7652 = vmatpush1.msra.mxu0 0.0
    %7653 = vmatprep.subr.mxu0 0.0
    %7654 = vmatpush1.msra.mxu0 0.0
    %7655 = vmatprep.subr.mxu0 0.0
    %7656 = vmatpush1.msra.mxu0 0.0
    %7657 = vmatprep.subr.mxu0 0.0
    %7658 = vmatpush1.msra.mxu0 0.0
    %7659 = vmatprep.subr.mxu0 0.0
    %7660 = vmatpush1.msra.mxu0 0.0
    %7661 = vmatprep.subr.mxu0 0.0
    %7662 = vmatpush1.msra.mxu0 0.0
    %7663 = vmatprep.subr.mxu0 0.0
    %7664 = vmatpush1.msra.mxu0 0.0
    %7665 = vmatprep.subr.mxu0 0.0
    %7666 = vmatpush1.msra.mxu0 0.0
    %7667 = vmatprep.subr.mxu0 0.0
    %7668 = vmatpush1.msra.mxu0 0.0
    %7669 = vmatprep.subr.mxu0 0.0
    %7670 = vmatpush1.msra.mxu0 0.0
    %7671 = vmatprep.subr.mxu0 0.0
    %7672 = vmatpush1.msra.mxu0 0.0
    %7673 = vmatprep.subr.mxu0 0.0
    %7674 = vmatpush1.msra.mxu0 0.0
    %7675 = vmatprep.subr.mxu0 0.0
    %7676 = vmatpush1.msra.mxu0 0.0
    %7677 = vmatprep.subr.mxu0 0.0
    %7678 = vmatpush1.msra.mxu0 0.0
    %7679 = vmatprep.mubr.f32.mxu0 0.0
    %v7680 = vand.u32 %v7612, 4294901760
    %v7681 = vsub.f32 %v7612, %v7680
    %v7682 = vand.u32 %v7681, 4294901760
    %v7683 = vsub.f32 %v7681, %v7682
    %v7684 = vand.u32 %v7683, 4294901760
    %7685 = vmatmul.mubr.f32.gmra.mrb[0].mxu0 %v7684
    %v7686 = vpop.f32.mrb[0].mxu0
    %v7687 = vadd.f32 %v7609, %v7686
    %v7688 = vpop.f32.mrb[0].mxu0
    %7689 = vdwg.mxu0
    %7690 = vmatprep.subr.mxu0 0.0
    %v7691 = vand.u32 %v7593, 4294901760
    %v7692 = vsub.f32 %v7593, %v7691
    %v7693 = vand.u32 %v7692, 4294901760
    %v7694 = vsub.f32 %v7692, %v7693
    %v7695 = vand.u32 %v7694, 4294901760
    %7696 = vmatpush1.msra.mxu0 %v7695
    %7697 = vmatprep.subr.mxu0 0.0
    %7698 = vmatpush1.msra.mxu0 0.0
    %7699 = vmatprep.subr.mxu0 0.0
    %7700 = vmatpush1.msra.mxu0 0.0
    %7701 = vmatprep.subr.mxu0 0.0
    %7702 = vmatpush1.msra.mxu0 0.0
    %7703 = vmatprep.subr.mxu0 0.0
    %7704 = vmatpush1.msra.mxu0 0.0
    %7705 = vmatprep.subr.mxu0 0.0
    %7706 = vmatpush1.msra.mxu0 0.0
    %7707 = vmatprep.subr.mxu0 0.0
    %7708 = vmatpush1.msra.mxu0 0.0
    %7709 = vmatprep.subr.mxu0 0.0
    %7710 = vmatpush1.msra.mxu0 0.0
    %7711 = vmatprep.subr.mxu0 0.0
    %7712 = vmatpush1.msra.mxu0 0.0
    %7713 = vmatprep.subr.mxu0 0.0
    %7714 = vmatpush1.msra.mxu0 0.0
    %7715 = vmatprep.subr.mxu0 0.0
    %7716 = vmatpush1.msra.mxu0 0.0
    %7717 = vmatprep.subr.mxu0 0.0
    %7718 = vmatpush1.msra.mxu0 0.0
    %7719 = vmatprep.subr.mxu0 0.0
    %7720 = vmatpush1.msra.mxu0 0.0
    %7721 = vmatprep.subr.mxu0 0.0
    %7722 = vmatpush1.msra.mxu0 0.0
    %7723 = vmatprep.subr.mxu0 0.0
    %7724 = vmatpush1.msra.mxu0 0.0
    %7725 = vmatprep.subr.mxu0 0.0
    %7726 = vmatpush1.msra.mxu0 0.0
    %7727 = vmatprep.subr.mxu0 0.0
    %7728 = vmatpush1.msra.mxu0 0.0
    %7729 = vmatprep.subr.mxu0 0.0
    %7730 = vmatpush1.msra.mxu0 0.0
    %7731 = vmatprep.subr.mxu0 0.0
    %7732 = vmatpush1.msra.mxu0 0.0
    %7733 = vmatprep.subr.mxu0 0.0
    %7734 = vmatpush1.msra.mxu0 0.0
    %7735 = vmatprep.subr.mxu0 0.0
    %7736 = vmatpush1.msra.mxu0 0.0
    %7737 = vmatprep.subr.mxu0 0.0
    %7738 = vmatpush1.msra.mxu0 0.0
    %7739 = vmatprep.subr.mxu0 0.0
    %7740 = vmatpush1.msra.mxu0 0.0
    %7741 = vmatprep.subr.mxu0 0.0
    %7742 = vmatpush1.msra.mxu0 0.0
    %7743 = vmatprep.subr.mxu0 0.0
    %7744 = vmatpush1.msra.mxu0 0.0
    %7745 = vmatprep.subr.mxu0 0.0
    %7746 = vmatpush1.msra.mxu0 0.0
    %7747 = vmatprep.subr.mxu0 0.0
    %7748 = vmatpush1.msra.mxu0 0.0
    %7749 = vmatprep.subr.mxu0 0.0
    %7750 = vmatpush1.msra.mxu0 0.0
    %7751 = vmatprep.subr.mxu0 0.0
    %7752 = vmatpush1.msra.mxu0 0.0
    %7753 = vmatprep.subr.mxu0 0.0
    %7754 = vmatpush1.msra.mxu0 0.0
    %7755 = vmatprep.subr.mxu0 0.0
    %7756 = vmatpush1.msra.mxu0 0.0
    %7757 = vmatprep.subr.mxu0 0.0
    %7758 = vmatpush1.msra.mxu0 0.0
    %7759 = vmatprep.mubr.f32.mxu0 0.0
    %v7760 = vand.u32 %v7612, 4294901760
    %7761 = vmatmul.mubr.f32.gmra.mrb[0].mxu0 %v7760
    %v7762 = vpop.f32.mrb[0].mxu0
    %v7763 = vadd.f32 %v7687, %v7762
    %v7764 = vpop.f32.mrb[0].mxu0
    %7765 = vdwg.mxu0
    %7766 = vmatprep.subr.mxu0 0.0
    %v7767 = vand.u32 %v7593, 4294901760
    %v7768 = vsub.f32 %v7593, %v7767
    %7769 = vmatpush1.msra.mxu0 %v7768
    %7770 = vmatprep.subr.mxu0 0.0
    %7771 = vmatpush1.msra.mxu0 0.0
    %7772 = vmatprep.subr.mxu0 0.0
    %7773 = vmatpush1.msra.mxu0 0.0
    %7774 = vmatprep.subr.mxu0 0.0
    %7775 = vmatpush1.msra.mxu0 0.0
    %7776 = vmatprep.subr.mxu0 0.0
    %7777 = vmatpush1.msra.mxu0 0.0
    %7778 = vmatprep.subr.mxu0 0.0
    %7779 = vmatpush1.msra.mxu0 0.0
    %7780 = vmatprep.subr.mxu0 0.0
    %7781 = vmatpush1.msra.mxu0 0.0
    %7782 = vmatprep.subr.mxu0 0.0
    %7783 = vmatpush1.msra.mxu0 0.0
    %7784 = vmatprep.subr.mxu0 0.0
    %7785 = vmatpush1.msra.mxu0 0.0
    %7786 = vmatprep.subr.mxu0 0.0
    %7787 = vmatpush1.msra.mxu0 0.0
    %7788 = vmatprep.subr.mxu0 0.0
    %7789 = vmatpush1.msra.mxu0 0.0
    %7790 = vmatprep.subr.mxu0 0.0
    %7791 = vmatpush1.msra.mxu0 0.0
    %7792 = vmatprep.subr.mxu0 0.0
    %7793 = vmatpush1.msra.mxu0 0.0
    %7794 = vmatprep.subr.mxu0 0.0
    %7795 = vmatpush1.msra.mxu0 0.0
    %7796 = vmatprep.subr.mxu0 0.0
    %7797 = vmatpush1.msra.mxu0 0.0
    %7798 = vmatprep.subr.mxu0 0.0
    %7799 = vmatpush1.msra.mxu0 0.0
    %7800 = vmatprep.subr.mxu0 0.0
    %7801 = vmatpush1.msra.mxu0 0.0
    %7802 = vmatprep.subr.mxu0 0.0
    %7803 = vmatpush1.msra.mxu0 0.0
    %7804 = vmatprep.subr.mxu0 0.0
    %7805 = vmatpush1.msra.mxu0 0.0
    %7806 = vmatprep.subr.mxu0 0.0
    %7807 = vmatpush1.msra.mxu0 0.0
    %7808 = vmatprep.subr.mxu0 0.0
    %7809 = vmatpush1.msra.mxu0 0.0
    %7810 = vmatprep.subr.mxu0 0.0
    %7811 = vmatpush1.msra.mxu0 0.0
    %7812 = vmatprep.subr.mxu0 0.0
    %7813 = vmatpush1.msra.mxu0 0.0
    %7814 = vmatprep.subr.mxu0 0.0
    %7815 = vmatpush1.msra.mxu0 0.0
    %7816 = vmatprep.subr.mxu0 0.0
    %7817 = vmatpush1.msra.mxu0 0.0
    %7818 = vmatprep.subr.mxu0 0.0
    %7819 = vmatpush1.msra.mxu0 0.0
    %7820 = vmatprep.subr.mxu0 0.0
    %7821 = vmatpush1.msra.mxu0 0.0
    %7822 = vmatprep.subr.mxu0 0.0
    %7823 = vmatpush1.msra.mxu0 0.0
    %7824 = vmatprep.subr.mxu0 0.0
    %7825 = vmatpush1.msra.mxu0 0.0
    %7826 = vmatprep.subr.mxu0 0.0
    %7827 = vmatpush1.msra.mxu0 0.0
    %7828 = vmatprep.subr.mxu0 0.0
    %7829 = vmatpush1.msra.mxu0 0.0
    %7830 = vmatprep.subr.mxu0 0.0
    %7831 = vmatpush1.msra.mxu0 0.0
    %7832 = vmatprep.mubr.f32.mxu0 0.0
    %v7833 = vand.u32 %v7612, 4294901760
    %v7834 = vsub.f32 %v7612, %v7833
    %7835 = vmatmul.mubr.f32.gmra.mrb[0].mxu0 %v7834
    %v7836 = vpop.f32.mrb[0].mxu0
    %v7837 = vadd.f32 %v7763, %v7836
    %v7838 = vpop.f32.mrb[0].mxu0
    %7839 = vdwg.mxu0
    %7840 = vmatprep.subr.mxu0 0.0
    %v7841 = vand.u32 %v7593, 4294901760
    %7842 = vmatpush1.msra.mxu0 %v7841
    %7843 = vmatprep.subr.mxu0 0.0
    %7844 = vmatpush1.msra.mxu0 0.0
    %7845 = vmatprep.subr.mxu0 0.0
    %7846 = vmatpush1.msra.mxu0 0.0
    %7847 = vmatprep.subr.mxu0 0.0
    %7848 = vmatpush1.msra.mxu0 0.0
    %7849 = vmatprep.subr.mxu0 0.0
    %7850 = vmatpush1.msra.mxu0 0.0
    %7851 = vmatprep.subr.mxu0 0.0
    %7852 = vmatpush1.msra.mxu0 0.0
    %7853 = vmatprep.subr.mxu0 0.0
    %7854 = vmatpush1.msra.mxu0 0.0
    %7855 = vmatprep.subr.mxu0 0.0
    %7856 = vmatpush1.msra.mxu0 0.0
    %7857 = vmatprep.subr.mxu0 0.0
    %7858 = vmatpush1.msra.mxu0 0.0
    %7859 = vmatprep.subr.mxu0 0.0
    %7860 = vmatpush1.msra.mxu0 0.0
    %7861 = vmatprep.subr.mxu0 0.0
    %7862 = vmatpush1.msra.mxu0 0.0
    %7863 = vmatprep.subr.mxu0 0.0
    %7864 = vmatpush1.msra.mxu0 0.0
    %7865 = vmatprep.subr.mxu0 0.0
    %7866 = vmatpush1.msra.mxu0 0.0
    %7867 = vmatprep.subr.mxu0 0.0
    %7868 = vmatpush1.msra.mxu0 0.0
    %7869 = vmatprep.subr.mxu0 0.0
    %7870 = vmatpush1.msra.mxu0 0.0
    %7871 = vmatprep.subr.mxu0 0.0
    %7872 = vmatpush1.msra.mxu0 0.0
    %7873 = vmatprep.subr.mxu0 0.0
    %7874 = vmatpush1.msra.mxu0 0.0
    %7875 = vmatprep.subr.mxu0 0.0
    %7876 = vmatpush1.msra.mxu0 0.0
    %7877 = vmatprep.subr.mxu0 0.0
    %7878 = vmatpush1.msra.mxu0 0.0
    %7879 = vmatprep.subr.mxu0 0.0
    %7880 = vmatpush1.msra.mxu0 0.0
    %7881 = vmatprep.subr.mxu0 0.0
    %7882 = vmatpush1.msra.mxu0 0.0
    %7883 = vmatprep.subr.mxu0 0.0
    %7884 = vmatpush1.msra.mxu0 0.0
    %7885 = vmatprep.subr.mxu0 0.0
    %7886 = vmatpush1.msra.mxu0 0.0
    %7887 = vmatprep.subr.mxu0 0.0
    %7888 = vmatpush1.msra.mxu0 0.0
    %7889 = vmatprep.subr.mxu0 0.0
    %7890 = vmatpush1.msra.mxu0 0.0
    %7891 = vmatprep.subr.mxu0 0.0
    %7892 = vmatpush1.msra.mxu0 0.0
    %7893 = vmatprep.subr.mxu0 0.0
    %7894 = vmatpush1.msra.mxu0 0.0
    %7895 = vmatprep.subr.mxu0 0.0
    %7896 = vmatpush1.msra.mxu0 0.0
    %7897 = vmatprep.subr.mxu0 0.0
    %7898 = vmatpush1.msra.mxu0 0.0
    %7899 = vmatprep.subr.mxu0 0.0
    %7900 = vmatpush1.msra.mxu0 0.0
    %7901 = vmatprep.subr.mxu0 0.0
    %7902 = vmatpush1.msra.mxu0 0.0
    %7903 = vmatprep.subr.mxu0 0.0
    %7904 = vmatpush1.msra.mxu0 0.0
    %7905 = vmatprep.mubr.f32.mxu0 0.0
    %v7906 = vand.u32 %v7612, 4294901760
    %v7907 = vsub.f32 %v7612, %v7906
    %v7908 = vand.u32 %v7907, 4294901760
    %7909 = vmatmul.mubr.f32.gmra.mrb[0].mxu0 %v7908
    %v7910 = vpop.f32.mrb[0].mxu0
    %v7911 = vadd.f32 %v7837, %v7910
    %v7912 = vpop.f32.mrb[0].mxu0
    %7913 = vdwg.mxu0
    %7914 = vmatprep.subr.mxu0 0.0
    %v7915 = vand.u32 %v7593, 4294901760
    %v7916 = vsub.f32 %v7593, %v7915
    %v7917 = vand.u32 %v7916, 4294901760
    %7918 = vmatpush1.msra.mxu0 %v7917
    %7919 = vmatprep.subr.mxu0 0.0
    %7920 = vmatpush1.msra.mxu0 0.0
    %7921 = vmatprep.subr.mxu0 0.0
    %7922 = vmatpush1.msra.mxu0 0.0
    %7923 = vmatprep.subr.mxu0 0.0
    %7924 = vmatpush1.msra.mxu0 0.0
    %7925 = vmatprep.subr.mxu0 0.0
    %7926 = vmatpush1.msra.mxu0 0.0
    %7927 = vmatprep.subr.mxu0 0.0
    %7928 = vmatpush1.msra.mxu0 0.0
    %7929 = vmatprep.subr.mxu0 0.0
    %7930 = vmatpush1.msra.mxu0 0.0
    %7931 = vmatprep.subr.mxu0 0.0
    %7932 = vmatpush1.msra.mxu0 0.0
    %7933 = vmatprep.subr.mxu0 0.0
    %7934 = vmatpush1.msra.mxu0 0.0
    %7935 = vmatprep.subr.mxu0 0.0
    %7936 = vmatpush1.msra.mxu0 0.0
    %7937 = vmatprep.subr.mxu0 0.0
    %7938 = vmatpush1.msra.mxu0 0.0
    %7939 = vmatprep.subr.mxu0 0.0
    %7940 = vmatpush1.msra.mxu0 0.0
    %7941 = vmatprep.subr.mxu0 0.0
    %7942 = vmatpush1.msra.mxu0 0.0
    %7943 = vmatprep.subr.mxu0 0.0
    %7944 = vmatpush1.msra.mxu0 0.0
    %7945 = vmatprep.subr.mxu0 0.0
    %7946 = vmatpush1.msra.mxu0 0.0
    %7947 = vmatprep.subr.mxu0 0.0
    %7948 = vmatpush1.msra.mxu0 0.0
    %7949 = vmatprep.subr.mxu0 0.0
    %7950 = vmatpush1.msra.mxu0 0.0
    %7951 = vmatprep.subr.mxu0 0.0
    %7952 = vmatpush1.msra.mxu0 0.0
    %7953 = vmatprep.subr.mxu0 0.0
    %7954 = vmatpush1.msra.mxu0 0.0
    %7955 = vmatprep.subr.mxu0 0.0
    %7956 = vmatpush1.msra.mxu0 0.0
    %7957 = vmatprep.subr.mxu0 0.0
    %7958 = vmatpush1.msra.mxu0 0.0
    %7959 = vmatprep.subr.mxu0 0.0
    %7960 = vmatpush1.msra.mxu0 0.0
    %7961 = vmatprep.subr.mxu0 0.0
    %7962 = vmatpush1.msra.mxu0 0.0
    %7963 = vmatprep.subr.mxu0 0.0
    %7964 = vmatpush1.msra.mxu0 0.0
    %7965 = vmatprep.subr.mxu0 0.0
    %7966 = vmatpush1.msra.mxu0 0.0
    %7967 = vmatprep.subr.mxu0 0.0
    %7968 = vmatpush1.msra.mxu0 0.0
    %7969 = vmatprep.subr.mxu0 0.0
    %7970 = vmatpush1.msra.mxu0 0.0
    %7971 = vmatprep.subr.mxu0 0.0
    %7972 = vmatpush1.msra.mxu0 0.0
    %7973 = vmatprep.subr.mxu0 0.0
    %7974 = vmatpush1.msra.mxu0 0.0
    %7975 = vmatprep.subr.mxu0 0.0
    %7976 = vmatpush1.msra.mxu0 0.0
    %7977 = vmatprep.subr.mxu0 0.0
    %7978 = vmatpush1.msra.mxu0 0.0
    %7979 = vmatprep.subr.mxu0 0.0
    %7980 = vmatpush1.msra.mxu0 0.0
    %7981 = vmatprep.mubr.f32.mxu0 0.0
    %v7982 = vand.u32 %v7612, 4294901760
    %7983 = vmatmul.mubr.f32.gmra.mrb[0].mxu0 %v7982
    %v7984 = vpop.f32.mrb[0].mxu0
    %v7985 = vadd.f32 %v7911, %v7984
    %v7986 = vpop.f32.mrb[0].mxu0
    %7987 = vdwg.mxu0
    %7988 = vmatprep.subr.mxu0 0.0
    %v7989 = vand.u32 %v7593, 4294901760
    %7990 = vmatpush1.msra.mxu0 %v7989
    %7991 = vmatprep.subr.mxu0 0.0
    %7992 = vmatpush1.msra.mxu0 0.0
    %7993 = vmatprep.subr.mxu0 0.0
    %7994 = vmatpush1.msra.mxu0 0.0
    %7995 = vmatprep.subr.mxu0 0.0
    %7996 = vmatpush1.msra.mxu0 0.0
    %7997 = vmatprep.subr.mxu0 0.0
    %7998 = vmatpush1.msra.mxu0 0.0
    %7999 = vmatprep.subr.mxu0 0.0
    %8000 = vmatpush1.msra.mxu0 0.0
    %8001 = vmatprep.subr.mxu0 0.0
    %8002 = vmatpush1.msra.mxu0 0.0
    %8003 = vmatprep.subr.mxu0 0.0
    %8004 = vmatpush1.msra.mxu0 0.0
    %8005 = vmatprep.subr.mxu0 0.0
    %8006 = vmatpush1.msra.mxu0 0.0
    %8007 = vmatprep.subr.mxu0 0.0
    %8008 = vmatpush1.msra.mxu0 0.0
    %8009 = vmatprep.subr.mxu0 0.0
    %8010 = vmatpush1.msra.mxu0 0.0
    %8011 = vmatprep.subr.mxu0 0.0
    %8012 = vmatpush1.msra.mxu0 0.0
    %8013 = vmatprep.subr.mxu0 0.0
    %8014 = vmatpush1.msra.mxu0 0.0
    %8015 = vmatprep.subr.mxu0 0.0
    %8016 = vmatpush1.msra.mxu0 0.0
    %8017 = vmatprep.subr.mxu0 0.0
    %8018 = vmatpush1.msra.mxu0 0.0
    %8019 = vmatprep.subr.mxu0 0.0
    %8020 = vmatpush1.msra.mxu0 0.0
    %8021 = vmatprep.subr.mxu0 0.0
    %8022 = vmatpush1.msra.mxu0 0.0
    %8023 = vmatprep.subr.mxu0 0.0
    %8024 = vmatpush1.msra.mxu0 0.0
    %8025 = vmatprep.subr.mxu0 0.0
    %8026 = vmatpush1.msra.mxu0 0.0
    %8027 = vmatprep.subr.mxu0 0.0
    %8028 = vmatpush1.msra.mxu0 0.0
    %8029 = vmatprep.subr.mxu0 0.0
    %8030 = vmatpush1.msra.mxu0 0.0
    %8031 = vmatprep.subr.mxu0 0.0
    %8032 = vmatpush1.msra.mxu0 0.0
    %8033 = vmatprep.subr.mxu0 0.0
    %8034 = vmatpush1.msra.mxu0 0.0
    %8035 = vmatprep.subr.mxu0 0.0
    %8036 = vmatpush1.msra.mxu0 0.0
    %8037 = vmatprep.subr.mxu0 0.0
    %8038 = vmatpush1.msra.mxu0 0.0
    %8039 = vmatprep.subr.mxu0 0.0
    %8040 = vmatpush1.msra.mxu0 0.0
    %8041 = vmatprep.subr.mxu0 0.0
    %8042 = vmatpush1.msra.mxu0 0.0
    %8043 = vmatprep.subr.mxu0 0.0
    %8044 = vmatpush1.msra.mxu0 0.0
    %8045 = vmatprep.subr.mxu0 0.0
    %8046 = vmatpush1.msra.mxu0 0.0
    %8047 = vmatprep.subr.mxu0 0.0
    %8048 = vmatpush1.msra.mxu0 0.0
    %8049 = vmatprep.subr.mxu0 0.0
    %8050 = vmatpush1.msra.mxu0 0.0
    %8051 = vmatprep.subr.mxu0 0.0
    %8052 = vmatpush1.msra.mxu0 0.0
    %8053 = vmatprep.mubr.f32.mxu0 0.0
    %v8054 = vand.u32 %v7612, 4294901760
    %8055 = vmatmul.mubr.f32.gmra.mrb[0].mxu0 %v8054
    %v8056 = vpop.f32.mrb[0].mxu0
    %v8057 = vadd.f32 %v7985, %v8056
    %v8058 = vpop.f32.mrb[0].mxu0
    %8059 = vdwg.mxu0
    %8060 = vmatprep.subr.mxu0 0.0
    %v8061 = vand.u32 %v7594, 4294901760
    %8062 = vmatpush1.msra.mxu0 %v8061
    %8063 = vmatprep.subr.mxu0 0.0
    %8064 = vmatpush1.msra.mxu0 0.0
    %8065 = vmatprep.subr.mxu0 0.0
    %8066 = vmatpush1.msra.mxu0 0.0
    %8067 = vmatprep.subr.mxu0 0.0
    %8068 = vmatpush1.msra.mxu0 0.0
    %8069 = vmatprep.subr.mxu0 0.0
    %8070 = vmatpush1.msra.mxu0 0.0
    %8071 = vmatprep.subr.mxu0 0.0
    %8072 = vmatpush1.msra.mxu0 0.0
    %8073 = vmatprep.subr.mxu0 0.0
    %8074 = vmatpush1.msra.mxu0 0.0
    %8075 = vmatprep.subr.mxu0 0.0
    %8076 = vmatpush1.msra.mxu0 0.0
    %8077 = vmatprep.subr.mxu0 0.0
    %8078 = vmatpush1.msra.mxu0 0.0
    %8079 = vmatprep.subr.mxu0 0.0
    %8080 = vmatpush1.msra.mxu0 0.0
    %8081 = vmatprep.subr.mxu0 0.0
    %8082 = vmatpush1.msra.mxu0 0.0
    %8083 = vmatprep.subr.mxu0 0.0
    %8084 = vmatpush1.msra.mxu0 0.0
    %8085 = vmatprep.subr.mxu0 0.0
    %8086 = vmatpush1.msra.mxu0 0.0
    %8087 = vmatprep.subr.mxu0 0.0
    %8088 = vmatpush1.msra.mxu0 0.0
    %8089 = vmatprep.subr.mxu0 0.0
    %8090 = vmatpush1.msra.mxu0 0.0
    %8091 = vmatprep.subr.mxu0 0.0
    %8092 = vmatpush1.msra.mxu0 0.0
    %8093 = vmatprep.subr.mxu0 0.0
    %8094 = vmatpush1.msra.mxu0 0.0
    %8095 = vmatprep.subr.mxu0 0.0
    %8096 = vmatpush1.msra.mxu0 0.0
    %8097 = vmatprep.subr.mxu0 0.0
    %8098 = vmatpush1.msra.mxu0 0.0
    %8099 = vmatprep.subr.mxu0 0.0
    %8100 = vmatpush1.msra.mxu0 0.0
    %8101 = vmatprep.subr.mxu0 0.0
    %8102 = vmatpush1.msra.mxu0 0.0
    %8103 = vmatprep.subr.mxu0 0.0
    %8104 = vmatpush1.msra.mxu0 0.0
    %8105 = vmatprep.subr.mxu0 0.0
    %8106 = vmatpush1.msra.mxu0 0.0
    %8107 = vmatprep.subr.mxu0 0.0
    %8108 = vmatpush1.msra.mxu0 0.0
    %8109 = vmatprep.subr.mxu0 0.0
    %8110 = vmatpush1.msra.mxu0 0.0
    %8111 = vmatprep.subr.mxu0 0.0
    %8112 = vmatpush1.msra.mxu0 0.0
    %8113 = vmatprep.subr.mxu0 0.0
    %8114 = vmatpush1.msra.mxu0 0.0
    %8115 = vmatprep.subr.mxu0 0.0
    %8116 = vmatpush1.msra.mxu0 0.0
    %8117 = vmatprep.subr.mxu0 0.0
    %8118 = vmatpush1.msra.mxu0 0.0
    %8119 = vmatprep.subr.mxu0 0.0
    %8120 = vmatpush1.msra.mxu0 0.0
    %8121 = vmatprep.subr.mxu0 0.0
    %8122 = vmatpush1.msra.mxu0 0.0
    %8123 = vmatprep.subr.mxu0 0.0
    %8124 = vmatpush1.msra.mxu0 0.0
    %8125 = vmatprep.mubr.f32.mxu0 0.0
    %v8126 = vand.u32 %v7612, 4294901760
    %v8127 = vsub.f32 %v7612, %v8126
    %v8128 = vand.u32 %v8127, 4294901760
    %v8129 = vsub.f32 %v8127, %v8128
    %v8130 = vand.u32 %v8129, 4294901760
    %8131 = vmatmul.mubr.f32.gmra.mrb[0].mxu0 %v8130
    %v8132 = vpop.f32.mrb[0].mxu0
    %v8133 = vadd.f32 %v7609, %v8132
    %v8134 = vpop.f32.mrb[0].mxu0
    %8135 = vdwg.mxu0
    %8136 = vmatprep.subr.mxu0 0.0
    %v8137 = vand.u32 %v7594, 4294901760
    %v8138 = vsub.f32 %v7594, %v8137
    %v8139 = vand.u32 %v8138, 4294901760
    %v8140 = vsub.f32 %v8138, %v8139
    %v8141 = vand.u32 %v8140, 4294901760
    %8142 = vmatpush1.msra.mxu0 %v8141
    %8143 = vmatprep.subr.mxu0 0.0
    %8144 = vmatpush1.msra.mxu0 0.0
    %8145 = vmatprep.subr.mxu0 0.0
    %8146 = vmatpush1.msra.mxu0 0.0
    %8147 = vmatprep.subr.mxu0 0.0
    %8148 = vmatpush1.msra.mxu0 0.0
    %8149 = vmatprep.subr.mxu0 0.0
    %8150 = vmatpush1.msra.mxu0 0.0
    %8151 = vmatprep.subr.mxu0 0.0
    %8152 = vmatpush1.msra.mxu0 0.0
    %8153 = vmatprep.subr.mxu0 0.0
    %8154 = vmatpush1.msra.mxu0 0.0
    %8155 = vmatprep.subr.mxu0 0.0
    %8156 = vmatpush1.msra.mxu0 0.0
    %8157 = vmatprep.subr.mxu0 0.0
    %8158 = vmatpush1.msra.mxu0 0.0
    %8159 = vmatprep.subr.mxu0 0.0
    %8160 = vmatpush1.msra.mxu0 0.0
    %8161 = vmatprep.subr.mxu0 0.0
    %8162 = vmatpush1.msra.mxu0 0.0
    %8163 = vmatprep.subr.mxu0 0.0
    %8164 = vmatpush1.msra.mxu0 0.0
    %8165 = vmatprep.subr.mxu0 0.0
    %8166 = vmatpush1.msra.mxu0 0.0
    %8167 = vmatprep.subr.mxu0 0.0
    %8168 = vmatpush1.msra.mxu0 0.0
    %8169 = vmatprep.subr.mxu0 0.0
    %8170 = vmatpush1.msra.mxu0 0.0
    %8171 = vmatprep.subr.mxu0 0.0
    %8172 = vmatpush1.msra.mxu0 0.0
    %8173 = vmatprep.subr.mxu0 0.0
    %8174 = vmatpush1.msra.mxu0 0.0
    %8175 = vmatprep.subr.mxu0 0.0
    %8176 = vmatpush1.msra.mxu0 0.0
    %8177 = vmatprep.subr.mxu0 0.0
    %8178 = vmatpush1.msra.mxu0 0.0
    %8179 = vmatprep.subr.mxu0 0.0
    %8180 = vmatpush1.msra.mxu0 0.0
    %8181 = vmatprep.subr.mxu0 0.0
    %8182 = vmatpush1.msra.mxu0 0.0
    %8183 = vmatprep.subr.mxu0 0.0
    %8184 = vmatpush1.msra.mxu0 0.0
    %8185 = vmatprep.subr.mxu0 0.0
    %8186 = vmatpush1.msra.mxu0 0.0
    %8187 = vmatprep.subr.mxu0 0.0
    %8188 = vmatpush1.msra.mxu0 0.0
    %8189 = vmatprep.subr.mxu0 0.0
    %8190 = vmatpush1.msra.mxu0 0.0
    %8191 = vmatprep.subr.mxu0 0.0
    %8192 = vmatpush1.msra.mxu0 0.0
    %8193 = vmatprep.subr.mxu0 0.0
    %8194 = vmatpush1.msra.mxu0 0.0
    %8195 = vmatprep.subr.mxu0 0.0
    %8196 = vmatpush1.msra.mxu0 0.0
    %8197 = vmatprep.subr.mxu0 0.0
    %8198 = vmatpush1.msra.mxu0 0.0
    %8199 = vmatprep.subr.mxu0 0.0
    %8200 = vmatpush1.msra.mxu0 0.0
    %8201 = vmatprep.subr.mxu0 0.0
    %8202 = vmatpush1.msra.mxu0 0.0
    %8203 = vmatprep.subr.mxu0 0.0
    %8204 = vmatpush1.msra.mxu0 0.0
    %8205 = vmatprep.mubr.f32.mxu0 0.0
    %v8206 = vand.u32 %v7612, 4294901760
    %8207 = vmatmul.mubr.f32.gmra.mrb[0].mxu0 %v8206
    %v8208 = vpop.f32.mrb[0].mxu0
    %v8209 = vadd.f32 %v8133, %v8208
    %v8210 = vpop.f32.mrb[0].mxu0
    %8211 = vdwg.mxu0
    %8212 = vmatprep.subr.mxu0 0.0
    %v8213 = vand.u32 %v7594, 4294901760
    %v8214 = vsub.f32 %v7594, %v8213
    %8215 = vmatpush1.msra.mxu0 %v8214
    %8216 = vmatprep.subr.mxu0 0.0
    %8217 = vmatpush1.msra.mxu0 0.0
    %8218 = vmatprep.subr.mxu0 0.0
    %8219 = vmatpush1.msra.mxu0 0.0
    %8220 = vmatprep.subr.mxu0 0.0
    %8221 = vmatpush1.msra.mxu0 0.0
    %8222 = vmatprep.subr.mxu0 0.0
    %8223 = vmatpush1.msra.mxu0 0.0
    %8224 = vmatprep.subr.mxu0 0.0
    %8225 = vmatpush1.msra.mxu0 0.0
    %8226 = vmatprep.subr.mxu0 0.0
    %8227 = vmatpush1.msra.mxu0 0.0
    %8228 = vmatprep.subr.mxu0 0.0
    %8229 = vmatpush1.msra.mxu0 0.0
    %8230 = vmatprep.subr.mxu0 0.0
    %8231 = vmatpush1.msra.mxu0 0.0
    %8232 = vmatprep.subr.mxu0 0.0
    %8233 = vmatpush1.msra.mxu0 0.0
    %8234 = vmatprep.subr.mxu0 0.0
    %8235 = vmatpush1.msra.mxu0 0.0
    %8236 = vmatprep.subr.mxu0 0.0
    %8237 = vmatpush1.msra.mxu0 0.0
    %8238 = vmatprep.subr.mxu0 0.0
    %8239 = vmatpush1.msra.mxu0 0.0
    %8240 = vmatprep.subr.mxu0 0.0
    %8241 = vmatpush1.msra.mxu0 0.0
    %8242 = vmatprep.subr.mxu0 0.0
    %8243 = vmatpush1.msra.mxu0 0.0
    %8244 = vmatprep.subr.mxu0 0.0
    %8245 = vmatpush1.msra.mxu0 0.0
    %8246 = vmatprep.subr.mxu0 0.0
    %8247 = vmatpush1.msra.mxu0 0.0
    %8248 = vmatprep.subr.mxu0 0.0
    %8249 = vmatpush1.msra.mxu0 0.0
    %8250 = vmatprep.subr.mxu0 0.0
    %8251 = vmatpush1.msra.mxu0 0.0
    %8252 = vmatprep.subr.mxu0 0.0
    %8253 = vmatpush1.msra.mxu0 0.0
    %8254 = vmatprep.subr.mxu0 0.0
    %8255 = vmatpush1.msra.mxu0 0.0
    %8256 = vmatprep.subr.mxu0 0.0
    %8257 = vmatpush1.msra.mxu0 0.0
    %8258 = vmatprep.subr.mxu0 0.0
    %8259 = vmatpush1.msra.mxu0 0.0
    %8260 = vmatprep.subr.mxu0 0.0
    %8261 = vmatpush1.msra.mxu0 0.0
    %8262 = vmatprep.subr.mxu0 0.0
    %8263 = vmatpush1.msra.mxu0 0.0
    %8264 = vmatprep.subr.mxu0 0.0
    %8265 = vmatpush1.msra.mxu0 0.0
    %8266 = vmatprep.subr.mxu0 0.0
    %8267 = vmatpush1.msra.mxu0 0.0
    %8268 = vmatprep.subr.mxu0 0.0
    %8269 = vmatpush1.msra.mxu0 0.0
    %8270 = vmatprep.subr.mxu0 0.0
    %8271 = vmatpush1.msra.mxu0 0.0
    %8272 = vmatprep.subr.mxu0 0.0
    %8273 = vmatpush1.msra.mxu0 0.0
    %8274 = vmatprep.subr.mxu0 0.0
    %8275 = vmatpush1.msra.mxu0 0.0
    %8276 = vmatprep.subr.mxu0 0.0
    %8277 = vmatpush1.msra.mxu0 0.0
    %8278 = vmatprep.mubr.f32.mxu0 0.0
    %v8279 = vand.u32 %v7612, 4294901760
    %v8280 = vsub.f32 %v7612, %v8279
    %8281 = vmatmul.mubr.f32.gmra.mrb[0].mxu0 %v8280
    %v8282 = vpop.f32.mrb[0].mxu0
    %v8283 = vadd.f32 %v8209, %v8282
    %v8284 = vpop.f32.mrb[0].mxu0
    %8285 = vdwg.mxu0
    %8286 = vmatprep.subr.mxu0 0.0
    %v8287 = vand.u32 %v7594, 4294901760
    %8288 = vmatpush1.msra.mxu0 %v8287
    %8289 = vmatprep.subr.mxu0 0.0
    %8290 = vmatpush1.msra.mxu0 0.0
    %8291 = vmatprep.subr.mxu0 0.0
    %8292 = vmatpush1.msra.mxu0 0.0
    %8293 = vmatprep.subr.mxu0 0.0
    %8294 = vmatpush1.msra.mxu0 0.0
    %8295 = vmatprep.subr.mxu0 0.0
    %8296 = vmatpush1.msra.mxu0 0.0
    %8297 = vmatprep.subr.mxu0 0.0
    %8298 = vmatpush1.msra.mxu0 0.0
    %8299 = vmatprep.subr.mxu0 0.0
    %8300 = vmatpush1.msra.mxu0 0.0
    %8301 = vmatprep.subr.mxu0 0.0
    %8302 = vmatpush1.msra.mxu0 0.0
    %8303 = vmatprep.subr.mxu0 0.0
    %8304 = vmatpush1.msra.mxu0 0.0
    %8305 = vmatprep.subr.mxu0 0.0
    %8306 = vmatpush1.msra.mxu0 0.0
    %8307 = vmatprep.subr.mxu0 0.0
    %8308 = vmatpush1.msra.mxu0 0.0
    %8309 = vmatprep.subr.mxu0 0.0
    %8310 = vmatpush1.msra.mxu0 0.0
    %8311 = vmatprep.subr.mxu0 0.0
    %8312 = vmatpush1.msra.mxu0 0.0
    %8313 = vmatprep.subr.mxu0 0.0
    %8314 = vmatpush1.msra.mxu0 0.0
    %8315 = vmatprep.subr.mxu0 0.0
    %8316 = vmatpush1.msra.mxu0 0.0
    %8317 = vmatprep.subr.mxu0 0.0
    %8318 = vmatpush1.msra.mxu0 0.0
    %8319 = vmatprep.subr.mxu0 0.0
    %8320 = vmatpush1.msra.mxu0 0.0
    %8321 = vmatprep.subr.mxu0 0.0
    %8322 = vmatpush1.msra.mxu0 0.0
    %8323 = vmatprep.subr.mxu0 0.0
    %8324 = vmatpush1.msra.mxu0 0.0
    %8325 = vmatprep.subr.mxu0 0.0
    %8326 = vmatpush1.msra.mxu0 0.0
    %8327 = vmatprep.subr.mxu0 0.0
    %8328 = vmatpush1.msra.mxu0 0.0
    %8329 = vmatprep.subr.mxu0 0.0
    %8330 = vmatpush1.msra.mxu0 0.0
    %8331 = vmatprep.subr.mxu0 0.0
    %8332 = vmatpush1.msra.mxu0 0.0
    %8333 = vmatprep.subr.mxu0 0.0
    %8334 = vmatpush1.msra.mxu0 0.0
    %8335 = vmatprep.subr.mxu0 0.0
    %8336 = vmatpush1.msra.mxu0 0.0
    %8337 = vmatprep.subr.mxu0 0.0
    %8338 = vmatpush1.msra.mxu0 0.0
    %8339 = vmatprep.subr.mxu0 0.0
    %8340 = vmatpush1.msra.mxu0 0.0
    %8341 = vmatprep.subr.mxu0 0.0
    %8342 = vmatpush1.msra.mxu0 0.0
    %8343 = vmatprep.subr.mxu0 0.0
    %8344 = vmatpush1.msra.mxu0 0.0
    %8345 = vmatprep.subr.mxu0 0.0
    %8346 = vmatpush1.msra.mxu0 0.0
    %8347 = vmatprep.subr.mxu0 0.0
    %8348 = vmatpush1.msra.mxu0 0.0
    %8349 = vmatprep.subr.mxu0 0.0
    %8350 = vmatpush1.msra.mxu0 0.0
    %8351 = vmatprep.mubr.f32.mxu0 0.0
    %v8352 = vand.u32 %v7612, 4294901760
    %v8353 = vsub.f32 %v7612, %v8352
    %v8354 = vand.u32 %v8353, 4294901760
    %8355 = vmatmul.mubr.f32.gmra.mrb[0].mxu0 %v8354
    %v8356 = vpop.f32.mrb[0].mxu0
    %v8357 = vadd.f32 %v8283, %v8356
    %v8358 = vpop.f32.mrb[0].mxu0
    %8359 = vdwg.mxu0
    %8360 = vmatprep.subr.mxu0 0.0
    %v8361 = vand.u32 %v7594, 4294901760
    %v8362 = vsub.f32 %v7594, %v8361
    %v8363 = vand.u32 %v8362, 4294901760
    %8364 = vmatpush1.msra.mxu0 %v8363
    %8365 = vmatprep.subr.mxu0 0.0
    %8366 = vmatpush1.msra.mxu0 0.0
    %8367 = vmatprep.subr.mxu0 0.0
    %8368 = vmatpush1.msra.mxu0 0.0
    %8369 = vmatprep.subr.mxu0 0.0
    %8370 = vmatpush1.msra.mxu0 0.0
    %8371 = vmatprep.subr.mxu0 0.0
    %8372 = vmatpush1.msra.mxu0 0.0
    %8373 = vmatprep.subr.mxu0 0.0
    %8374 = vmatpush1.msra.mxu0 0.0
    %8375 = vmatprep.subr.mxu0 0.0
    %8376 = vmatpush1.msra.mxu0 0.0
    %8377 = vmatprep.subr.mxu0 0.0
    %8378 = vmatpush1.msra.mxu0 0.0
    %8379 = vmatprep.subr.mxu0 0.0
    %8380 = vmatpush1.msra.mxu0 0.0
    %8381 = vmatprep.subr.mxu0 0.0
    %8382 = vmatpush1.msra.mxu0 0.0
    %8383 = vmatprep.subr.mxu0 0.0
    %8384 = vmatpush1.msra.mxu0 0.0
    %8385 = vmatprep.subr.mxu0 0.0
    %8386 = vmatpush1.msra.mxu0 0.0
    %8387 = vmatprep.subr.mxu0 0.0
    %8388 = vmatpush1.msra.mxu0 0.0
    %8389 = vmatprep.subr.mxu0 0.0
    %8390 = vmatpush1.msra.mxu0 0.0
    %8391 = vmatprep.subr.mxu0 0.0
    %8392 = vmatpush1.msra.mxu0 0.0
    %8393 = vmatprep.subr.mxu0 0.0
    %8394 = vmatpush1.msra.mxu0 0.0
    %8395 = vmatprep.subr.mxu0 0.0
    %8396 = vmatpush1.msra.mxu0 0.0
    %8397 = vmatprep.subr.mxu0 0.0
    %8398 = vmatpush1.msra.mxu0 0.0
    %8399 = vmatprep.subr.mxu0 0.0
    %8400 = vmatpush1.msra.mxu0 0.0
    %8401 = vmatprep.subr.mxu0 0.0
    %8402 = vmatpush1.msra.mxu0 0.0
    %8403 = vmatprep.subr.mxu0 0.0
    %8404 = vmatpush1.msra.mxu0 0.0
    %8405 = vmatprep.subr.mxu0 0.0
    %8406 = vmatpush1.msra.mxu0 0.0
    %8407 = vmatprep.subr.mxu0 0.0
    %8408 = vmatpush1.msra.mxu0 0.0
    %8409 = vmatprep.subr.mxu0 0.0
    %8410 = vmatpush1.msra.mxu0 0.0
    %8411 = vmatprep.subr.mxu0 0.0
    %8412 = vmatpush1.msra.mxu0 0.0
    %8413 = vmatprep.subr.mxu0 0.0
    %8414 = vmatpush1.msra.mxu0 0.0
    %8415 = vmatprep.subr.mxu0 0.0
    %8416 = vmatpush1.msra.mxu0 0.0
    %8417 = vmatprep.subr.mxu0 0.0
    %8418 = vmatpush1.msra.mxu0 0.0
    %8419 = vmatprep.subr.mxu0 0.0
    %8420 = vmatpush1.msra.mxu0 0.0
    %8421 = vmatprep.subr.mxu0 0.0
    %8422 = vmatpush1.msra.mxu0 0.0
    %8423 = vmatprep.subr.mxu0 0.0
    %8424 = vmatpush1.msra.mxu0 0.0
    %8425 = vmatprep.subr.mxu0 0.0
    %8426 = vmatpush1.msra.mxu0 0.0
    %8427 = vmatprep.mubr.f32.mxu0 0.0
    %v8428 = vand.u32 %v7612, 4294901760
    %8429 = vmatmul.mubr.f32.gmra.mrb[0].mxu0 %v8428
    %v8430 = vpop.f32.mrb[0].mxu0
    %v8431 = vadd.f32 %v8357, %v8430
    %v8432 = vpop.f32.mrb[0].mxu0
    %8433 = vdwg.mxu0
    %8434 = vmatprep.subr.mxu0 0.0
    %v8435 = vand.u32 %v7594, 4294901760
    %8436 = vmatpush1.msra.mxu0 %v8435
    %8437 = vmatprep.subr.mxu0 0.0
    %8438 = vmatpush1.msra.mxu0 0.0
    %8439 = vmatprep.subr.mxu0 0.0
    %8440 = vmatpush1.msra.mxu0 0.0
    %8441 = vmatprep.subr.mxu0 0.0
    %8442 = vmatpush1.msra.mxu0 0.0
    %8443 = vmatprep.subr.mxu0 0.0
    %8444 = vmatpush1.msra.mxu0 0.0
    %8445 = vmatprep.subr.mxu0 0.0
    %8446 = vmatpush1.msra.mxu0 0.0
    %8447 = vmatprep.subr.mxu0 0.0
    %8448 = vmatpush1.msra.mxu0 0.0
    %8449 = vmatprep.subr.mxu0 0.0
    %8450 = vmatpush1.msra.mxu0 0.0
    %8451 = vmatprep.subr.mxu0 0.0
    %8452 = vmatpush1.msra.mxu0 0.0
    %8453 = vmatprep.subr.mxu0 0.0
    %8454 = vmatpush1.msra.mxu0 0.0
    %8455 = vmatprep.subr.mxu0 0.0
    %8456 = vmatpush1.msra.mxu0 0.0
    %8457 = vmatprep.subr.mxu0 0.0
    %8458 = vmatpush1.msra.mxu0 0.0
    %8459 = vmatprep.subr.mxu0 0.0
    %8460 = vmatpush1.msra.mxu0 0.0
    %8461 = vmatprep.subr.mxu0 0.0
    %8462 = vmatpush1.msra.mxu0 0.0
    %8463 = vmatprep.subr.mxu0 0.0
    %8464 = vmatpush1.msra.mxu0 0.0
    %8465 = vmatprep.subr.mxu0 0.0
    %8466 = vmatpush1.msra.mxu0 0.0
    %8467 = vmatprep.subr.mxu0 0.0
    %8468 = vmatpush1.msra.mxu0 0.0
    %8469 = vmatprep.subr.mxu0 0.0
    %8470 = vmatpush1.msra.mxu0 0.0
    %8471 = vmatprep.subr.mxu0 0.0
    %8472 = vmatpush1.msra.mxu0 0.0
    %8473 = vmatprep.subr.mxu0 0.0
    %8474 = vmatpush1.msra.mxu0 0.0
    %8475 = vmatprep.subr.mxu0 0.0
    %8476 = vmatpush1.msra.mxu0 0.0
    %8477 = vmatprep.subr.mxu0 0.0
    %8478 = vmatpush1.msra.mxu0 0.0
    %8479 = vmatprep.subr.mxu0 0.0
    %8480 = vmatpush1.msra.mxu0 0.0
    %8481 = vmatprep.subr.mxu0 0.0
    %8482 = vmatpush1.msra.mxu0 0.0
    %8483 = vmatprep.subr.mxu0 0.0
    %8484 = vmatpush1.msra.mxu0 0.0
    %8485 = vmatprep.subr.mxu0 0.0
    %8486 = vmatpush1.msra.mxu0 0.0
    %8487 = vmatprep.subr.mxu0 0.0
    %8488 = vmatpush1.msra.mxu0 0.0
    %8489 = vmatprep.subr.mxu0 0.0
    %8490 = vmatpush1.msra.mxu0 0.0
    %8491 = vmatprep.subr.mxu0 0.0
    %8492 = vmatpush1.msra.mxu0 0.0
    %8493 = vmatprep.subr.mxu0 0.0
    %8494 = vmatpush1.msra.mxu0 0.0
    %8495 = vmatprep.subr.mxu0 0.0
    %8496 = vmatpush1.msra.mxu0 0.0
    %8497 = vmatprep.subr.mxu0 0.0
    %8498 = vmatpush1.msra.mxu0 0.0
    %8499 = vmatprep.mubr.f32.mxu0 0.0
    %v8500 = vand.u32 %v7612, 4294901760
    %8501 = vmatmul.mubr.f32.gmra.mrb[0].mxu0 %v8500
    %v8502 = vpop.f32.mrb[0].mxu0
    %v8503 = vadd.f32 %v8431, %v8502
    %v8504 = vpop.f32.mrb[0].mxu0
    %8505 = vdwg.mxu0
    %vm8506 = vcmask 60416
    %8507 = vst.msk [vmem:[#allocation6] sm:$0xf] %vm8506, %v8057
    %8508 = vst.msk [vmem:[#allocation6 + $0x4] sm:$0xf] %vm8506, %v8503
    // Predicated region
    $region38: #{rnnwithode_forward.1} parent=1 // pred_check
      _
    $region39: #{rnnwithode_forward.1} parent=1 // pred_check_branch
      %8510 = sbr.rel (0) target = $region41
    $region40: #{rnnwithode_forward.1} parent=1 // pred_region
      %s8512 = ssub.s32 128, 128
      %8513 = vsyncadd [#allocation4], %s8512
      %s8514 = sshll.u32 [#allocation6], 4
      %s8515 = int_to_ptr.vmem [resolvable:$true] %s8514
      %8520 = dma.vmem_to_hbm [thread:$0]  %s8515, 128, %s8, [#allocation4], 64, 64, 4
    $region41: #{rnnwithode_forward.1} parent=1 // pred_fallthru
      _
    // Predicated region
    $region42: #{rnnwithode_forward.1} parent=1 // pred_check
      _
    $region43: #{rnnwithode_forward.1} parent=1 // pred_check_branch
      %8522 = sbr.rel (0) target = $region45
    $region44: #{rnnwithode_forward.1} parent=1 // pred_region
      %s8524 = ssub.s32 512, 512
      %8525 = vsyncadd [#allocation8], %s8524
      %s8526 = sshll.u32 [#allocation7], 4
      %s8527 = int_to_ptr.vmem [resolvable:$true] %s8526
      %8532 = dma.vmem_to_hbm [thread:$0]  %s8527, 512, %s9, [#allocation8], 128, 128, 8
    $region45: #{rnnwithode_forward.1} parent=1 // pred_fallthru
      _
    // Predicated region
    $region46: #{rnnwithode_forward.1} parent=1 // pred_check
      _
    $region47: #{rnnwithode_forward.1} parent=1 // pred_check_branch
      %8534 = sbr.rel (0) target = $region49
    $region48: #{rnnwithode_forward.1} parent=1 // pred_region
      %8535 = dma.done [#allocation4], 128
    $region49: #{rnnwithode_forward.1} parent=1 // pred_fallthru
      _
    // Predicated region
    $region50: #{rnnwithode_forward.1} parent=1 // pred_check
      _
    $region51: #{rnnwithode_forward.1} parent=1 // pred_check_branch
      %8537 = sbr.rel (0) target = $region53
    $region52: #{rnnwithode_forward.1} parent=1 // pred_region
      %8538 = dma.done [#allocation8], 512
    $region53: #{rnnwithode_forward.1} parent=1 // pred_fallthru
      _
    %8539 = vsyncpa [#allocation4], 1
    %8540 = vsyncpa [#allocation8], 1
    %8541 = vsyncpa [#allocation5], 1

</llo_original>
